<compile_context>
chip_gen: v6e
topology: v6e:2x2x1
jax: 0.10.0
libtpu: 0.0.40
codegen_flags: <defaults>
</compile_context>

<pallas_src>
import jax
import jax.numpy as jnp
from jax import lax
from jax.experimental import pallas as pl
from jax.experimental.pallas import tpu as pltpu

# Dims fixed by MyNet: Conv2d(3, 32, kernel=3, pad=1) on 32x32 input, Linear(32*32*32, 10)
H = W = 32
P = H * W                      # 1024 output pixels per image
CIN = 3
COUT = 32
KH = KW = 3
NTAP = KH * KW * CIN           # 27 real conv taps
FC_IN = COUT * P               # 32768
FC_OUT = 10
J = FC_OUT * COUT              # 320 columns of the repacked FC weight

B = 8                          # images per grid step (fills 256-row MXU on v6e/v7x)
BR = B * COUT                  # 256 stacked feature rows per step
BT = B * NTAP                  # 216 stacked tap rows per step


def fused_kernel(pt_ref, wbig_ref, bconv_ref, g_ref, mask_ref, sel_ref, pool_ref, bfc_ref, o_ref):
    # pt_ref  : (BT, P)   bf16  stacked transposed im2col patches for B images (row b*27 + t)
    # wbig_ref: (BR, BT)  bf16  block-diag conv taps: wbig[b*32+co, b*27+t] = taps[co, t]
    # bconv_ref: (BR, 1)  f32   conv bias tiled per image
    # g_ref   : (P, J)    bf16  FC weight repack: G[p, o*32+c] = W_fc[o, c*1024+p]
    # mask_ref: (BR, J)   f32   1 iff j % 32 == r % 32   (diagonal extractor)
    # sel_ref : (J, 10)   f32   1 iff j // 32 == o       (output-column collapse)
    # pool_ref: (B, BR)   f32   1 iff r // 32 == b       (per-image 32-row sum)
    # bfc_ref : (1, 10)   f32
    # o_ref   : (B, 10)   f32

    # Conv + bias + ReLU for all B images in a single MXU matmul (block-diagonal weights).
    conv = jnp.dot(wbig_ref[...], pt_ref[...], preferred_element_type=jnp.float32)      # (BR, P)
    feats = jnp.maximum(conv + bconv_ref[...], 0.0).astype(jnp.bfloat16)                # (BR, P)

    # Stacked FC: m[b*32+c', o*32+c] = sum_p feats[b,c',p] * W_fc[o, c*1024+p]
    m = jnp.dot(feats, g_ref[...], preferred_element_type=jnp.float32)                  # (BR, J)
    # Keep only the c'==c diagonal and collapse the 32 columns per output o.
    d = jnp.dot(m * mask_ref[...], sel_ref[...], preferred_element_type=jnp.float32)    # (BR, 10)
    # Sum the 32 channel-rows of each image and add the FC bias.
    o_ref[...] = jnp.dot(pool_ref[...], d, preferred_element_type=jnp.float32) + bfc_ref[...]


def mynet_pallas(pt, wbig, bconv, g, mask, sel, pool, bfc):
    n_pad = pt.shape[0] // NTAP
    grid = (n_pad // B,)
    return pl.pallas_call(
        fused_kernel,
        out_shape=jax.ShapeDtypeStruct((n_pad, FC_OUT), jnp.float32),
        grid=grid,
        in_specs=[
            pl.BlockSpec((BT, P), lambda i: (i, 0)),       # per-step stacked patches (8 x 54 KB bf16)
            pl.BlockSpec((BR, BT), lambda i: (0, 0)),      # block-diag conv taps (constant)
            pl.BlockSpec((BR, 1), lambda i: (0, 0)),       # conv bias (constant)
            pl.BlockSpec((P, J), lambda i: (0, 0)),        # FC weight repack (constant, bf16)
            pl.BlockSpec((BR, J), lambda i: (0, 0)),       # hoisted diag mask (constant)
            pl.BlockSpec((J, FC_OUT), lambda i: (0, 0)),   # hoisted column selector (constant)
            pl.BlockSpec((B, BR), lambda i: (0, 0)),       # hoisted per-image pooling (constant)
            pl.BlockSpec((1, FC_OUT), lambda i: (0, 0)),   # FC bias (constant)
        ],
        out_specs=pl.BlockSpec((B, FC_OUT), lambda i: (i, 0)),
        compiler_params=pltpu.CompilerParams(dimension_semantics=("parallel",)),
    )(pt, wbig, bconv, g, mask, sel, pool, bfc)


def prepare_params(params):
    """One-time repack of torch-layout parameters into kernel layouts (hoisted out of the forward)."""
    w_conv, b_conv, w_fc, b_fc = params
    # Conv taps: taps[co, (kh*3 + kw)*3 + ci] = w_conv[co, ci, kh, kw]
    taps = jnp.transpose(w_conv, (0, 2, 3, 1)).reshape(COUT, NTAP)
    # Block-diagonal stacked conv weight: wbig[a*32+co, b*27+t] = (a==b) * taps[co, t]
    wbig = (jnp.eye(B, dtype=jnp.float32)[:, None, :, None]
            * taps[None, :, None, :]).reshape(BR, BT).astype(jnp.bfloat16)
    bconv = jnp.tile(b_conv, B).reshape(BR, 1).astype(jnp.float32)
    # FC weight repack (torch NCHW flatten order): G[p, o*32 + c] = w_fc[o, c*1024 + p]
    g = jnp.transpose(w_fc.reshape(FC_OUT, COUT, P), (2, 0, 1)).reshape(P, J).astype(jnp.bfloat16)
    # Hoisted loop-invariant selection constants.
    r = jnp.arange(BR, dtype=jnp.int32)
    j = jnp.arange(J, dtype=jnp.int32)
    mask = ((j[None, :] % COUT) == (r[:, None] % COUT)).astype(jnp.float32)                            # (BR, J)
    sel = ((j[:, None] // COUT) == jnp.arange(FC_OUT, dtype=jnp.int32)[None, :]).astype(jnp.float32)   # (J, 10)
    pool = ((r[None, :] // COUT) == jnp.arange(B, dtype=jnp.int32)[:, None]).astype(jnp.float32)       # (B, BR)
    bfc = b_fc.reshape(1, FC_OUT).astype(jnp.float32)
    return wbig, bconv, g, mask, sel, pool, bfc


def mynet_forward(x_nchw, prepared):
    """Forward pass matching torch MyNet. x_nchw: (N, 3, 32, 32) f32 -> (N, 10) f32."""
    wbig, bconv, g, mask, sel, pool, bfc = prepared
    n = x_nchw.shape[0]
    n_pad = ((n + B - 1) // B) * B
    # Glue (XLA): transposed im2col with only the 27 real taps, streamed as bf16.
    # pt[img*27 + (kh*3+kw)*3 + ci, h*32 + w] = x_pad[img, h+kh, w+kw, ci]
    xp = jnp.pad(jnp.transpose(x_nchw, (0, 2, 3, 1)),
                 ((0, n_pad - n), (1, 1), (1, 1), (0, 0)))
    slabs = [xp[:, kh:kh + H, kw:kw + W, ci].reshape(n_pad, 1, P)
             for kh in range(KH) for kw in range(KW) for ci in range(CIN)]
    pt = jnp.concatenate(slabs, axis=1).astype(jnp.bfloat16).reshape(n_pad * NTAP, P)
    out = mynet_pallas(pt, wbig, bconv, g, mask, sel, pool, bfc)
    return out[:n]


def mynet_reference(x_nchw, params):
    """Pure-JAX reference reproducing torch semantics exactly (NCHW conv + NCHW flatten)."""
    w_conv, b_conv, w_fc, b_fc = params
    y = lax.conv_general_dilated(
        x_nchw, w_conv, window_strides=(1, 1), padding=((1, 1), (1, 1)),
        dimension_numbers=("NCHW", "OIHW", "NCHW"),
        precision=lax.Precision.HIGHEST)
    y = jnp.maximum(y + b_conv[None, :, None, None], 0.0)
    flat = y.reshape(x_nchw.shape[0], -1)
    return jnp.dot(flat, w_fc.T, precision=lax.Precision.HIGHEST) + b_fc


if __name__ == "__main__":
    key = jax.random.PRNGKey(0)
    kx, kw1, kb1, kw2, kb2 = jax.random.split(key, 5)

    n = 16  # small batch; 2 grid steps of B=8 so both v7x TensorCores get work
    x = jax.random.normal(kx, (n, CIN, H, W), dtype=jnp.float32)

    # deterministic synthetic parameters (torch layouts: conv OIHW, linear (out, in))
    w_conv = jax.random.normal(kw1, (COUT, CIN, KH, KW), jnp.float32) / (CIN * KH * KW) ** 0.5
    b_conv = jax.random.normal(kb1, (COUT,), jnp.float32) * 0.1
    w_fc = jax.random.normal(kw2, (FC_OUT, FC_IN), jnp.float32) / FC_IN ** 0.5
    b_fc = jax.random.normal(kb2, (FC_OUT,), jnp.float32) * 0.1
    params = (w_conv, b_conv, w_fc, b_fc)

    prepared = prepare_params(params)            # one-time parameter repack (not per-forward)
    fwd = jax.jit(mynet_forward)
    out = jax.block_until_ready(fwd(x, prepared))

    ref = mynet_reference(x, params)
    assert out.shape == (n, FC_OUT) and out.dtype == jnp.float32
    assert bool(jnp.allclose(out, ref, rtol=3e-2, atol=3e-2)), \
        f"max abs diff {float(jnp.max(jnp.abs(out - ref)))}"

    print("KERNEL_OK")
</pallas_src>

<mosaic_0001>
module attributes {stable_mosaic.version = 11 : i64} {
  func.func @fused_kernel(%arg0: i32, %arg1: memref<216x1024xbf16, #tpu.memory_space<vmem>>, %arg2: memref<256x216xbf16, #tpu.memory_space<vmem>>, %arg3: memref<256x1xf32, #tpu.memory_space<vmem>>, %arg4: memref<1024x320xbf16, #tpu.memory_space<vmem>>, %arg5: memref<256x320xf32, #tpu.memory_space<vmem>>, %arg6: memref<320x10xf32, #tpu.memory_space<vmem>>, %arg7: memref<8x256xf32, #tpu.memory_space<vmem>>, %arg8: memref<1x10xf32, #tpu.memory_space<vmem>>, %arg9: memref<8x10xf32, #tpu.memory_space<vmem>>) attributes {dimension_semantics = [#tpu.dimension_semantics<parallel>], iteration_bounds = array<i64: 2>, scalar_prefetch = 0 : i64, scratch_operands = 0 : i64, tpu.core_type = #tpu.core_type<tc>, window_params = [{transform_indices = @transform_0, window_bounds = array<i64: 216, 1024>}, {pipeline_mode = #tpu.pipeline_mode<synchronous>, transform_indices = @transform_1, window_bounds = array<i64: 256, 216>}, {pipeline_mode = #tpu.pipeline_mode<synchronous>, transform_indices = @transform_2, window_bounds = array<i64: 256, 1>}, {pipeline_mode = #tpu.pipeline_mode<synchronous>, transform_indices = @transform_3, window_bounds = array<i64: 1024, 320>}, {pipeline_mode = #tpu.pipeline_mode<synchronous>, transform_indices = @transform_4, window_bounds = array<i64: 256, 320>}, {pipeline_mode = #tpu.pipeline_mode<synchronous>, transform_indices = @transform_5, window_bounds = array<i64: 320, 10>}, {pipeline_mode = #tpu.pipeline_mode<synchronous>, transform_indices = @transform_6, window_bounds = array<i64: 8, 256>}, {pipeline_mode = #tpu.pipeline_mode<synchronous>, transform_indices = @transform_7, window_bounds = array<i64: 1, 10>}, {transform_indices = @transform_8, window_bounds = array<i64: 8, 10>}]} {
    %c0 = arith.constant 0 : index
    %c0_0 = arith.constant 0 : index
    %0 = vector.load %arg2[%c0, %c0_0] : memref<256x216xbf16, #tpu.memory_space<vmem>>, vector<256x216xbf16>
    %c0_1 = arith.constant 0 : index
    %c0_2 = arith.constant 0 : index
    %1 = vector.load %arg1[%c0_1, %c0_2] : memref<216x1024xbf16, #tpu.memory_space<vmem>>, vector<216x1024xbf16>
    %cst = arith.constant dense<0.000000e+00> : vector<256x1024xf32>
    %2 = tpu.matmul %0, %1, %cst {dimension_numbers = #tpu.dot_dimension_numbers<[1], [0], [0], [1], [0, 0, 1, 1], [], []>} : vector<256x216xbf16>, vector<216x1024xbf16>, vector<256x1024xf32> -> vector<256x1024xf32>
    %c0_3 = arith.constant 0 : index
    %c0_4 = arith.constant 0 : index
    %3 = vector.load %arg3[%c0_3, %c0_4] : memref<256x1xf32, #tpu.memory_space<vmem>>, vector<256x1xf32>
    %4 = vector.broadcast %3 : vector<256x1xf32> to vector<256x1024xf32>
    %5 = arith.addf %2, %4 : vector<256x1024xf32>
    %cst_5 = arith.constant 0.000000e+00 : f32
    %6 = vector.broadcast %cst_5 : f32 to vector<256x1024xf32>
    %7 = arith.maximumf %5, %6 : vector<256x1024xf32>
    %8 = arith.truncf %7 : vector<256x1024xf32> to vector<256x1024xbf16>
    %c0_6 = arith.constant 0 : index
    %c0_7 = arith.constant 0 : index
    %9 = vector.load %arg4[%c0_6, %c0_7] : memref<1024x320xbf16, #tpu.memory_space<vmem>>, vector<1024x320xbf16>
    %cst_8 = arith.constant dense<0.000000e+00> : vector<256x320xf32>
    %10 = tpu.matmul %8, %9, %cst_8 {dimension_numbers = #tpu.dot_dimension_numbers<[1], [0], [0], [1], [0, 0, 1, 1], [], []>} : vector<256x1024xbf16>, vector<1024x320xbf16>, vector<256x320xf32> -> vector<256x320xf32>
    %c0_9 = arith.constant 0 : index
    %c0_10 = arith.constant 0 : index
    %11 = vector.load %arg5[%c0_9, %c0_10] : memref<256x320xf32, #tpu.memory_space<vmem>>, vector<256x320xf32>
    %12 = arith.mulf %10, %11 : vector<256x320xf32>
    %c0_11 = arith.constant 0 : index
    %c0_12 = arith.constant 0 : index
    %13 = vector.load %arg6[%c0_11, %c0_12] : memref<320x10xf32, #tpu.memory_space<vmem>>, vector<320x10xf32>
    %cst_13 = arith.constant dense<0.000000e+00> : vector<256x10xf32>
    %14 = tpu.matmul %12, %13, %cst_13 {dimension_numbers = #tpu.dot_dimension_numbers<[1], [0], [0], [1], [0, 0, 1, 1], [], []>} : vector<256x320xf32>, vector<320x10xf32>, vector<256x10xf32> -> vector<256x10xf32>
    %c0_14 = arith.constant 0 : index
    %c0_15 = arith.constant 0 : index
    %15 = vector.load %arg7[%c0_14, %c0_15] : memref<8x256xf32, #tpu.memory_space<vmem>>, vector<8x256xf32>
    %cst_16 = arith.constant dense<0.000000e+00> : vector<8x10xf32>
    %16 = tpu.matmul %15, %14, %cst_16 {dimension_numbers = #tpu.dot_dimension_numbers<[1], [0], [0], [1], [0, 0, 1, 1], [], []>} : vector<8x256xf32>, vector<256x10xf32>, vector<8x10xf32> -> vector<8x10xf32>
    %c0_17 = arith.constant 0 : index
    %c0_18 = arith.constant 0 : index
    %17 = vector.load %arg8[%c0_17, %c0_18] : memref<1x10xf32, #tpu.memory_space<vmem>>, vector<1x10xf32>
    %18 = vector.broadcast %17 : vector<1x10xf32> to vector<8x10xf32>
    %19 = arith.addf %16, %18 : vector<8x10xf32>
    %c0_19 = arith.constant 0 : index
    %c0_20 = arith.constant 0 : index
    %20 = vector.load %arg9[%c0_19, %c0_20] : memref<8x10xf32, #tpu.memory_space<vmem>>, vector<8x10xf32>
    tpu.vector_store %arg9[%c0_19, %c0_20], %19 {strides = array<i32>} : memref<8x10xf32, #tpu.memory_space<vmem>>, vector<8x10xf32>,
    return
  }
  func.func @transform_0(%arg0: i32) -> (i32, i32) {
    %c0_i32 = arith.constant 0 : i32
    %c0_i32_0 = arith.constant 0 : i32
    return %arg0, %c0_i32 : i32, i32
  }
  func.func @transform_1(%arg0: i32) -> (i32, i32) {
    %c0_i32 = arith.constant 0 : i32
    %c0_i32_0 = arith.constant 0 : i32
    %c0_i32_1 = arith.constant 0 : i32
    return %c0_i32, %c0_i32_0 : i32, i32
  }
  func.func @transform_2(%arg0: i32) -> (i32, i32) {
    %c0_i32 = arith.constant 0 : i32
    %c0_i32_0 = arith.constant 0 : i32
    %c0_i32_1 = arith.constant 0 : i32
    return %c0_i32, %c0_i32_0 : i32, i32
  }
  func.func @transform_3(%arg0: i32) -> (i32, i32) {
    %c0_i32 = arith.constant 0 : i32
    %c0_i32_0 = arith.constant 0 : i32
    %c0_i32_1 = arith.constant 0 : i32
    return %c0_i32, %c0_i32_0 : i32, i32
  }
  func.func @transform_4(%arg0: i32) -> (i32, i32) {
    %c0_i32 = arith.constant 0 : i32
    %c0_i32_0 = arith.constant 0 : i32
    %c0_i32_1 = arith.constant 0 : i32
    return %c0_i32, %c0_i32_0 : i32, i32
  }
  func.func @transform_5(%arg0: i32) -> (i32, i32) {
    %c0_i32 = arith.constant 0 : i32
    %c0_i32_0 = arith.constant 0 : i32
    %c0_i32_1 = arith.constant 0 : i32
    return %c0_i32, %c0_i32_0 : i32, i32
  }
  func.func @transform_6(%arg0: i32) -> (i32, i32) {
    %c0_i32 = arith.constant 0 : i32
    %c0_i32_0 = arith.constant 0 : i32
    %c0_i32_1 = arith.constant 0 : i32
    return %c0_i32, %c0_i32_0 : i32, i32
  }
  func.func @transform_7(%arg0: i32) -> (i32, i32) {
    %c0_i32 = arith.constant 0 : i32
    %c0_i32_0 = arith.constant 0 : i32
    %c0_i32_1 = arith.constant 0 : i32
    return %c0_i32, %c0_i32_0 : i32, i32
  }
  func.func @transform_8(%arg0: i32) -> (i32, i32) {
    %c0_i32 = arith.constant 0 : i32
    %c0_i32_0 = arith.constant 0 : i32
    return %arg0, %c0_i32 : i32, i32
  }
}

</mosaic_0001>

<llo_original>
// kernel: squeeze.59
$region0: #{squeeze.59}
  %s0 = inlined_call_operand.vmem [shape: bf16[16,32,32,1], index: 0, kind: input, shape index: {}]
  %s1 = inlined_call_operand.vmem [shape: bf16[16,1,1024], index: 1, kind: output, shape index: {}]
  $region1: #{squeeze.59} parent=0
    #allocation0 [shape = 'u8[524288]{0}', space=vmem, size = 0x80000, scoped, tag = 'scoped mem for output reshape']
    #allocation1 [shape = 'u8[262144]{0}', space=vmem, size = 0x40000, scoped, tag = 'scoped mem for input reshape']
    %s3 = smul.u32 4, 2
    %s4 = sshll.u32 1, %s3
    %s5 = ssub.s32 %s4, 1
    %s6 = smul.addr 4, 63
    %s7 = scalar_lea.vmem %s0, %s6
    %s8 = sshrl.u32 %s5, 1
    %s9 = sor.u32 %s5, %s8
    %s10 = sand.u32 %s9, 85
    %s11 = sshrl.u32 %s10, 1
    %s12 = sor.u32 %s10, %s11
    %s13 = sand.u32 51, %s12
    %s14 = sshrl.u32 %s13, 2
    %s15 = sor.u32 %s13, %s14
    %s16 = sand.u32 15, %s15
    %v17 = vld [vmem:[%s7] sm:%s16]
    %v18 = vunpack.c.l.bf16 %v17
    %v19 = vunpack.c.h.bf16 %v17
    %s20 = scalar_lea.vmem [#allocation1], 504
    %21 = vst [vmem:[%s20] sm:%s5] %v18
    %s22 = smul.addr 4, 62
    %s23 = scalar_lea.vmem %s0, %s22
    %s24 = sshrl.u32 %s5, 1
    %s25 = sor.u32 %s5, %s24
    %s26 = sand.u32 %s25, 85
    %s27 = sshrl.u32 %s26, 1
    %s28 = sor.u32 %s26, %s27
    %s29 = sand.u32 51, %s28
    %s30 = sshrl.u32 %s29, 2
    %s31 = sor.u32 %s29, %s30
    %s32 = sand.u32 15, %s31
    %v33 = vld [vmem:[%s23] sm:%s32]
    %v34 = vunpack.c.l.bf16 %v33
    %v35 = vunpack.c.h.bf16 %v33
    %s36 = scalar_lea.vmem [#allocation1], 496
    %37 = vst [vmem:[%s36] sm:%s5] %v34
    %s38 = smul.addr 4, 61
    %s39 = scalar_lea.vmem %s0, %s38
    %s40 = sshrl.u32 %s5, 1
    %s41 = sor.u32 %s5, %s40
    %s42 = sand.u32 %s41, 85
    %s43 = sshrl.u32 %s42, 1
    %s44 = sor.u32 %s42, %s43
    %s45 = sand.u32 51, %s44
    %s46 = sshrl.u32 %s45, 2
    %s47 = sor.u32 %s45, %s46
    %s48 = sand.u32 15, %s47
    %v49 = vld [vmem:[%s39] sm:%s48]
    %v50 = vunpack.c.l.bf16 %v49
    %v51 = vunpack.c.h.bf16 %v49
    %s52 = scalar_lea.vmem [#allocation1], 488
    %53 = vst [vmem:[%s52] sm:%s5] %v50
    %s54 = smul.addr 4, 60
    %s55 = scalar_lea.vmem %s0, %s54
    %s56 = sshrl.u32 %s5, 1
    %s57 = sor.u32 %s5, %s56
    %s58 = sand.u32 %s57, 85
    %s59 = sshrl.u32 %s58, 1
    %s60 = sor.u32 %s58, %s59
    %s61 = sand.u32 51, %s60
    %s62 = sshrl.u32 %s61, 2
    %s63 = sor.u32 %s61, %s62
    %s64 = sand.u32 15, %s63
    %v65 = vld [vmem:[%s55] sm:%s64]
    %v66 = vunpack.c.l.bf16 %v65
    %v67 = vunpack.c.h.bf16 %v65
    %s68 = scalar_lea.vmem [#allocation1], 480
    %69 = vst [vmem:[%s68] sm:%s5] %v66
    %s70 = smul.addr 4, 59
    %s71 = scalar_lea.vmem %s0, %s70
    %s72 = sshrl.u32 %s5, 1
    %s73 = sor.u32 %s5, %s72
    %s74 = sand.u32 %s73, 85
    %s75 = sshrl.u32 %s74, 1
    %s76 = sor.u32 %s74, %s75
    %s77 = sand.u32 51, %s76
    %s78 = sshrl.u32 %s77, 2
    %s79 = sor.u32 %s77, %s78
    %s80 = sand.u32 15, %s79
    %v81 = vld [vmem:[%s71] sm:%s80]
    %v82 = vunpack.c.l.bf16 %v81
    %v83 = vunpack.c.h.bf16 %v81
    %s84 = scalar_lea.vmem [#allocation1], 472
    %85 = vst [vmem:[%s84] sm:%s5] %v82
    %s86 = smul.addr 4, 58
    %s87 = scalar_lea.vmem %s0, %s86
    %s88 = sshrl.u32 %s5, 1
    %s89 = sor.u32 %s5, %s88
    %s90 = sand.u32 %s89, 85
    %s91 = sshrl.u32 %s90, 1
    %s92 = sor.u32 %s90, %s91
    %s93 = sand.u32 51, %s92
    %s94 = sshrl.u32 %s93, 2
    %s95 = sor.u32 %s93, %s94
    %s96 = sand.u32 15, %s95
    %v97 = vld [vmem:[%s87] sm:%s96]
    %v98 = vunpack.c.l.bf16 %v97
    %v99 = vunpack.c.h.bf16 %v97
    %s100 = scalar_lea.vmem [#allocation1], 464
    %101 = vst [vmem:[%s100] sm:%s5] %v98
    %s102 = smul.addr 4, 57
    %s103 = scalar_lea.vmem %s0, %s102
    %s104 = sshrl.u32 %s5, 1
    %s105 = sor.u32 %s5, %s104
    %s106 = sand.u32 %s105, 85
    %s107 = sshrl.u32 %s106, 1
    %s108 = sor.u32 %s106, %s107
    %s109 = sand.u32 51, %s108
    %s110 = sshrl.u32 %s109, 2
    %s111 = sor.u32 %s109, %s110
    %s112 = sand.u32 15, %s111
    %v113 = vld [vmem:[%s103] sm:%s112]
    %v114 = vunpack.c.l.bf16 %v113
    %v115 = vunpack.c.h.bf16 %v113
    %s116 = scalar_lea.vmem [#allocation1], 456
    %117 = vst [vmem:[%s116] sm:%s5] %v114
    %s118 = smul.addr 4, 56
    %s119 = scalar_lea.vmem %s0, %s118
    %s120 = sshrl.u32 %s5, 1
    %s121 = sor.u32 %s5, %s120
    %s122 = sand.u32 %s121, 85
    %s123 = sshrl.u32 %s122, 1
    %s124 = sor.u32 %s122, %s123
    %s125 = sand.u32 51, %s124
    %s126 = sshrl.u32 %s125, 2
    %s127 = sor.u32 %s125, %s126
    %s128 = sand.u32 15, %s127
    %v129 = vld [vmem:[%s119] sm:%s128]
    %v130 = vunpack.c.l.bf16 %v129
    %v131 = vunpack.c.h.bf16 %v129
    %s132 = scalar_lea.vmem [#allocation1], 448
    %133 = vst [vmem:[%s132] sm:%s5] %v130
    %s134 = smul.addr 4, 55
    %s135 = scalar_lea.vmem %s0, %s134
    %s136 = sshrl.u32 %s5, 1
    %s137 = sor.u32 %s5, %s136
    %s138 = sand.u32 %s137, 85
    %s139 = sshrl.u32 %s138, 1
    %s140 = sor.u32 %s138, %s139
    %s141 = sand.u32 51, %s140
    %s142 = sshrl.u32 %s141, 2
    %s143 = sor.u32 %s141, %s142
    %s144 = sand.u32 15, %s143
    %v145 = vld [vmem:[%s135] sm:%s144]
    %v146 = vunpack.c.l.bf16 %v145
    %v147 = vunpack.c.h.bf16 %v145
    %s148 = scalar_lea.vmem [#allocation1], 440
    %149 = vst [vmem:[%s148] sm:%s5] %v146
    %s150 = smul.addr 4, 54
    %s151 = scalar_lea.vmem %s0, %s150
    %s152 = sshrl.u32 %s5, 1
    %s153 = sor.u32 %s5, %s152
    %s154 = sand.u32 %s153, 85
    %s155 = sshrl.u32 %s154, 1
    %s156 = sor.u32 %s154, %s155
    %s157 = sand.u32 51, %s156
    %s158 = sshrl.u32 %s157, 2
    %s159 = sor.u32 %s157, %s158
    %s160 = sand.u32 15, %s159
    %v161 = vld [vmem:[%s151] sm:%s160]
    %v162 = vunpack.c.l.bf16 %v161
    %v163 = vunpack.c.h.bf16 %v161
    %s164 = scalar_lea.vmem [#allocation1], 432
    %165 = vst [vmem:[%s164] sm:%s5] %v162
    %s166 = smul.addr 4, 53
    %s167 = scalar_lea.vmem %s0, %s166
    %s168 = sshrl.u32 %s5, 1
    %s169 = sor.u32 %s5, %s168
    %s170 = sand.u32 %s169, 85
    %s171 = sshrl.u32 %s170, 1
    %s172 = sor.u32 %s170, %s171
    %s173 = sand.u32 51, %s172
    %s174 = sshrl.u32 %s173, 2
    %s175 = sor.u32 %s173, %s174
    %s176 = sand.u32 15, %s175
    %v177 = vld [vmem:[%s167] sm:%s176]
    %v178 = vunpack.c.l.bf16 %v177
    %v179 = vunpack.c.h.bf16 %v177
    %s180 = scalar_lea.vmem [#allocation1], 424
    %181 = vst [vmem:[%s180] sm:%s5] %v178
    %s182 = smul.addr 4, 52
    %s183 = scalar_lea.vmem %s0, %s182
    %s184 = sshrl.u32 %s5, 1
    %s185 = sor.u32 %s5, %s184
    %s186 = sand.u32 %s185, 85
    %s187 = sshrl.u32 %s186, 1
    %s188 = sor.u32 %s186, %s187
    %s189 = sand.u32 51, %s188
    %s190 = sshrl.u32 %s189, 2
    %s191 = sor.u32 %s189, %s190
    %s192 = sand.u32 15, %s191
    %v193 = vld [vmem:[%s183] sm:%s192]
    %v194 = vunpack.c.l.bf16 %v193
    %v195 = vunpack.c.h.bf16 %v193
    %s196 = scalar_lea.vmem [#allocation1], 416
    %197 = vst [vmem:[%s196] sm:%s5] %v194
    %s198 = smul.addr 4, 51
    %s199 = scalar_lea.vmem %s0, %s198
    %s200 = sshrl.u32 %s5, 1
    %s201 = sor.u32 %s5, %s200
    %s202 = sand.u32 %s201, 85
    %s203 = sshrl.u32 %s202, 1
    %s204 = sor.u32 %s202, %s203
    %s205 = sand.u32 51, %s204
    %s206 = sshrl.u32 %s205, 2
    %s207 = sor.u32 %s205, %s206
    %s208 = sand.u32 15, %s207
    %v209 = vld [vmem:[%s199] sm:%s208]
    %v210 = vunpack.c.l.bf16 %v209
    %v211 = vunpack.c.h.bf16 %v209
    %s212 = scalar_lea.vmem [#allocation1], 408
    %213 = vst [vmem:[%s212] sm:%s5] %v210
    %s214 = smul.addr 4, 50
    %s215 = scalar_lea.vmem %s0, %s214
    %s216 = sshrl.u32 %s5, 1
    %s217 = sor.u32 %s5, %s216
    %s218 = sand.u32 %s217, 85
    %s219 = sshrl.u32 %s218, 1
    %s220 = sor.u32 %s218, %s219
    %s221 = sand.u32 51, %s220
    %s222 = sshrl.u32 %s221, 2
    %s223 = sor.u32 %s221, %s222
    %s224 = sand.u32 15, %s223
    %v225 = vld [vmem:[%s215] sm:%s224]
    %v226 = vunpack.c.l.bf16 %v225
    %v227 = vunpack.c.h.bf16 %v225
    %s228 = scalar_lea.vmem [#allocation1], 400
    %229 = vst [vmem:[%s228] sm:%s5] %v226
    %s230 = smul.addr 4, 49
    %s231 = scalar_lea.vmem %s0, %s230
    %s232 = sshrl.u32 %s5, 1
    %s233 = sor.u32 %s5, %s232
    %s234 = sand.u32 %s233, 85
    %s235 = sshrl.u32 %s234, 1
    %s236 = sor.u32 %s234, %s235
    %s237 = sand.u32 51, %s236
    %s238 = sshrl.u32 %s237, 2
    %s239 = sor.u32 %s237, %s238
    %s240 = sand.u32 15, %s239
    %v241 = vld [vmem:[%s231] sm:%s240]
    %v242 = vunpack.c.l.bf16 %v241
    %v243 = vunpack.c.h.bf16 %v241
    %s244 = scalar_lea.vmem [#allocation1], 392
    %245 = vst [vmem:[%s244] sm:%s5] %v242
    %s246 = smul.addr 4, 48
    %s247 = scalar_lea.vmem %s0, %s246
    %s248 = sshrl.u32 %s5, 1
    %s249 = sor.u32 %s5, %s248
    %s250 = sand.u32 %s249, 85
    %s251 = sshrl.u32 %s250, 1
    %s252 = sor.u32 %s250, %s251
    %s253 = sand.u32 51, %s252
    %s254 = sshrl.u32 %s253, 2
    %s255 = sor.u32 %s253, %s254
    %s256 = sand.u32 15, %s255
    %v257 = vld [vmem:[%s247] sm:%s256]
    %v258 = vunpack.c.l.bf16 %v257
    %v259 = vunpack.c.h.bf16 %v257
    %s260 = scalar_lea.vmem [#allocation1], 384
    %261 = vst [vmem:[%s260] sm:%s5] %v258
    %s262 = smul.addr 4, 47
    %s263 = scalar_lea.vmem %s0, %s262
    %s264 = sshrl.u32 %s5, 1
    %s265 = sor.u32 %s5, %s264
    %s266 = sand.u32 %s265, 85
    %s267 = sshrl.u32 %s266, 1
    %s268 = sor.u32 %s266, %s267
    %s269 = sand.u32 51, %s268
    %s270 = sshrl.u32 %s269, 2
    %s271 = sor.u32 %s269, %s270
    %s272 = sand.u32 15, %s271
    %v273 = vld [vmem:[%s263] sm:%s272]
    %v274 = vunpack.c.l.bf16 %v273
    %v275 = vunpack.c.h.bf16 %v273
    %s276 = scalar_lea.vmem [#allocation1], 376
    %277 = vst [vmem:[%s276] sm:%s5] %v274
    %s278 = smul.addr 4, 46
    %s279 = scalar_lea.vmem %s0, %s278
    %s280 = sshrl.u32 %s5, 1
    %s281 = sor.u32 %s5, %s280
    %s282 = sand.u32 %s281, 85
    %s283 = sshrl.u32 %s282, 1
    %s284 = sor.u32 %s282, %s283
    %s285 = sand.u32 51, %s284
    %s286 = sshrl.u32 %s285, 2
    %s287 = sor.u32 %s285, %s286
    %s288 = sand.u32 15, %s287
    %v289 = vld [vmem:[%s279] sm:%s288]
    %v290 = vunpack.c.l.bf16 %v289
    %v291 = vunpack.c.h.bf16 %v289
    %s292 = scalar_lea.vmem [#allocation1], 368
    %293 = vst [vmem:[%s292] sm:%s5] %v290
    %s294 = smul.addr 4, 45
    %s295 = scalar_lea.vmem %s0, %s294
    %s296 = sshrl.u32 %s5, 1
    %s297 = sor.u32 %s5, %s296
    %s298 = sand.u32 %s297, 85
    %s299 = sshrl.u32 %s298, 1
    %s300 = sor.u32 %s298, %s299
    %s301 = sand.u32 51, %s300
    %s302 = sshrl.u32 %s301, 2
    %s303 = sor.u32 %s301, %s302
    %s304 = sand.u32 15, %s303
    %v305 = vld [vmem:[%s295] sm:%s304]
    %v306 = vunpack.c.l.bf16 %v305
    %v307 = vunpack.c.h.bf16 %v305
    %s308 = scalar_lea.vmem [#allocation1], 360
    %309 = vst [vmem:[%s308] sm:%s5] %v306
    %s310 = smul.addr 4, 44
    %s311 = scalar_lea.vmem %s0, %s310
    %s312 = sshrl.u32 %s5, 1
    %s313 = sor.u32 %s5, %s312
    %s314 = sand.u32 %s313, 85
    %s315 = sshrl.u32 %s314, 1
    %s316 = sor.u32 %s314, %s315
    %s317 = sand.u32 51, %s316
    %s318 = sshrl.u32 %s317, 2
    %s319 = sor.u32 %s317, %s318
    %s320 = sand.u32 15, %s319
    %v321 = vld [vmem:[%s311] sm:%s320]
    %v322 = vunpack.c.l.bf16 %v321
    %v323 = vunpack.c.h.bf16 %v321
    %s324 = scalar_lea.vmem [#allocation1], 352
    %325 = vst [vmem:[%s324] sm:%s5] %v322
    %s326 = smul.addr 4, 43
    %s327 = scalar_lea.vmem %s0, %s326
    %s328 = sshrl.u32 %s5, 1
    %s329 = sor.u32 %s5, %s328
    %s330 = sand.u32 %s329, 85
    %s331 = sshrl.u32 %s330, 1
    %s332 = sor.u32 %s330, %s331
    %s333 = sand.u32 51, %s332
    %s334 = sshrl.u32 %s333, 2
    %s335 = sor.u32 %s333, %s334
    %s336 = sand.u32 15, %s335
    %v337 = vld [vmem:[%s327] sm:%s336]
    %v338 = vunpack.c.l.bf16 %v337
    %v339 = vunpack.c.h.bf16 %v337
    %s340 = scalar_lea.vmem [#allocation1], 344
    %341 = vst [vmem:[%s340] sm:%s5] %v338
    %s342 = smul.addr 4, 42
    %s343 = scalar_lea.vmem %s0, %s342
    %s344 = sshrl.u32 %s5, 1
    %s345 = sor.u32 %s5, %s344
    %s346 = sand.u32 %s345, 85
    %s347 = sshrl.u32 %s346, 1
    %s348 = sor.u32 %s346, %s347
    %s349 = sand.u32 51, %s348
    %s350 = sshrl.u32 %s349, 2
    %s351 = sor.u32 %s349, %s350
    %s352 = sand.u32 15, %s351
    %v353 = vld [vmem:[%s343] sm:%s352]
    %v354 = vunpack.c.l.bf16 %v353
    %v355 = vunpack.c.h.bf16 %v353
    %s356 = scalar_lea.vmem [#allocation1], 336
    %357 = vst [vmem:[%s356] sm:%s5] %v354
    %s358 = smul.addr 4, 41
    %s359 = scalar_lea.vmem %s0, %s358
    %s360 = sshrl.u32 %s5, 1
    %s361 = sor.u32 %s5, %s360
    %s362 = sand.u32 %s361, 85
    %s363 = sshrl.u32 %s362, 1
    %s364 = sor.u32 %s362, %s363
    %s365 = sand.u32 51, %s364
    %s366 = sshrl.u32 %s365, 2
    %s367 = sor.u32 %s365, %s366
    %s368 = sand.u32 15, %s367
    %v369 = vld [vmem:[%s359] sm:%s368]
    %v370 = vunpack.c.l.bf16 %v369
    %v371 = vunpack.c.h.bf16 %v369
    %s372 = scalar_lea.vmem [#allocation1], 328
    %373 = vst [vmem:[%s372] sm:%s5] %v370
    %s374 = smul.addr 4, 40
    %s375 = scalar_lea.vmem %s0, %s374
    %s376 = sshrl.u32 %s5, 1
    %s377 = sor.u32 %s5, %s376
    %s378 = sand.u32 %s377, 85
    %s379 = sshrl.u32 %s378, 1
    %s380 = sor.u32 %s378, %s379
    %s381 = sand.u32 51, %s380
    %s382 = sshrl.u32 %s381, 2
    %s383 = sor.u32 %s381, %s382
    %s384 = sand.u32 15, %s383
    %v385 = vld [vmem:[%s375] sm:%s384]
    %v386 = vunpack.c.l.bf16 %v385
    %v387 = vunpack.c.h.bf16 %v385
    %s388 = scalar_lea.vmem [#allocation1], 320
    %389 = vst [vmem:[%s388] sm:%s5] %v386
    %s390 = smul.addr 4, 39
    %s391 = scalar_lea.vmem %s0, %s390
    %s392 = sshrl.u32 %s5, 1
    %s393 = sor.u32 %s5, %s392
    %s394 = sand.u32 %s393, 85
    %s395 = sshrl.u32 %s394, 1
    %s396 = sor.u32 %s394, %s395
    %s397 = sand.u32 51, %s396
    %s398 = sshrl.u32 %s397, 2
    %s399 = sor.u32 %s397, %s398
    %s400 = sand.u32 15, %s399
    %v401 = vld [vmem:[%s391] sm:%s400]
    %v402 = vunpack.c.l.bf16 %v401
    %v403 = vunpack.c.h.bf16 %v401
    %s404 = scalar_lea.vmem [#allocation1], 312
    %405 = vst [vmem:[%s404] sm:%s5] %v402
    %s406 = smul.addr 4, 38
    %s407 = scalar_lea.vmem %s0, %s406
    %s408 = sshrl.u32 %s5, 1
    %s409 = sor.u32 %s5, %s408
    %s410 = sand.u32 %s409, 85
    %s411 = sshrl.u32 %s410, 1
    %s412 = sor.u32 %s410, %s411
    %s413 = sand.u32 51, %s412
    %s414 = sshrl.u32 %s413, 2
    %s415 = sor.u32 %s413, %s414
    %s416 = sand.u32 15, %s415
    %v417 = vld [vmem:[%s407] sm:%s416]
    %v418 = vunpack.c.l.bf16 %v417
    %v419 = vunpack.c.h.bf16 %v417
    %s420 = scalar_lea.vmem [#allocation1], 304
    %421 = vst [vmem:[%s420] sm:%s5] %v418
    %s422 = smul.addr 4, 37
    %s423 = scalar_lea.vmem %s0, %s422
    %s424 = sshrl.u32 %s5, 1
    %s425 = sor.u32 %s5, %s424
    %s426 = sand.u32 %s425, 85
    %s427 = sshrl.u32 %s426, 1
    %s428 = sor.u32 %s426, %s427
    %s429 = sand.u32 51, %s428
    %s430 = sshrl.u32 %s429, 2
    %s431 = sor.u32 %s429, %s430
    %s432 = sand.u32 15, %s431
    %v433 = vld [vmem:[%s423] sm:%s432]
    %v434 = vunpack.c.l.bf16 %v433
    %v435 = vunpack.c.h.bf16 %v433
    %s436 = scalar_lea.vmem [#allocation1], 296
    %437 = vst [vmem:[%s436] sm:%s5] %v434
    %s438 = smul.addr 4, 36
    %s439 = scalar_lea.vmem %s0, %s438
    %s440 = sshrl.u32 %s5, 1
    %s441 = sor.u32 %s5, %s440
    %s442 = sand.u32 %s441, 85
    %s443 = sshrl.u32 %s442, 1
    %s444 = sor.u32 %s442, %s443
    %s445 = sand.u32 51, %s444
    %s446 = sshrl.u32 %s445, 2
    %s447 = sor.u32 %s445, %s446
    %s448 = sand.u32 15, %s447
    %v449 = vld [vmem:[%s439] sm:%s448]
    %v450 = vunpack.c.l.bf16 %v449
    %v451 = vunpack.c.h.bf16 %v449
    %s452 = scalar_lea.vmem [#allocation1], 288
    %453 = vst [vmem:[%s452] sm:%s5] %v450
    %s454 = smul.addr 4, 35
    %s455 = scalar_lea.vmem %s0, %s454
    %s456 = sshrl.u32 %s5, 1
    %s457 = sor.u32 %s5, %s456
    %s458 = sand.u32 %s457, 85
    %s459 = sshrl.u32 %s458, 1
    %s460 = sor.u32 %s458, %s459
    %s461 = sand.u32 51, %s460
    %s462 = sshrl.u32 %s461, 2
    %s463 = sor.u32 %s461, %s462
    %s464 = sand.u32 15, %s463
    %v465 = vld [vmem:[%s455] sm:%s464]
    %v466 = vunpack.c.l.bf16 %v465
    %v467 = vunpack.c.h.bf16 %v465
    %s468 = scalar_lea.vmem [#allocation1], 280
    %469 = vst [vmem:[%s468] sm:%s5] %v466
    %s470 = smul.addr 4, 34
    %s471 = scalar_lea.vmem %s0, %s470
    %s472 = sshrl.u32 %s5, 1
    %s473 = sor.u32 %s5, %s472
    %s474 = sand.u32 %s473, 85
    %s475 = sshrl.u32 %s474, 1
    %s476 = sor.u32 %s474, %s475
    %s477 = sand.u32 51, %s476
    %s478 = sshrl.u32 %s477, 2
    %s479 = sor.u32 %s477, %s478
    %s480 = sand.u32 15, %s479
    %v481 = vld [vmem:[%s471] sm:%s480]
    %v482 = vunpack.c.l.bf16 %v481
    %v483 = vunpack.c.h.bf16 %v481
    %s484 = scalar_lea.vmem [#allocation1], 272
    %485 = vst [vmem:[%s484] sm:%s5] %v482
    %s486 = smul.addr 4, 33
    %s487 = scalar_lea.vmem %s0, %s486
    %s488 = sshrl.u32 %s5, 1
    %s489 = sor.u32 %s5, %s488
    %s490 = sand.u32 %s489, 85
    %s491 = sshrl.u32 %s490, 1
    %s492 = sor.u32 %s490, %s491
    %s493 = sand.u32 51, %s492
    %s494 = sshrl.u32 %s493, 2
    %s495 = sor.u32 %s493, %s494
    %s496 = sand.u32 15, %s495
    %v497 = vld [vmem:[%s487] sm:%s496]
    %v498 = vunpack.c.l.bf16 %v497
    %v499 = vunpack.c.h.bf16 %v497
    %s500 = scalar_lea.vmem [#allocation1], 264
    %501 = vst [vmem:[%s500] sm:%s5] %v498
    %s502 = smul.addr 4, 32
    %s503 = scalar_lea.vmem %s0, %s502
    %s504 = sshrl.u32 %s5, 1
    %s505 = sor.u32 %s5, %s504
    %s506 = sand.u32 %s505, 85
    %s507 = sshrl.u32 %s506, 1
    %s508 = sor.u32 %s506, %s507
    %s509 = sand.u32 51, %s508
    %s510 = sshrl.u32 %s509, 2
    %s511 = sor.u32 %s509, %s510
    %s512 = sand.u32 15, %s511
    %v513 = vld [vmem:[%s503] sm:%s512]
    %v514 = vunpack.c.l.bf16 %v513
    %v515 = vunpack.c.h.bf16 %v513
    %s516 = scalar_lea.vmem [#allocation1], 256
    %517 = vst [vmem:[%s516] sm:%s5] %v514
    %s518 = smul.addr 4, 31
    %s519 = scalar_lea.vmem %s0, %s518
    %s520 = sshrl.u32 %s5, 1
    %s521 = sor.u32 %s5, %s520
    %s522 = sand.u32 %s521, 85
    %s523 = sshrl.u32 %s522, 1
    %s524 = sor.u32 %s522, %s523
    %s525 = sand.u32 51, %s524
    %s526 = sshrl.u32 %s525, 2
    %s527 = sor.u32 %s525, %s526
    %s528 = sand.u32 15, %s527
    %v529 = vld [vmem:[%s519] sm:%s528]
    %v530 = vunpack.c.l.bf16 %v529
    %v531 = vunpack.c.h.bf16 %v529
    %s532 = scalar_lea.vmem [#allocation1], 248
    %533 = vst [vmem:[%s532] sm:%s5] %v530
    %s534 = smul.addr 4, 30
    %s535 = scalar_lea.vmem %s0, %s534
    %s536 = sshrl.u32 %s5, 1
    %s537 = sor.u32 %s5, %s536
    %s538 = sand.u32 %s537, 85
    %s539 = sshrl.u32 %s538, 1
    %s540 = sor.u32 %s538, %s539
    %s541 = sand.u32 51, %s540
    %s542 = sshrl.u32 %s541, 2
    %s543 = sor.u32 %s541, %s542
    %s544 = sand.u32 15, %s543
    %v545 = vld [vmem:[%s535] sm:%s544]
    %v546 = vunpack.c.l.bf16 %v545
    %v547 = vunpack.c.h.bf16 %v545
    %s548 = scalar_lea.vmem [#allocation1], 240
    %549 = vst [vmem:[%s548] sm:%s5] %v546
    %s550 = smul.addr 4, 29
    %s551 = scalar_lea.vmem %s0, %s550
    %s552 = sshrl.u32 %s5, 1
    %s553 = sor.u32 %s5, %s552
    %s554 = sand.u32 %s553, 85
    %s555 = sshrl.u32 %s554, 1
    %s556 = sor.u32 %s554, %s555
    %s557 = sand.u32 51, %s556
    %s558 = sshrl.u32 %s557, 2
    %s559 = sor.u32 %s557, %s558
    %s560 = sand.u32 15, %s559
    %v561 = vld [vmem:[%s551] sm:%s560]
    %v562 = vunpack.c.l.bf16 %v561
    %v563 = vunpack.c.h.bf16 %v561
    %s564 = scalar_lea.vmem [#allocation1], 232
    %565 = vst [vmem:[%s564] sm:%s5] %v562
    %s566 = smul.addr 4, 28
    %s567 = scalar_lea.vmem %s0, %s566
    %s568 = sshrl.u32 %s5, 1
    %s569 = sor.u32 %s5, %s568
    %s570 = sand.u32 %s569, 85
    %s571 = sshrl.u32 %s570, 1
    %s572 = sor.u32 %s570, %s571
    %s573 = sand.u32 51, %s572
    %s574 = sshrl.u32 %s573, 2
    %s575 = sor.u32 %s573, %s574
    %s576 = sand.u32 15, %s575
    %v577 = vld [vmem:[%s567] sm:%s576]
    %v578 = vunpack.c.l.bf16 %v577
    %v579 = vunpack.c.h.bf16 %v577
    %s580 = scalar_lea.vmem [#allocation1], 224
    %581 = vst [vmem:[%s580] sm:%s5] %v578
    %s582 = smul.addr 4, 27
    %s583 = scalar_lea.vmem %s0, %s582
    %s584 = sshrl.u32 %s5, 1
    %s585 = sor.u32 %s5, %s584
    %s586 = sand.u32 %s585, 85
    %s587 = sshrl.u32 %s586, 1
    %s588 = sor.u32 %s586, %s587
    %s589 = sand.u32 51, %s588
    %s590 = sshrl.u32 %s589, 2
    %s591 = sor.u32 %s589, %s590
    %s592 = sand.u32 15, %s591
    %v593 = vld [vmem:[%s583] sm:%s592]
    %v594 = vunpack.c.l.bf16 %v593
    %v595 = vunpack.c.h.bf16 %v593
    %s596 = scalar_lea.vmem [#allocation1], 216
    %597 = vst [vmem:[%s596] sm:%s5] %v594
    %s598 = smul.addr 4, 26
    %s599 = scalar_lea.vmem %s0, %s598
    %s600 = sshrl.u32 %s5, 1
    %s601 = sor.u32 %s5, %s600
    %s602 = sand.u32 %s601, 85
    %s603 = sshrl.u32 %s602, 1
    %s604 = sor.u32 %s602, %s603
    %s605 = sand.u32 51, %s604
    %s606 = sshrl.u32 %s605, 2
    %s607 = sor.u32 %s605, %s606
    %s608 = sand.u32 15, %s607
    %v609 = vld [vmem:[%s599] sm:%s608]
    %v610 = vunpack.c.l.bf16 %v609
    %v611 = vunpack.c.h.bf16 %v609
    %s612 = scalar_lea.vmem [#allocation1], 208
    %613 = vst [vmem:[%s612] sm:%s5] %v610
    %s614 = smul.addr 4, 25
    %s615 = scalar_lea.vmem %s0, %s614
    %s616 = sshrl.u32 %s5, 1
    %s617 = sor.u32 %s5, %s616
    %s618 = sand.u32 %s617, 85
    %s619 = sshrl.u32 %s618, 1
    %s620 = sor.u32 %s618, %s619
    %s621 = sand.u32 51, %s620
    %s622 = sshrl.u32 %s621, 2
    %s623 = sor.u32 %s621, %s622
    %s624 = sand.u32 15, %s623
    %v625 = vld [vmem:[%s615] sm:%s624]
    %v626 = vunpack.c.l.bf16 %v625
    %v627 = vunpack.c.h.bf16 %v625
    %s628 = scalar_lea.vmem [#allocation1], 200
    %629 = vst [vmem:[%s628] sm:%s5] %v626
    %s630 = smul.addr 4, 24
    %s631 = scalar_lea.vmem %s0, %s630
    %s632 = sshrl.u32 %s5, 1
    %s633 = sor.u32 %s5, %s632
    %s634 = sand.u32 %s633, 85
    %s635 = sshrl.u32 %s634, 1
    %s636 = sor.u32 %s634, %s635
    %s637 = sand.u32 51, %s636
    %s638 = sshrl.u32 %s637, 2
    %s639 = sor.u32 %s637, %s638
    %s640 = sand.u32 15, %s639
    %v641 = vld [vmem:[%s631] sm:%s640]
    %v642 = vunpack.c.l.bf16 %v641
    %v643 = vunpack.c.h.bf16 %v641
    %s644 = scalar_lea.vmem [#allocation1], 192
    %645 = vst [vmem:[%s644] sm:%s5] %v642
    %s646 = smul.addr 4, 23
    %s647 = scalar_lea.vmem %s0, %s646
    %s648 = sshrl.u32 %s5, 1
    %s649 = sor.u32 %s5, %s648
    %s650 = sand.u32 %s649, 85
    %s651 = sshrl.u32 %s650, 1
    %s652 = sor.u32 %s650, %s651
    %s653 = sand.u32 51, %s652
    %s654 = sshrl.u32 %s653, 2
    %s655 = sor.u32 %s653, %s654
    %s656 = sand.u32 15, %s655
    %v657 = vld [vmem:[%s647] sm:%s656]
    %v658 = vunpack.c.l.bf16 %v657
    %v659 = vunpack.c.h.bf16 %v657
    %s660 = scalar_lea.vmem [#allocation1], 184
    %661 = vst [vmem:[%s660] sm:%s5] %v658
    %s662 = smul.addr 4, 22
    %s663 = scalar_lea.vmem %s0, %s662
    %s664 = sshrl.u32 %s5, 1
    %s665 = sor.u32 %s5, %s664
    %s666 = sand.u32 %s665, 85
    %s667 = sshrl.u32 %s666, 1
    %s668 = sor.u32 %s666, %s667
    %s669 = sand.u32 51, %s668
    %s670 = sshrl.u32 %s669, 2
    %s671 = sor.u32 %s669, %s670
    %s672 = sand.u32 15, %s671
    %v673 = vld [vmem:[%s663] sm:%s672]
    %v674 = vunpack.c.l.bf16 %v673
    %v675 = vunpack.c.h.bf16 %v673
    %s676 = scalar_lea.vmem [#allocation1], 176
    %677 = vst [vmem:[%s676] sm:%s5] %v674
    %s678 = smul.addr 4, 21
    %s679 = scalar_lea.vmem %s0, %s678
    %s680 = sshrl.u32 %s5, 1
    %s681 = sor.u32 %s5, %s680
    %s682 = sand.u32 %s681, 85
    %s683 = sshrl.u32 %s682, 1
    %s684 = sor.u32 %s682, %s683
    %s685 = sand.u32 51, %s684
    %s686 = sshrl.u32 %s685, 2
    %s687 = sor.u32 %s685, %s686
    %s688 = sand.u32 15, %s687
    %v689 = vld [vmem:[%s679] sm:%s688]
    %v690 = vunpack.c.l.bf16 %v689
    %v691 = vunpack.c.h.bf16 %v689
    %s692 = scalar_lea.vmem [#allocation1], 168
    %693 = vst [vmem:[%s692] sm:%s5] %v690
    %s694 = smul.addr 4, 20
    %s695 = scalar_lea.vmem %s0, %s694
    %s696 = sshrl.u32 %s5, 1
    %s697 = sor.u32 %s5, %s696
    %s698 = sand.u32 %s697, 85
    %s699 = sshrl.u32 %s698, 1
    %s700 = sor.u32 %s698, %s699
    %s701 = sand.u32 51, %s700
    %s702 = sshrl.u32 %s701, 2
    %s703 = sor.u32 %s701, %s702
    %s704 = sand.u32 15, %s703
    %v705 = vld [vmem:[%s695] sm:%s704]
    %v706 = vunpack.c.l.bf16 %v705
    %v707 = vunpack.c.h.bf16 %v705
    %s708 = scalar_lea.vmem [#allocation1], 160
    %709 = vst [vmem:[%s708] sm:%s5] %v706
    %s710 = smul.addr 4, 19
    %s711 = scalar_lea.vmem %s0, %s710
    %s712 = sshrl.u32 %s5, 1
    %s713 = sor.u32 %s5, %s712
    %s714 = sand.u32 %s713, 85
    %s715 = sshrl.u32 %s714, 1
    %s716 = sor.u32 %s714, %s715
    %s717 = sand.u32 51, %s716
    %s718 = sshrl.u32 %s717, 2
    %s719 = sor.u32 %s717, %s718
    %s720 = sand.u32 15, %s719
    %v721 = vld [vmem:[%s711] sm:%s720]
    %v722 = vunpack.c.l.bf16 %v721
    %v723 = vunpack.c.h.bf16 %v721
    %s724 = scalar_lea.vmem [#allocation1], 152
    %725 = vst [vmem:[%s724] sm:%s5] %v722
    %s726 = smul.addr 4, 18
    %s727 = scalar_lea.vmem %s0, %s726
    %s728 = sshrl.u32 %s5, 1
    %s729 = sor.u32 %s5, %s728
    %s730 = sand.u32 %s729, 85
    %s731 = sshrl.u32 %s730, 1
    %s732 = sor.u32 %s730, %s731
    %s733 = sand.u32 51, %s732
    %s734 = sshrl.u32 %s733, 2
    %s735 = sor.u32 %s733, %s734
    %s736 = sand.u32 15, %s735
    %v737 = vld [vmem:[%s727] sm:%s736]
    %v738 = vunpack.c.l.bf16 %v737
    %v739 = vunpack.c.h.bf16 %v737
    %s740 = scalar_lea.vmem [#allocation1], 144
    %741 = vst [vmem:[%s740] sm:%s5] %v738
    %s742 = smul.addr 4, 17
    %s743 = scalar_lea.vmem %s0, %s742
    %s744 = sshrl.u32 %s5, 1
    %s745 = sor.u32 %s5, %s744
    %s746 = sand.u32 %s745, 85
    %s747 = sshrl.u32 %s746, 1
    %s748 = sor.u32 %s746, %s747
    %s749 = sand.u32 51, %s748
    %s750 = sshrl.u32 %s749, 2
    %s751 = sor.u32 %s749, %s750
    %s752 = sand.u32 15, %s751
    %v753 = vld [vmem:[%s743] sm:%s752]
    %v754 = vunpack.c.l.bf16 %v753
    %v755 = vunpack.c.h.bf16 %v753
    %s756 = scalar_lea.vmem [#allocation1], 136
    %757 = vst [vmem:[%s756] sm:%s5] %v754
    %s758 = smul.addr 4, 16
    %s759 = scalar_lea.vmem %s0, %s758
    %s760 = sshrl.u32 %s5, 1
    %s761 = sor.u32 %s5, %s760
    %s762 = sand.u32 %s761, 85
    %s763 = sshrl.u32 %s762, 1
    %s764 = sor.u32 %s762, %s763
    %s765 = sand.u32 51, %s764
    %s766 = sshrl.u32 %s765, 2
    %s767 = sor.u32 %s765, %s766
    %s768 = sand.u32 15, %s767
    %v769 = vld [vmem:[%s759] sm:%s768]
    %v770 = vunpack.c.l.bf16 %v769
    %v771 = vunpack.c.h.bf16 %v769
    %s772 = scalar_lea.vmem [#allocation1], 128
    %773 = vst [vmem:[%s772] sm:%s5] %v770
    %s774 = smul.addr 4, 15
    %s775 = scalar_lea.vmem %s0, %s774
    %s776 = sshrl.u32 %s5, 1
    %s777 = sor.u32 %s5, %s776
    %s778 = sand.u32 %s777, 85
    %s779 = sshrl.u32 %s778, 1
    %s780 = sor.u32 %s778, %s779
    %s781 = sand.u32 51, %s780
    %s782 = sshrl.u32 %s781, 2
    %s783 = sor.u32 %s781, %s782
    %s784 = sand.u32 15, %s783
    %v785 = vld [vmem:[%s775] sm:%s784]
    %v786 = vunpack.c.l.bf16 %v785
    %v787 = vunpack.c.h.bf16 %v785
    %s788 = scalar_lea.vmem [#allocation1], 120
    %789 = vst [vmem:[%s788] sm:%s5] %v786
    %s790 = smul.addr 4, 14
    %s791 = scalar_lea.vmem %s0, %s790
    %s792 = sshrl.u32 %s5, 1
    %s793 = sor.u32 %s5, %s792
    %s794 = sand.u32 %s793, 85
    %s795 = sshrl.u32 %s794, 1
    %s796 = sor.u32 %s794, %s795
    %s797 = sand.u32 51, %s796
    %s798 = sshrl.u32 %s797, 2
    %s799 = sor.u32 %s797, %s798
    %s800 = sand.u32 15, %s799
    %v801 = vld [vmem:[%s791] sm:%s800]
    %v802 = vunpack.c.l.bf16 %v801
    %v803 = vunpack.c.h.bf16 %v801
    %s804 = scalar_lea.vmem [#allocation1], 112
    %805 = vst [vmem:[%s804] sm:%s5] %v802
    %s806 = smul.addr 4, 13
    %s807 = scalar_lea.vmem %s0, %s806
    %s808 = sshrl.u32 %s5, 1
    %s809 = sor.u32 %s5, %s808
    %s810 = sand.u32 %s809, 85
    %s811 = sshrl.u32 %s810, 1
    %s812 = sor.u32 %s810, %s811
    %s813 = sand.u32 51, %s812
    %s814 = sshrl.u32 %s813, 2
    %s815 = sor.u32 %s813, %s814
    %s816 = sand.u32 15, %s815
    %v817 = vld [vmem:[%s807] sm:%s816]
    %v818 = vunpack.c.l.bf16 %v817
    %v819 = vunpack.c.h.bf16 %v817
    %s820 = scalar_lea.vmem [#allocation1], 104
    %821 = vst [vmem:[%s820] sm:%s5] %v818
    %s822 = smul.addr 4, 12
    %s823 = scalar_lea.vmem %s0, %s822
    %s824 = sshrl.u32 %s5, 1
    %s825 = sor.u32 %s5, %s824
    %s826 = sand.u32 %s825, 85
    %s827 = sshrl.u32 %s826, 1
    %s828 = sor.u32 %s826, %s827
    %s829 = sand.u32 51, %s828
    %s830 = sshrl.u32 %s829, 2
    %s831 = sor.u32 %s829, %s830
    %s832 = sand.u32 15, %s831
    %v833 = vld [vmem:[%s823] sm:%s832]
    %v834 = vunpack.c.l.bf16 %v833
    %v835 = vunpack.c.h.bf16 %v833
    %s836 = scalar_lea.vmem [#allocation1], 96
    %837 = vst [vmem:[%s836] sm:%s5] %v834
    %s838 = smul.addr 4, 11
    %s839 = scalar_lea.vmem %s0, %s838
    %s840 = sshrl.u32 %s5, 1
    %s841 = sor.u32 %s5, %s840
    %s842 = sand.u32 %s841, 85
    %s843 = sshrl.u32 %s842, 1
    %s844 = sor.u32 %s842, %s843
    %s845 = sand.u32 51, %s844
    %s846 = sshrl.u32 %s845, 2
    %s847 = sor.u32 %s845, %s846
    %s848 = sand.u32 15, %s847
    %v849 = vld [vmem:[%s839] sm:%s848]
    %v850 = vunpack.c.l.bf16 %v849
    %v851 = vunpack.c.h.bf16 %v849
    %s852 = scalar_lea.vmem [#allocation1], 88
    %853 = vst [vmem:[%s852] sm:%s5] %v850
    %s854 = smul.addr 4, 10
    %s855 = scalar_lea.vmem %s0, %s854
    %s856 = sshrl.u32 %s5, 1
    %s857 = sor.u32 %s5, %s856
    %s858 = sand.u32 %s857, 85
    %s859 = sshrl.u32 %s858, 1
    %s860 = sor.u32 %s858, %s859
    %s861 = sand.u32 51, %s860
    %s862 = sshrl.u32 %s861, 2
    %s863 = sor.u32 %s861, %s862
    %s864 = sand.u32 15, %s863
    %v865 = vld [vmem:[%s855] sm:%s864]
    %v866 = vunpack.c.l.bf16 %v865
    %v867 = vunpack.c.h.bf16 %v865
    %s868 = scalar_lea.vmem [#allocation1], 80
    %869 = vst [vmem:[%s868] sm:%s5] %v866
    %s870 = smul.addr 4, 9
    %s871 = scalar_lea.vmem %s0, %s870
    %s872 = sshrl.u32 %s5, 1
    %s873 = sor.u32 %s5, %s872
    %s874 = sand.u32 %s873, 85
    %s875 = sshrl.u32 %s874, 1
    %s876 = sor.u32 %s874, %s875
    %s877 = sand.u32 51, %s876
    %s878 = sshrl.u32 %s877, 2
    %s879 = sor.u32 %s877, %s878
    %s880 = sand.u32 15, %s879
    %v881 = vld [vmem:[%s871] sm:%s880]
    %v882 = vunpack.c.l.bf16 %v881
    %v883 = vunpack.c.h.bf16 %v881
    %s884 = scalar_lea.vmem [#allocation1], 72
    %885 = vst [vmem:[%s884] sm:%s5] %v882
    %s886 = smul.addr 4, 8
    %s887 = scalar_lea.vmem %s0, %s886
    %s888 = sshrl.u32 %s5, 1
    %s889 = sor.u32 %s5, %s888
    %s890 = sand.u32 %s889, 85
    %s891 = sshrl.u32 %s890, 1
    %s892 = sor.u32 %s890, %s891
    %s893 = sand.u32 51, %s892
    %s894 = sshrl.u32 %s893, 2
    %s895 = sor.u32 %s893, %s894
    %s896 = sand.u32 15, %s895
    %v897 = vld [vmem:[%s887] sm:%s896]
    %v898 = vunpack.c.l.bf16 %v897
    %v899 = vunpack.c.h.bf16 %v897
    %s900 = scalar_lea.vmem [#allocation1], 64
    %901 = vst [vmem:[%s900] sm:%s5] %v898
    %s902 = smul.addr 4, 7
    %s903 = scalar_lea.vmem %s0, %s902
    %s904 = sshrl.u32 %s5, 1
    %s905 = sor.u32 %s5, %s904
    %s906 = sand.u32 %s905, 85
    %s907 = sshrl.u32 %s906, 1
    %s908 = sor.u32 %s906, %s907
    %s909 = sand.u32 51, %s908
    %s910 = sshrl.u32 %s909, 2
    %s911 = sor.u32 %s909, %s910
    %s912 = sand.u32 15, %s911
    %v913 = vld [vmem:[%s903] sm:%s912]
    %v914 = vunpack.c.l.bf16 %v913
    %v915 = vunpack.c.h.bf16 %v913
    %s916 = scalar_lea.vmem [#allocation1], 56
    %917 = vst [vmem:[%s916] sm:%s5] %v914
    %s918 = smul.addr 4, 6
    %s919 = scalar_lea.vmem %s0, %s918
    %s920 = sshrl.u32 %s5, 1
    %s921 = sor.u32 %s5, %s920
    %s922 = sand.u32 %s921, 85
    %s923 = sshrl.u32 %s922, 1
    %s924 = sor.u32 %s922, %s923
    %s925 = sand.u32 51, %s924
    %s926 = sshrl.u32 %s925, 2
    %s927 = sor.u32 %s925, %s926
    %s928 = sand.u32 15, %s927
    %v929 = vld [vmem:[%s919] sm:%s928]
    %v930 = vunpack.c.l.bf16 %v929
    %v931 = vunpack.c.h.bf16 %v929
    %s932 = scalar_lea.vmem [#allocation1], 48
    %933 = vst [vmem:[%s932] sm:%s5] %v930
    %s934 = smul.addr 4, 5
    %s935 = scalar_lea.vmem %s0, %s934
    %s936 = sshrl.u32 %s5, 1
    %s937 = sor.u32 %s5, %s936
    %s938 = sand.u32 %s937, 85
    %s939 = sshrl.u32 %s938, 1
    %s940 = sor.u32 %s938, %s939
    %s941 = sand.u32 51, %s940
    %s942 = sshrl.u32 %s941, 2
    %s943 = sor.u32 %s941, %s942
    %s944 = sand.u32 15, %s943
    %v945 = vld [vmem:[%s935] sm:%s944]
    %v946 = vunpack.c.l.bf16 %v945
    %v947 = vunpack.c.h.bf16 %v945
    %s948 = scalar_lea.vmem [#allocation1], 40
    %949 = vst [vmem:[%s948] sm:%s5] %v946
    %s950 = smul.addr 4, 4
    %s951 = scalar_lea.vmem %s0, %s950
    %s952 = sshrl.u32 %s5, 1
    %s953 = sor.u32 %s5, %s952
    %s954 = sand.u32 %s953, 85
    %s955 = sshrl.u32 %s954, 1
    %s956 = sor.u32 %s954, %s955
    %s957 = sand.u32 51, %s956
    %s958 = sshrl.u32 %s957, 2
    %s959 = sor.u32 %s957, %s958
    %s960 = sand.u32 15, %s959
    %v961 = vld [vmem:[%s951] sm:%s960]
    %v962 = vunpack.c.l.bf16 %v961
    %v963 = vunpack.c.h.bf16 %v961
    %s964 = scalar_lea.vmem [#allocation1], 32
    %965 = vst [vmem:[%s964] sm:%s5] %v962
    %s966 = smul.addr 4, 3
    %s967 = scalar_lea.vmem %s0, %s966
    %s968 = sshrl.u32 %s5, 1
    %s969 = sor.u32 %s5, %s968
    %s970 = sand.u32 %s969, 85
    %s971 = sshrl.u32 %s970, 1
    %s972 = sor.u32 %s970, %s971
    %s973 = sand.u32 51, %s972
    %s974 = sshrl.u32 %s973, 2
    %s975 = sor.u32 %s973, %s974
    %s976 = sand.u32 15, %s975
    %v977 = vld [vmem:[%s967] sm:%s976]
    %v978 = vunpack.c.l.bf16 %v977
    %v979 = vunpack.c.h.bf16 %v977
    %s980 = scalar_lea.vmem [#allocation1], 24
    %981 = vst [vmem:[%s980] sm:%s5] %v978
    %s982 = smul.addr 4, 2
    %s983 = scalar_lea.vmem %s0, %s982
    %s984 = sshrl.u32 %s5, 1
    %s985 = sor.u32 %s5, %s984
    %s986 = sand.u32 %s985, 85
    %s987 = sshrl.u32 %s986, 1
    %s988 = sor.u32 %s986, %s987
    %s989 = sand.u32 51, %s988
    %s990 = sshrl.u32 %s989, 2
    %s991 = sor.u32 %s989, %s990
    %s992 = sand.u32 15, %s991
    %v993 = vld [vmem:[%s983] sm:%s992]
    %v994 = vunpack.c.l.bf16 %v993
    %v995 = vunpack.c.h.bf16 %v993
    %s996 = scalar_lea.vmem [#allocation1], 16
    %997 = vst [vmem:[%s996] sm:%s5] %v994
    %s998 = scalar_lea.vmem %s0, 4
    %s999 = sshrl.u32 %s5, 1
    %s1000 = sor.u32 %s5, %s999
    %s1001 = sand.u32 %s1000, 85
    %s1002 = sshrl.u32 %s1001, 1
    %s1003 = sor.u32 %s1001, %s1002
    %s1004 = sand.u32 51, %s1003
    %s1005 = sshrl.u32 %s1004, 2
    %s1006 = sor.u32 %s1004, %s1005
    %s1007 = sand.u32 15, %s1006
    %v1008 = vld [vmem:[%s998] sm:%s1007]
    %v1009 = vunpack.c.l.bf16 %v1008
    %v1010 = vunpack.c.h.bf16 %v1008
    %s1011 = scalar_lea.vmem [#allocation1], 8
    %1012 = vst [vmem:[%s1011] sm:%s5] %v1009
    %s1013 = sshrl.u32 %s5, 1
    %s1014 = sor.u32 %s5, %s1013
    %s1015 = sand.u32 %s1014, 85
    %s1016 = sshrl.u32 %s1015, 1
    %s1017 = sor.u32 %s1015, %s1016
    %s1018 = sand.u32 51, %s1017
    %s1019 = sshrl.u32 %s1018, 2
    %s1020 = sor.u32 %s1018, %s1019
    %s1021 = sand.u32 15, %s1020
    %v1022 = vld [vmem:[%s0] sm:%s1021]
    %v1023 = vunpack.c.l.bf16 %v1022
    %v1024 = vunpack.c.h.bf16 %v1022
    %1025 = vst [vmem:[#allocation1] sm:%s5] %v1023
    %v1026 = vld [vmem:[#allocation1] ss:$4 sm:$0xff]
    %vm1027 = vcmask 261120
    %1028 = vst.msk [vmem:[#allocation0] ss:$8 sm:$0xf] %vm1027, %v1026
    %1029 = vst.msk [vmem:[#allocation0] ss:$8 sm:$0xf0] %vm1027, %v1026
    %s1030 = scalar_lea.vmem [#allocation1], 32
    %v1031 = vld [vmem:[%s1030] ss:$4 sm:$0xff]
    %vm1032 = vcmask 261120
    %s1033 = scalar_lea.vmem [#allocation0], 64
    %1034 = vst.msk [vmem:[%s1033] ss:$8 sm:$0xf] %vm1032, %v1031
    %s1035 = scalar_lea.vmem [#allocation0], 64
    %1036 = vst.msk [vmem:[%s1035] ss:$8 sm:$0xf0] %vm1032, %v1031
    %s1037 = scalar_lea.vmem [#allocation1], 64
    %v1038 = vld [vmem:[%s1037] ss:$4 sm:$0xff]
    %vm1039 = vcmask 261120
    %s1040 = scalar_lea.vmem [#allocation0], 128
    %1041 = vst.msk [vmem:[%s1040] ss:$8 sm:$0xf] %vm1039, %v1038
    %s1042 = scalar_lea.vmem [#allocation0], 128
    %1043 = vst.msk [vmem:[%s1042] ss:$8 sm:$0xf0] %vm1039, %v1038
    %s1044 = scalar_lea.vmem [#allocation1], 96
    %v1045 = vld [vmem:[%s1044] ss:$4 sm:$0xff]
    %vm1046 = vcmask 261120
    %s1047 = scalar_lea.vmem [#allocation0], 192
    %1048 = vst.msk [vmem:[%s1047] ss:$8 sm:$0xf] %vm1046, %v1045
    %s1049 = scalar_lea.vmem [#allocation0], 192
    %1050 = vst.msk [vmem:[%s1049] ss:$8 sm:$0xf0] %vm1046, %v1045
    %s1051 = scalar_lea.vmem [#allocation1], 128
    %v1052 = vld [vmem:[%s1051] ss:$4 sm:$0xff]
    %vm1053 = vcmask 261120
    %s1054 = scalar_lea.vmem [#allocation0], 256
    %1055 = vst.msk [vmem:[%s1054] ss:$8 sm:$0xf] %vm1053, %v1052
    %s1056 = scalar_lea.vmem [#allocation0], 256
    %1057 = vst.msk [vmem:[%s1056] ss:$8 sm:$0xf0] %vm1053, %v1052
    %s1058 = scalar_lea.vmem [#allocation1], 160
    %v1059 = vld [vmem:[%s1058] ss:$4 sm:$0xff]
    %vm1060 = vcmask 261120
    %s1061 = scalar_lea.vmem [#allocation0], 320
    %1062 = vst.msk [vmem:[%s1061] ss:$8 sm:$0xf] %vm1060, %v1059
    %s1063 = scalar_lea.vmem [#allocation0], 320
    %1064 = vst.msk [vmem:[%s1063] ss:$8 sm:$0xf0] %vm1060, %v1059
    %s1065 = scalar_lea.vmem [#allocation1], 192
    %v1066 = vld [vmem:[%s1065] ss:$4 sm:$0xff]
    %vm1067 = vcmask 261120
    %s1068 = scalar_lea.vmem [#allocation0], 384
    %1069 = vst.msk [vmem:[%s1068] ss:$8 sm:$0xf] %vm1067, %v1066
    %s1070 = scalar_lea.vmem [#allocation0], 384
    %1071 = vst.msk [vmem:[%s1070] ss:$8 sm:$0xf0] %vm1067, %v1066
    %s1072 = scalar_lea.vmem [#allocation1], 224
    %v1073 = vld [vmem:[%s1072] ss:$4 sm:$0xff]
    %vm1074 = vcmask 261120
    %s1075 = scalar_lea.vmem [#allocation0], 448
    %1076 = vst.msk [vmem:[%s1075] ss:$8 sm:$0xf] %vm1074, %v1073
    %s1077 = scalar_lea.vmem [#allocation0], 448
    %1078 = vst.msk [vmem:[%s1077] ss:$8 sm:$0xf0] %vm1074, %v1073
    %s1079 = scalar_lea.vmem [#allocation1], 256
    %v1080 = vld [vmem:[%s1079] ss:$4 sm:$0xff]
    %vm1081 = vcmask 261120
    %s1082 = scalar_lea.vmem [#allocation0], 512
    %1083 = vst.msk [vmem:[%s1082] ss:$8 sm:$0xf] %vm1081, %v1080
    %s1084 = scalar_lea.vmem [#allocation0], 512
    %1085 = vst.msk [vmem:[%s1084] ss:$8 sm:$0xf0] %vm1081, %v1080
    %s1086 = scalar_lea.vmem [#allocation1], 288
    %v1087 = vld [vmem:[%s1086] ss:$4 sm:$0xff]
    %vm1088 = vcmask 261120
    %s1089 = scalar_lea.vmem [#allocation0], 576
    %1090 = vst.msk [vmem:[%s1089] ss:$8 sm:$0xf] %vm1088, %v1087
    %s1091 = scalar_lea.vmem [#allocation0], 576
    %1092 = vst.msk [vmem:[%s1091] ss:$8 sm:$0xf0] %vm1088, %v1087
    %s1093 = scalar_lea.vmem [#allocation1], 320
    %v1094 = vld [vmem:[%s1093] ss:$4 sm:$0xff]
    %vm1095 = vcmask 261120
    %s1096 = scalar_lea.vmem [#allocation0], 640
    %1097 = vst.msk [vmem:[%s1096] ss:$8 sm:$0xf] %vm1095, %v1094
    %s1098 = scalar_lea.vmem [#allocation0], 640
    %1099 = vst.msk [vmem:[%s1098] ss:$8 sm:$0xf0] %vm1095, %v1094
    %s1100 = scalar_lea.vmem [#allocation1], 352
    %v1101 = vld [vmem:[%s1100] ss:$4 sm:$0xff]
    %vm1102 = vcmask 261120
    %s1103 = scalar_lea.vmem [#allocation0], 704
    %1104 = vst.msk [vmem:[%s1103] ss:$8 sm:$0xf] %vm1102, %v1101
    %s1105 = scalar_lea.vmem [#allocation0], 704
    %1106 = vst.msk [vmem:[%s1105] ss:$8 sm:$0xf0] %vm1102, %v1101
    %s1107 = scalar_lea.vmem [#allocation1], 384
    %v1108 = vld [vmem:[%s1107] ss:$4 sm:$0xff]
    %vm1109 = vcmask 261120
    %s1110 = scalar_lea.vmem [#allocation0], 768
    %1111 = vst.msk [vmem:[%s1110] ss:$8 sm:$0xf] %vm1109, %v1108
    %s1112 = scalar_lea.vmem [#allocation0], 768
    %1113 = vst.msk [vmem:[%s1112] ss:$8 sm:$0xf0] %vm1109, %v1108
    %s1114 = scalar_lea.vmem [#allocation1], 416
    %v1115 = vld [vmem:[%s1114] ss:$4 sm:$0xff]
    %vm1116 = vcmask 261120
    %s1117 = scalar_lea.vmem [#allocation0], 832
    %1118 = vst.msk [vmem:[%s1117] ss:$8 sm:$0xf] %vm1116, %v1115
    %s1119 = scalar_lea.vmem [#allocation0], 832
    %1120 = vst.msk [vmem:[%s1119] ss:$8 sm:$0xf0] %vm1116, %v1115
    %s1121 = scalar_lea.vmem [#allocation1], 448
    %v1122 = vld [vmem:[%s1121] ss:$4 sm:$0xff]
    %vm1123 = vcmask 261120
    %s1124 = scalar_lea.vmem [#allocation0], 896
    %1125 = vst.msk [vmem:[%s1124] ss:$8 sm:$0xf] %vm1123, %v1122
    %s1126 = scalar_lea.vmem [#allocation0], 896
    %1127 = vst.msk [vmem:[%s1126] ss:$8 sm:$0xf0] %vm1123, %v1122
    %s1128 = scalar_lea.vmem [#allocation1], 480
    %v1129 = vld [vmem:[%s1128] ss:$4 sm:$0xff]
    %vm1130 = vcmask 261120
    %s1131 = scalar_lea.vmem [#allocation0], 960
    %1132 = vst.msk [vmem:[%s1131] ss:$8 sm:$0xf] %vm1130, %v1129
    %s1133 = scalar_lea.vmem [#allocation0], 960
    %1134 = vst.msk [vmem:[%s1133] ss:$8 sm:$0xf0] %vm1130, %v1129
    %s1135 = scalar_lea.vmem [#allocation1], 3
    %v1136 = vld [vmem:[%s1135] ss:$4 sm:$0xff]
    %1137 = vrot.lane.b32.xlu0 %v1136, 96
    %v1138 = vpop.permute.xlu0 %1137
    %vm1139 = vcmask 1048320
    %1140 = vst.msk [vmem:[#allocation0] ss:$8 sm:$0xf] %vm1139, %v1138
    %1141 = vst.msk [vmem:[#allocation0] ss:$8 sm:$0xf0] %vm1139, %v1138
    %s1142 = scalar_lea.vmem [#allocation1], 35
    %v1143 = vld [vmem:[%s1142] ss:$4 sm:$0xff]
    %1144 = vrot.lane.b32.xlu0 %v1143, 96
    %v1145 = vpop.permute.xlu0 %1144
    %vm1146 = vcmask 1048320
    %s1147 = scalar_lea.vmem [#allocation0], 64
    %1148 = vst.msk [vmem:[%s1147] ss:$8 sm:$0xf] %vm1146, %v1145
    %s1149 = scalar_lea.vmem [#allocation0], 64
    %1150 = vst.msk [vmem:[%s1149] ss:$8 sm:$0xf0] %vm1146, %v1145
    %s1151 = scalar_lea.vmem [#allocation1], 67
    %v1152 = vld [vmem:[%s1151] ss:$4 sm:$0xff]
    %1153 = vrot.lane.b32.xlu0 %v1152, 96
    %v1154 = vpop.permute.xlu0 %1153
    %vm1155 = vcmask 1048320
    %s1156 = scalar_lea.vmem [#allocation0], 128
    %1157 = vst.msk [vmem:[%s1156] ss:$8 sm:$0xf] %vm1155, %v1154
    %s1158 = scalar_lea.vmem [#allocation0], 128
    %1159 = vst.msk [vmem:[%s1158] ss:$8 sm:$0xf0] %vm1155, %v1154
    %s1160 = scalar_lea.vmem [#allocation1], 99
    %v1161 = vld [vmem:[%s1160] ss:$4 sm:$0xff]
    %1162 = vrot.lane.b32.xlu0 %v1161, 96
    %v1163 = vpop.permute.xlu0 %1162
    %vm1164 = vcmask 1048320
    %s1165 = scalar_lea.vmem [#allocation0], 192
    %1166 = vst.msk [vmem:[%s1165] ss:$8 sm:$0xf] %vm1164, %v1163
    %s1167 = scalar_lea.vmem [#allocation0], 192
    %1168 = vst.msk [vmem:[%s1167] ss:$8 sm:$0xf0] %vm1164, %v1163
    %s1169 = scalar_lea.vmem [#allocation1], 131
    %v1170 = vld [vmem:[%s1169] ss:$4 sm:$0xff]
    %1171 = vrot.lane.b32.xlu0 %v1170, 96
    %v1172 = vpop.permute.xlu0 %1171
    %vm1173 = vcmask 1048320
    %s1174 = scalar_lea.vmem [#allocation0], 256
    %1175 = vst.msk [vmem:[%s1174] ss:$8 sm:$0xf] %vm1173, %v1172
    %s1176 = scalar_lea.vmem [#allocation0], 256
    %1177 = vst.msk [vmem:[%s1176] ss:$8 sm:$0xf0] %vm1173, %v1172
    %s1178 = scalar_lea.vmem [#allocation1], 163
    %v1179 = vld [vmem:[%s1178] ss:$4 sm:$0xff]
    %1180 = vrot.lane.b32.xlu0 %v1179, 96
    %v1181 = vpop.permute.xlu0 %1180
    %vm1182 = vcmask 1048320
    %s1183 = scalar_lea.vmem [#allocation0], 320
    %1184 = vst.msk [vmem:[%s1183] ss:$8 sm:$0xf] %vm1182, %v1181
    %s1185 = scalar_lea.vmem [#allocation0], 320
    %1186 = vst.msk [vmem:[%s1185] ss:$8 sm:$0xf0] %vm1182, %v1181
    %s1187 = scalar_lea.vmem [#allocation1], 195
    %v1188 = vld [vmem:[%s1187] ss:$4 sm:$0xff]
    %1189 = vrot.lane.b32.xlu0 %v1188, 96
    %v1190 = vpop.permute.xlu0 %1189
    %vm1191 = vcmask 1048320
    %s1192 = scalar_lea.vmem [#allocation0], 384
    %1193 = vst.msk [vmem:[%s1192] ss:$8 sm:$0xf] %vm1191, %v1190
    %s1194 = scalar_lea.vmem [#allocation0], 384
    %1195 = vst.msk [vmem:[%s1194] ss:$8 sm:$0xf0] %vm1191, %v1190
    %s1196 = scalar_lea.vmem [#allocation1], 227
    %v1197 = vld [vmem:[%s1196] ss:$4 sm:$0xff]
    %1198 = vrot.lane.b32.xlu0 %v1197, 96
    %v1199 = vpop.permute.xlu0 %1198
    %vm1200 = vcmask 1048320
    %s1201 = scalar_lea.vmem [#allocation0], 448
    %1202 = vst.msk [vmem:[%s1201] ss:$8 sm:$0xf] %vm1200, %v1199
    %s1203 = scalar_lea.vmem [#allocation0], 448
    %1204 = vst.msk [vmem:[%s1203] ss:$8 sm:$0xf0] %vm1200, %v1199
    %s1205 = scalar_lea.vmem [#allocation1], 259
    %v1206 = vld [vmem:[%s1205] ss:$4 sm:$0xff]
    %1207 = vrot.lane.b32.xlu0 %v1206, 96
    %v1208 = vpop.permute.xlu0 %1207
    %vm1209 = vcmask 1048320
    %s1210 = scalar_lea.vmem [#allocation0], 512
    %1211 = vst.msk [vmem:[%s1210] ss:$8 sm:$0xf] %vm1209, %v1208
    %s1212 = scalar_lea.vmem [#allocation0], 512
    %1213 = vst.msk [vmem:[%s1212] ss:$8 sm:$0xf0] %vm1209, %v1208
    %s1214 = scalar_lea.vmem [#allocation1], 291
    %v1215 = vld [vmem:[%s1214] ss:$4 sm:$0xff]
    %1216 = vrot.lane.b32.xlu0 %v1215, 96
    %v1217 = vpop.permute.xlu0 %1216
    %vm1218 = vcmask 1048320
    %s1219 = scalar_lea.vmem [#allocation0], 576
    %1220 = vst.msk [vmem:[%s1219] ss:$8 sm:$0xf] %vm1218, %v1217
    %s1221 = scalar_lea.vmem [#allocation0], 576
    %1222 = vst.msk [vmem:[%s1221] ss:$8 sm:$0xf0] %vm1218, %v1217
    %s1223 = scalar_lea.vmem [#allocation1], 323
    %v1224 = vld [vmem:[%s1223] ss:$4 sm:$0xff]
    %1225 = vrot.lane.b32.xlu0 %v1224, 96
    %v1226 = vpop.permute.xlu0 %1225
    %vm1227 = vcmask 1048320
    %s1228 = scalar_lea.vmem [#allocation0], 640
    %1229 = vst.msk [vmem:[%s1228] ss:$8 sm:$0xf] %vm1227, %v1226
    %s1230 = scalar_lea.vmem [#allocation0], 640
    %1231 = vst.msk [vmem:[%s1230] ss:$8 sm:$0xf0] %vm1227, %v1226
    %s1232 = scalar_lea.vmem [#allocation1], 355
    %v1233 = vld [vmem:[%s1232] ss:$4 sm:$0xff]
    %1234 = vrot.lane.b32.xlu0 %v1233, 96
    %v1235 = vpop.permute.xlu0 %1234
    %vm1236 = vcmask 1048320
    %s1237 = scalar_lea.vmem [#allocation0], 704
    %1238 = vst.msk [vmem:[%s1237] ss:$8 sm:$0xf] %vm1236, %v1235
    %s1239 = scalar_lea.vmem [#allocation0], 704
    %1240 = vst.msk [vmem:[%s1239] ss:$8 sm:$0xf0] %vm1236, %v1235
    %s1241 = scalar_lea.vmem [#allocation1], 387
    %v1242 = vld [vmem:[%s1241] ss:$4 sm:$0xff]
    %1243 = vrot.lane.b32.xlu0 %v1242, 96
    %v1244 = vpop.permute.xlu0 %1243
    %vm1245 = vcmask 1048320
    %s1246 = scalar_lea.vmem [#allocation0], 768
    %1247 = vst.msk [vmem:[%s1246] ss:$8 sm:$0xf] %vm1245, %v1244
    %s1248 = scalar_lea.vmem [#allocation0], 768
    %1249 = vst.msk [vmem:[%s1248] ss:$8 sm:$0xf0] %vm1245, %v1244
    %s1250 = scalar_lea.vmem [#allocation1], 419
    %v1251 = vld [vmem:[%s1250] ss:$4 sm:$0xff]
    %1252 = vrot.lane.b32.xlu0 %v1251, 96
    %v1253 = vpop.permute.xlu0 %1252
    %vm1254 = vcmask 1048320
    %s1255 = scalar_lea.vmem [#allocation0], 832
    %1256 = vst.msk [vmem:[%s1255] ss:$8 sm:$0xf] %vm1254, %v1253
    %s1257 = scalar_lea.vmem [#allocation0], 832
    %1258 = vst.msk [vmem:[%s1257] ss:$8 sm:$0xf0] %vm1254, %v1253
    %s1259 = scalar_lea.vmem [#allocation1], 451
    %v1260 = vld [vmem:[%s1259] ss:$4 sm:$0xff]
    %1261 = vrot.lane.b32.xlu0 %v1260, 96
    %v1262 = vpop.permute.xlu0 %1261
    %vm1263 = vcmask 1048320
    %s1264 = scalar_lea.vmem [#allocation0], 896
    %1265 = vst.msk [vmem:[%s1264] ss:$8 sm:$0xf] %vm1263, %v1262
    %s1266 = scalar_lea.vmem [#allocation0], 896
    %1267 = vst.msk [vmem:[%s1266] ss:$8 sm:$0xf0] %vm1263, %v1262
    %s1268 = scalar_lea.vmem [#allocation1], 483
    %v1269 = vld [vmem:[%s1268] ss:$4 sm:$0xff]
    %1270 = vrot.lane.b32.xlu0 %v1269, 96
    %v1271 = vpop.permute.xlu0 %1270
    %vm1272 = vcmask 1048320
    %s1273 = scalar_lea.vmem [#allocation0], 960
    %1274 = vst.msk [vmem:[%s1273] ss:$8 sm:$0xf] %vm1272, %v1271
    %s1275 = scalar_lea.vmem [#allocation0], 960
    %1276 = vst.msk [vmem:[%s1275] ss:$8 sm:$0xf0] %vm1272, %v1271
    %s1277 = scalar_lea.vmem [#allocation1], 2
    %v1278 = vld [vmem:[%s1277] ss:$4 sm:$0xff]
    %1279 = vrot.lane.b32.xlu0 %v1278, 64
    %v1280 = vpop.permute.xlu0 %1279
    %vm1281 = vcmask 785920
    %1282 = vst.msk [vmem:[#allocation0] ss:$8 sm:$0xf] %vm1281, %v1280
    %1283 = vst.msk [vmem:[#allocation0] ss:$8 sm:$0xf0] %vm1281, %v1280
    %s1284 = scalar_lea.vmem [#allocation1], 34
    %v1285 = vld [vmem:[%s1284] ss:$4 sm:$0xff]
    %1286 = vrot.lane.b32.xlu0 %v1285, 64
    %v1287 = vpop.permute.xlu0 %1286
    %vm1288 = vcmask 785920
    %s1289 = scalar_lea.vmem [#allocation0], 64
    %1290 = vst.msk [vmem:[%s1289] ss:$8 sm:$0xf] %vm1288, %v1287
    %s1291 = scalar_lea.vmem [#allocation0], 64
    %1292 = vst.msk [vmem:[%s1291] ss:$8 sm:$0xf0] %vm1288, %v1287
    %s1293 = scalar_lea.vmem [#allocation1], 66
    %v1294 = vld [vmem:[%s1293] ss:$4 sm:$0xff]
    %1295 = vrot.lane.b32.xlu0 %v1294, 64
    %v1296 = vpop.permute.xlu0 %1295
    %vm1297 = vcmask 785920
    %s1298 = scalar_lea.vmem [#allocation0], 128
    %1299 = vst.msk [vmem:[%s1298] ss:$8 sm:$0xf] %vm1297, %v1296
    %s1300 = scalar_lea.vmem [#allocation0], 128
    %1301 = vst.msk [vmem:[%s1300] ss:$8 sm:$0xf0] %vm1297, %v1296
    %s1302 = scalar_lea.vmem [#allocation1], 98
    %v1303 = vld [vmem:[%s1302] ss:$4 sm:$0xff]
    %1304 = vrot.lane.b32.xlu0 %v1303, 64
    %v1305 = vpop.permute.xlu0 %1304
    %vm1306 = vcmask 785920
    %s1307 = scalar_lea.vmem [#allocation0], 192
    %1308 = vst.msk [vmem:[%s1307] ss:$8 sm:$0xf] %vm1306, %v1305
    %s1309 = scalar_lea.vmem [#allocation0], 192
    %1310 = vst.msk [vmem:[%s1309] ss:$8 sm:$0xf0] %vm1306, %v1305
    %s1311 = scalar_lea.vmem [#allocation1], 130
    %v1312 = vld [vmem:[%s1311] ss:$4 sm:$0xff]
    %1313 = vrot.lane.b32.xlu0 %v1312, 64
    %v1314 = vpop.permute.xlu0 %1313
    %vm1315 = vcmask 785920
    %s1316 = scalar_lea.vmem [#allocation0], 256
    %1317 = vst.msk [vmem:[%s1316] ss:$8 sm:$0xf] %vm1315, %v1314
    %s1318 = scalar_lea.vmem [#allocation0], 256
    %1319 = vst.msk [vmem:[%s1318] ss:$8 sm:$0xf0] %vm1315, %v1314
    %s1320 = scalar_lea.vmem [#allocation1], 162
    %v1321 = vld [vmem:[%s1320] ss:$4 sm:$0xff]
    %1322 = vrot.lane.b32.xlu0 %v1321, 64
    %v1323 = vpop.permute.xlu0 %1322
    %vm1324 = vcmask 785920
    %s1325 = scalar_lea.vmem [#allocation0], 320
    %1326 = vst.msk [vmem:[%s1325] ss:$8 sm:$0xf] %vm1324, %v1323
    %s1327 = scalar_lea.vmem [#allocation0], 320
    %1328 = vst.msk [vmem:[%s1327] ss:$8 sm:$0xf0] %vm1324, %v1323
    %s1329 = scalar_lea.vmem [#allocation1], 194
    %v1330 = vld [vmem:[%s1329] ss:$4 sm:$0xff]
    %1331 = vrot.lane.b32.xlu0 %v1330, 64
    %v1332 = vpop.permute.xlu0 %1331
    %vm1333 = vcmask 785920
    %s1334 = scalar_lea.vmem [#allocation0], 384
    %1335 = vst.msk [vmem:[%s1334] ss:$8 sm:$0xf] %vm1333, %v1332
    %s1336 = scalar_lea.vmem [#allocation0], 384
    %1337 = vst.msk [vmem:[%s1336] ss:$8 sm:$0xf0] %vm1333, %v1332
    %s1338 = scalar_lea.vmem [#allocation1], 226
    %v1339 = vld [vmem:[%s1338] ss:$4 sm:$0xff]
    %1340 = vrot.lane.b32.xlu0 %v1339, 64
    %v1341 = vpop.permute.xlu0 %1340
    %vm1342 = vcmask 785920
    %s1343 = scalar_lea.vmem [#allocation0], 448
    %1344 = vst.msk [vmem:[%s1343] ss:$8 sm:$0xf] %vm1342, %v1341
    %s1345 = scalar_lea.vmem [#allocation0], 448
    %1346 = vst.msk [vmem:[%s1345] ss:$8 sm:$0xf0] %vm1342, %v1341
    %s1347 = scalar_lea.vmem [#allocation1], 258
    %v1348 = vld [vmem:[%s1347] ss:$4 sm:$0xff]
    %1349 = vrot.lane.b32.xlu0 %v1348, 64
    %v1350 = vpop.permute.xlu0 %1349
    %vm1351 = vcmask 785920
    %s1352 = scalar_lea.vmem [#allocation0], 512
    %1353 = vst.msk [vmem:[%s1352] ss:$8 sm:$0xf] %vm1351, %v1350
    %s1354 = scalar_lea.vmem [#allocation0], 512
    %1355 = vst.msk [vmem:[%s1354] ss:$8 sm:$0xf0] %vm1351, %v1350
    %s1356 = scalar_lea.vmem [#allocation1], 290
    %v1357 = vld [vmem:[%s1356] ss:$4 sm:$0xff]
    %1358 = vrot.lane.b32.xlu0 %v1357, 64
    %v1359 = vpop.permute.xlu0 %1358
    %vm1360 = vcmask 785920
    %s1361 = scalar_lea.vmem [#allocation0], 576
    %1362 = vst.msk [vmem:[%s1361] ss:$8 sm:$0xf] %vm1360, %v1359
    %s1363 = scalar_lea.vmem [#allocation0], 576
    %1364 = vst.msk [vmem:[%s1363] ss:$8 sm:$0xf0] %vm1360, %v1359
    %s1365 = scalar_lea.vmem [#allocation1], 322
    %v1366 = vld [vmem:[%s1365] ss:$4 sm:$0xff]
    %1367 = vrot.lane.b32.xlu0 %v1366, 64
    %v1368 = vpop.permute.xlu0 %1367
    %vm1369 = vcmask 785920
    %s1370 = scalar_lea.vmem [#allocation0], 640
    %1371 = vst.msk [vmem:[%s1370] ss:$8 sm:$0xf] %vm1369, %v1368
    %s1372 = scalar_lea.vmem [#allocation0], 640
    %1373 = vst.msk [vmem:[%s1372] ss:$8 sm:$0xf0] %vm1369, %v1368
    %s1374 = scalar_lea.vmem [#allocation1], 354
    %v1375 = vld [vmem:[%s1374] ss:$4 sm:$0xff]
    %1376 = vrot.lane.b32.xlu0 %v1375, 64
    %v1377 = vpop.permute.xlu0 %1376
    %vm1378 = vcmask 785920
    %s1379 = scalar_lea.vmem [#allocation0], 704
    %1380 = vst.msk [vmem:[%s1379] ss:$8 sm:$0xf] %vm1378, %v1377
    %s1381 = scalar_lea.vmem [#allocation0], 704
    %1382 = vst.msk [vmem:[%s1381] ss:$8 sm:$0xf0] %vm1378, %v1377
    %s1383 = scalar_lea.vmem [#allocation1], 386
    %v1384 = vld [vmem:[%s1383] ss:$4 sm:$0xff]
    %1385 = vrot.lane.b32.xlu0 %v1384, 64
    %v1386 = vpop.permute.xlu0 %1385
    %vm1387 = vcmask 785920
    %s1388 = scalar_lea.vmem [#allocation0], 768
    %1389 = vst.msk [vmem:[%s1388] ss:$8 sm:$0xf] %vm1387, %v1386
    %s1390 = scalar_lea.vmem [#allocation0], 768
    %1391 = vst.msk [vmem:[%s1390] ss:$8 sm:$0xf0] %vm1387, %v1386
    %s1392 = scalar_lea.vmem [#allocation1], 418
    %v1393 = vld [vmem:[%s1392] ss:$4 sm:$0xff]
    %1394 = vrot.lane.b32.xlu0 %v1393, 64
    %v1395 = vpop.permute.xlu0 %1394
    %vm1396 = vcmask 785920
    %s1397 = scalar_lea.vmem [#allocation0], 832
    %1398 = vst.msk [vmem:[%s1397] ss:$8 sm:$0xf] %vm1396, %v1395
    %s1399 = scalar_lea.vmem [#allocation0], 832
    %1400 = vst.msk [vmem:[%s1399] ss:$8 sm:$0xf0] %vm1396, %v1395
    %s1401 = scalar_lea.vmem [#allocation1], 450
    %v1402 = vld [vmem:[%s1401] ss:$4 sm:$0xff]
    %1403 = vrot.lane.b32.xlu0 %v1402, 64
    %v1404 = vpop.permute.xlu0 %1403
    %vm1405 = vcmask 785920
    %s1406 = scalar_lea.vmem [#allocation0], 896
    %1407 = vst.msk [vmem:[%s1406] ss:$8 sm:$0xf] %vm1405, %v1404
    %s1408 = scalar_lea.vmem [#allocation0], 896
    %1409 = vst.msk [vmem:[%s1408] ss:$8 sm:$0xf0] %vm1405, %v1404
    %s1410 = scalar_lea.vmem [#allocation1], 482
    %v1411 = vld [vmem:[%s1410] ss:$4 sm:$0xff]
    %1412 = vrot.lane.b32.xlu0 %v1411, 64
    %v1413 = vpop.permute.xlu0 %1412
    %vm1414 = vcmask 785920
    %s1415 = scalar_lea.vmem [#allocation0], 960
    %1416 = vst.msk [vmem:[%s1415] ss:$8 sm:$0xf] %vm1414, %v1413
    %s1417 = scalar_lea.vmem [#allocation0], 960
    %1418 = vst.msk [vmem:[%s1417] ss:$8 sm:$0xf0] %vm1414, %v1413
    %s1419 = scalar_lea.vmem [#allocation1], 1
    %v1420 = vld [vmem:[%s1419] ss:$4 sm:$0xff]
    %1421 = vrot.lane.b32.xlu0 %v1420, 32
    %v1422 = vpop.permute.xlu0 %1421
    %vm1423 = vcmask 523520
    %1424 = vst.msk [vmem:[#allocation0] ss:$8 sm:$0xf] %vm1423, %v1422
    %1425 = vst.msk [vmem:[#allocation0] ss:$8 sm:$0xf0] %vm1423, %v1422
    %s1426 = scalar_lea.vmem [#allocation1], 33
    %v1427 = vld [vmem:[%s1426] ss:$4 sm:$0xff]
    %1428 = vrot.lane.b32.xlu0 %v1427, 32
    %v1429 = vpop.permute.xlu0 %1428
    %vm1430 = vcmask 523520
    %s1431 = scalar_lea.vmem [#allocation0], 64
    %1432 = vst.msk [vmem:[%s1431] ss:$8 sm:$0xf] %vm1430, %v1429
    %s1433 = scalar_lea.vmem [#allocation0], 64
    %1434 = vst.msk [vmem:[%s1433] ss:$8 sm:$0xf0] %vm1430, %v1429
    %s1435 = scalar_lea.vmem [#allocation1], 65
    %v1436 = vld [vmem:[%s1435] ss:$4 sm:$0xff]
    %1437 = vrot.lane.b32.xlu0 %v1436, 32
    %v1438 = vpop.permute.xlu0 %1437
    %vm1439 = vcmask 523520
    %s1440 = scalar_lea.vmem [#allocation0], 128
    %1441 = vst.msk [vmem:[%s1440] ss:$8 sm:$0xf] %vm1439, %v1438
    %s1442 = scalar_lea.vmem [#allocation0], 128
    %1443 = vst.msk [vmem:[%s1442] ss:$8 sm:$0xf0] %vm1439, %v1438
    %s1444 = scalar_lea.vmem [#allocation1], 97
    %v1445 = vld [vmem:[%s1444] ss:$4 sm:$0xff]
    %1446 = vrot.lane.b32.xlu0 %v1445, 32
    %v1447 = vpop.permute.xlu0 %1446
    %vm1448 = vcmask 523520
    %s1449 = scalar_lea.vmem [#allocation0], 192
    %1450 = vst.msk [vmem:[%s1449] ss:$8 sm:$0xf] %vm1448, %v1447
    %s1451 = scalar_lea.vmem [#allocation0], 192
    %1452 = vst.msk [vmem:[%s1451] ss:$8 sm:$0xf0] %vm1448, %v1447
    %s1453 = scalar_lea.vmem [#allocation1], 129
    %v1454 = vld [vmem:[%s1453] ss:$4 sm:$0xff]
    %1455 = vrot.lane.b32.xlu0 %v1454, 32
    %v1456 = vpop.permute.xlu0 %1455
    %vm1457 = vcmask 523520
    %s1458 = scalar_lea.vmem [#allocation0], 256
    %1459 = vst.msk [vmem:[%s1458] ss:$8 sm:$0xf] %vm1457, %v1456
    %s1460 = scalar_lea.vmem [#allocation0], 256
    %1461 = vst.msk [vmem:[%s1460] ss:$8 sm:$0xf0] %vm1457, %v1456
    %s1462 = scalar_lea.vmem [#allocation1], 161
    %v1463 = vld [vmem:[%s1462] ss:$4 sm:$0xff]
    %1464 = vrot.lane.b32.xlu0 %v1463, 32
    %v1465 = vpop.permute.xlu0 %1464
    %vm1466 = vcmask 523520
    %s1467 = scalar_lea.vmem [#allocation0], 320
    %1468 = vst.msk [vmem:[%s1467] ss:$8 sm:$0xf] %vm1466, %v1465
    %s1469 = scalar_lea.vmem [#allocation0], 320
    %1470 = vst.msk [vmem:[%s1469] ss:$8 sm:$0xf0] %vm1466, %v1465
    %s1471 = scalar_lea.vmem [#allocation1], 193
    %v1472 = vld [vmem:[%s1471] ss:$4 sm:$0xff]
    %1473 = vrot.lane.b32.xlu0 %v1472, 32
    %v1474 = vpop.permute.xlu0 %1473
    %vm1475 = vcmask 523520
    %s1476 = scalar_lea.vmem [#allocation0], 384
    %1477 = vst.msk [vmem:[%s1476] ss:$8 sm:$0xf] %vm1475, %v1474
    %s1478 = scalar_lea.vmem [#allocation0], 384
    %1479 = vst.msk [vmem:[%s1478] ss:$8 sm:$0xf0] %vm1475, %v1474
    %s1480 = scalar_lea.vmem [#allocation1], 225
    %v1481 = vld [vmem:[%s1480] ss:$4 sm:$0xff]
    %1482 = vrot.lane.b32.xlu0 %v1481, 32
    %v1483 = vpop.permute.xlu0 %1482
    %vm1484 = vcmask 523520
    %s1485 = scalar_lea.vmem [#allocation0], 448
    %1486 = vst.msk [vmem:[%s1485] ss:$8 sm:$0xf] %vm1484, %v1483
    %s1487 = scalar_lea.vmem [#allocation0], 448
    %1488 = vst.msk [vmem:[%s1487] ss:$8 sm:$0xf0] %vm1484, %v1483
    %s1489 = scalar_lea.vmem [#allocation1], 257
    %v1490 = vld [vmem:[%s1489] ss:$4 sm:$0xff]
    %1491 = vrot.lane.b32.xlu0 %v1490, 32
    %v1492 = vpop.permute.xlu0 %1491
    %vm1493 = vcmask 523520
    %s1494 = scalar_lea.vmem [#allocation0], 512
    %1495 = vst.msk [vmem:[%s1494] ss:$8 sm:$0xf] %vm1493, %v1492
    %s1496 = scalar_lea.vmem [#allocation0], 512
    %1497 = vst.msk [vmem:[%s1496] ss:$8 sm:$0xf0] %vm1493, %v1492
    %s1498 = scalar_lea.vmem [#allocation1], 289
    %v1499 = vld [vmem:[%s1498] ss:$4 sm:$0xff]
    %1500 = vrot.lane.b32.xlu0 %v1499, 32
    %v1501 = vpop.permute.xlu0 %1500
    %vm1502 = vcmask 523520
    %s1503 = scalar_lea.vmem [#allocation0], 576
    %1504 = vst.msk [vmem:[%s1503] ss:$8 sm:$0xf] %vm1502, %v1501
    %s1505 = scalar_lea.vmem [#allocation0], 576
    %1506 = vst.msk [vmem:[%s1505] ss:$8 sm:$0xf0] %vm1502, %v1501
    %s1507 = scalar_lea.vmem [#allocation1], 321
    %v1508 = vld [vmem:[%s1507] ss:$4 sm:$0xff]
    %1509 = vrot.lane.b32.xlu0 %v1508, 32
    %v1510 = vpop.permute.xlu0 %1509
    %vm1511 = vcmask 523520
    %s1512 = scalar_lea.vmem [#allocation0], 640
    %1513 = vst.msk [vmem:[%s1512] ss:$8 sm:$0xf] %vm1511, %v1510
    %s1514 = scalar_lea.vmem [#allocation0], 640
    %1515 = vst.msk [vmem:[%s1514] ss:$8 sm:$0xf0] %vm1511, %v1510
    %s1516 = scalar_lea.vmem [#allocation1], 353
    %v1517 = vld [vmem:[%s1516] ss:$4 sm:$0xff]
    %1518 = vrot.lane.b32.xlu0 %v1517, 32
    %v1519 = vpop.permute.xlu0 %1518
    %vm1520 = vcmask 523520
    %s1521 = scalar_lea.vmem [#allocation0], 704
    %1522 = vst.msk [vmem:[%s1521] ss:$8 sm:$0xf] %vm1520, %v1519
    %s1523 = scalar_lea.vmem [#allocation0], 704
    %1524 = vst.msk [vmem:[%s1523] ss:$8 sm:$0xf0] %vm1520, %v1519
    %s1525 = scalar_lea.vmem [#allocation1], 385
    %v1526 = vld [vmem:[%s1525] ss:$4 sm:$0xff]
    %1527 = vrot.lane.b32.xlu0 %v1526, 32
    %v1528 = vpop.permute.xlu0 %1527
    %vm1529 = vcmask 523520
    %s1530 = scalar_lea.vmem [#allocation0], 768
    %1531 = vst.msk [vmem:[%s1530] ss:$8 sm:$0xf] %vm1529, %v1528
    %s1532 = scalar_lea.vmem [#allocation0], 768
    %1533 = vst.msk [vmem:[%s1532] ss:$8 sm:$0xf0] %vm1529, %v1528
    %s1534 = scalar_lea.vmem [#allocation1], 417
    %v1535 = vld [vmem:[%s1534] ss:$4 sm:$0xff]
    %1536 = vrot.lane.b32.xlu0 %v1535, 32
    %v1537 = vpop.permute.xlu0 %1536
    %vm1538 = vcmask 523520
    %s1539 = scalar_lea.vmem [#allocation0], 832
    %1540 = vst.msk [vmem:[%s1539] ss:$8 sm:$0xf] %vm1538, %v1537
    %s1541 = scalar_lea.vmem [#allocation0], 832
    %1542 = vst.msk [vmem:[%s1541] ss:$8 sm:$0xf0] %vm1538, %v1537
    %s1543 = scalar_lea.vmem [#allocation1], 449
    %v1544 = vld [vmem:[%s1543] ss:$4 sm:$0xff]
    %1545 = vrot.lane.b32.xlu0 %v1544, 32
    %v1546 = vpop.permute.xlu0 %1545
    %vm1547 = vcmask 523520
    %s1548 = scalar_lea.vmem [#allocation0], 896
    %1549 = vst.msk [vmem:[%s1548] ss:$8 sm:$0xf] %vm1547, %v1546
    %s1550 = scalar_lea.vmem [#allocation0], 896
    %1551 = vst.msk [vmem:[%s1550] ss:$8 sm:$0xf0] %vm1547, %v1546
    %s1552 = scalar_lea.vmem [#allocation1], 481
    %v1553 = vld [vmem:[%s1552] ss:$4 sm:$0xff]
    %1554 = vrot.lane.b32.xlu0 %v1553, 32
    %v1555 = vpop.permute.xlu0 %1554
    %vm1556 = vcmask 523520
    %s1557 = scalar_lea.vmem [#allocation0], 960
    %1558 = vst.msk [vmem:[%s1557] ss:$8 sm:$0xf] %vm1556, %v1555
    %s1559 = scalar_lea.vmem [#allocation0], 960
    %1560 = vst.msk [vmem:[%s1559] ss:$8 sm:$0xf0] %vm1556, %v1555
    %s1562 = smul.u32 1, 2
    %s1563 = sshll.u32 1, %s1562
    %s1564 = ssub.s32 %s1563, 1
    %s1565 = sshrl.u32 %s1562, 1
    %v1566 = vld [vmem:[#allocation0] sm:%s1564]
    %v1567 = vpack.c.bf16 0.0, %v1566
    %s1568 = sshll.u32 1, %s1565
    %s1569 = ssub.s32 %s1568, 1
    %1570 = vst [vmem:[%s1] sm:%s1569] %v1567
    %s1571 = scalar_lea.vmem [#allocation0], 8
    %v1572 = vld [vmem:[%s1571] sm:%s1564]
    %v1573 = vpack.c.bf16 0.0, %v1572
    %s1574 = sshll.u32 1, %s1565
    %s1575 = ssub.s32 %s1574, 1
    %s1576 = scalar_lea.vmem %s1, 1
    %1577 = vst [vmem:[%s1576] sm:%s1575] %v1573
    %s1578 = scalar_lea.vmem [#allocation0], 16
    %v1579 = vld [vmem:[%s1578] sm:%s1564]
    %v1580 = vpack.c.bf16 0.0, %v1579
    %s1581 = sshll.u32 1, %s1565
    %s1582 = ssub.s32 %s1581, 1
    %s1583 = smul.addr 1, 2
    %s1584 = scalar_lea.vmem %s1, %s1583
    %1585 = vst [vmem:[%s1584] sm:%s1582] %v1580
    %s1586 = scalar_lea.vmem [#allocation0], 24
    %v1587 = vld [vmem:[%s1586] sm:%s1564]
    %v1588 = vpack.c.bf16 0.0, %v1587
    %s1589 = sshll.u32 1, %s1565
    %s1590 = ssub.s32 %s1589, 1
    %s1591 = smul.addr 1, 3
    %s1592 = scalar_lea.vmem %s1, %s1591
    %1593 = vst [vmem:[%s1592] sm:%s1590] %v1588
    %s1594 = scalar_lea.vmem [#allocation0], 32
    %v1595 = vld [vmem:[%s1594] sm:%s1564]
    %v1596 = vpack.c.bf16 0.0, %v1595
    %s1597 = sshll.u32 1, %s1565
    %s1598 = ssub.s32 %s1597, 1
    %s1599 = smul.addr 1, 4
    %s1600 = scalar_lea.vmem %s1, %s1599
    %1601 = vst [vmem:[%s1600] sm:%s1598] %v1596
    %s1602 = scalar_lea.vmem [#allocation0], 40
    %v1603 = vld [vmem:[%s1602] sm:%s1564]
    %v1604 = vpack.c.bf16 0.0, %v1603
    %s1605 = sshll.u32 1, %s1565
    %s1606 = ssub.s32 %s1605, 1
    %s1607 = smul.addr 1, 5
    %s1608 = scalar_lea.vmem %s1, %s1607
    %1609 = vst [vmem:[%s1608] sm:%s1606] %v1604
    %s1610 = scalar_lea.vmem [#allocation0], 48
    %v1611 = vld [vmem:[%s1610] sm:%s1564]
    %v1612 = vpack.c.bf16 0.0, %v1611
    %s1613 = sshll.u32 1, %s1565
    %s1614 = ssub.s32 %s1613, 1
    %s1615 = smul.addr 1, 6
    %s1616 = scalar_lea.vmem %s1, %s1615
    %1617 = vst [vmem:[%s1616] sm:%s1614] %v1612
    %s1618 = scalar_lea.vmem [#allocation0], 56
    %v1619 = vld [vmem:[%s1618] sm:%s1564]
    %v1620 = vpack.c.bf16 0.0, %v1619
    %s1621 = sshll.u32 1, %s1565
    %s1622 = ssub.s32 %s1621, 1
    %s1623 = smul.addr 1, 7
    %s1624 = scalar_lea.vmem %s1, %s1623
    %1625 = vst [vmem:[%s1624] sm:%s1622] %v1620
    %s1626 = scalar_lea.vmem [#allocation0], 64
    %v1627 = vld [vmem:[%s1626] sm:%s1564]
    %v1628 = vpack.c.bf16 0.0, %v1627
    %s1629 = sshll.u32 1, %s1565
    %s1630 = ssub.s32 %s1629, 1
    %s1631 = smul.addr 1, 8
    %s1632 = scalar_lea.vmem %s1, %s1631
    %1633 = vst [vmem:[%s1632] sm:%s1630] %v1628
    %s1634 = scalar_lea.vmem [#allocation0], 72
    %v1635 = vld [vmem:[%s1634] sm:%s1564]
    %v1636 = vpack.c.bf16 0.0, %v1635
    %s1637 = sshll.u32 1, %s1565
    %s1638 = ssub.s32 %s1637, 1
    %s1639 = smul.addr 1, 9
    %s1640 = scalar_lea.vmem %s1, %s1639
    %1641 = vst [vmem:[%s1640] sm:%s1638] %v1636
    %s1642 = scalar_lea.vmem [#allocation0], 80
    %v1643 = vld [vmem:[%s1642] sm:%s1564]
    %v1644 = vpack.c.bf16 0.0, %v1643
    %s1645 = sshll.u32 1, %s1565
    %s1646 = ssub.s32 %s1645, 1
    %s1647 = smul.addr 1, 10
    %s1648 = scalar_lea.vmem %s1, %s1647
    %1649 = vst [vmem:[%s1648] sm:%s1646] %v1644
    %s1650 = scalar_lea.vmem [#allocation0], 88
    %v1651 = vld [vmem:[%s1650] sm:%s1564]
    %v1652 = vpack.c.bf16 0.0, %v1651
    %s1653 = sshll.u32 1, %s1565
    %s1654 = ssub.s32 %s1653, 1
    %s1655 = smul.addr 1, 11
    %s1656 = scalar_lea.vmem %s1, %s1655
    %1657 = vst [vmem:[%s1656] sm:%s1654] %v1652
    %s1658 = scalar_lea.vmem [#allocation0], 96
    %v1659 = vld [vmem:[%s1658] sm:%s1564]
    %v1660 = vpack.c.bf16 0.0, %v1659
    %s1661 = sshll.u32 1, %s1565
    %s1662 = ssub.s32 %s1661, 1
    %s1663 = smul.addr 1, 12
    %s1664 = scalar_lea.vmem %s1, %s1663
    %1665 = vst [vmem:[%s1664] sm:%s1662] %v1660
    %s1666 = scalar_lea.vmem [#allocation0], 104
    %v1667 = vld [vmem:[%s1666] sm:%s1564]
    %v1668 = vpack.c.bf16 0.0, %v1667
    %s1669 = sshll.u32 1, %s1565
    %s1670 = ssub.s32 %s1669, 1
    %s1671 = smul.addr 1, 13
    %s1672 = scalar_lea.vmem %s1, %s1671
    %1673 = vst [vmem:[%s1672] sm:%s1670] %v1668
    %s1674 = scalar_lea.vmem [#allocation0], 112
    %v1675 = vld [vmem:[%s1674] sm:%s1564]
    %v1676 = vpack.c.bf16 0.0, %v1675
    %s1677 = sshll.u32 1, %s1565
    %s1678 = ssub.s32 %s1677, 1
    %s1679 = smul.addr 1, 14
    %s1680 = scalar_lea.vmem %s1, %s1679
    %1681 = vst [vmem:[%s1680] sm:%s1678] %v1676
    %s1682 = scalar_lea.vmem [#allocation0], 120
    %v1683 = vld [vmem:[%s1682] sm:%s1564]
    %v1684 = vpack.c.bf16 0.0, %v1683
    %s1685 = sshll.u32 1, %s1565
    %s1686 = ssub.s32 %s1685, 1
    %s1687 = smul.addr 1, 15
    %s1688 = scalar_lea.vmem %s1, %s1687
    %1689 = vst [vmem:[%s1688] sm:%s1686] %v1684
    %s1690 = scalar_lea.vmem [#allocation0], 128
    %v1691 = vld [vmem:[%s1690] sm:%s1564]
    %v1692 = vpack.c.bf16 0.0, %v1691
    %s1693 = sshll.u32 1, %s1565
    %s1694 = ssub.s32 %s1693, 1
    %s1695 = smul.addr 1, 16
    %s1696 = scalar_lea.vmem %s1, %s1695
    %1697 = vst [vmem:[%s1696] sm:%s1694] %v1692
    %s1698 = scalar_lea.vmem [#allocation0], 136
    %v1699 = vld [vmem:[%s1698] sm:%s1564]
    %v1700 = vpack.c.bf16 0.0, %v1699
    %s1701 = sshll.u32 1, %s1565
    %s1702 = ssub.s32 %s1701, 1
    %s1703 = smul.addr 1, 17
    %s1704 = scalar_lea.vmem %s1, %s1703
    %1705 = vst [vmem:[%s1704] sm:%s1702] %v1700
    %s1706 = scalar_lea.vmem [#allocation0], 144
    %v1707 = vld [vmem:[%s1706] sm:%s1564]
    %v1708 = vpack.c.bf16 0.0, %v1707
    %s1709 = sshll.u32 1, %s1565
    %s1710 = ssub.s32 %s1709, 1
    %s1711 = smul.addr 1, 18
    %s1712 = scalar_lea.vmem %s1, %s1711
    %1713 = vst [vmem:[%s1712] sm:%s1710] %v1708
    %s1714 = scalar_lea.vmem [#allocation0], 152
    %v1715 = vld [vmem:[%s1714] sm:%s1564]
    %v1716 = vpack.c.bf16 0.0, %v1715
    %s1717 = sshll.u32 1, %s1565
    %s1718 = ssub.s32 %s1717, 1
    %s1719 = smul.addr 1, 19
    %s1720 = scalar_lea.vmem %s1, %s1719
    %1721 = vst [vmem:[%s1720] sm:%s1718] %v1716
    %s1722 = scalar_lea.vmem [#allocation0], 160
    %v1723 = vld [vmem:[%s1722] sm:%s1564]
    %v1724 = vpack.c.bf16 0.0, %v1723
    %s1725 = sshll.u32 1, %s1565
    %s1726 = ssub.s32 %s1725, 1
    %s1727 = smul.addr 1, 20
    %s1728 = scalar_lea.vmem %s1, %s1727
    %1729 = vst [vmem:[%s1728] sm:%s1726] %v1724
    %s1730 = scalar_lea.vmem [#allocation0], 168
    %v1731 = vld [vmem:[%s1730] sm:%s1564]
    %v1732 = vpack.c.bf16 0.0, %v1731
    %s1733 = sshll.u32 1, %s1565
    %s1734 = ssub.s32 %s1733, 1
    %s1735 = smul.addr 1, 21
    %s1736 = scalar_lea.vmem %s1, %s1735
    %1737 = vst [vmem:[%s1736] sm:%s1734] %v1732
    %s1738 = scalar_lea.vmem [#allocation0], 176
    %v1739 = vld [vmem:[%s1738] sm:%s1564]
    %v1740 = vpack.c.bf16 0.0, %v1739
    %s1741 = sshll.u32 1, %s1565
    %s1742 = ssub.s32 %s1741, 1
    %s1743 = smul.addr 1, 22
    %s1744 = scalar_lea.vmem %s1, %s1743
    %1745 = vst [vmem:[%s1744] sm:%s1742] %v1740
    %s1746 = scalar_lea.vmem [#allocation0], 184
    %v1747 = vld [vmem:[%s1746] sm:%s1564]
    %v1748 = vpack.c.bf16 0.0, %v1747
    %s1749 = sshll.u32 1, %s1565
    %s1750 = ssub.s32 %s1749, 1
    %s1751 = smul.addr 1, 23
    %s1752 = scalar_lea.vmem %s1, %s1751
    %1753 = vst [vmem:[%s1752] sm:%s1750] %v1748
    %s1754 = scalar_lea.vmem [#allocation0], 192
    %v1755 = vld [vmem:[%s1754] sm:%s1564]
    %v1756 = vpack.c.bf16 0.0, %v1755
    %s1757 = sshll.u32 1, %s1565
    %s1758 = ssub.s32 %s1757, 1
    %s1759 = smul.addr 1, 24
    %s1760 = scalar_lea.vmem %s1, %s1759
    %1761 = vst [vmem:[%s1760] sm:%s1758] %v1756
    %s1762 = scalar_lea.vmem [#allocation0], 200
    %v1763 = vld [vmem:[%s1762] sm:%s1564]
    %v1764 = vpack.c.bf16 0.0, %v1763
    %s1765 = sshll.u32 1, %s1565
    %s1766 = ssub.s32 %s1765, 1
    %s1767 = smul.addr 1, 25
    %s1768 = scalar_lea.vmem %s1, %s1767
    %1769 = vst [vmem:[%s1768] sm:%s1766] %v1764
    %s1770 = scalar_lea.vmem [#allocation0], 208
    %v1771 = vld [vmem:[%s1770] sm:%s1564]
    %v1772 = vpack.c.bf16 0.0, %v1771
    %s1773 = sshll.u32 1, %s1565
    %s1774 = ssub.s32 %s1773, 1
    %s1775 = smul.addr 1, 26
    %s1776 = scalar_lea.vmem %s1, %s1775
    %1777 = vst [vmem:[%s1776] sm:%s1774] %v1772
    %s1778 = scalar_lea.vmem [#allocation0], 216
    %v1779 = vld [vmem:[%s1778] sm:%s1564]
    %v1780 = vpack.c.bf16 0.0, %v1779
    %s1781 = sshll.u32 1, %s1565
    %s1782 = ssub.s32 %s1781, 1
    %s1783 = smul.addr 1, 27
    %s1784 = scalar_lea.vmem %s1, %s1783
    %1785 = vst [vmem:[%s1784] sm:%s1782] %v1780
    %s1786 = scalar_lea.vmem [#allocation0], 224
    %v1787 = vld [vmem:[%s1786] sm:%s1564]
    %v1788 = vpack.c.bf16 0.0, %v1787
    %s1789 = sshll.u32 1, %s1565
    %s1790 = ssub.s32 %s1789, 1
    %s1791 = smul.addr 1, 28
    %s1792 = scalar_lea.vmem %s1, %s1791
    %1793 = vst [vmem:[%s1792] sm:%s1790] %v1788
    %s1794 = scalar_lea.vmem [#allocation0], 232
    %v1795 = vld [vmem:[%s1794] sm:%s1564]
    %v1796 = vpack.c.bf16 0.0, %v1795
    %s1797 = sshll.u32 1, %s1565
    %s1798 = ssub.s32 %s1797, 1
    %s1799 = smul.addr 1, 29
    %s1800 = scalar_lea.vmem %s1, %s1799
    %1801 = vst [vmem:[%s1800] sm:%s1798] %v1796
    %s1802 = scalar_lea.vmem [#allocation0], 240
    %v1803 = vld [vmem:[%s1802] sm:%s1564]
    %v1804 = vpack.c.bf16 0.0, %v1803
    %s1805 = sshll.u32 1, %s1565
    %s1806 = ssub.s32 %s1805, 1
    %s1807 = smul.addr 1, 30
    %s1808 = scalar_lea.vmem %s1, %s1807
    %1809 = vst [vmem:[%s1808] sm:%s1806] %v1804
    %s1810 = scalar_lea.vmem [#allocation0], 248
    %v1811 = vld [vmem:[%s1810] sm:%s1564]
    %v1812 = vpack.c.bf16 0.0, %v1811
    %s1813 = sshll.u32 1, %s1565
    %s1814 = ssub.s32 %s1813, 1
    %s1815 = smul.addr 1, 31
    %s1816 = scalar_lea.vmem %s1, %s1815
    %1817 = vst [vmem:[%s1816] sm:%s1814] %v1812
    %s1818 = scalar_lea.vmem [#allocation0], 256
    %v1819 = vld [vmem:[%s1818] sm:%s1564]
    %v1820 = vpack.c.bf16 0.0, %v1819
    %s1821 = sshll.u32 1, %s1565
    %s1822 = ssub.s32 %s1821, 1
    %s1823 = smul.addr 1, 32
    %s1824 = scalar_lea.vmem %s1, %s1823
    %1825 = vst [vmem:[%s1824] sm:%s1822] %v1820
    %s1826 = scalar_lea.vmem [#allocation0], 264
    %v1827 = vld [vmem:[%s1826] sm:%s1564]
    %v1828 = vpack.c.bf16 0.0, %v1827
    %s1829 = sshll.u32 1, %s1565
    %s1830 = ssub.s32 %s1829, 1
    %s1831 = smul.addr 1, 33
    %s1832 = scalar_lea.vmem %s1, %s1831
    %1833 = vst [vmem:[%s1832] sm:%s1830] %v1828
    %s1834 = scalar_lea.vmem [#allocation0], 272
    %v1835 = vld [vmem:[%s1834] sm:%s1564]
    %v1836 = vpack.c.bf16 0.0, %v1835
    %s1837 = sshll.u32 1, %s1565
    %s1838 = ssub.s32 %s1837, 1
    %s1839 = smul.addr 1, 34
    %s1840 = scalar_lea.vmem %s1, %s1839
    %1841 = vst [vmem:[%s1840] sm:%s1838] %v1836
    %s1842 = scalar_lea.vmem [#allocation0], 280
    %v1843 = vld [vmem:[%s1842] sm:%s1564]
    %v1844 = vpack.c.bf16 0.0, %v1843
    %s1845 = sshll.u32 1, %s1565
    %s1846 = ssub.s32 %s1845, 1
    %s1847 = smul.addr 1, 35
    %s1848 = scalar_lea.vmem %s1, %s1847
    %1849 = vst [vmem:[%s1848] sm:%s1846] %v1844
    %s1850 = scalar_lea.vmem [#allocation0], 288
    %v1851 = vld [vmem:[%s1850] sm:%s1564]
    %v1852 = vpack.c.bf16 0.0, %v1851
    %s1853 = sshll.u32 1, %s1565
    %s1854 = ssub.s32 %s1853, 1
    %s1855 = smul.addr 1, 36
    %s1856 = scalar_lea.vmem %s1, %s1855
    %1857 = vst [vmem:[%s1856] sm:%s1854] %v1852
    %s1858 = scalar_lea.vmem [#allocation0], 296
    %v1859 = vld [vmem:[%s1858] sm:%s1564]
    %v1860 = vpack.c.bf16 0.0, %v1859
    %s1861 = sshll.u32 1, %s1565
    %s1862 = ssub.s32 %s1861, 1
    %s1863 = smul.addr 1, 37
    %s1864 = scalar_lea.vmem %s1, %s1863
    %1865 = vst [vmem:[%s1864] sm:%s1862] %v1860
    %s1866 = scalar_lea.vmem [#allocation0], 304
    %v1867 = vld [vmem:[%s1866] sm:%s1564]
    %v1868 = vpack.c.bf16 0.0, %v1867
    %s1869 = sshll.u32 1, %s1565
    %s1870 = ssub.s32 %s1869, 1
    %s1871 = smul.addr 1, 38
    %s1872 = scalar_lea.vmem %s1, %s1871
    %1873 = vst [vmem:[%s1872] sm:%s1870] %v1868
    %s1874 = scalar_lea.vmem [#allocation0], 312
    %v1875 = vld [vmem:[%s1874] sm:%s1564]
    %v1876 = vpack.c.bf16 0.0, %v1875
    %s1877 = sshll.u32 1, %s1565
    %s1878 = ssub.s32 %s1877, 1
    %s1879 = smul.addr 1, 39
    %s1880 = scalar_lea.vmem %s1, %s1879
    %1881 = vst [vmem:[%s1880] sm:%s1878] %v1876
    %s1882 = scalar_lea.vmem [#allocation0], 320
    %v1883 = vld [vmem:[%s1882] sm:%s1564]
    %v1884 = vpack.c.bf16 0.0, %v1883
    %s1885 = sshll.u32 1, %s1565
    %s1886 = ssub.s32 %s1885, 1
    %s1887 = smul.addr 1, 40
    %s1888 = scalar_lea.vmem %s1, %s1887
    %1889 = vst [vmem:[%s1888] sm:%s1886] %v1884
    %s1890 = scalar_lea.vmem [#allocation0], 328
    %v1891 = vld [vmem:[%s1890] sm:%s1564]
    %v1892 = vpack.c.bf16 0.0, %v1891
    %s1893 = sshll.u32 1, %s1565
    %s1894 = ssub.s32 %s1893, 1
    %s1895 = smul.addr 1, 41
    %s1896 = scalar_lea.vmem %s1, %s1895
    %1897 = vst [vmem:[%s1896] sm:%s1894] %v1892
    %s1898 = scalar_lea.vmem [#allocation0], 336
    %v1899 = vld [vmem:[%s1898] sm:%s1564]
    %v1900 = vpack.c.bf16 0.0, %v1899
    %s1901 = sshll.u32 1, %s1565
    %s1902 = ssub.s32 %s1901, 1
    %s1903 = smul.addr 1, 42
    %s1904 = scalar_lea.vmem %s1, %s1903
    %1905 = vst [vmem:[%s1904] sm:%s1902] %v1900
    %s1906 = scalar_lea.vmem [#allocation0], 344
    %v1907 = vld [vmem:[%s1906] sm:%s1564]
    %v1908 = vpack.c.bf16 0.0, %v1907
    %s1909 = sshll.u32 1, %s1565
    %s1910 = ssub.s32 %s1909, 1
    %s1911 = smul.addr 1, 43
    %s1912 = scalar_lea.vmem %s1, %s1911
    %1913 = vst [vmem:[%s1912] sm:%s1910] %v1908
    %s1914 = scalar_lea.vmem [#allocation0], 352
    %v1915 = vld [vmem:[%s1914] sm:%s1564]
    %v1916 = vpack.c.bf16 0.0, %v1915
    %s1917 = sshll.u32 1, %s1565
    %s1918 = ssub.s32 %s1917, 1
    %s1919 = smul.addr 1, 44
    %s1920 = scalar_lea.vmem %s1, %s1919
    %1921 = vst [vmem:[%s1920] sm:%s1918] %v1916
    %s1922 = scalar_lea.vmem [#allocation0], 360
    %v1923 = vld [vmem:[%s1922] sm:%s1564]
    %v1924 = vpack.c.bf16 0.0, %v1923
    %s1925 = sshll.u32 1, %s1565
    %s1926 = ssub.s32 %s1925, 1
    %s1927 = smul.addr 1, 45
    %s1928 = scalar_lea.vmem %s1, %s1927
    %1929 = vst [vmem:[%s1928] sm:%s1926] %v1924
    %s1930 = scalar_lea.vmem [#allocation0], 368
    %v1931 = vld [vmem:[%s1930] sm:%s1564]
    %v1932 = vpack.c.bf16 0.0, %v1931
    %s1933 = sshll.u32 1, %s1565
    %s1934 = ssub.s32 %s1933, 1
    %s1935 = smul.addr 1, 46
    %s1936 = scalar_lea.vmem %s1, %s1935
    %1937 = vst [vmem:[%s1936] sm:%s1934] %v1932
    %s1938 = scalar_lea.vmem [#allocation0], 376
    %v1939 = vld [vmem:[%s1938] sm:%s1564]
    %v1940 = vpack.c.bf16 0.0, %v1939
    %s1941 = sshll.u32 1, %s1565
    %s1942 = ssub.s32 %s1941, 1
    %s1943 = smul.addr 1, 47
    %s1944 = scalar_lea.vmem %s1, %s1943
    %1945 = vst [vmem:[%s1944] sm:%s1942] %v1940
    %s1946 = scalar_lea.vmem [#allocation0], 384
    %v1947 = vld [vmem:[%s1946] sm:%s1564]
    %v1948 = vpack.c.bf16 0.0, %v1947
    %s1949 = sshll.u32 1, %s1565
    %s1950 = ssub.s32 %s1949, 1
    %s1951 = smul.addr 1, 48
    %s1952 = scalar_lea.vmem %s1, %s1951
    %1953 = vst [vmem:[%s1952] sm:%s1950] %v1948
    %s1954 = scalar_lea.vmem [#allocation0], 392
    %v1955 = vld [vmem:[%s1954] sm:%s1564]
    %v1956 = vpack.c.bf16 0.0, %v1955
    %s1957 = sshll.u32 1, %s1565
    %s1958 = ssub.s32 %s1957, 1
    %s1959 = smul.addr 1, 49
    %s1960 = scalar_lea.vmem %s1, %s1959
    %1961 = vst [vmem:[%s1960] sm:%s1958] %v1956
    %s1962 = scalar_lea.vmem [#allocation0], 400
    %v1963 = vld [vmem:[%s1962] sm:%s1564]
    %v1964 = vpack.c.bf16 0.0, %v1963
    %s1965 = sshll.u32 1, %s1565
    %s1966 = ssub.s32 %s1965, 1
    %s1967 = smul.addr 1, 50
    %s1968 = scalar_lea.vmem %s1, %s1967
    %1969 = vst [vmem:[%s1968] sm:%s1966] %v1964
    %s1970 = scalar_lea.vmem [#allocation0], 408
    %v1971 = vld [vmem:[%s1970] sm:%s1564]
    %v1972 = vpack.c.bf16 0.0, %v1971
    %s1973 = sshll.u32 1, %s1565
    %s1974 = ssub.s32 %s1973, 1
    %s1975 = smul.addr 1, 51
    %s1976 = scalar_lea.vmem %s1, %s1975
    %1977 = vst [vmem:[%s1976] sm:%s1974] %v1972
    %s1978 = scalar_lea.vmem [#allocation0], 416
    %v1979 = vld [vmem:[%s1978] sm:%s1564]
    %v1980 = vpack.c.bf16 0.0, %v1979
    %s1981 = sshll.u32 1, %s1565
    %s1982 = ssub.s32 %s1981, 1
    %s1983 = smul.addr 1, 52
    %s1984 = scalar_lea.vmem %s1, %s1983
    %1985 = vst [vmem:[%s1984] sm:%s1982] %v1980
    %s1986 = scalar_lea.vmem [#allocation0], 424
    %v1987 = vld [vmem:[%s1986] sm:%s1564]
    %v1988 = vpack.c.bf16 0.0, %v1987
    %s1989 = sshll.u32 1, %s1565
    %s1990 = ssub.s32 %s1989, 1
    %s1991 = smul.addr 1, 53
    %s1992 = scalar_lea.vmem %s1, %s1991
    %1993 = vst [vmem:[%s1992] sm:%s1990] %v1988
    %s1994 = scalar_lea.vmem [#allocation0], 432
    %v1995 = vld [vmem:[%s1994] sm:%s1564]
    %v1996 = vpack.c.bf16 0.0, %v1995
    %s1997 = sshll.u32 1, %s1565
    %s1998 = ssub.s32 %s1997, 1
    %s1999 = smul.addr 1, 54
    %s2000 = scalar_lea.vmem %s1, %s1999
    %2001 = vst [vmem:[%s2000] sm:%s1998] %v1996
    %s2002 = scalar_lea.vmem [#allocation0], 440
    %v2003 = vld [vmem:[%s2002] sm:%s1564]
    %v2004 = vpack.c.bf16 0.0, %v2003
    %s2005 = sshll.u32 1, %s1565
    %s2006 = ssub.s32 %s2005, 1
    %s2007 = smul.addr 1, 55
    %s2008 = scalar_lea.vmem %s1, %s2007
    %2009 = vst [vmem:[%s2008] sm:%s2006] %v2004
    %s2010 = scalar_lea.vmem [#allocation0], 448
    %v2011 = vld [vmem:[%s2010] sm:%s1564]
    %v2012 = vpack.c.bf16 0.0, %v2011
    %s2013 = sshll.u32 1, %s1565
    %s2014 = ssub.s32 %s2013, 1
    %s2015 = smul.addr 1, 56
    %s2016 = scalar_lea.vmem %s1, %s2015
    %2017 = vst [vmem:[%s2016] sm:%s2014] %v2012
    %s2018 = scalar_lea.vmem [#allocation0], 456
    %v2019 = vld [vmem:[%s2018] sm:%s1564]
    %v2020 = vpack.c.bf16 0.0, %v2019
    %s2021 = sshll.u32 1, %s1565
    %s2022 = ssub.s32 %s2021, 1
    %s2023 = smul.addr 1, 57
    %s2024 = scalar_lea.vmem %s1, %s2023
    %2025 = vst [vmem:[%s2024] sm:%s2022] %v2020
    %s2026 = scalar_lea.vmem [#allocation0], 464
    %v2027 = vld [vmem:[%s2026] sm:%s1564]
    %v2028 = vpack.c.bf16 0.0, %v2027
    %s2029 = sshll.u32 1, %s1565
    %s2030 = ssub.s32 %s2029, 1
    %s2031 = smul.addr 1, 58
    %s2032 = scalar_lea.vmem %s1, %s2031
    %2033 = vst [vmem:[%s2032] sm:%s2030] %v2028
    %s2034 = scalar_lea.vmem [#allocation0], 472
    %v2035 = vld [vmem:[%s2034] sm:%s1564]
    %v2036 = vpack.c.bf16 0.0, %v2035
    %s2037 = sshll.u32 1, %s1565
    %s2038 = ssub.s32 %s2037, 1
    %s2039 = smul.addr 1, 59
    %s2040 = scalar_lea.vmem %s1, %s2039
    %2041 = vst [vmem:[%s2040] sm:%s2038] %v2036
    %s2042 = scalar_lea.vmem [#allocation0], 480
    %v2043 = vld [vmem:[%s2042] sm:%s1564]
    %v2044 = vpack.c.bf16 0.0, %v2043
    %s2045 = sshll.u32 1, %s1565
    %s2046 = ssub.s32 %s2045, 1
    %s2047 = smul.addr 1, 60
    %s2048 = scalar_lea.vmem %s1, %s2047
    %2049 = vst [vmem:[%s2048] sm:%s2046] %v2044
    %s2050 = scalar_lea.vmem [#allocation0], 488
    %v2051 = vld [vmem:[%s2050] sm:%s1564]
    %v2052 = vpack.c.bf16 0.0, %v2051
    %s2053 = sshll.u32 1, %s1565
    %s2054 = ssub.s32 %s2053, 1
    %s2055 = smul.addr 1, 61
    %s2056 = scalar_lea.vmem %s1, %s2055
    %2057 = vst [vmem:[%s2056] sm:%s2054] %v2052
    %s2058 = scalar_lea.vmem [#allocation0], 496
    %v2059 = vld [vmem:[%s2058] sm:%s1564]
    %v2060 = vpack.c.bf16 0.0, %v2059
    %s2061 = sshll.u32 1, %s1565
    %s2062 = ssub.s32 %s2061, 1
    %s2063 = smul.addr 1, 62
    %s2064 = scalar_lea.vmem %s1, %s2063
    %2065 = vst [vmem:[%s2064] sm:%s2062] %v2060
    %s2066 = scalar_lea.vmem [#allocation0], 504
    %v2067 = vld [vmem:[%s2066] sm:%s1564]
    %v2068 = vpack.c.bf16 0.0, %v2067
    %s2069 = sshll.u32 1, %s1565
    %s2070 = ssub.s32 %s2069, 1
    %s2071 = smul.addr 1, 63
    %s2072 = scalar_lea.vmem %s1, %s2071
    %2073 = vst [vmem:[%s2072] sm:%s2070] %v2068
    %s2074 = scalar_lea.vmem [#allocation0], 512
    %v2075 = vld [vmem:[%s2074] sm:%s1564]
    %v2076 = vpack.c.bf16 0.0, %v2075
    %s2077 = sshll.u32 1, %s1565
    %s2078 = ssub.s32 %s2077, 1
    %s2079 = smul.addr 1, 64
    %s2080 = scalar_lea.vmem %s1, %s2079
    %2081 = vst [vmem:[%s2080] sm:%s2078] %v2076
    %s2082 = scalar_lea.vmem [#allocation0], 520
    %v2083 = vld [vmem:[%s2082] sm:%s1564]
    %v2084 = vpack.c.bf16 0.0, %v2083
    %s2085 = sshll.u32 1, %s1565
    %s2086 = ssub.s32 %s2085, 1
    %s2087 = smul.addr 1, 65
    %s2088 = scalar_lea.vmem %s1, %s2087
    %2089 = vst [vmem:[%s2088] sm:%s2086] %v2084
    %s2090 = scalar_lea.vmem [#allocation0], 528
    %v2091 = vld [vmem:[%s2090] sm:%s1564]
    %v2092 = vpack.c.bf16 0.0, %v2091
    %s2093 = sshll.u32 1, %s1565
    %s2094 = ssub.s32 %s2093, 1
    %s2095 = smul.addr 1, 66
    %s2096 = scalar_lea.vmem %s1, %s2095
    %2097 = vst [vmem:[%s2096] sm:%s2094] %v2092
    %s2098 = scalar_lea.vmem [#allocation0], 536
    %v2099 = vld [vmem:[%s2098] sm:%s1564]
    %v2100 = vpack.c.bf16 0.0, %v2099
    %s2101 = sshll.u32 1, %s1565
    %s2102 = ssub.s32 %s2101, 1
    %s2103 = smul.addr 1, 67
    %s2104 = scalar_lea.vmem %s1, %s2103
    %2105 = vst [vmem:[%s2104] sm:%s2102] %v2100
    %s2106 = scalar_lea.vmem [#allocation0], 544
    %v2107 = vld [vmem:[%s2106] sm:%s1564]
    %v2108 = vpack.c.bf16 0.0, %v2107
    %s2109 = sshll.u32 1, %s1565
    %s2110 = ssub.s32 %s2109, 1
    %s2111 = smul.addr 1, 68
    %s2112 = scalar_lea.vmem %s1, %s2111
    %2113 = vst [vmem:[%s2112] sm:%s2110] %v2108
    %s2114 = scalar_lea.vmem [#allocation0], 552
    %v2115 = vld [vmem:[%s2114] sm:%s1564]
    %v2116 = vpack.c.bf16 0.0, %v2115
    %s2117 = sshll.u32 1, %s1565
    %s2118 = ssub.s32 %s2117, 1
    %s2119 = smul.addr 1, 69
    %s2120 = scalar_lea.vmem %s1, %s2119
    %2121 = vst [vmem:[%s2120] sm:%s2118] %v2116
    %s2122 = scalar_lea.vmem [#allocation0], 560
    %v2123 = vld [vmem:[%s2122] sm:%s1564]
    %v2124 = vpack.c.bf16 0.0, %v2123
    %s2125 = sshll.u32 1, %s1565
    %s2126 = ssub.s32 %s2125, 1
    %s2127 = smul.addr 1, 70
    %s2128 = scalar_lea.vmem %s1, %s2127
    %2129 = vst [vmem:[%s2128] sm:%s2126] %v2124
    %s2130 = scalar_lea.vmem [#allocation0], 568
    %v2131 = vld [vmem:[%s2130] sm:%s1564]
    %v2132 = vpack.c.bf16 0.0, %v2131
    %s2133 = sshll.u32 1, %s1565
    %s2134 = ssub.s32 %s2133, 1
    %s2135 = smul.addr 1, 71
    %s2136 = scalar_lea.vmem %s1, %s2135
    %2137 = vst [vmem:[%s2136] sm:%s2134] %v2132
    %s2138 = scalar_lea.vmem [#allocation0], 576
    %v2139 = vld [vmem:[%s2138] sm:%s1564]
    %v2140 = vpack.c.bf16 0.0, %v2139
    %s2141 = sshll.u32 1, %s1565
    %s2142 = ssub.s32 %s2141, 1
    %s2143 = smul.addr 1, 72
    %s2144 = scalar_lea.vmem %s1, %s2143
    %2145 = vst [vmem:[%s2144] sm:%s2142] %v2140
    %s2146 = scalar_lea.vmem [#allocation0], 584
    %v2147 = vld [vmem:[%s2146] sm:%s1564]
    %v2148 = vpack.c.bf16 0.0, %v2147
    %s2149 = sshll.u32 1, %s1565
    %s2150 = ssub.s32 %s2149, 1
    %s2151 = smul.addr 1, 73
    %s2152 = scalar_lea.vmem %s1, %s2151
    %2153 = vst [vmem:[%s2152] sm:%s2150] %v2148
    %s2154 = scalar_lea.vmem [#allocation0], 592
    %v2155 = vld [vmem:[%s2154] sm:%s1564]
    %v2156 = vpack.c.bf16 0.0, %v2155
    %s2157 = sshll.u32 1, %s1565
    %s2158 = ssub.s32 %s2157, 1
    %s2159 = smul.addr 1, 74
    %s2160 = scalar_lea.vmem %s1, %s2159
    %2161 = vst [vmem:[%s2160] sm:%s2158] %v2156
    %s2162 = scalar_lea.vmem [#allocation0], 600
    %v2163 = vld [vmem:[%s2162] sm:%s1564]
    %v2164 = vpack.c.bf16 0.0, %v2163
    %s2165 = sshll.u32 1, %s1565
    %s2166 = ssub.s32 %s2165, 1
    %s2167 = smul.addr 1, 75
    %s2168 = scalar_lea.vmem %s1, %s2167
    %2169 = vst [vmem:[%s2168] sm:%s2166] %v2164
    %s2170 = scalar_lea.vmem [#allocation0], 608
    %v2171 = vld [vmem:[%s2170] sm:%s1564]
    %v2172 = vpack.c.bf16 0.0, %v2171
    %s2173 = sshll.u32 1, %s1565
    %s2174 = ssub.s32 %s2173, 1
    %s2175 = smul.addr 1, 76
    %s2176 = scalar_lea.vmem %s1, %s2175
    %2177 = vst [vmem:[%s2176] sm:%s2174] %v2172
    %s2178 = scalar_lea.vmem [#allocation0], 616
    %v2179 = vld [vmem:[%s2178] sm:%s1564]
    %v2180 = vpack.c.bf16 0.0, %v2179
    %s2181 = sshll.u32 1, %s1565
    %s2182 = ssub.s32 %s2181, 1
    %s2183 = smul.addr 1, 77
    %s2184 = scalar_lea.vmem %s1, %s2183
    %2185 = vst [vmem:[%s2184] sm:%s2182] %v2180
    %s2186 = scalar_lea.vmem [#allocation0], 624
    %v2187 = vld [vmem:[%s2186] sm:%s1564]
    %v2188 = vpack.c.bf16 0.0, %v2187
    %s2189 = sshll.u32 1, %s1565
    %s2190 = ssub.s32 %s2189, 1
    %s2191 = smul.addr 1, 78
    %s2192 = scalar_lea.vmem %s1, %s2191
    %2193 = vst [vmem:[%s2192] sm:%s2190] %v2188
    %s2194 = scalar_lea.vmem [#allocation0], 632
    %v2195 = vld [vmem:[%s2194] sm:%s1564]
    %v2196 = vpack.c.bf16 0.0, %v2195
    %s2197 = sshll.u32 1, %s1565
    %s2198 = ssub.s32 %s2197, 1
    %s2199 = smul.addr 1, 79
    %s2200 = scalar_lea.vmem %s1, %s2199
    %2201 = vst [vmem:[%s2200] sm:%s2198] %v2196
    %s2202 = scalar_lea.vmem [#allocation0], 640
    %v2203 = vld [vmem:[%s2202] sm:%s1564]
    %v2204 = vpack.c.bf16 0.0, %v2203
    %s2205 = sshll.u32 1, %s1565
    %s2206 = ssub.s32 %s2205, 1
    %s2207 = smul.addr 1, 80
    %s2208 = scalar_lea.vmem %s1, %s2207
    %2209 = vst [vmem:[%s2208] sm:%s2206] %v2204
    %s2210 = scalar_lea.vmem [#allocation0], 648
    %v2211 = vld [vmem:[%s2210] sm:%s1564]
    %v2212 = vpack.c.bf16 0.0, %v2211
    %s2213 = sshll.u32 1, %s1565
    %s2214 = ssub.s32 %s2213, 1
    %s2215 = smul.addr 1, 81
    %s2216 = scalar_lea.vmem %s1, %s2215
    %2217 = vst [vmem:[%s2216] sm:%s2214] %v2212
    %s2218 = scalar_lea.vmem [#allocation0], 656
    %v2219 = vld [vmem:[%s2218] sm:%s1564]
    %v2220 = vpack.c.bf16 0.0, %v2219
    %s2221 = sshll.u32 1, %s1565
    %s2222 = ssub.s32 %s2221, 1
    %s2223 = smul.addr 1, 82
    %s2224 = scalar_lea.vmem %s1, %s2223
    %2225 = vst [vmem:[%s2224] sm:%s2222] %v2220
    %s2226 = scalar_lea.vmem [#allocation0], 664
    %v2227 = vld [vmem:[%s2226] sm:%s1564]
    %v2228 = vpack.c.bf16 0.0, %v2227
    %s2229 = sshll.u32 1, %s1565
    %s2230 = ssub.s32 %s2229, 1
    %s2231 = smul.addr 1, 83
    %s2232 = scalar_lea.vmem %s1, %s2231
    %2233 = vst [vmem:[%s2232] sm:%s2230] %v2228
    %s2234 = scalar_lea.vmem [#allocation0], 672
    %v2235 = vld [vmem:[%s2234] sm:%s1564]
    %v2236 = vpack.c.bf16 0.0, %v2235
    %s2237 = sshll.u32 1, %s1565
    %s2238 = ssub.s32 %s2237, 1
    %s2239 = smul.addr 1, 84
    %s2240 = scalar_lea.vmem %s1, %s2239
    %2241 = vst [vmem:[%s2240] sm:%s2238] %v2236
    %s2242 = scalar_lea.vmem [#allocation0], 680
    %v2243 = vld [vmem:[%s2242] sm:%s1564]
    %v2244 = vpack.c.bf16 0.0, %v2243
    %s2245 = sshll.u32 1, %s1565
    %s2246 = ssub.s32 %s2245, 1
    %s2247 = smul.addr 1, 85
    %s2248 = scalar_lea.vmem %s1, %s2247
    %2249 = vst [vmem:[%s2248] sm:%s2246] %v2244
    %s2250 = scalar_lea.vmem [#allocation0], 688
    %v2251 = vld [vmem:[%s2250] sm:%s1564]
    %v2252 = vpack.c.bf16 0.0, %v2251
    %s2253 = sshll.u32 1, %s1565
    %s2254 = ssub.s32 %s2253, 1
    %s2255 = smul.addr 1, 86
    %s2256 = scalar_lea.vmem %s1, %s2255
    %2257 = vst [vmem:[%s2256] sm:%s2254] %v2252
    %s2258 = scalar_lea.vmem [#allocation0], 696
    %v2259 = vld [vmem:[%s2258] sm:%s1564]
    %v2260 = vpack.c.bf16 0.0, %v2259
    %s2261 = sshll.u32 1, %s1565
    %s2262 = ssub.s32 %s2261, 1
    %s2263 = smul.addr 1, 87
    %s2264 = scalar_lea.vmem %s1, %s2263
    %2265 = vst [vmem:[%s2264] sm:%s2262] %v2260
    %s2266 = scalar_lea.vmem [#allocation0], 704
    %v2267 = vld [vmem:[%s2266] sm:%s1564]
    %v2268 = vpack.c.bf16 0.0, %v2267
    %s2269 = sshll.u32 1, %s1565
    %s2270 = ssub.s32 %s2269, 1
    %s2271 = smul.addr 1, 88
    %s2272 = scalar_lea.vmem %s1, %s2271
    %2273 = vst [vmem:[%s2272] sm:%s2270] %v2268
    %s2274 = scalar_lea.vmem [#allocation0], 712
    %v2275 = vld [vmem:[%s2274] sm:%s1564]
    %v2276 = vpack.c.bf16 0.0, %v2275
    %s2277 = sshll.u32 1, %s1565
    %s2278 = ssub.s32 %s2277, 1
    %s2279 = smul.addr 1, 89
    %s2280 = scalar_lea.vmem %s1, %s2279
    %2281 = vst [vmem:[%s2280] sm:%s2278] %v2276
    %s2282 = scalar_lea.vmem [#allocation0], 720
    %v2283 = vld [vmem:[%s2282] sm:%s1564]
    %v2284 = vpack.c.bf16 0.0, %v2283
    %s2285 = sshll.u32 1, %s1565
    %s2286 = ssub.s32 %s2285, 1
    %s2287 = smul.addr 1, 90
    %s2288 = scalar_lea.vmem %s1, %s2287
    %2289 = vst [vmem:[%s2288] sm:%s2286] %v2284
    %s2290 = scalar_lea.vmem [#allocation0], 728
    %v2291 = vld [vmem:[%s2290] sm:%s1564]
    %v2292 = vpack.c.bf16 0.0, %v2291
    %s2293 = sshll.u32 1, %s1565
    %s2294 = ssub.s32 %s2293, 1
    %s2295 = smul.addr 1, 91
    %s2296 = scalar_lea.vmem %s1, %s2295
    %2297 = vst [vmem:[%s2296] sm:%s2294] %v2292
    %s2298 = scalar_lea.vmem [#allocation0], 736
    %v2299 = vld [vmem:[%s2298] sm:%s1564]
    %v2300 = vpack.c.bf16 0.0, %v2299
    %s2301 = sshll.u32 1, %s1565
    %s2302 = ssub.s32 %s2301, 1
    %s2303 = smul.addr 1, 92
    %s2304 = scalar_lea.vmem %s1, %s2303
    %2305 = vst [vmem:[%s2304] sm:%s2302] %v2300
    %s2306 = scalar_lea.vmem [#allocation0], 744
    %v2307 = vld [vmem:[%s2306] sm:%s1564]
    %v2308 = vpack.c.bf16 0.0, %v2307
    %s2309 = sshll.u32 1, %s1565
    %s2310 = ssub.s32 %s2309, 1
    %s2311 = smul.addr 1, 93
    %s2312 = scalar_lea.vmem %s1, %s2311
    %2313 = vst [vmem:[%s2312] sm:%s2310] %v2308
    %s2314 = scalar_lea.vmem [#allocation0], 752
    %v2315 = vld [vmem:[%s2314] sm:%s1564]
    %v2316 = vpack.c.bf16 0.0, %v2315
    %s2317 = sshll.u32 1, %s1565
    %s2318 = ssub.s32 %s2317, 1
    %s2319 = smul.addr 1, 94
    %s2320 = scalar_lea.vmem %s1, %s2319
    %2321 = vst [vmem:[%s2320] sm:%s2318] %v2316
    %s2322 = scalar_lea.vmem [#allocation0], 760
    %v2323 = vld [vmem:[%s2322] sm:%s1564]
    %v2324 = vpack.c.bf16 0.0, %v2323
    %s2325 = sshll.u32 1, %s1565
    %s2326 = ssub.s32 %s2325, 1
    %s2327 = smul.addr 1, 95
    %s2328 = scalar_lea.vmem %s1, %s2327
    %2329 = vst [vmem:[%s2328] sm:%s2326] %v2324
    %s2330 = scalar_lea.vmem [#allocation0], 768
    %v2331 = vld [vmem:[%s2330] sm:%s1564]
    %v2332 = vpack.c.bf16 0.0, %v2331
    %s2333 = sshll.u32 1, %s1565
    %s2334 = ssub.s32 %s2333, 1
    %s2335 = smul.addr 1, 96
    %s2336 = scalar_lea.vmem %s1, %s2335
    %2337 = vst [vmem:[%s2336] sm:%s2334] %v2332
    %s2338 = scalar_lea.vmem [#allocation0], 776
    %v2339 = vld [vmem:[%s2338] sm:%s1564]
    %v2340 = vpack.c.bf16 0.0, %v2339
    %s2341 = sshll.u32 1, %s1565
    %s2342 = ssub.s32 %s2341, 1
    %s2343 = smul.addr 1, 97
    %s2344 = scalar_lea.vmem %s1, %s2343
    %2345 = vst [vmem:[%s2344] sm:%s2342] %v2340
    %s2346 = scalar_lea.vmem [#allocation0], 784
    %v2347 = vld [vmem:[%s2346] sm:%s1564]
    %v2348 = vpack.c.bf16 0.0, %v2347
    %s2349 = sshll.u32 1, %s1565
    %s2350 = ssub.s32 %s2349, 1
    %s2351 = smul.addr 1, 98
    %s2352 = scalar_lea.vmem %s1, %s2351
    %2353 = vst [vmem:[%s2352] sm:%s2350] %v2348
    %s2354 = scalar_lea.vmem [#allocation0], 792
    %v2355 = vld [vmem:[%s2354] sm:%s1564]
    %v2356 = vpack.c.bf16 0.0, %v2355
    %s2357 = sshll.u32 1, %s1565
    %s2358 = ssub.s32 %s2357, 1
    %s2359 = smul.addr 1, 99
    %s2360 = scalar_lea.vmem %s1, %s2359
    %2361 = vst [vmem:[%s2360] sm:%s2358] %v2356
    %s2362 = scalar_lea.vmem [#allocation0], 800
    %v2363 = vld [vmem:[%s2362] sm:%s1564]
    %v2364 = vpack.c.bf16 0.0, %v2363
    %s2365 = sshll.u32 1, %s1565
    %s2366 = ssub.s32 %s2365, 1
    %s2367 = smul.addr 1, 100
    %s2368 = scalar_lea.vmem %s1, %s2367
    %2369 = vst [vmem:[%s2368] sm:%s2366] %v2364
    %s2370 = scalar_lea.vmem [#allocation0], 808
    %v2371 = vld [vmem:[%s2370] sm:%s1564]
    %v2372 = vpack.c.bf16 0.0, %v2371
    %s2373 = sshll.u32 1, %s1565
    %s2374 = ssub.s32 %s2373, 1
    %s2375 = smul.addr 1, 101
    %s2376 = scalar_lea.vmem %s1, %s2375
    %2377 = vst [vmem:[%s2376] sm:%s2374] %v2372
    %s2378 = scalar_lea.vmem [#allocation0], 816
    %v2379 = vld [vmem:[%s2378] sm:%s1564]
    %v2380 = vpack.c.bf16 0.0, %v2379
    %s2381 = sshll.u32 1, %s1565
    %s2382 = ssub.s32 %s2381, 1
    %s2383 = smul.addr 1, 102
    %s2384 = scalar_lea.vmem %s1, %s2383
    %2385 = vst [vmem:[%s2384] sm:%s2382] %v2380
    %s2386 = scalar_lea.vmem [#allocation0], 824
    %v2387 = vld [vmem:[%s2386] sm:%s1564]
    %v2388 = vpack.c.bf16 0.0, %v2387
    %s2389 = sshll.u32 1, %s1565
    %s2390 = ssub.s32 %s2389, 1
    %s2391 = smul.addr 1, 103
    %s2392 = scalar_lea.vmem %s1, %s2391
    %2393 = vst [vmem:[%s2392] sm:%s2390] %v2388
    %s2394 = scalar_lea.vmem [#allocation0], 832
    %v2395 = vld [vmem:[%s2394] sm:%s1564]
    %v2396 = vpack.c.bf16 0.0, %v2395
    %s2397 = sshll.u32 1, %s1565
    %s2398 = ssub.s32 %s2397, 1
    %s2399 = smul.addr 1, 104
    %s2400 = scalar_lea.vmem %s1, %s2399
    %2401 = vst [vmem:[%s2400] sm:%s2398] %v2396
    %s2402 = scalar_lea.vmem [#allocation0], 840
    %v2403 = vld [vmem:[%s2402] sm:%s1564]
    %v2404 = vpack.c.bf16 0.0, %v2403
    %s2405 = sshll.u32 1, %s1565
    %s2406 = ssub.s32 %s2405, 1
    %s2407 = smul.addr 1, 105
    %s2408 = scalar_lea.vmem %s1, %s2407
    %2409 = vst [vmem:[%s2408] sm:%s2406] %v2404
    %s2410 = scalar_lea.vmem [#allocation0], 848
    %v2411 = vld [vmem:[%s2410] sm:%s1564]
    %v2412 = vpack.c.bf16 0.0, %v2411
    %s2413 = sshll.u32 1, %s1565
    %s2414 = ssub.s32 %s2413, 1
    %s2415 = smul.addr 1, 106
    %s2416 = scalar_lea.vmem %s1, %s2415
    %2417 = vst [vmem:[%s2416] sm:%s2414] %v2412
    %s2418 = scalar_lea.vmem [#allocation0], 856
    %v2419 = vld [vmem:[%s2418] sm:%s1564]
    %v2420 = vpack.c.bf16 0.0, %v2419
    %s2421 = sshll.u32 1, %s1565
    %s2422 = ssub.s32 %s2421, 1
    %s2423 = smul.addr 1, 107
    %s2424 = scalar_lea.vmem %s1, %s2423
    %2425 = vst [vmem:[%s2424] sm:%s2422] %v2420
    %s2426 = scalar_lea.vmem [#allocation0], 864
    %v2427 = vld [vmem:[%s2426] sm:%s1564]
    %v2428 = vpack.c.bf16 0.0, %v2427
    %s2429 = sshll.u32 1, %s1565
    %s2430 = ssub.s32 %s2429, 1
    %s2431 = smul.addr 1, 108
    %s2432 = scalar_lea.vmem %s1, %s2431
    %2433 = vst [vmem:[%s2432] sm:%s2430] %v2428
    %s2434 = scalar_lea.vmem [#allocation0], 872
    %v2435 = vld [vmem:[%s2434] sm:%s1564]
    %v2436 = vpack.c.bf16 0.0, %v2435
    %s2437 = sshll.u32 1, %s1565
    %s2438 = ssub.s32 %s2437, 1
    %s2439 = smul.addr 1, 109
    %s2440 = scalar_lea.vmem %s1, %s2439
    %2441 = vst [vmem:[%s2440] sm:%s2438] %v2436
    %s2442 = scalar_lea.vmem [#allocation0], 880
    %v2443 = vld [vmem:[%s2442] sm:%s1564]
    %v2444 = vpack.c.bf16 0.0, %v2443
    %s2445 = sshll.u32 1, %s1565
    %s2446 = ssub.s32 %s2445, 1
    %s2447 = smul.addr 1, 110
    %s2448 = scalar_lea.vmem %s1, %s2447
    %2449 = vst [vmem:[%s2448] sm:%s2446] %v2444
    %s2450 = scalar_lea.vmem [#allocation0], 888
    %v2451 = vld [vmem:[%s2450] sm:%s1564]
    %v2452 = vpack.c.bf16 0.0, %v2451
    %s2453 = sshll.u32 1, %s1565
    %s2454 = ssub.s32 %s2453, 1
    %s2455 = smul.addr 1, 111
    %s2456 = scalar_lea.vmem %s1, %s2455
    %2457 = vst [vmem:[%s2456] sm:%s2454] %v2452
    %s2458 = scalar_lea.vmem [#allocation0], 896
    %v2459 = vld [vmem:[%s2458] sm:%s1564]
    %v2460 = vpack.c.bf16 0.0, %v2459
    %s2461 = sshll.u32 1, %s1565
    %s2462 = ssub.s32 %s2461, 1
    %s2463 = smul.addr 1, 112
    %s2464 = scalar_lea.vmem %s1, %s2463
    %2465 = vst [vmem:[%s2464] sm:%s2462] %v2460
    %s2466 = scalar_lea.vmem [#allocation0], 904
    %v2467 = vld [vmem:[%s2466] sm:%s1564]
    %v2468 = vpack.c.bf16 0.0, %v2467
    %s2469 = sshll.u32 1, %s1565
    %s2470 = ssub.s32 %s2469, 1
    %s2471 = smul.addr 1, 113
    %s2472 = scalar_lea.vmem %s1, %s2471
    %2473 = vst [vmem:[%s2472] sm:%s2470] %v2468
    %s2474 = scalar_lea.vmem [#allocation0], 912
    %v2475 = vld [vmem:[%s2474] sm:%s1564]
    %v2476 = vpack.c.bf16 0.0, %v2475
    %s2477 = sshll.u32 1, %s1565
    %s2478 = ssub.s32 %s2477, 1
    %s2479 = smul.addr 1, 114
    %s2480 = scalar_lea.vmem %s1, %s2479
    %2481 = vst [vmem:[%s2480] sm:%s2478] %v2476
    %s2482 = scalar_lea.vmem [#allocation0], 920
    %v2483 = vld [vmem:[%s2482] sm:%s1564]
    %v2484 = vpack.c.bf16 0.0, %v2483
    %s2485 = sshll.u32 1, %s1565
    %s2486 = ssub.s32 %s2485, 1
    %s2487 = smul.addr 1, 115
    %s2488 = scalar_lea.vmem %s1, %s2487
    %2489 = vst [vmem:[%s2488] sm:%s2486] %v2484
    %s2490 = scalar_lea.vmem [#allocation0], 928
    %v2491 = vld [vmem:[%s2490] sm:%s1564]
    %v2492 = vpack.c.bf16 0.0, %v2491
    %s2493 = sshll.u32 1, %s1565
    %s2494 = ssub.s32 %s2493, 1
    %s2495 = smul.addr 1, 116
    %s2496 = scalar_lea.vmem %s1, %s2495
    %2497 = vst [vmem:[%s2496] sm:%s2494] %v2492
    %s2498 = scalar_lea.vmem [#allocation0], 936
    %v2499 = vld [vmem:[%s2498] sm:%s1564]
    %v2500 = vpack.c.bf16 0.0, %v2499
    %s2501 = sshll.u32 1, %s1565
    %s2502 = ssub.s32 %s2501, 1
    %s2503 = smul.addr 1, 117
    %s2504 = scalar_lea.vmem %s1, %s2503
    %2505 = vst [vmem:[%s2504] sm:%s2502] %v2500
    %s2506 = scalar_lea.vmem [#allocation0], 944
    %v2507 = vld [vmem:[%s2506] sm:%s1564]
    %v2508 = vpack.c.bf16 0.0, %v2507
    %s2509 = sshll.u32 1, %s1565
    %s2510 = ssub.s32 %s2509, 1
    %s2511 = smul.addr 1, 118
    %s2512 = scalar_lea.vmem %s1, %s2511
    %2513 = vst [vmem:[%s2512] sm:%s2510] %v2508
    %s2514 = scalar_lea.vmem [#allocation0], 952
    %v2515 = vld [vmem:[%s2514] sm:%s1564]
    %v2516 = vpack.c.bf16 0.0, %v2515
    %s2517 = sshll.u32 1, %s1565
    %s2518 = ssub.s32 %s2517, 1
    %s2519 = smul.addr 1, 119
    %s2520 = scalar_lea.vmem %s1, %s2519
    %2521 = vst [vmem:[%s2520] sm:%s2518] %v2516
    %s2522 = scalar_lea.vmem [#allocation0], 960
    %v2523 = vld [vmem:[%s2522] sm:%s1564]
    %v2524 = vpack.c.bf16 0.0, %v2523
    %s2525 = sshll.u32 1, %s1565
    %s2526 = ssub.s32 %s2525, 1
    %s2527 = smul.addr 1, 120
    %s2528 = scalar_lea.vmem %s1, %s2527
    %2529 = vst [vmem:[%s2528] sm:%s2526] %v2524
    %s2530 = scalar_lea.vmem [#allocation0], 968
    %v2531 = vld [vmem:[%s2530] sm:%s1564]
    %v2532 = vpack.c.bf16 0.0, %v2531
    %s2533 = sshll.u32 1, %s1565
    %s2534 = ssub.s32 %s2533, 1
    %s2535 = smul.addr 1, 121
    %s2536 = scalar_lea.vmem %s1, %s2535
    %2537 = vst [vmem:[%s2536] sm:%s2534] %v2532
    %s2538 = scalar_lea.vmem [#allocation0], 976
    %v2539 = vld [vmem:[%s2538] sm:%s1564]
    %v2540 = vpack.c.bf16 0.0, %v2539
    %s2541 = sshll.u32 1, %s1565
    %s2542 = ssub.s32 %s2541, 1
    %s2543 = smul.addr 1, 122
    %s2544 = scalar_lea.vmem %s1, %s2543
    %2545 = vst [vmem:[%s2544] sm:%s2542] %v2540
    %s2546 = scalar_lea.vmem [#allocation0], 984
    %v2547 = vld [vmem:[%s2546] sm:%s1564]
    %v2548 = vpack.c.bf16 0.0, %v2547
    %s2549 = sshll.u32 1, %s1565
    %s2550 = ssub.s32 %s2549, 1
    %s2551 = smul.addr 1, 123
    %s2552 = scalar_lea.vmem %s1, %s2551
    %2553 = vst [vmem:[%s2552] sm:%s2550] %v2548
    %s2554 = scalar_lea.vmem [#allocation0], 992
    %v2555 = vld [vmem:[%s2554] sm:%s1564]
    %v2556 = vpack.c.bf16 0.0, %v2555
    %s2557 = sshll.u32 1, %s1565
    %s2558 = ssub.s32 %s2557, 1
    %s2559 = smul.addr 1, 124
    %s2560 = scalar_lea.vmem %s1, %s2559
    %2561 = vst [vmem:[%s2560] sm:%s2558] %v2556
    %s2562 = scalar_lea.vmem [#allocation0], 1000
    %v2563 = vld [vmem:[%s2562] sm:%s1564]
    %v2564 = vpack.c.bf16 0.0, %v2563
    %s2565 = sshll.u32 1, %s1565
    %s2566 = ssub.s32 %s2565, 1
    %s2567 = smul.addr 1, 125
    %s2568 = scalar_lea.vmem %s1, %s2567
    %2569 = vst [vmem:[%s2568] sm:%s2566] %v2564
    %s2570 = scalar_lea.vmem [#allocation0], 1008
    %v2571 = vld [vmem:[%s2570] sm:%s1564]
    %v2572 = vpack.c.bf16 0.0, %v2571
    %s2573 = sshll.u32 1, %s1565
    %s2574 = ssub.s32 %s2573, 1
    %s2575 = smul.addr 1, 126
    %s2576 = scalar_lea.vmem %s1, %s2575
    %2577 = vst [vmem:[%s2576] sm:%s2574] %v2572
    %s2578 = scalar_lea.vmem [#allocation0], 1016
    %v2579 = vld [vmem:[%s2578] sm:%s1564]
    %v2580 = vpack.c.bf16 0.0, %v2579
    %s2581 = sshll.u32 1, %s1565
    %s2582 = ssub.s32 %s2581, 1
    %s2583 = smul.addr 1, 127
    %s2584 = scalar_lea.vmem %s1, %s2583
    %2585 = vst [vmem:[%s2584] sm:%s2582] %v2580

// kernel: mynet_forward.1
$region0: #{mynet_forward.1}
  #allocation0 [shape = 'u32[]', space=smem, size = 0x4, offset = 0x4, fixed_abs, tag = 'smem constant byte address 0x4 - core index']
  #allocation1 [shape = 'u32[144,128]{1,0:T(1,128)}', space=vmem, size = 0x12000, scoped, tag = 'internal scratch']
  %s0 = inlined_call_operand.vmem [shape: bf16[432,1024], index: 0, kind: input, shape index: {}]
  %s1 = inlined_call_operand.vmem [shape: bf16[256,216], index: 1, kind: input, shape index: {}]
  %s2 = inlined_call_operand.vmem [shape: f32[256,1], index: 2, kind: input, shape index: {}]
  %s3 = inlined_call_operand.vmem [shape: bf16[1024,320], index: 3, kind: input, shape index: {}]
  %s4 = inlined_call_operand.vmem [shape: f32[256,320], index: 4, kind: input, shape index: {}]
  %s5 = inlined_call_operand.vmem [shape: f32[320,10], index: 5, kind: input, shape index: {}]
  %s6 = inlined_call_operand.vmem [shape: f32[8,256], index: 6, kind: input, shape index: {}]
  %s7 = inlined_call_operand.vmem [shape: f32[1,10], index: 7, kind: input, shape index: {}]
  %s8 = inlined_call_operand.hbm [shape: f32[16,10], index: 8, kind: output, shape index: {}]
  %s9 = sld [smem:[#allocation0]]
  $region65: #{mynet_forward.1} parent=0
    _
  %s11 = ssub.s32 1, %s9
  %s12 = scalar_select 0, %s11, %s9
  $region1: #{mynet_forward.1} parent=0
    #allocation2 [shape = 'u8[8192]{0}', space=vmem, size = 0x2000, scoped, tag = 'output window, operand 0']
    #allocation3 [shape = 's32[2]{0}', space=sflag, size = 0x8, scoped, tag = 'scoped memory for mynet_forward.1']
    %13 = vsyncpa [#allocation3], 0
    %s14 = scalar_lea.sflag [#allocation3], 1
    %15 = vsyncpa %s14, 0
    loop: start=0, step=1, limit=4
    $region2: #{mynet_forward.1} parent=1 // loop_pre_header
      _
    $region3: #{mynet_forward.1} parent=1 // loop_header
      %s17 = sphi 0, %s21
      %p18 = scmp.ge.s32.totalorder %s17, 4
      %s27 = sphi 0, %s29
      %s30 = sphi 0, %s27
      %s31 = sphi 0, %s30
      %s47 = sphi 0, %s31
      %s51 = sphi 0, %s51
      %s53 = sphi 0, %s51
      %s54 = sphi 0, %s53
      %s68 = sphi 0, %s54
      %s72 = sphi 0, %s72
      %s74 = sphi 0, %s72
      %s75 = sphi 0, %s74
      %s89 = sphi 0, %s75
      %s93 = sphi 0, %s93
      %s95 = sphi 0, %s93
      %s96 = sphi 0, %s95
      %s110 = sphi 0, %s96
      %s114 = sphi 0, %s114
      %s116 = sphi 0, %s114
      %s117 = sphi 0, %s116
      %s131 = sphi 0, %s117
      %s135 = sphi 0, %s135
      %s137 = sphi 0, %s135
      %s138 = sphi 0, %s137
      %s152 = sphi 0, %s138
      %s156 = sphi 0, %s156
      %s158 = sphi 0, %s156
      %s159 = sphi 0, %s158
      %s173 = sphi 0, %s159
      %s177 = sphi 0, %s177
      %s179 = sphi 0, %s177
      %s180 = sphi 0, %s179
      %s194 = sphi 0, %s180
      %s200 = sphi 0, %s202
      %s203 = sphi 0, %s200
      %s204 = sphi 0, %s203
      %s220 = sphi 0, %s204
    $region4: #{mynet_forward.1} parent=1 // loop_header_branch
      %20 = sbr.rel (%p18) target = $region8
    $region5: #{mynet_forward.1} parent=1 // loop_body
      %s22 = ssub.s32 %s17, 1
      %s23 = ssub.s32 %s17, 2
      %s24 = sadd.s32 %s17, 1
      %s25 = ssub.s32 %s17, %s24
      %p26 = scmp.eq.s32.totalorder %s25, 0
      %s28 = sadd.s32 %s27, 1
      %s29 = scalar_select %p26, %s27, %s28
      %p32 = pneg %p26
      %p33 = scmp.eq.s32.totalorder %s17, 1
      %p34 = por %p32, %p33
      %p35 = scmp.ne.s32.totalorder %s27, %s30
      %p36 = scmp.eq.s32.totalorder %s17, 0
      %p37 = por %p35, %p36
      %p38 = scmp.ne.s32.totalorder %s27, %s30
      %p39 = scmp.eq.s32.totalorder %s22, 1
      %p40 = por %p38, %p39
      %p41 = scmp.ne.s32.totalorder %s30, %s31
      %p42 = scmp.eq.s32.totalorder %s22, 0
      %p43 = por %p41, %p42
      %p44 = scmp.ne.s32.totalorder %s30, %s31
      %p45 = scmp.eq.s32.totalorder %s23, 1
      %p46 = por %p44, %p45
      %p48 = scmp.ne.s32.totalorder %s31, %s47
      %p49 = scmp.eq.s32.totalorder %s23, 0
      %p50 = por %p48, %p49
      %s52 = sadd.s32 %s51, 1
      %p55 = scmp.eq.s32.totalorder %s17, 1
      %p56 = scmp.ne.s32.totalorder %s51, %s53
      %p57 = scmp.eq.s32.totalorder %s17, 0
      %p58 = por %p56, %p57
      %p59 = scmp.ne.s32.totalorder %s51, %s53
      %p60 = scmp.eq.s32.totalorder %s22, 1
      %p61 = por %p59, %p60
      %p62 = scmp.ne.s32.totalorder %s53, %s54
      %p63 = scmp.eq.s32.totalorder %s22, 0
      %p64 = por %p62, %p63
      %p65 = scmp.ne.s32.totalorder %s53, %s54
      %p66 = scmp.eq.s32.totalorder %s23, 1
      %p67 = por %p65, %p66
      %p69 = scmp.ne.s32.totalorder %s54, %s68
      %p70 = scmp.eq.s32.totalorder %s23, 0
      %p71 = por %p69, %p70
      %s73 = sadd.s32 %s72, 1
      %p76 = scmp.eq.s32.totalorder %s17, 1
      %p77 = scmp.ne.s32.totalorder %s72, %s74
      %p78 = scmp.eq.s32.totalorder %s17, 0
      %p79 = por %p77, %p78
      %p80 = scmp.ne.s32.totalorder %s72, %s74
      %p81 = scmp.eq.s32.totalorder %s22, 1
      %p82 = por %p80, %p81
      %p83 = scmp.ne.s32.totalorder %s74, %s75
      %p84 = scmp.eq.s32.totalorder %s22, 0
      %p85 = por %p83, %p84
      %p86 = scmp.ne.s32.totalorder %s74, %s75
      %p87 = scmp.eq.s32.totalorder %s23, 1
      %p88 = por %p86, %p87
      %p90 = scmp.ne.s32.totalorder %s75, %s89
      %p91 = scmp.eq.s32.totalorder %s23, 0
      %p92 = por %p90, %p91
      %s94 = sadd.s32 %s93, 1
      %p97 = scmp.eq.s32.totalorder %s17, 1
      %p98 = scmp.ne.s32.totalorder %s93, %s95
      %p99 = scmp.eq.s32.totalorder %s17, 0
      %p100 = por %p98, %p99
      %p101 = scmp.ne.s32.totalorder %s93, %s95
      %p102 = scmp.eq.s32.totalorder %s22, 1
      %p103 = por %p101, %p102
      %p104 = scmp.ne.s32.totalorder %s95, %s96
      %p105 = scmp.eq.s32.totalorder %s22, 0
      %p106 = por %p104, %p105
      %p107 = scmp.ne.s32.totalorder %s95, %s96
      %p108 = scmp.eq.s32.totalorder %s23, 1
      %p109 = por %p107, %p108
      %p111 = scmp.ne.s32.totalorder %s96, %s110
      %p112 = scmp.eq.s32.totalorder %s23, 0
      %p113 = por %p111, %p112
      %s115 = sadd.s32 %s114, 1
      %p118 = scmp.eq.s32.totalorder %s17, 1
      %p119 = scmp.ne.s32.totalorder %s114, %s116
      %p120 = scmp.eq.s32.totalorder %s17, 0
      %p121 = por %p119, %p120
      %p122 = scmp.ne.s32.totalorder %s114, %s116
      %p123 = scmp.eq.s32.totalorder %s22, 1
      %p124 = por %p122, %p123
      %p125 = scmp.ne.s32.totalorder %s116, %s117
      %p126 = scmp.eq.s32.totalorder %s22, 0
      %p127 = por %p125, %p126
      %p128 = scmp.ne.s32.totalorder %s116, %s117
      %p129 = scmp.eq.s32.totalorder %s23, 1
      %p130 = por %p128, %p129
      %p132 = scmp.ne.s32.totalorder %s117, %s131
      %p133 = scmp.eq.s32.totalorder %s23, 0
      %p134 = por %p132, %p133
      %s136 = sadd.s32 %s135, 1
      %p139 = scmp.eq.s32.totalorder %s17, 1
      %p140 = scmp.ne.s32.totalorder %s135, %s137
      %p141 = scmp.eq.s32.totalorder %s17, 0
      %p142 = por %p140, %p141
      %p143 = scmp.ne.s32.totalorder %s135, %s137
      %p144 = scmp.eq.s32.totalorder %s22, 1
      %p145 = por %p143, %p144
      %p146 = scmp.ne.s32.totalorder %s137, %s138
      %p147 = scmp.eq.s32.totalorder %s22, 0
      %p148 = por %p146, %p147
      %p149 = scmp.ne.s32.totalorder %s137, %s138
      %p150 = scmp.eq.s32.totalorder %s23, 1
      %p151 = por %p149, %p150
      %p153 = scmp.ne.s32.totalorder %s138, %s152
      %p154 = scmp.eq.s32.totalorder %s23, 0
      %p155 = por %p153, %p154
      %s157 = sadd.s32 %s156, 1
      %p160 = scmp.eq.s32.totalorder %s17, 1
      %p161 = scmp.ne.s32.totalorder %s156, %s158
      %p162 = scmp.eq.s32.totalorder %s17, 0
      %p163 = por %p161, %p162
      %p164 = scmp.ne.s32.totalorder %s156, %s158
      %p165 = scmp.eq.s32.totalorder %s22, 1
      %p166 = por %p164, %p165
      %p167 = scmp.ne.s32.totalorder %s158, %s159
      %p168 = scmp.eq.s32.totalorder %s22, 0
      %p169 = por %p167, %p168
      %p170 = scmp.ne.s32.totalorder %s158, %s159
      %p171 = scmp.eq.s32.totalorder %s23, 1
      %p172 = por %p170, %p171
      %p174 = scmp.ne.s32.totalorder %s159, %s173
      %p175 = scmp.eq.s32.totalorder %s23, 0
      %p176 = por %p174, %p175
      %s178 = sadd.s32 %s177, 1
      %p181 = scmp.eq.s32.totalorder %s17, 1
      %p182 = scmp.ne.s32.totalorder %s177, %s179
      %p183 = scmp.eq.s32.totalorder %s17, 0
      %p184 = por %p182, %p183
      %p185 = scmp.ne.s32.totalorder %s177, %s179
      %p186 = scmp.eq.s32.totalorder %s22, 1
      %p187 = por %p185, %p186
      %p188 = scmp.ne.s32.totalorder %s179, %s180
      %p189 = scmp.eq.s32.totalorder %s22, 0
      %p190 = por %p188, %p189
      %p191 = scmp.ne.s32.totalorder %s179, %s180
      %p192 = scmp.eq.s32.totalorder %s23, 1
      %p193 = por %p191, %p192
      %p195 = scmp.ne.s32.totalorder %s180, %s194
      %p196 = scmp.eq.s32.totalorder %s23, 0
      %p197 = por %p195, %p196
      %s198 = ssub.s32 %s17, %s24
      %p199 = scmp.eq.s32.totalorder %s198, 0
      %s201 = sadd.s32 %s200, 1
      %s202 = scalar_select %p199, %s200, %s201
      %p205 = pneg %p199
      %p206 = scmp.eq.s32.totalorder %s17, 1
      %p207 = por %p205, %p206
      %p208 = scmp.ne.s32.totalorder %s200, %s203
      %p209 = scmp.eq.s32.totalorder %s17, 0
      %p210 = por %p208, %p209
      %p211 = scmp.ne.s32.totalorder %s200, %s203
      %p212 = scmp.eq.s32.totalorder %s22, 1
      %p213 = por %p211, %p212
      %p214 = scmp.ne.s32.totalorder %s203, %s204
      %p215 = scmp.eq.s32.totalorder %s22, 0
      %p216 = por %p214, %p215
      %p217 = scmp.ne.s32.totalorder %s203, %s204
      %p218 = scmp.eq.s32.totalorder %s23, 1
      %p219 = por %p217, %p218
      %p221 = scmp.ne.s32.totalorder %s204, %s220
      %p222 = scmp.eq.s32.totalorder %s23, 0
      %p223 = por %p221, %p222
      %p224 = scmp.le.s32.totalorder 1, %s17
      %p225 = scmp.lt.s32.totalorder %s17, 3
      %p226 = pnand %p224, %p225
      %p227 = pneg %p226
      // Predicated region
      $region9: #{mynet_forward.1} parent=5 // pred_check
        _
      $region10: #{mynet_forward.1} parent=5 // pred_check_branch
        %229 = sbr.rel (%p226) target = $region12
      $region11: #{mynet_forward.1} parent=5 // pred_region
        %s230 = ssub.s32 %s17, 1
        // Predicated region
        $region13: #{mynet_forward.1} parent=11 // pred_check
          %p231 = pneg %p64
        $region14: #{mynet_forward.1} parent=11 // pred_check_branch
          %233 = sbr.rel (%p231) target = $region16
        $region15: #{mynet_forward.1} parent=11 // pred_region
          _
        $region16: #{mynet_forward.1} parent=11 // pred_fallthru
          _
        // Predicated region
        $region17: #{mynet_forward.1} parent=11 // pred_check
          %p234 = pneg %p85
        $region18: #{mynet_forward.1} parent=11 // pred_check_branch
          %236 = sbr.rel (%p234) target = $region20
        $region19: #{mynet_forward.1} parent=11 // pred_region
          _
        $region20: #{mynet_forward.1} parent=11 // pred_fallthru
          _
        // Predicated region
        $region21: #{mynet_forward.1} parent=11 // pred_check
          %p237 = pneg %p106
        $region22: #{mynet_forward.1} parent=11 // pred_check_branch
          %239 = sbr.rel (%p237) target = $region24
        $region23: #{mynet_forward.1} parent=11 // pred_region
          _
        $region24: #{mynet_forward.1} parent=11 // pred_fallthru
          _
        // Predicated region
        $region25: #{mynet_forward.1} parent=11 // pred_check
          %p240 = pneg %p127
        $region26: #{mynet_forward.1} parent=11 // pred_check_branch
          %242 = sbr.rel (%p240) target = $region28
        $region27: #{mynet_forward.1} parent=11 // pred_region
          _
        $region28: #{mynet_forward.1} parent=11 // pred_fallthru
          _
        // Predicated region
        $region29: #{mynet_forward.1} parent=11 // pred_check
          %p243 = pneg %p148
        $region30: #{mynet_forward.1} parent=11 // pred_check_branch
          %245 = sbr.rel (%p243) target = $region32
        $region31: #{mynet_forward.1} parent=11 // pred_region
          _
        $region32: #{mynet_forward.1} parent=11 // pred_fallthru
          _
        // Predicated region
        $region33: #{mynet_forward.1} parent=11 // pred_check
          %p246 = pneg %p169
        $region34: #{mynet_forward.1} parent=11 // pred_check_branch
          %248 = sbr.rel (%p246) target = $region36
        $region35: #{mynet_forward.1} parent=11 // pred_region
          _
        $region36: #{mynet_forward.1} parent=11 // pred_fallthru
          _
        // Predicated region
        $region37: #{mynet_forward.1} parent=11 // pred_check
          %p249 = pneg %p190
        $region38: #{mynet_forward.1} parent=11 // pred_check_branch
          %251 = sbr.rel (%p249) target = $region40
        $region39: #{mynet_forward.1} parent=11 // pred_region
          _
        $region40: #{mynet_forward.1} parent=11 // pred_fallthru
          _
      $region12: #{mynet_forward.1} parent=5 // pred_fallthru
        _
      %p252 = scmp.lt.s32.totalorder %s17, 2
      // Predicated region
      $region41: #{mynet_forward.1} parent=5 // pred_check
        %p253 = pneg %p252
      $region42: #{mynet_forward.1} parent=5 // pred_check_branch
        %255 = sbr.rel (%p253) target = $region44
      $region43: #{mynet_forward.1} parent=5 // pred_region
        // Predicated region
        $region45: #{mynet_forward.1} parent=43 // pred_check
          %p256 = pneg %p37
        $region46: #{mynet_forward.1} parent=43 // pred_check_branch
          %258 = sbr.rel (%p256) target = $region48
        $region47: #{mynet_forward.1} parent=43 // pred_region
          %s259 = smul.u32 27, %s17
          %p260 = scmp.lt.s32.totalorder %s259, 53
          %s261 = scalar_select %p260, %s259, 53
          %s262 = smul.addr %s261, 8
          %s263 = smul.addr %s262, 4
          %s264 = scalar_lea.vmem %s0, %s263
          %s265 = smul.u32 27, %s17
        $region48: #{mynet_forward.1} parent=43 // pred_fallthru
          _
      $region44: #{mynet_forward.1} parent=5 // pred_fallthru
        _
      %p266 = scmp.le.s32.totalorder 1, %s17
      %p267 = scmp.lt.s32.totalorder %s17, 3
      %p268 = pnand %p266, %p267
      %p269 = pneg %p268
      // Predicated region
      $region49: #{mynet_forward.1} parent=5 // pred_check
        _
      $region50: #{mynet_forward.1} parent=5 // pred_check_branch
        %271 = sbr.rel (%p268) target = $region52
      $region51: #{mynet_forward.1} parent=5 // pred_region
        %s272 = ssub.s32 %s17, 1
        %s273 = smul.u32 27, %s22
        %p274 = scmp.lt.s32.totalorder %s273, 53
        %s275 = scalar_select %p274, %s273, 53
        %s276 = smul.addr %s275, 8
        %s277 = smul.addr %s276, 4
        %s278 = scalar_lea.vmem %s0, %s277
        %p279 = pneg %p43
        %p280 = pneg %p40
        %p281 = pneg %p64
        %p282 = pneg %p61
        %p283 = pneg %p85
        %p284 = pneg %p82
        %p285 = pneg %p106
        %p286 = pneg %p103
        %p287 = pneg %p127
        %p288 = pneg %p124
        %p289 = pneg %p148
        %p290 = pneg %p145
        %p291 = pneg %p169
        %p292 = pneg %p166
        %p293 = pneg %p190
        %p294 = pneg %p187
        %p295 = pneg %p216
        %p296 = pneg %p213
        %s297 = sand.u32 %s203, 1
        %s298 = scalar_lea.sflag [#allocation3], %s297
        %s299 = sand.u32 %s203, 1
        %s300 = smul.addr %s299, 8
        %s301 = scalar_lea.vmem [#allocation2], %s300
        %s302 = smul.u32 27, %s22
        %p303 = scmp.lt.s32.totalorder %s302, 53
        %s304 = scalar_select %p303, %s302, 53
        %s305 = smul.addr %s304, 8
        %s306 = smul.addr %s305, 4
        %s307 = scalar_lea.vmem %s0, %s306
        %s308 = smul.u32 27, %s22
        %v310 = vld [vmem:[%s1] sm:$0xff]
        %v311 = vld [vmem:[%s1 + $0x8] sm:$0xff]
        %v312 = vld [vmem:[%s1 + $0x10] sm:$0xff]
        %v313 = vld [vmem:[%s1 + $0x18] sm:$0xff]
        %v314 = vld [vmem:[%s1 + $0x20] sm:$0xff]
        %v315 = vld [vmem:[%s1 + $0x28] sm:$0xff]
        %v316 = vld [vmem:[%s1 + $0x30] sm:$0xff]
        %v317 = vld [vmem:[%s1 + $0x38] sm:$0xff]
        %v318 = vld [vmem:[%s1 + $0x40] sm:$0xff]
        %v319 = vld [vmem:[%s1 + $0x48] sm:$0xff]
        %v320 = vld [vmem:[%s1 + $0x50] sm:$0xff]
        %v321 = vld [vmem:[%s1 + $0x58] sm:$0xff]
        %v322 = vld [vmem:[%s1 + $0x60] sm:$0xff]
        %v323 = vld [vmem:[%s1 + $0x68] sm:$0xff]
        %v324 = vld [vmem:[%s1 + $0x70] sm:$0xff]
        %v325 = vld [vmem:[%s1 + $0x78] sm:$0xff]
        %v326 = vld [vmem:[%s1 + $0x80] sm:$0xff]
        %v327 = vld [vmem:[%s1 + $0x88] sm:$0xff]
        %v328 = vld [vmem:[%s1 + $0x90] sm:$0xff]
        %v329 = vld [vmem:[%s1 + $0x98] sm:$0xff]
        %v330 = vld [vmem:[%s1 + $0xa0] sm:$0xff]
        %v331 = vld [vmem:[%s1 + $0xa8] sm:$0xff]
        %v332 = vld [vmem:[%s1 + $0xb0] sm:$0xff]
        %v333 = vld [vmem:[%s1 + $0xb8] sm:$0xff]
        %v334 = vld [vmem:[%s1 + $0xc0] sm:$0xff]
        %v335 = vld [vmem:[%s1 + $0xc8] sm:$0xff]
        %v336 = vld [vmem:[%s1 + $0xd0] sm:$0xff]
        %v337 = vld [vmem:[%s1 + $0xd8] sm:$0xff]
        %v338 = vld [vmem:[%s1 + $0xe0] sm:$0xff]
        %v339 = vld [vmem:[%s1 + $0xe8] sm:$0xff]
        %v340 = vld [vmem:[%s1 + $0xf0] sm:$0xff]
        %v341 = vld [vmem:[%s1 + $0xf8] sm:$0xff]
        %v342 = vld [vmem:[%s307] sm:$0xff]
        %v343 = vld [vmem:[%s307 + $0x8] sm:$0xff]
        %v344 = vld [vmem:[%s307 + $0x10] sm:$0xff]
        %v345 = vld [vmem:[%s307 + $0x18] sm:$0xff]
        %v346 = vld [vmem:[%s307 + $0x20] sm:$0xff]
        %v347 = vld [vmem:[%s307 + $0x28] sm:$0xff]
        %v348 = vld [vmem:[%s307 + $0x30] sm:$0xff]
        %v349 = vld [vmem:[%s307 + $0x38] sm:$0xff]
        %v350 = vld [vmem:[%s307 + $0x40] sm:$0xff]
        %v351 = vld [vmem:[%s307 + $0x48] sm:$0xff]
        %v352 = vld [vmem:[%s307 + $0x50] sm:$0xff]
        %v353 = vld [vmem:[%s307 + $0x58] sm:$0xff]
        %v354 = vld [vmem:[%s307 + $0x60] sm:$0xff]
        %v355 = vld [vmem:[%s307 + $0x68] sm:$0xff]
        %v356 = vld [vmem:[%s307 + $0x70] sm:$0xff]
        %v357 = vld [vmem:[%s307 + $0x78] sm:$0xff]
        %v358 = vld [vmem:[%s307 + $0x80] sm:$0xff]
        %v359 = vld [vmem:[%s307 + $0x88] sm:$0xff]
        %v360 = vld [vmem:[%s307 + $0x90] sm:$0xff]
        %v361 = vld [vmem:[%s307 + $0x98] sm:$0xff]
        %v362 = vld [vmem:[%s307 + $0xa0] sm:$0xff]
        %v363 = vld [vmem:[%s307 + $0xa8] sm:$0xff]
        %v364 = vld [vmem:[%s307 + $0xb0] sm:$0xff]
        %v365 = vld [vmem:[%s307 + $0xb8] sm:$0xff]
        %v366 = vld [vmem:[%s307 + $0xc0] sm:$0xff]
        %v367 = vld [vmem:[%s307 + $0xc8] sm:$0xff]
        %v368 = vld [vmem:[%s307 + $0xd0] sm:$0xff]
        %v369 = vld [vmem:[%s307 + $0xd8] sm:$0xff]
        %v370 = vld [vmem:[%s307 + $0xe0] sm:$0xff]
        %v371 = vld [vmem:[%s307 + $0xe8] sm:$0xff]
        %v372 = vld [vmem:[%s307 + $0xf0] sm:$0xff]
        %v373 = vld [vmem:[%s307 + $0xf8] sm:$0xff]
        %v374 = vld [vmem:[%s307 + $0x100] sm:$0xff]
        %v375 = vld [vmem:[%s307 + $0x108] sm:$0xff]
        %v376 = vld [vmem:[%s307 + $0x110] sm:$0xff]
        %v377 = vld [vmem:[%s307 + $0x118] sm:$0xff]
        %v378 = vld [vmem:[%s307 + $0x120] sm:$0xff]
        %v379 = vld [vmem:[%s307 + $0x128] sm:$0xff]
        %v380 = vld [vmem:[%s307 + $0x130] sm:$0xff]
        %v381 = vld [vmem:[%s307 + $0x138] sm:$0xff]
        %v382 = vld [vmem:[%s307 + $0x140] sm:$0xff]
        %v383 = vld [vmem:[%s307 + $0x148] sm:$0xff]
        %v384 = vld [vmem:[%s307 + $0x150] sm:$0xff]
        %v385 = vld [vmem:[%s307 + $0x158] sm:$0xff]
        %v386 = vld [vmem:[%s307 + $0x160] sm:$0xff]
        %v387 = vld [vmem:[%s307 + $0x168] sm:$0xff]
        %v388 = vld [vmem:[%s307 + $0x170] sm:$0xff]
        %v389 = vld [vmem:[%s307 + $0x178] sm:$0xff]
        %v390 = vld [vmem:[%s307 + $0x180] sm:$0xff]
        %v391 = vld [vmem:[%s307 + $0x188] sm:$0xff]
        %v392 = vld [vmem:[%s307 + $0x190] sm:$0xff]
        %v393 = vld [vmem:[%s307 + $0x198] sm:$0xff]
        %v394 = vld [vmem:[%s307 + $0x1a0] sm:$0xff]
        %v395 = vld [vmem:[%s307 + $0x1a8] sm:$0xff]
        %v396 = vld [vmem:[%s307 + $0x1b0] sm:$0xff]
        %v397 = vld [vmem:[%s307 + $0x1b8] sm:$0xff]
        %v398 = vld [vmem:[%s307 + $0x1c0] sm:$0xff]
        %v399 = vld [vmem:[%s307 + $0x1c8] sm:$0xff]
        %v400 = vld [vmem:[%s307 + $0x1d0] sm:$0xff]
        %v401 = vld [vmem:[%s307 + $0x1d8] sm:$0xff]
        %v402 = vld [vmem:[%s307 + $0x1e0] sm:$0xff]
        %v403 = vld [vmem:[%s307 + $0x1e8] sm:$0xff]
        %v404 = vld [vmem:[%s307 + $0x1f0] sm:$0xff]
        %v405 = vld [vmem:[%s307 + $0x1f8] sm:$0xff]
        %v406 = vld [vmem:[%s307 + $0x200] sm:$0xff]
        %v407 = vld [vmem:[%s307 + $0x208] sm:$0xff]
        %v408 = vld [vmem:[%s307 + $0x210] sm:$0xff]
        %v409 = vld [vmem:[%s307 + $0x218] sm:$0xff]
        %v410 = vld [vmem:[%s307 + $0x220] sm:$0xff]
        %v411 = vld [vmem:[%s307 + $0x228] sm:$0xff]
        %v412 = vld [vmem:[%s307 + $0x230] sm:$0xff]
        %v413 = vld [vmem:[%s307 + $0x238] sm:$0xff]
        %v414 = vld [vmem:[%s307 + $0x240] sm:$0xff]
        %v415 = vld [vmem:[%s307 + $0x248] sm:$0xff]
        %v416 = vld [vmem:[%s307 + $0x250] sm:$0xff]
        %v417 = vld [vmem:[%s307 + $0x258] sm:$0xff]
        %v418 = vld [vmem:[%s307 + $0x260] sm:$0xff]
        %v419 = vld [vmem:[%s307 + $0x268] sm:$0xff]
        %v420 = vld [vmem:[%s307 + $0x270] sm:$0xff]
        %v421 = vld [vmem:[%s307 + $0x278] sm:$0xff]
        %v422 = vld [vmem:[%s307 + $0x280] sm:$0xff]
        %v423 = vld [vmem:[%s307 + $0x288] sm:$0xff]
        %v424 = vld [vmem:[%s307 + $0x290] sm:$0xff]
        %v425 = vld [vmem:[%s307 + $0x298] sm:$0xff]
        %v426 = vld [vmem:[%s307 + $0x2a0] sm:$0xff]
        %v427 = vld [vmem:[%s307 + $0x2a8] sm:$0xff]
        %v428 = vld [vmem:[%s307 + $0x2b0] sm:$0xff]
        %v429 = vld [vmem:[%s307 + $0x2b8] sm:$0xff]
        %v430 = vld [vmem:[%s307 + $0x2c0] sm:$0xff]
        %v431 = vld [vmem:[%s307 + $0x2c8] sm:$0xff]
        %v432 = vld [vmem:[%s307 + $0x2d0] sm:$0xff]
        %v433 = vld [vmem:[%s307 + $0x2d8] sm:$0xff]
        %v434 = vld [vmem:[%s307 + $0x2e0] sm:$0xff]
        %v435 = vld [vmem:[%s307 + $0x2e8] sm:$0xff]
        %v436 = vld [vmem:[%s307 + $0x2f0] sm:$0xff]
        %v437 = vld [vmem:[%s307 + $0x2f8] sm:$0xff]
        %v438 = vld [vmem:[%s307 + $0x300] sm:$0xff]
        %v439 = vld [vmem:[%s307 + $0x308] sm:$0xff]
        %v440 = vld [vmem:[%s307 + $0x310] sm:$0xff]
        %v441 = vld [vmem:[%s307 + $0x318] sm:$0xff]
        %v442 = vld [vmem:[%s307 + $0x320] sm:$0xff]
        %v443 = vld [vmem:[%s307 + $0x328] sm:$0xff]
        %v444 = vld [vmem:[%s307 + $0x330] sm:$0xff]
        %v445 = vld [vmem:[%s307 + $0x338] sm:$0xff]
        %v446 = vld [vmem:[%s307 + $0x340] sm:$0xff]
        %v447 = vld [vmem:[%s307 + $0x348] sm:$0xff]
        %v448 = vld [vmem:[%s307 + $0x350] sm:$0xff]
        %v449 = vld [vmem:[%s307 + $0x358] sm:$0xff]
        %v450 = vld [vmem:[%s2] sm:$0xff]
        %v451 = vld [vmem:[%s2 + $0x8] sm:$0xff]
        %v452 = vld [vmem:[%s2 + $0x10] sm:$0xff]
        %v453 = vld [vmem:[%s2 + $0x18] sm:$0xff]
        %v454 = vld [vmem:[%s2 + $0x20] sm:$0xff]
        %v455 = vld [vmem:[%s2 + $0x28] sm:$0xff]
        %v456 = vld [vmem:[%s2 + $0x30] sm:$0xff]
        %v457 = vld [vmem:[%s2 + $0x38] sm:$0xff]
        %v458 = vld [vmem:[%s2 + $0x40] sm:$0xff]
        %v459 = vld [vmem:[%s2 + $0x48] sm:$0xff]
        %v460 = vld [vmem:[%s2 + $0x50] sm:$0xff]
        %v461 = vld [vmem:[%s2 + $0x58] sm:$0xff]
        %v462 = vld [vmem:[%s2 + $0x60] sm:$0xff]
        %v463 = vld [vmem:[%s2 + $0x68] sm:$0xff]
        %v464 = vld [vmem:[%s2 + $0x70] sm:$0xff]
        %v465 = vld [vmem:[%s2 + $0x78] sm:$0xff]
        %v466 = vld [vmem:[%s2 + $0x80] sm:$0xff]
        %v467 = vld [vmem:[%s2 + $0x88] sm:$0xff]
        %v468 = vld [vmem:[%s2 + $0x90] sm:$0xff]
        %v469 = vld [vmem:[%s2 + $0x98] sm:$0xff]
        %v470 = vld [vmem:[%s2 + $0xa0] sm:$0xff]
        %v471 = vld [vmem:[%s2 + $0xa8] sm:$0xff]
        %v472 = vld [vmem:[%s2 + $0xb0] sm:$0xff]
        %v473 = vld [vmem:[%s2 + $0xb8] sm:$0xff]
        %v474 = vld [vmem:[%s2 + $0xc0] sm:$0xff]
        %v475 = vld [vmem:[%s2 + $0xc8] sm:$0xff]
        %v476 = vld [vmem:[%s2 + $0xd0] sm:$0xff]
        %v477 = vld [vmem:[%s2 + $0xd8] sm:$0xff]
        %v478 = vld [vmem:[%s2 + $0xe0] sm:$0xff]
        %v479 = vld [vmem:[%s2 + $0xe8] sm:$0xff]
        %v480 = vld [vmem:[%s2 + $0xf0] sm:$0xff]
        %v481 = vld [vmem:[%s2 + $0xf8] sm:$0xff]
        %483 = vset.pattern.permute.xlu0 0
        %484 = vperm.xlu0 %483, %v450
        %v485 = vpop.permute.xlu0 %484
        %488 = vset.pattern.permute.xlu0 0
        %489 = vperm.xlu0 %488, %v451
        %v490 = vpop.permute.xlu0 %489
        %493 = vset.pattern.permute.xlu0 0
        %494 = vperm.xlu0 %493, %v452
        %v495 = vpop.permute.xlu0 %494
        %498 = vset.pattern.permute.xlu0 0
        %499 = vperm.xlu0 %498, %v453
        %v500 = vpop.permute.xlu0 %499
        %503 = vset.pattern.permute.xlu0 0
        %504 = vperm.xlu0 %503, %v454
        %v505 = vpop.permute.xlu0 %504
        %508 = vset.pattern.permute.xlu0 0
        %509 = vperm.xlu0 %508, %v455
        %v510 = vpop.permute.xlu0 %509
        %513 = vset.pattern.permute.xlu0 0
        %514 = vperm.xlu0 %513, %v456
        %v515 = vpop.permute.xlu0 %514
        %518 = vset.pattern.permute.xlu0 0
        %519 = vperm.xlu0 %518, %v457
        %v520 = vpop.permute.xlu0 %519
        %523 = vset.pattern.permute.xlu0 0
        %524 = vperm.xlu0 %523, %v458
        %v525 = vpop.permute.xlu0 %524
        %528 = vset.pattern.permute.xlu0 0
        %529 = vperm.xlu0 %528, %v459
        %v530 = vpop.permute.xlu0 %529
        %533 = vset.pattern.permute.xlu0 0
        %534 = vperm.xlu0 %533, %v460
        %v535 = vpop.permute.xlu0 %534
        %538 = vset.pattern.permute.xlu0 0
        %539 = vperm.xlu0 %538, %v461
        %v540 = vpop.permute.xlu0 %539
        %543 = vset.pattern.permute.xlu0 0
        %544 = vperm.xlu0 %543, %v462
        %v545 = vpop.permute.xlu0 %544
        %548 = vset.pattern.permute.xlu0 0
        %549 = vperm.xlu0 %548, %v463
        %v550 = vpop.permute.xlu0 %549
        %553 = vset.pattern.permute.xlu0 0
        %554 = vperm.xlu0 %553, %v464
        %v555 = vpop.permute.xlu0 %554
        %558 = vset.pattern.permute.xlu0 0
        %559 = vperm.xlu0 %558, %v465
        %v560 = vpop.permute.xlu0 %559
        %563 = vset.pattern.permute.xlu0 0
        %564 = vperm.xlu0 %563, %v466
        %v565 = vpop.permute.xlu0 %564
        %568 = vset.pattern.permute.xlu0 0
        %569 = vperm.xlu0 %568, %v467
        %v570 = vpop.permute.xlu0 %569
        %573 = vset.pattern.permute.xlu0 0
        %574 = vperm.xlu0 %573, %v468
        %v575 = vpop.permute.xlu0 %574
        %578 = vset.pattern.permute.xlu0 0
        %579 = vperm.xlu0 %578, %v469
        %v580 = vpop.permute.xlu0 %579
        %583 = vset.pattern.permute.xlu0 0
        %584 = vperm.xlu0 %583, %v470
        %v585 = vpop.permute.xlu0 %584
        %588 = vset.pattern.permute.xlu0 0
        %589 = vperm.xlu0 %588, %v471
        %v590 = vpop.permute.xlu0 %589
        %593 = vset.pattern.permute.xlu0 0
        %594 = vperm.xlu0 %593, %v472
        %v595 = vpop.permute.xlu0 %594
        %598 = vset.pattern.permute.xlu0 0
        %599 = vperm.xlu0 %598, %v473
        %v600 = vpop.permute.xlu0 %599
        %603 = vset.pattern.permute.xlu0 0
        %604 = vperm.xlu0 %603, %v474
        %v605 = vpop.permute.xlu0 %604
        %608 = vset.pattern.permute.xlu0 0
        %609 = vperm.xlu0 %608, %v475
        %v610 = vpop.permute.xlu0 %609
        %613 = vset.pattern.permute.xlu0 0
        %614 = vperm.xlu0 %613, %v476
        %v615 = vpop.permute.xlu0 %614
        %618 = vset.pattern.permute.xlu0 0
        %619 = vperm.xlu0 %618, %v477
        %v620 = vpop.permute.xlu0 %619
        %623 = vset.pattern.permute.xlu0 0
        %624 = vperm.xlu0 %623, %v478
        %v625 = vpop.permute.xlu0 %624
        %628 = vset.pattern.permute.xlu0 0
        %629 = vperm.xlu0 %628, %v479
        %v630 = vpop.permute.xlu0 %629
        %633 = vset.pattern.permute.xlu0 0
        %634 = vperm.xlu0 %633, %v480
        %v635 = vpop.permute.xlu0 %634
        %638 = vset.pattern.permute.xlu0 0
        %639 = vperm.xlu0 %638, %v481
        %v640 = vpop.permute.xlu0 %639
        %v674 = vunpack.c.l.b16 %v310
        %v675 = vunpack.c.h.b16 %v310
        %v676 = vunpack.c.l.b16 %v311
        %v677 = vunpack.c.h.b16 %v311
        %v678 = vunpack.c.l.b16 %v312
        %v679 = vunpack.c.h.b16 %v312
        %v680 = vunpack.c.l.b16 %v313
        %v681 = vunpack.c.h.b16 %v313
        %v682 = vunpack.c.l.b16 %v314
        %v683 = vunpack.c.h.b16 %v314
        %v684 = vunpack.c.l.b16 %v315
        %v685 = vunpack.c.h.b16 %v315
        %v686 = vunpack.c.l.b16 %v316
        %v687 = vunpack.c.h.b16 %v316
        %v688 = vunpack.c.l.b16 %v317
        %v689 = vunpack.c.h.b16 %v317
        %v690 = vunpack.c.l.b16 %v318
        %v691 = vunpack.c.h.b16 %v318
        %v692 = vunpack.c.l.b16 %v319
        %v693 = vunpack.c.h.b16 %v319
        %v694 = vunpack.c.l.b16 %v320
        %v695 = vunpack.c.h.b16 %v320
        %v696 = vunpack.c.l.b16 %v321
        %v697 = vunpack.c.h.b16 %v321
        %v698 = vunpack.c.l.b16 %v322
        %v699 = vunpack.c.h.b16 %v322
        %v700 = vunpack.c.l.b16 %v323
        %v701 = vunpack.c.h.b16 %v323
        %v702 = vunpack.c.l.b16 %v324
        %v703 = vunpack.c.h.b16 %v324
        %v704 = vunpack.c.l.b16 %v325
        %v705 = vunpack.c.h.b16 %v325
        %v706 = vunpack.c.l.b16 %v326
        %v707 = vunpack.c.h.b16 %v326
        %v708 = vunpack.c.l.b16 %v327
        %v709 = vunpack.c.h.b16 %v327
        %v710 = vunpack.c.l.b16 %v328
        %v711 = vunpack.c.h.b16 %v328
        %v712 = vunpack.c.l.b16 %v329
        %v713 = vunpack.c.h.b16 %v329
        %v714 = vunpack.c.l.b16 %v330
        %v715 = vunpack.c.h.b16 %v330
        %v716 = vunpack.c.l.b16 %v331
        %v717 = vunpack.c.h.b16 %v331
        %v718 = vunpack.c.l.b16 %v332
        %v719 = vunpack.c.h.b16 %v332
        %v720 = vunpack.c.l.b16 %v333
        %v721 = vunpack.c.h.b16 %v333
        %v722 = vunpack.c.l.b16 %v334
        %v723 = vunpack.c.h.b16 %v334
        %v724 = vunpack.c.l.b16 %v335
        %v725 = vunpack.c.h.b16 %v335
        %v726 = vunpack.c.l.b16 %v336
        %v727 = vunpack.c.h.b16 %v336
        %v728 = vunpack.c.l.b16 %v337
        %v729 = vunpack.c.h.b16 %v337
        %v730 = vunpack.c.l.b16 %v338
        %v731 = vunpack.c.h.b16 %v338
        %v732 = vunpack.c.l.b16 %v339
        %v733 = vunpack.c.h.b16 %v339
        %v734 = vunpack.c.l.b16 %v340
        %v735 = vunpack.c.h.b16 %v340
        %v736 = vunpack.c.l.b16 %v341
        %v737 = vunpack.c.h.b16 %v341
        %v738 = vpack.c.b16 %v676, %v674
        %v739 = vpack.c.b16 %v677, %v675
        %v740 = vpack.c.b16 %v680, %v678
        %v741 = vpack.c.b16 %v681, %v679
        %v742 = vpack.c.b16 %v684, %v682
        %v743 = vpack.c.b16 %v685, %v683
        %v744 = vpack.c.b16 %v688, %v686
        %v745 = vpack.c.b16 %v689, %v687
        %v746 = vpack.c.b16 %v692, %v690
        %v747 = vpack.c.b16 %v693, %v691
        %v748 = vpack.c.b16 %v696, %v694
        %v749 = vpack.c.b16 %v697, %v695
        %v750 = vpack.c.b16 %v700, %v698
        %v751 = vpack.c.b16 %v701, %v699
        %v752 = vpack.c.b16 %v704, %v702
        %v753 = vpack.c.b16 %v705, %v703
        %v754 = vpack.c.b16 %v708, %v706
        %v755 = vpack.c.b16 %v709, %v707
        %v756 = vpack.c.b16 %v712, %v710
        %v757 = vpack.c.b16 %v713, %v711
        %v758 = vpack.c.b16 %v716, %v714
        %v759 = vpack.c.b16 %v717, %v715
        %v760 = vpack.c.b16 %v720, %v718
        %v761 = vpack.c.b16 %v721, %v719
        %v762 = vpack.c.b16 %v724, %v722
        %v763 = vpack.c.b16 %v725, %v723
        %v764 = vpack.c.b16 %v728, %v726
        %v765 = vpack.c.b16 %v729, %v727
        %v766 = vpack.c.b16 %v732, %v730
        %v767 = vpack.c.b16 %v733, %v731
        %v768 = vpack.c.b16 %v736, %v734
        %v769 = vpack.c.b16 %v737, %v735
        %v894 = vunpack.c.l.b16 %v342
        %v895 = vunpack.c.h.b16 %v342
        %v896 = vunpack.c.l.b16 %v343
        %v897 = vunpack.c.h.b16 %v343
        %v898 = vunpack.c.l.b16 %v344
        %v899 = vunpack.c.h.b16 %v344
        %v900 = vunpack.c.l.b16 %v345
        %v901 = vunpack.c.h.b16 %v345
        %v902 = vunpack.c.l.b16 %v346
        %v903 = vunpack.c.h.b16 %v346
        %v904 = vunpack.c.l.b16 %v347
        %v905 = vunpack.c.h.b16 %v347
        %v906 = vunpack.c.l.b16 %v348
        %v907 = vunpack.c.h.b16 %v348
        %v908 = vunpack.c.l.b16 %v349
        %v909 = vunpack.c.h.b16 %v349
        %v910 = vunpack.c.l.b16 %v350
        %v911 = vunpack.c.h.b16 %v350
        %v912 = vunpack.c.l.b16 %v351
        %v913 = vunpack.c.h.b16 %v351
        %v914 = vunpack.c.l.b16 %v352
        %v915 = vunpack.c.h.b16 %v352
        %v916 = vunpack.c.l.b16 %v353
        %v917 = vunpack.c.h.b16 %v353
        %v918 = vunpack.c.l.b16 %v354
        %v919 = vunpack.c.h.b16 %v354
        %v920 = vunpack.c.l.b16 %v355
        %v921 = vunpack.c.h.b16 %v355
        %v922 = vunpack.c.l.b16 %v356
        %v923 = vunpack.c.h.b16 %v356
        %v924 = vunpack.c.l.b16 %v357
        %v925 = vunpack.c.h.b16 %v357
        %v926 = vunpack.c.l.b16 %v358
        %v927 = vunpack.c.h.b16 %v358
        %v928 = vunpack.c.l.b16 %v359
        %v929 = vunpack.c.h.b16 %v359
        %v930 = vunpack.c.l.b16 %v360
        %v931 = vunpack.c.h.b16 %v360
        %v932 = vunpack.c.l.b16 %v361
        %v933 = vunpack.c.h.b16 %v361
        %v934 = vunpack.c.l.b16 %v362
        %v935 = vunpack.c.h.b16 %v362
        %v936 = vunpack.c.l.b16 %v363
        %v937 = vunpack.c.h.b16 %v363
        %v938 = vunpack.c.l.b16 %v364
        %v939 = vunpack.c.h.b16 %v364
        %v940 = vunpack.c.l.b16 %v365
        %v941 = vunpack.c.h.b16 %v365
        %v942 = vunpack.c.l.b16 %v366
        %v943 = vunpack.c.h.b16 %v366
        %v944 = vunpack.c.l.b16 %v367
        %v945 = vunpack.c.h.b16 %v367
        %v946 = vunpack.c.l.b16 %v368
        %v947 = vunpack.c.h.b16 %v368
        %v948 = vunpack.c.l.b16 %v369
        %v949 = vunpack.c.h.b16 %v369
        %v950 = vunpack.c.l.b16 %v370
        %v951 = vunpack.c.h.b16 %v370
        %v952 = vunpack.c.l.b16 %v371
        %v953 = vunpack.c.h.b16 %v371
        %v954 = vunpack.c.l.b16 %v372
        %v955 = vunpack.c.h.b16 %v372
        %v956 = vunpack.c.l.b16 %v373
        %v957 = vunpack.c.h.b16 %v373
        %v958 = vunpack.c.l.b16 %v374
        %v959 = vunpack.c.h.b16 %v374
        %v960 = vunpack.c.l.b16 %v375
        %v961 = vunpack.c.h.b16 %v375
        %v962 = vunpack.c.l.b16 %v376
        %v963 = vunpack.c.h.b16 %v376
        %v964 = vunpack.c.l.b16 %v377
        %v965 = vunpack.c.h.b16 %v377
        %v966 = vunpack.c.l.b16 %v378
        %v967 = vunpack.c.h.b16 %v378
        %v968 = vunpack.c.l.b16 %v379
        %v969 = vunpack.c.h.b16 %v379
        %v970 = vunpack.c.l.b16 %v380
        %v971 = vunpack.c.h.b16 %v380
        %v972 = vunpack.c.l.b16 %v381
        %v973 = vunpack.c.h.b16 %v381
        %v974 = vunpack.c.l.b16 %v382
        %v975 = vunpack.c.h.b16 %v382
        %v976 = vunpack.c.l.b16 %v383
        %v977 = vunpack.c.h.b16 %v383
        %v978 = vunpack.c.l.b16 %v384
        %v979 = vunpack.c.h.b16 %v384
        %v980 = vunpack.c.l.b16 %v385
        %v981 = vunpack.c.h.b16 %v385
        %v982 = vunpack.c.l.b16 %v386
        %v983 = vunpack.c.h.b16 %v386
        %v984 = vunpack.c.l.b16 %v387
        %v985 = vunpack.c.h.b16 %v387
        %v986 = vunpack.c.l.b16 %v388
        %v987 = vunpack.c.h.b16 %v388
        %v988 = vunpack.c.l.b16 %v389
        %v989 = vunpack.c.h.b16 %v389
        %v990 = vunpack.c.l.b16 %v390
        %v991 = vunpack.c.h.b16 %v390
        %v992 = vunpack.c.l.b16 %v391
        %v993 = vunpack.c.h.b16 %v391
        %v994 = vunpack.c.l.b16 %v392
        %v995 = vunpack.c.h.b16 %v392
        %v996 = vunpack.c.l.b16 %v393
        %v997 = vunpack.c.h.b16 %v393
        %v998 = vunpack.c.l.b16 %v394
        %v999 = vunpack.c.h.b16 %v394
        %v1000 = vunpack.c.l.b16 %v395
        %v1001 = vunpack.c.h.b16 %v395
        %v1002 = vunpack.c.l.b16 %v396
        %v1003 = vunpack.c.h.b16 %v396
        %v1004 = vunpack.c.l.b16 %v397
        %v1005 = vunpack.c.h.b16 %v397
        %v1006 = vunpack.c.l.b16 %v398
        %v1007 = vunpack.c.h.b16 %v398
        %v1008 = vunpack.c.l.b16 %v399
        %v1009 = vunpack.c.h.b16 %v399
        %v1010 = vunpack.c.l.b16 %v400
        %v1011 = vunpack.c.h.b16 %v400
        %v1012 = vunpack.c.l.b16 %v401
        %v1013 = vunpack.c.h.b16 %v401
        %v1014 = vunpack.c.l.b16 %v402
        %v1015 = vunpack.c.h.b16 %v402
        %v1016 = vunpack.c.l.b16 %v403
        %v1017 = vunpack.c.h.b16 %v403
        %v1018 = vunpack.c.l.b16 %v404
        %v1019 = vunpack.c.h.b16 %v404
        %v1020 = vunpack.c.l.b16 %v405
        %v1021 = vunpack.c.h.b16 %v405
        %v1022 = vunpack.c.l.b16 %v406
        %v1023 = vunpack.c.h.b16 %v406
        %v1024 = vunpack.c.l.b16 %v407
        %v1025 = vunpack.c.h.b16 %v407
        %v1026 = vunpack.c.l.b16 %v408
        %v1027 = vunpack.c.h.b16 %v408
        %v1028 = vunpack.c.l.b16 %v409
        %v1029 = vunpack.c.h.b16 %v409
        %v1030 = vunpack.c.l.b16 %v410
        %v1031 = vunpack.c.h.b16 %v410
        %v1032 = vunpack.c.l.b16 %v411
        %v1033 = vunpack.c.h.b16 %v411
        %v1034 = vunpack.c.l.b16 %v412
        %v1035 = vunpack.c.h.b16 %v412
        %v1036 = vunpack.c.l.b16 %v413
        %v1037 = vunpack.c.h.b16 %v413
        %v1038 = vunpack.c.l.b16 %v414
        %v1039 = vunpack.c.h.b16 %v414
        %v1040 = vunpack.c.l.b16 %v415
        %v1041 = vunpack.c.h.b16 %v415
        %v1042 = vunpack.c.l.b16 %v416
        %v1043 = vunpack.c.h.b16 %v416
        %v1044 = vunpack.c.l.b16 %v417
        %v1045 = vunpack.c.h.b16 %v417
        %v1046 = vunpack.c.l.b16 %v418
        %v1047 = vunpack.c.h.b16 %v418
        %v1048 = vunpack.c.l.b16 %v419
        %v1049 = vunpack.c.h.b16 %v419
        %v1050 = vunpack.c.l.b16 %v420
        %v1051 = vunpack.c.h.b16 %v420
        %v1052 = vunpack.c.l.b16 %v421
        %v1053 = vunpack.c.h.b16 %v421
        %v1054 = vunpack.c.l.b16 %v422
        %v1055 = vunpack.c.h.b16 %v422
        %v1056 = vunpack.c.l.b16 %v423
        %v1057 = vunpack.c.h.b16 %v423
        %v1058 = vunpack.c.l.b16 %v424
        %v1059 = vunpack.c.h.b16 %v424
        %v1060 = vunpack.c.l.b16 %v425
        %v1061 = vunpack.c.h.b16 %v425
        %v1062 = vunpack.c.l.b16 %v426
        %v1063 = vunpack.c.h.b16 %v426
        %v1064 = vunpack.c.l.b16 %v427
        %v1065 = vunpack.c.h.b16 %v427
        %v1066 = vunpack.c.l.b16 %v428
        %v1067 = vunpack.c.h.b16 %v428
        %v1068 = vunpack.c.l.b16 %v429
        %v1069 = vunpack.c.h.b16 %v429
        %v1070 = vunpack.c.l.b16 %v430
        %v1071 = vunpack.c.h.b16 %v430
        %v1072 = vunpack.c.l.b16 %v431
        %v1073 = vunpack.c.h.b16 %v431
        %v1074 = vunpack.c.l.b16 %v432
        %v1075 = vunpack.c.h.b16 %v432
        %v1076 = vunpack.c.l.b16 %v433
        %v1077 = vunpack.c.h.b16 %v433
        %v1078 = vunpack.c.l.b16 %v434
        %v1079 = vunpack.c.h.b16 %v434
        %v1080 = vunpack.c.l.b16 %v435
        %v1081 = vunpack.c.h.b16 %v435
        %v1082 = vunpack.c.l.b16 %v436
        %v1083 = vunpack.c.h.b16 %v436
        %v1084 = vunpack.c.l.b16 %v437
        %v1085 = vunpack.c.h.b16 %v437
        %v1086 = vunpack.c.l.b16 %v438
        %v1087 = vunpack.c.h.b16 %v438
        %v1088 = vunpack.c.l.b16 %v439
        %v1089 = vunpack.c.h.b16 %v439
        %v1090 = vunpack.c.l.b16 %v440
        %v1091 = vunpack.c.h.b16 %v440
        %v1092 = vunpack.c.l.b16 %v441
        %v1093 = vunpack.c.h.b16 %v441
        %v1094 = vunpack.c.l.b16 %v442
        %v1095 = vunpack.c.h.b16 %v442
        %v1096 = vunpack.c.l.b16 %v443
        %v1097 = vunpack.c.h.b16 %v443
        %v1098 = vunpack.c.l.b16 %v444
        %v1099 = vunpack.c.h.b16 %v444
        %v1100 = vunpack.c.l.b16 %v445
        %v1101 = vunpack.c.h.b16 %v445
        %v1102 = vunpack.c.l.b16 %v446
        %v1103 = vunpack.c.h.b16 %v446
        %v1104 = vunpack.c.l.b16 %v447
        %v1105 = vunpack.c.h.b16 %v447
        %v1106 = vunpack.c.l.b16 %v448
        %v1107 = vunpack.c.h.b16 %v448
        %v1108 = vunpack.c.l.b16 %v449
        %v1109 = vunpack.c.h.b16 %v449
        %v1110 = vpack.c.b16 %v902, %v894
        %v1111 = vpack.c.b16 %v903, %v895
        %v1112 = vpack.c.b16 %v904, %v896
        %v1113 = vpack.c.b16 %v905, %v897
        %v1114 = vpack.c.b16 %v906, %v898
        %v1115 = vpack.c.b16 %v907, %v899
        %v1116 = vpack.c.b16 %v908, %v900
        %v1117 = vpack.c.b16 %v909, %v901
        %v1118 = vpack.c.b16 %v918, %v910
        %v1119 = vpack.c.b16 %v919, %v911
        %v1120 = vpack.c.b16 %v920, %v912
        %v1121 = vpack.c.b16 %v921, %v913
        %v1122 = vpack.c.b16 %v922, %v914
        %v1123 = vpack.c.b16 %v923, %v915
        %v1124 = vpack.c.b16 %v924, %v916
        %v1125 = vpack.c.b16 %v925, %v917
        %v1126 = vpack.c.b16 %v934, %v926
        %v1127 = vpack.c.b16 %v935, %v927
        %v1128 = vpack.c.b16 %v936, %v928
        %v1129 = vpack.c.b16 %v937, %v929
        %v1130 = vpack.c.b16 %v938, %v930
        %v1131 = vpack.c.b16 %v939, %v931
        %v1132 = vpack.c.b16 %v940, %v932
        %v1133 = vpack.c.b16 %v941, %v933
        %v1134 = vpack.c.b16 %v950, %v942
        %v1135 = vpack.c.b16 %v951, %v943
        %v1136 = vpack.c.b16 %v952, %v944
        %v1137 = vpack.c.b16 %v953, %v945
        %v1138 = vpack.c.b16 %v954, %v946
        %v1139 = vpack.c.b16 %v955, %v947
        %v1140 = vpack.c.b16 %v956, %v948
        %v1141 = vpack.c.b16 %v957, %v949
        %v1142 = vpack.c.b16 %v966, %v958
        %v1143 = vpack.c.b16 %v967, %v959
        %v1144 = vpack.c.b16 %v968, %v960
        %v1145 = vpack.c.b16 %v969, %v961
        %v1146 = vpack.c.b16 %v970, %v962
        %v1147 = vpack.c.b16 %v971, %v963
        %v1148 = vpack.c.b16 %v972, %v964
        %v1149 = vpack.c.b16 %v973, %v965
        %v1150 = vpack.c.b16 %v982, %v974
        %v1151 = vpack.c.b16 %v983, %v975
        %v1152 = vpack.c.b16 %v984, %v976
        %v1153 = vpack.c.b16 %v985, %v977
        %v1154 = vpack.c.b16 %v986, %v978
        %v1155 = vpack.c.b16 %v987, %v979
        %v1156 = vpack.c.b16 %v988, %v980
        %v1157 = vpack.c.b16 %v989, %v981
        %v1158 = vpack.c.b16 %v998, %v990
        %v1159 = vpack.c.b16 %v999, %v991
        %v1160 = vpack.c.b16 %v1000, %v992
        %v1161 = vpack.c.b16 %v1001, %v993
        %v1162 = vpack.c.b16 %v1002, %v994
        %v1163 = vpack.c.b16 %v1003, %v995
        %v1164 = vpack.c.b16 %v1004, %v996
        %v1165 = vpack.c.b16 %v1005, %v997
        %v1166 = vpack.c.b16 %v1014, %v1006
        %v1167 = vpack.c.b16 %v1015, %v1007
        %v1168 = vpack.c.b16 %v1016, %v1008
        %v1169 = vpack.c.b16 %v1017, %v1009
        %v1170 = vpack.c.b16 %v1018, %v1010
        %v1171 = vpack.c.b16 %v1019, %v1011
        %v1172 = vpack.c.b16 %v1020, %v1012
        %v1173 = vpack.c.b16 %v1021, %v1013
        %v1174 = vpack.c.b16 %v1030, %v1022
        %v1175 = vpack.c.b16 %v1031, %v1023
        %v1176 = vpack.c.b16 %v1032, %v1024
        %v1177 = vpack.c.b16 %v1033, %v1025
        %v1178 = vpack.c.b16 %v1034, %v1026
        %v1179 = vpack.c.b16 %v1035, %v1027
        %v1180 = vpack.c.b16 %v1036, %v1028
        %v1181 = vpack.c.b16 %v1037, %v1029
        %v1182 = vpack.c.b16 %v1046, %v1038
        %v1183 = vpack.c.b16 %v1047, %v1039
        %v1184 = vpack.c.b16 %v1048, %v1040
        %v1185 = vpack.c.b16 %v1049, %v1041
        %v1186 = vpack.c.b16 %v1050, %v1042
        %v1187 = vpack.c.b16 %v1051, %v1043
        %v1188 = vpack.c.b16 %v1052, %v1044
        %v1189 = vpack.c.b16 %v1053, %v1045
        %v1190 = vpack.c.b16 %v1062, %v1054
        %v1191 = vpack.c.b16 %v1063, %v1055
        %v1192 = vpack.c.b16 %v1064, %v1056
        %v1193 = vpack.c.b16 %v1065, %v1057
        %v1194 = vpack.c.b16 %v1066, %v1058
        %v1195 = vpack.c.b16 %v1067, %v1059
        %v1196 = vpack.c.b16 %v1068, %v1060
        %v1197 = vpack.c.b16 %v1069, %v1061
        %v1198 = vpack.c.b16 %v1078, %v1070
        %v1199 = vpack.c.b16 %v1079, %v1071
        %v1200 = vpack.c.b16 %v1080, %v1072
        %v1201 = vpack.c.b16 %v1081, %v1073
        %v1202 = vpack.c.b16 %v1082, %v1074
        %v1203 = vpack.c.b16 %v1083, %v1075
        %v1204 = vpack.c.b16 %v1084, %v1076
        %v1205 = vpack.c.b16 %v1085, %v1077
        %v1206 = vpack.c.b16 %v1094, %v1086
        %v1207 = vpack.c.b16 %v1095, %v1087
        %v1208 = vpack.c.b16 %v1096, %v1088
        %v1209 = vpack.c.b16 %v1097, %v1089
        %v1210 = vpack.c.b16 %v1098, %v1090
        %v1211 = vpack.c.b16 %v1099, %v1091
        %v1212 = vpack.c.b16 %v1100, %v1092
        %v1213 = vpack.c.b16 %v1101, %v1093
        %v1214 = vpack.c.b16 %v1102, %v1102
        %v1215 = vpack.c.b16 %v1103, %v1103
        %v1216 = vpack.c.b16 %v1104, %v1104
        %v1217 = vpack.c.b16 %v1105, %v1105
        %v1218 = vpack.c.b16 %v1106, %v1106
        %v1219 = vpack.c.b16 %v1107, %v1107
        %v1220 = vpack.c.b16 %v1108, %v1108
        %v1221 = vpack.c.b16 %v1109, %v1109
        %vm1326 = vcmask 719872
        %v1328 = vsel %vm1326, %v739, 0
        %v1331 = vsel %vm1326, %v741, 0
        %v1334 = vsel %vm1326, %v743, 0
        %v1337 = vsel %vm1326, %v745, 0
        %v1340 = vsel %vm1326, %v747, 0
        %v1343 = vsel %vm1326, %v749, 0
        %v1346 = vsel %vm1326, %v751, 0
        %v1349 = vsel %vm1326, %v753, 0
        %v1352 = vsel %vm1326, %v755, 0
        %v1355 = vsel %vm1326, %v757, 0
        %v1358 = vsel %vm1326, %v759, 0
        %v1361 = vsel %vm1326, %v761, 0
        %v1364 = vsel %vm1326, %v763, 0
        %v1367 = vsel %vm1326, %v765, 0
        %v1370 = vsel %vm1326, %v767, 0
        %v1373 = vsel %vm1326, %v769, 0
        %vm1375 = vcmask 1043456
        %v1377 = vsel %vm1375, %v1214, 0
        %v1380 = vsel %vm1375, %v1215, 0
        %v1383 = vsel %vm1375, %v1216, 0
        %v1386 = vsel %vm1375, %v1217, 0
        %v1389 = vsel %vm1375, %v1218, 0
        %v1392 = vsel %vm1375, %v1219, 0
        %v1395 = vsel %vm1375, %v1220, 0
        %v1398 = vsel %vm1375, %v1221, 0
        %1400 = vmatprep.subr.bf16.mxu0 %v1167
        %1401 = vmatpush1.bf16.msra.mxu0 %v1166
        %1402 = vmatprep.subr.bf16.mxu0 %v1159
        %1403 = vmatpush1.bf16.msra.mxu0 %v1158
        %1404 = vmatprep.subr.bf16.mxu0 %v1151
        %1405 = vmatpush1.bf16.msra.mxu0 %v1150
        %1406 = vmatprep.subr.bf16.mxu0 %v1143
        %1407 = vmatpush1.bf16.msra.mxu0 %v1142
        %1408 = vmatprep.subr.bf16.mxu0 %v1135
        %1409 = vmatpush1.bf16.msra.mxu0 %v1134
        %1410 = vmatprep.subr.bf16.mxu0 %v1127
        %1411 = vmatpush1.bf16.msra.mxu0 %v1126
        %1412 = vmatprep.subr.bf16.mxu0 %v1119
        %1413 = vmatpush1.bf16.msra.mxu0 %v1118
        %1414 = vmatprep.subr.bf16.mxu0 %v1111
        %1415 = vmatpush1.bf16.msra.mxu0 %v1110
        %1416 = vmatprep.subr.bf16.mxu0 0
        %1417 = vmatpush2.bf16.msra.mxu0 0
        %1418 = vmatprep.subr.bf16.mxu0 0
        %1419 = vmatpush2.bf16.msra.mxu0 0
        %1420 = vmatprep.subr.bf16.mxu0 %v1380
        %1421 = vmatpush2.bf16.msra.mxu0 %v1377
        %1422 = vmatprep.subr.bf16.mxu0 %v1207
        %1423 = vmatpush2.bf16.msra.mxu0 %v1206
        %1424 = vmatprep.subr.bf16.mxu0 %v1199
        %1425 = vmatpush2.bf16.msra.mxu0 %v1198
        %1426 = vmatprep.subr.bf16.mxu0 %v1191
        %1427 = vmatpush2.bf16.msra.mxu0 %v1190
        %1428 = vmatprep.subr.bf16.mxu0 %v1183
        %1429 = vmatpush2.bf16.msra.mxu0 %v1182
        %1430 = vmatprep.subr.bf16.mxu0 %v1175
        %1431 = vmatpush2.bf16.msra.mxu0 %v1174
        %1432 = vmatprep.mubr.bf16.mxu0 %v1328
        %1433 = vmatmul.mubr.bf16.gmra.mxu0 %v738
        %v1434 = vpop.f32.mrf.mxu0
        %v1435 = vadd.f32 %v485, %v1434
        %v1436 = vpop.f32.mrf.mxu0
        %v1437 = vadd.f32 %v485, %v1436
        %v1438 = vpop.f32.mrf.mxu0
        %v1439 = vadd.f32 %v490, %v1438
        %v1440 = vpop.f32.mrf.mxu0
        %v1441 = vadd.f32 %v490, %v1440
        %1442 = vmatprep.mubr.bf16.mxu0 %v1331
        %1443 = vmatmul.mubr.bf16.gmra.mxu0 %v740
        %v1444 = vpop.f32.mrf.mxu0
        %v1445 = vadd.f32 %v495, %v1444
        %v1446 = vpop.f32.mrf.mxu0
        %v1447 = vadd.f32 %v495, %v1446
        %v1448 = vpop.f32.mrf.mxu0
        %v1449 = vadd.f32 %v500, %v1448
        %v1450 = vpop.f32.mrf.mxu0
        %v1451 = vadd.f32 %v500, %v1450
        %1452 = vmatprep.mubr.bf16.mxu0 %v1334
        %1453 = vmatmul.mubr.bf16.gmra.mxu0 %v742
        %v1454 = vpop.f32.mrf.mxu0
        %v1455 = vadd.f32 %v505, %v1454
        %v1456 = vpop.f32.mrf.mxu0
        %v1457 = vadd.f32 %v505, %v1456
        %v1458 = vpop.f32.mrf.mxu0
        %v1459 = vadd.f32 %v510, %v1458
        %v1460 = vpop.f32.mrf.mxu0
        %v1461 = vadd.f32 %v510, %v1460
        %1462 = vmatprep.mubr.bf16.mxu0 %v1337
        %1463 = vmatmul.mubr.bf16.gmra.mxu0 %v744
        %v1464 = vpop.f32.mrf.mxu0
        %v1465 = vadd.f32 %v515, %v1464
        %v1466 = vpop.f32.mrf.mxu0
        %v1467 = vadd.f32 %v515, %v1466
        %v1468 = vpop.f32.mrf.mxu0
        %v1469 = vadd.f32 %v520, %v1468
        %v1470 = vpop.f32.mrf.mxu0
        %v1471 = vadd.f32 %v520, %v1470
        %1472 = vmatprep.mubr.bf16.mxu0 %v1340
        %1473 = vmatmul.mubr.bf16.gmra.mxu0 %v746
        %v1474 = vpop.f32.mrf.mxu0
        %v1475 = vadd.f32 %v525, %v1474
        %v1476 = vpop.f32.mrf.mxu0
        %v1477 = vadd.f32 %v525, %v1476
        %v1478 = vpop.f32.mrf.mxu0
        %v1479 = vadd.f32 %v530, %v1478
        %v1480 = vpop.f32.mrf.mxu0
        %v1481 = vadd.f32 %v530, %v1480
        %1482 = vmatprep.mubr.bf16.mxu0 %v1343
        %1483 = vmatmul.mubr.bf16.gmra.mxu0 %v748
        %v1484 = vpop.f32.mrf.mxu0
        %v1485 = vadd.f32 %v535, %v1484
        %v1486 = vpop.f32.mrf.mxu0
        %v1487 = vadd.f32 %v535, %v1486
        %v1488 = vpop.f32.mrf.mxu0
        %v1489 = vadd.f32 %v540, %v1488
        %v1490 = vpop.f32.mrf.mxu0
        %v1491 = vadd.f32 %v540, %v1490
        %1492 = vmatprep.mubr.bf16.mxu0 %v1346
        %1493 = vmatmul.mubr.bf16.gmra.mxu0 %v750
        %v1494 = vpop.f32.mrf.mxu0
        %v1495 = vadd.f32 %v545, %v1494
        %v1496 = vpop.f32.mrf.mxu0
        %v1497 = vadd.f32 %v545, %v1496
        %v1498 = vpop.f32.mrf.mxu0
        %v1499 = vadd.f32 %v550, %v1498
        %v1500 = vpop.f32.mrf.mxu0
        %v1501 = vadd.f32 %v550, %v1500
        %1502 = vmatprep.mubr.bf16.mxu0 %v1349
        %1503 = vmatmul.mubr.bf16.gmra.mxu0 %v752
        %v1504 = vpop.f32.mrf.mxu0
        %v1505 = vadd.f32 %v555, %v1504
        %v1506 = vpop.f32.mrf.mxu0
        %v1507 = vadd.f32 %v555, %v1506
        %v1508 = vpop.f32.mrf.mxu0
        %v1509 = vadd.f32 %v560, %v1508
        %v1510 = vpop.f32.mrf.mxu0
        %v1511 = vadd.f32 %v560, %v1510
        %1512 = vmatprep.mubr.bf16.mxu0 %v1352
        %1513 = vmatmul.mubr.bf16.gmra.mxu0 %v754
        %v1514 = vpop.f32.mrf.mxu0
        %v1515 = vadd.f32 %v565, %v1514
        %v1516 = vpop.f32.mrf.mxu0
        %v1517 = vadd.f32 %v565, %v1516
        %v1518 = vpop.f32.mrf.mxu0
        %v1519 = vadd.f32 %v570, %v1518
        %v1520 = vpop.f32.mrf.mxu0
        %v1521 = vadd.f32 %v570, %v1520
        %1522 = vmatprep.mubr.bf16.mxu0 %v1355
        %1523 = vmatmul.mubr.bf16.gmra.mxu0 %v756
        %v1524 = vpop.f32.mrf.mxu0
        %v1525 = vadd.f32 %v575, %v1524
        %v1526 = vpop.f32.mrf.mxu0
        %v1527 = vadd.f32 %v575, %v1526
        %v1528 = vpop.f32.mrf.mxu0
        %v1529 = vadd.f32 %v580, %v1528
        %v1530 = vpop.f32.mrf.mxu0
        %v1531 = vadd.f32 %v580, %v1530
        %1532 = vmatprep.mubr.bf16.mxu0 %v1358
        %1533 = vmatmul.mubr.bf16.gmra.mxu0 %v758
        %v1534 = vpop.f32.mrf.mxu0
        %v1535 = vadd.f32 %v585, %v1534
        %v1536 = vpop.f32.mrf.mxu0
        %v1537 = vadd.f32 %v585, %v1536
        %v1538 = vpop.f32.mrf.mxu0
        %v1539 = vadd.f32 %v590, %v1538
        %v1540 = vpop.f32.mrf.mxu0
        %v1541 = vadd.f32 %v590, %v1540
        %1542 = vmatprep.mubr.bf16.mxu0 %v1361
        %1543 = vmatmul.mubr.bf16.gmra.mxu0 %v760
        %v1544 = vpop.f32.mrf.mxu0
        %v1545 = vadd.f32 %v595, %v1544
        %v1546 = vpop.f32.mrf.mxu0
        %v1547 = vadd.f32 %v595, %v1546
        %v1548 = vpop.f32.mrf.mxu0
        %v1549 = vadd.f32 %v600, %v1548
        %v1550 = vpop.f32.mrf.mxu0
        %v1551 = vadd.f32 %v600, %v1550
        %1552 = vmatprep.mubr.bf16.mxu0 %v1364
        %1553 = vmatmul.mubr.bf16.gmra.mxu0 %v762
        %v1554 = vpop.f32.mrf.mxu0
        %v1555 = vadd.f32 %v605, %v1554
        %v1556 = vpop.f32.mrf.mxu0
        %v1557 = vadd.f32 %v605, %v1556
        %v1558 = vpop.f32.mrf.mxu0
        %v1559 = vadd.f32 %v610, %v1558
        %v1560 = vpop.f32.mrf.mxu0
        %v1561 = vadd.f32 %v610, %v1560
        %1562 = vmatprep.mubr.bf16.mxu0 %v1367
        %1563 = vmatmul.mubr.bf16.gmra.mxu0 %v764
        %v1564 = vpop.f32.mrf.mxu0
        %v1565 = vadd.f32 %v615, %v1564
        %v1566 = vpop.f32.mrf.mxu0
        %v1567 = vadd.f32 %v615, %v1566
        %v1568 = vpop.f32.mrf.mxu0
        %v1569 = vadd.f32 %v620, %v1568
        %v1570 = vpop.f32.mrf.mxu0
        %v1571 = vadd.f32 %v620, %v1570
        %1572 = vmatprep.mubr.bf16.mxu0 %v1370
        %1573 = vmatmul.mubr.bf16.gmra.mxu0 %v766
        %v1574 = vpop.f32.mrf.mxu0
        %v1575 = vadd.f32 %v625, %v1574
        %v1576 = vpop.f32.mrf.mxu0
        %v1577 = vadd.f32 %v625, %v1576
        %v1578 = vpop.f32.mrf.mxu0
        %v1579 = vadd.f32 %v630, %v1578
        %v1580 = vpop.f32.mrf.mxu0
        %v1581 = vadd.f32 %v630, %v1580
        %1582 = vmatprep.mubr.bf16.mxu0 %v1373
        %1583 = vmatmul.mubr.bf16.gmra.mxu0 %v768
        %v1584 = vpop.f32.mrf.mxu0
        %v1585 = vadd.f32 %v635, %v1584
        %v1586 = vpop.f32.mrf.mxu0
        %v1587 = vadd.f32 %v635, %v1586
        %v1588 = vpop.f32.mrf.mxu0
        %v1589 = vadd.f32 %v640, %v1588
        %v1590 = vpop.f32.mrf.mxu0
        %v1591 = vadd.f32 %v640, %v1590
        %1592 = vdwg.mxu0
        %1593 = vmatprep.subr.bf16.mxu0 %v1169
        %1594 = vmatpush1.bf16.msra.mxu0 %v1168
        %1595 = vmatprep.subr.bf16.mxu0 %v1161
        %1596 = vmatpush1.bf16.msra.mxu0 %v1160
        %1597 = vmatprep.subr.bf16.mxu0 %v1153
        %1598 = vmatpush1.bf16.msra.mxu0 %v1152
        %1599 = vmatprep.subr.bf16.mxu0 %v1145
        %1600 = vmatpush1.bf16.msra.mxu0 %v1144
        %1601 = vmatprep.subr.bf16.mxu0 %v1137
        %1602 = vmatpush1.bf16.msra.mxu0 %v1136
        %1603 = vmatprep.subr.bf16.mxu0 %v1129
        %1604 = vmatpush1.bf16.msra.mxu0 %v1128
        %1605 = vmatprep.subr.bf16.mxu0 %v1121
        %1606 = vmatpush1.bf16.msra.mxu0 %v1120
        %1607 = vmatprep.subr.bf16.mxu0 %v1113
        %1608 = vmatpush1.bf16.msra.mxu0 %v1112
        %1609 = vmatprep.subr.bf16.mxu0 0
        %1610 = vmatpush2.bf16.msra.mxu0 0
        %1611 = vmatprep.subr.bf16.mxu0 0
        %1612 = vmatpush2.bf16.msra.mxu0 0
        %1613 = vmatprep.subr.bf16.mxu0 %v1386
        %1614 = vmatpush2.bf16.msra.mxu0 %v1383
        %1615 = vmatprep.subr.bf16.mxu0 %v1209
        %1616 = vmatpush2.bf16.msra.mxu0 %v1208
        %1617 = vmatprep.subr.bf16.mxu0 %v1201
        %1618 = vmatpush2.bf16.msra.mxu0 %v1200
        %1619 = vmatprep.subr.bf16.mxu0 %v1193
        %1620 = vmatpush2.bf16.msra.mxu0 %v1192
        %1621 = vmatprep.subr.bf16.mxu0 %v1185
        %1622 = vmatpush2.bf16.msra.mxu0 %v1184
        %1623 = vmatprep.subr.bf16.mxu0 %v1177
        %1624 = vmatpush2.bf16.msra.mxu0 %v1176
        %1625 = vmatprep.mubr.bf16.mxu0 %v1328
        %1626 = vmatmul.mubr.bf16.gmra.mxu0 %v738
        %v1627 = vpop.f32.mrf.mxu0
        %v1628 = vadd.f32 %v485, %v1627
        %v1629 = vpop.f32.mrf.mxu0
        %v1630 = vadd.f32 %v485, %v1629
        %v1631 = vpop.f32.mrf.mxu0
        %v1632 = vadd.f32 %v490, %v1631
        %v1633 = vpop.f32.mrf.mxu0
        %v1634 = vadd.f32 %v490, %v1633
        %1635 = vmatprep.mubr.bf16.mxu0 %v1331
        %1636 = vmatmul.mubr.bf16.gmra.mxu0 %v740
        %v1637 = vpop.f32.mrf.mxu0
        %v1638 = vadd.f32 %v495, %v1637
        %v1639 = vpop.f32.mrf.mxu0
        %v1640 = vadd.f32 %v495, %v1639
        %v1641 = vpop.f32.mrf.mxu0
        %v1642 = vadd.f32 %v500, %v1641
        %v1643 = vpop.f32.mrf.mxu0
        %v1644 = vadd.f32 %v500, %v1643
        %1645 = vmatprep.mubr.bf16.mxu0 %v1334
        %1646 = vmatmul.mubr.bf16.gmra.mxu0 %v742
        %v1647 = vpop.f32.mrf.mxu0
        %v1648 = vadd.f32 %v505, %v1647
        %v1649 = vpop.f32.mrf.mxu0
        %v1650 = vadd.f32 %v505, %v1649
        %v1651 = vpop.f32.mrf.mxu0
        %v1652 = vadd.f32 %v510, %v1651
        %v1653 = vpop.f32.mrf.mxu0
        %v1654 = vadd.f32 %v510, %v1653
        %1655 = vmatprep.mubr.bf16.mxu0 %v1337
        %1656 = vmatmul.mubr.bf16.gmra.mxu0 %v744
        %v1657 = vpop.f32.mrf.mxu0
        %v1658 = vadd.f32 %v515, %v1657
        %v1659 = vpop.f32.mrf.mxu0
        %v1660 = vadd.f32 %v515, %v1659
        %v1661 = vpop.f32.mrf.mxu0
        %v1662 = vadd.f32 %v520, %v1661
        %v1663 = vpop.f32.mrf.mxu0
        %v1664 = vadd.f32 %v520, %v1663
        %1665 = vmatprep.mubr.bf16.mxu0 %v1340
        %1666 = vmatmul.mubr.bf16.gmra.mxu0 %v746
        %v1667 = vpop.f32.mrf.mxu0
        %v1668 = vadd.f32 %v525, %v1667
        %v1669 = vpop.f32.mrf.mxu0
        %v1670 = vadd.f32 %v525, %v1669
        %v1671 = vpop.f32.mrf.mxu0
        %v1672 = vadd.f32 %v530, %v1671
        %v1673 = vpop.f32.mrf.mxu0
        %v1674 = vadd.f32 %v530, %v1673
        %1675 = vmatprep.mubr.bf16.mxu0 %v1343
        %1676 = vmatmul.mubr.bf16.gmra.mxu0 %v748
        %v1677 = vpop.f32.mrf.mxu0
        %v1678 = vadd.f32 %v535, %v1677
        %v1679 = vpop.f32.mrf.mxu0
        %v1680 = vadd.f32 %v535, %v1679
        %v1681 = vpop.f32.mrf.mxu0
        %v1682 = vadd.f32 %v540, %v1681
        %v1683 = vpop.f32.mrf.mxu0
        %v1684 = vadd.f32 %v540, %v1683
        %1685 = vmatprep.mubr.bf16.mxu0 %v1346
        %1686 = vmatmul.mubr.bf16.gmra.mxu0 %v750
        %v1687 = vpop.f32.mrf.mxu0
        %v1688 = vadd.f32 %v545, %v1687
        %v1689 = vpop.f32.mrf.mxu0
        %v1690 = vadd.f32 %v545, %v1689
        %v1691 = vpop.f32.mrf.mxu0
        %v1692 = vadd.f32 %v550, %v1691
        %v1693 = vpop.f32.mrf.mxu0
        %v1694 = vadd.f32 %v550, %v1693
        %1695 = vmatprep.mubr.bf16.mxu0 %v1349
        %1696 = vmatmul.mubr.bf16.gmra.mxu0 %v752
        %v1697 = vpop.f32.mrf.mxu0
        %v1698 = vadd.f32 %v555, %v1697
        %v1699 = vpop.f32.mrf.mxu0
        %v1700 = vadd.f32 %v555, %v1699
        %v1701 = vpop.f32.mrf.mxu0
        %v1702 = vadd.f32 %v560, %v1701
        %v1703 = vpop.f32.mrf.mxu0
        %v1704 = vadd.f32 %v560, %v1703
        %1705 = vmatprep.mubr.bf16.mxu0 %v1352
        %1706 = vmatmul.mubr.bf16.gmra.mxu0 %v754
        %v1707 = vpop.f32.mrf.mxu0
        %v1708 = vadd.f32 %v565, %v1707
        %v1709 = vpop.f32.mrf.mxu0
        %v1710 = vadd.f32 %v565, %v1709
        %v1711 = vpop.f32.mrf.mxu0
        %v1712 = vadd.f32 %v570, %v1711
        %v1713 = vpop.f32.mrf.mxu0
        %v1714 = vadd.f32 %v570, %v1713
        %1715 = vmatprep.mubr.bf16.mxu0 %v1355
        %1716 = vmatmul.mubr.bf16.gmra.mxu0 %v756
        %v1717 = vpop.f32.mrf.mxu0
        %v1718 = vadd.f32 %v575, %v1717
        %v1719 = vpop.f32.mrf.mxu0
        %v1720 = vadd.f32 %v575, %v1719
        %v1721 = vpop.f32.mrf.mxu0
        %v1722 = vadd.f32 %v580, %v1721
        %v1723 = vpop.f32.mrf.mxu0
        %v1724 = vadd.f32 %v580, %v1723
        %1725 = vmatprep.mubr.bf16.mxu0 %v1358
        %1726 = vmatmul.mubr.bf16.gmra.mxu0 %v758
        %v1727 = vpop.f32.mrf.mxu0
        %v1728 = vadd.f32 %v585, %v1727
        %v1729 = vpop.f32.mrf.mxu0
        %v1730 = vadd.f32 %v585, %v1729
        %v1731 = vpop.f32.mrf.mxu0
        %v1732 = vadd.f32 %v590, %v1731
        %v1733 = vpop.f32.mrf.mxu0
        %v1734 = vadd.f32 %v590, %v1733
        %1735 = vmatprep.mubr.bf16.mxu0 %v1361
        %1736 = vmatmul.mubr.bf16.gmra.mxu0 %v760
        %v1737 = vpop.f32.mrf.mxu0
        %v1738 = vadd.f32 %v595, %v1737
        %v1739 = vpop.f32.mrf.mxu0
        %v1740 = vadd.f32 %v595, %v1739
        %v1741 = vpop.f32.mrf.mxu0
        %v1742 = vadd.f32 %v600, %v1741
        %v1743 = vpop.f32.mrf.mxu0
        %v1744 = vadd.f32 %v600, %v1743
        %1745 = vmatprep.mubr.bf16.mxu0 %v1364
        %1746 = vmatmul.mubr.bf16.gmra.mxu0 %v762
        %v1747 = vpop.f32.mrf.mxu0
        %v1748 = vadd.f32 %v605, %v1747
        %v1749 = vpop.f32.mrf.mxu0
        %v1750 = vadd.f32 %v605, %v1749
        %v1751 = vpop.f32.mrf.mxu0
        %v1752 = vadd.f32 %v610, %v1751
        %v1753 = vpop.f32.mrf.mxu0
        %v1754 = vadd.f32 %v610, %v1753
        %1755 = vmatprep.mubr.bf16.mxu0 %v1367
        %1756 = vmatmul.mubr.bf16.gmra.mxu0 %v764
        %v1757 = vpop.f32.mrf.mxu0
        %v1758 = vadd.f32 %v615, %v1757
        %v1759 = vpop.f32.mrf.mxu0
        %v1760 = vadd.f32 %v615, %v1759
        %v1761 = vpop.f32.mrf.mxu0
        %v1762 = vadd.f32 %v620, %v1761
        %v1763 = vpop.f32.mrf.mxu0
        %v1764 = vadd.f32 %v620, %v1763
        %1765 = vmatprep.mubr.bf16.mxu0 %v1370
        %1766 = vmatmul.mubr.bf16.gmra.mxu0 %v766
        %v1767 = vpop.f32.mrf.mxu0
        %v1768 = vadd.f32 %v625, %v1767
        %v1769 = vpop.f32.mrf.mxu0
        %v1770 = vadd.f32 %v625, %v1769
        %v1771 = vpop.f32.mrf.mxu0
        %v1772 = vadd.f32 %v630, %v1771
        %v1773 = vpop.f32.mrf.mxu0
        %v1774 = vadd.f32 %v630, %v1773
        %1775 = vmatprep.mubr.bf16.mxu0 %v1373
        %1776 = vmatmul.mubr.bf16.gmra.mxu0 %v768
        %v1777 = vpop.f32.mrf.mxu0
        %v1778 = vadd.f32 %v635, %v1777
        %v1779 = vpop.f32.mrf.mxu0
        %v1780 = vadd.f32 %v635, %v1779
        %v1781 = vpop.f32.mrf.mxu0
        %v1782 = vadd.f32 %v640, %v1781
        %v1783 = vpop.f32.mrf.mxu0
        %v1784 = vadd.f32 %v640, %v1783
        %1785 = vdwg.mxu0
        %1786 = vmatprep.subr.bf16.mxu0 %v1171
        %1787 = vmatpush1.bf16.msra.mxu0 %v1170
        %1788 = vmatprep.subr.bf16.mxu0 %v1163
        %1789 = vmatpush1.bf16.msra.mxu0 %v1162
        %1790 = vmatprep.subr.bf16.mxu0 %v1155
        %1791 = vmatpush1.bf16.msra.mxu0 %v1154
        %1792 = vmatprep.subr.bf16.mxu0 %v1147
        %1793 = vmatpush1.bf16.msra.mxu0 %v1146
        %1794 = vmatprep.subr.bf16.mxu0 %v1139
        %1795 = vmatpush1.bf16.msra.mxu0 %v1138
        %1796 = vmatprep.subr.bf16.mxu0 %v1131
        %1797 = vmatpush1.bf16.msra.mxu0 %v1130
        %1798 = vmatprep.subr.bf16.mxu0 %v1123
        %1799 = vmatpush1.bf16.msra.mxu0 %v1122
        %1800 = vmatprep.subr.bf16.mxu0 %v1115
        %1801 = vmatpush1.bf16.msra.mxu0 %v1114
        %1802 = vmatprep.subr.bf16.mxu0 0
        %1803 = vmatpush2.bf16.msra.mxu0 0
        %1804 = vmatprep.subr.bf16.mxu0 0
        %1805 = vmatpush2.bf16.msra.mxu0 0
        %1806 = vmatprep.subr.bf16.mxu0 %v1392
        %1807 = vmatpush2.bf16.msra.mxu0 %v1389
        %1808 = vmatprep.subr.bf16.mxu0 %v1211
        %1809 = vmatpush2.bf16.msra.mxu0 %v1210
        %1810 = vmatprep.subr.bf16.mxu0 %v1203
        %1811 = vmatpush2.bf16.msra.mxu0 %v1202
        %1812 = vmatprep.subr.bf16.mxu0 %v1195
        %1813 = vmatpush2.bf16.msra.mxu0 %v1194
        %1814 = vmatprep.subr.bf16.mxu0 %v1187
        %1815 = vmatpush2.bf16.msra.mxu0 %v1186
        %1816 = vmatprep.subr.bf16.mxu0 %v1179
        %1817 = vmatpush2.bf16.msra.mxu0 %v1178
        %1818 = vmatprep.mubr.bf16.mxu0 %v1328
        %1819 = vmatmul.mubr.bf16.gmra.mxu0 %v738
        %v1820 = vpop.f32.mrf.mxu0
        %v1821 = vadd.f32 %v485, %v1820
        %v1822 = vpop.f32.mrf.mxu0
        %v1823 = vadd.f32 %v485, %v1822
        %v1824 = vpop.f32.mrf.mxu0
        %v1825 = vadd.f32 %v490, %v1824
        %v1826 = vpop.f32.mrf.mxu0
        %v1827 = vadd.f32 %v490, %v1826
        %1828 = vmatprep.mubr.bf16.mxu0 %v1331
        %1829 = vmatmul.mubr.bf16.gmra.mxu0 %v740
        %v1830 = vpop.f32.mrf.mxu0
        %v1831 = vadd.f32 %v495, %v1830
        %v1832 = vpop.f32.mrf.mxu0
        %v1833 = vadd.f32 %v495, %v1832
        %v1834 = vpop.f32.mrf.mxu0
        %v1835 = vadd.f32 %v500, %v1834
        %v1836 = vpop.f32.mrf.mxu0
        %v1837 = vadd.f32 %v500, %v1836
        %1838 = vmatprep.mubr.bf16.mxu0 %v1334
        %1839 = vmatmul.mubr.bf16.gmra.mxu0 %v742
        %v1840 = vpop.f32.mrf.mxu0
        %v1841 = vadd.f32 %v505, %v1840
        %v1842 = vpop.f32.mrf.mxu0
        %v1843 = vadd.f32 %v505, %v1842
        %v1844 = vpop.f32.mrf.mxu0
        %v1845 = vadd.f32 %v510, %v1844
        %v1846 = vpop.f32.mrf.mxu0
        %v1847 = vadd.f32 %v510, %v1846
        %1848 = vmatprep.mubr.bf16.mxu0 %v1337
        %1849 = vmatmul.mubr.bf16.gmra.mxu0 %v744
        %v1850 = vpop.f32.mrf.mxu0
        %v1851 = vadd.f32 %v515, %v1850
        %v1852 = vpop.f32.mrf.mxu0
        %v1853 = vadd.f32 %v515, %v1852
        %v1854 = vpop.f32.mrf.mxu0
        %v1855 = vadd.f32 %v520, %v1854
        %v1856 = vpop.f32.mrf.mxu0
        %v1857 = vadd.f32 %v520, %v1856
        %1858 = vmatprep.mubr.bf16.mxu0 %v1340
        %1859 = vmatmul.mubr.bf16.gmra.mxu0 %v746
        %v1860 = vpop.f32.mrf.mxu0
        %v1861 = vadd.f32 %v525, %v1860
        %v1862 = vpop.f32.mrf.mxu0
        %v1863 = vadd.f32 %v525, %v1862
        %v1864 = vpop.f32.mrf.mxu0
        %v1865 = vadd.f32 %v530, %v1864
        %v1866 = vpop.f32.mrf.mxu0
        %v1867 = vadd.f32 %v530, %v1866
        %1868 = vmatprep.mubr.bf16.mxu0 %v1343
        %1869 = vmatmul.mubr.bf16.gmra.mxu0 %v748
        %v1870 = vpop.f32.mrf.mxu0
        %v1871 = vadd.f32 %v535, %v1870
        %v1872 = vpop.f32.mrf.mxu0
        %v1873 = vadd.f32 %v535, %v1872
        %v1874 = vpop.f32.mrf.mxu0
        %v1875 = vadd.f32 %v540, %v1874
        %v1876 = vpop.f32.mrf.mxu0
        %v1877 = vadd.f32 %v540, %v1876
        %1878 = vmatprep.mubr.bf16.mxu0 %v1346
        %1879 = vmatmul.mubr.bf16.gmra.mxu0 %v750
        %v1880 = vpop.f32.mrf.mxu0
        %v1881 = vadd.f32 %v545, %v1880
        %v1882 = vpop.f32.mrf.mxu0
        %v1883 = vadd.f32 %v545, %v1882
        %v1884 = vpop.f32.mrf.mxu0
        %v1885 = vadd.f32 %v550, %v1884
        %v1886 = vpop.f32.mrf.mxu0
        %v1887 = vadd.f32 %v550, %v1886
        %1888 = vmatprep.mubr.bf16.mxu0 %v1349
        %1889 = vmatmul.mubr.bf16.gmra.mxu0 %v752
        %v1890 = vpop.f32.mrf.mxu0
        %v1891 = vadd.f32 %v555, %v1890
        %v1892 = vpop.f32.mrf.mxu0
        %v1893 = vadd.f32 %v555, %v1892
        %v1894 = vpop.f32.mrf.mxu0
        %v1895 = vadd.f32 %v560, %v1894
        %v1896 = vpop.f32.mrf.mxu0
        %v1897 = vadd.f32 %v560, %v1896
        %1898 = vmatprep.mubr.bf16.mxu0 %v1352
        %1899 = vmatmul.mubr.bf16.gmra.mxu0 %v754
        %v1900 = vpop.f32.mrf.mxu0
        %v1901 = vadd.f32 %v565, %v1900
        %v1902 = vpop.f32.mrf.mxu0
        %v1903 = vadd.f32 %v565, %v1902
        %v1904 = vpop.f32.mrf.mxu0
        %v1905 = vadd.f32 %v570, %v1904
        %v1906 = vpop.f32.mrf.mxu0
        %v1907 = vadd.f32 %v570, %v1906
        %1908 = vmatprep.mubr.bf16.mxu0 %v1355
        %1909 = vmatmul.mubr.bf16.gmra.mxu0 %v756
        %v1910 = vpop.f32.mrf.mxu0
        %v1911 = vadd.f32 %v575, %v1910
        %v1912 = vpop.f32.mrf.mxu0
        %v1913 = vadd.f32 %v575, %v1912
        %v1914 = vpop.f32.mrf.mxu0
        %v1915 = vadd.f32 %v580, %v1914
        %v1916 = vpop.f32.mrf.mxu0
        %v1917 = vadd.f32 %v580, %v1916
        %1918 = vmatprep.mubr.bf16.mxu0 %v1358
        %1919 = vmatmul.mubr.bf16.gmra.mxu0 %v758
        %v1920 = vpop.f32.mrf.mxu0
        %v1921 = vadd.f32 %v585, %v1920
        %v1922 = vpop.f32.mrf.mxu0
        %v1923 = vadd.f32 %v585, %v1922
        %v1924 = vpop.f32.mrf.mxu0
        %v1925 = vadd.f32 %v590, %v1924
        %v1926 = vpop.f32.mrf.mxu0
        %v1927 = vadd.f32 %v590, %v1926
        %1928 = vmatprep.mubr.bf16.mxu0 %v1361
        %1929 = vmatmul.mubr.bf16.gmra.mxu0 %v760
        %v1930 = vpop.f32.mrf.mxu0
        %v1931 = vadd.f32 %v595, %v1930
        %v1932 = vpop.f32.mrf.mxu0
        %v1933 = vadd.f32 %v595, %v1932
        %v1934 = vpop.f32.mrf.mxu0
        %v1935 = vadd.f32 %v600, %v1934
        %v1936 = vpop.f32.mrf.mxu0
        %v1937 = vadd.f32 %v600, %v1936
        %1938 = vmatprep.mubr.bf16.mxu0 %v1364
        %1939 = vmatmul.mubr.bf16.gmra.mxu0 %v762
        %v1940 = vpop.f32.mrf.mxu0
        %v1941 = vadd.f32 %v605, %v1940
        %v1942 = vpop.f32.mrf.mxu0
        %v1943 = vadd.f32 %v605, %v1942
        %v1944 = vpop.f32.mrf.mxu0
        %v1945 = vadd.f32 %v610, %v1944
        %v1946 = vpop.f32.mrf.mxu0
        %v1947 = vadd.f32 %v610, %v1946
        %1948 = vmatprep.mubr.bf16.mxu0 %v1367
        %1949 = vmatmul.mubr.bf16.gmra.mxu0 %v764
        %v1950 = vpop.f32.mrf.mxu0
        %v1951 = vadd.f32 %v615, %v1950
        %v1952 = vpop.f32.mrf.mxu0
        %v1953 = vadd.f32 %v615, %v1952
        %v1954 = vpop.f32.mrf.mxu0
        %v1955 = vadd.f32 %v620, %v1954
        %v1956 = vpop.f32.mrf.mxu0
        %v1957 = vadd.f32 %v620, %v1956
        %1958 = vmatprep.mubr.bf16.mxu0 %v1370
        %1959 = vmatmul.mubr.bf16.gmra.mxu0 %v766
        %v1960 = vpop.f32.mrf.mxu0
        %v1961 = vadd.f32 %v625, %v1960
        %v1962 = vpop.f32.mrf.mxu0
        %v1963 = vadd.f32 %v625, %v1962
        %v1964 = vpop.f32.mrf.mxu0
        %v1965 = vadd.f32 %v630, %v1964
        %v1966 = vpop.f32.mrf.mxu0
        %v1967 = vadd.f32 %v630, %v1966
        %1968 = vmatprep.mubr.bf16.mxu0 %v1373
        %1969 = vmatmul.mubr.bf16.gmra.mxu0 %v768
        %v1970 = vpop.f32.mrf.mxu0
        %v1971 = vadd.f32 %v635, %v1970
        %v1972 = vpop.f32.mrf.mxu0
        %v1973 = vadd.f32 %v635, %v1972
        %v1974 = vpop.f32.mrf.mxu0
        %v1975 = vadd.f32 %v640, %v1974
        %v1976 = vpop.f32.mrf.mxu0
        %v1977 = vadd.f32 %v640, %v1976
        %1978 = vdwg.mxu0
        %1979 = vmatprep.subr.bf16.mxu0 %v1173
        %1980 = vmatpush1.bf16.msra.mxu0 %v1172
        %1981 = vmatprep.subr.bf16.mxu0 %v1165
        %1982 = vmatpush1.bf16.msra.mxu0 %v1164
        %1983 = vmatprep.subr.bf16.mxu0 %v1157
        %1984 = vmatpush1.bf16.msra.mxu0 %v1156
        %1985 = vmatprep.subr.bf16.mxu0 %v1149
        %1986 = vmatpush1.bf16.msra.mxu0 %v1148
        %1987 = vmatprep.subr.bf16.mxu0 %v1141
        %1988 = vmatpush1.bf16.msra.mxu0 %v1140
        %1989 = vmatprep.subr.bf16.mxu0 %v1133
        %1990 = vmatpush1.bf16.msra.mxu0 %v1132
        %1991 = vmatprep.subr.bf16.mxu0 %v1125
        %1992 = vmatpush1.bf16.msra.mxu0 %v1124
        %1993 = vmatprep.subr.bf16.mxu0 %v1117
        %1994 = vmatpush1.bf16.msra.mxu0 %v1116
        %1995 = vmatprep.subr.bf16.mxu0 0
        %1996 = vmatpush2.bf16.msra.mxu0 0
        %1997 = vmatprep.subr.bf16.mxu0 0
        %1998 = vmatpush2.bf16.msra.mxu0 0
        %1999 = vmatprep.subr.bf16.mxu0 %v1398
        %2000 = vmatpush2.bf16.msra.mxu0 %v1395
        %2001 = vmatprep.subr.bf16.mxu0 %v1213
        %2002 = vmatpush2.bf16.msra.mxu0 %v1212
        %2003 = vmatprep.subr.bf16.mxu0 %v1205
        %2004 = vmatpush2.bf16.msra.mxu0 %v1204
        %2005 = vmatprep.subr.bf16.mxu0 %v1197
        %2006 = vmatpush2.bf16.msra.mxu0 %v1196
        %2007 = vmatprep.subr.bf16.mxu0 %v1189
        %2008 = vmatpush2.bf16.msra.mxu0 %v1188
        %2009 = vmatprep.subr.bf16.mxu0 %v1181
        %2010 = vmatpush2.bf16.msra.mxu0 %v1180
        %2011 = vmatprep.mubr.bf16.mxu0 %v1328
        %2012 = vmatmul.mubr.bf16.gmra.mxu0 %v738
        %v2013 = vpop.f32.mrf.mxu0
        %v2014 = vadd.f32 %v485, %v2013
        %v2015 = vpop.f32.mrf.mxu0
        %v2016 = vadd.f32 %v485, %v2015
        %v2017 = vpop.f32.mrf.mxu0
        %v2018 = vadd.f32 %v490, %v2017
        %v2019 = vpop.f32.mrf.mxu0
        %v2020 = vadd.f32 %v490, %v2019
        %2021 = vmatprep.mubr.bf16.mxu0 %v1331
        %2022 = vmatmul.mubr.bf16.gmra.mxu0 %v740
        %v2023 = vpop.f32.mrf.mxu0
        %v2024 = vadd.f32 %v495, %v2023
        %v2025 = vpop.f32.mrf.mxu0
        %v2026 = vadd.f32 %v495, %v2025
        %v2027 = vpop.f32.mrf.mxu0
        %v2028 = vadd.f32 %v500, %v2027
        %v2029 = vpop.f32.mrf.mxu0
        %v2030 = vadd.f32 %v500, %v2029
        %2031 = vmatprep.mubr.bf16.mxu0 %v1334
        %2032 = vmatmul.mubr.bf16.gmra.mxu0 %v742
        %v2033 = vpop.f32.mrf.mxu0
        %v2034 = vadd.f32 %v505, %v2033
        %v2035 = vpop.f32.mrf.mxu0
        %v2036 = vadd.f32 %v505, %v2035
        %v2037 = vpop.f32.mrf.mxu0
        %v2038 = vadd.f32 %v510, %v2037
        %v2039 = vpop.f32.mrf.mxu0
        %v2040 = vadd.f32 %v510, %v2039
        %2041 = vmatprep.mubr.bf16.mxu0 %v1337
        %2042 = vmatmul.mubr.bf16.gmra.mxu0 %v744
        %v2043 = vpop.f32.mrf.mxu0
        %v2044 = vadd.f32 %v515, %v2043
        %v2045 = vpop.f32.mrf.mxu0
        %v2046 = vadd.f32 %v515, %v2045
        %v2047 = vpop.f32.mrf.mxu0
        %v2048 = vadd.f32 %v520, %v2047
        %v2049 = vpop.f32.mrf.mxu0
        %v2050 = vadd.f32 %v520, %v2049
        %2051 = vmatprep.mubr.bf16.mxu0 %v1340
        %2052 = vmatmul.mubr.bf16.gmra.mxu0 %v746
        %v2053 = vpop.f32.mrf.mxu0
        %v2054 = vadd.f32 %v525, %v2053
        %v2055 = vpop.f32.mrf.mxu0
        %v2056 = vadd.f32 %v525, %v2055
        %v2057 = vpop.f32.mrf.mxu0
        %v2058 = vadd.f32 %v530, %v2057
        %v2059 = vpop.f32.mrf.mxu0
        %v2060 = vadd.f32 %v530, %v2059
        %2061 = vmatprep.mubr.bf16.mxu0 %v1343
        %2062 = vmatmul.mubr.bf16.gmra.mxu0 %v748
        %v2063 = vpop.f32.mrf.mxu0
        %v2064 = vadd.f32 %v535, %v2063
        %v2065 = vpop.f32.mrf.mxu0
        %v2066 = vadd.f32 %v535, %v2065
        %v2067 = vpop.f32.mrf.mxu0
        %v2068 = vadd.f32 %v540, %v2067
        %v2069 = vpop.f32.mrf.mxu0
        %v2070 = vadd.f32 %v540, %v2069
        %2071 = vmatprep.mubr.bf16.mxu0 %v1346
        %2072 = vmatmul.mubr.bf16.gmra.mxu0 %v750
        %v2073 = vpop.f32.mrf.mxu0
        %v2074 = vadd.f32 %v545, %v2073
        %v2075 = vpop.f32.mrf.mxu0
        %v2076 = vadd.f32 %v545, %v2075
        %v2077 = vpop.f32.mrf.mxu0
        %v2078 = vadd.f32 %v550, %v2077
        %v2079 = vpop.f32.mrf.mxu0
        %v2080 = vadd.f32 %v550, %v2079
        %2081 = vmatprep.mubr.bf16.mxu0 %v1349
        %2082 = vmatmul.mubr.bf16.gmra.mxu0 %v752
        %v2083 = vpop.f32.mrf.mxu0
        %v2084 = vadd.f32 %v555, %v2083
        %v2085 = vpop.f32.mrf.mxu0
        %v2086 = vadd.f32 %v555, %v2085
        %v2087 = vpop.f32.mrf.mxu0
        %v2088 = vadd.f32 %v560, %v2087
        %v2089 = vpop.f32.mrf.mxu0
        %v2090 = vadd.f32 %v560, %v2089
        %2091 = vmatprep.mubr.bf16.mxu0 %v1352
        %2092 = vmatmul.mubr.bf16.gmra.mxu0 %v754
        %v2093 = vpop.f32.mrf.mxu0
        %v2094 = vadd.f32 %v565, %v2093
        %v2095 = vpop.f32.mrf.mxu0
        %v2096 = vadd.f32 %v565, %v2095
        %v2097 = vpop.f32.mrf.mxu0
        %v2098 = vadd.f32 %v570, %v2097
        %v2099 = vpop.f32.mrf.mxu0
        %v2100 = vadd.f32 %v570, %v2099
        %2101 = vmatprep.mubr.bf16.mxu0 %v1355
        %2102 = vmatmul.mubr.bf16.gmra.mxu0 %v756
        %v2103 = vpop.f32.mrf.mxu0
        %v2104 = vadd.f32 %v575, %v2103
        %v2105 = vpop.f32.mrf.mxu0
        %v2106 = vadd.f32 %v575, %v2105
        %v2107 = vpop.f32.mrf.mxu0
        %v2108 = vadd.f32 %v580, %v2107
        %v2109 = vpop.f32.mrf.mxu0
        %v2110 = vadd.f32 %v580, %v2109
        %2111 = vmatprep.mubr.bf16.mxu0 %v1358
        %2112 = vmatmul.mubr.bf16.gmra.mxu0 %v758
        %v2113 = vpop.f32.mrf.mxu0
        %v2114 = vadd.f32 %v585, %v2113
        %v2115 = vpop.f32.mrf.mxu0
        %v2116 = vadd.f32 %v585, %v2115
        %v2117 = vpop.f32.mrf.mxu0
        %v2118 = vadd.f32 %v590, %v2117
        %v2119 = vpop.f32.mrf.mxu0
        %v2120 = vadd.f32 %v590, %v2119
        %2121 = vmatprep.mubr.bf16.mxu0 %v1361
        %2122 = vmatmul.mubr.bf16.gmra.mxu0 %v760
        %v2123 = vpop.f32.mrf.mxu0
        %v2124 = vadd.f32 %v595, %v2123
        %v2125 = vpop.f32.mrf.mxu0
        %v2126 = vadd.f32 %v595, %v2125
        %v2127 = vpop.f32.mrf.mxu0
        %v2128 = vadd.f32 %v600, %v2127
        %v2129 = vpop.f32.mrf.mxu0
        %v2130 = vadd.f32 %v600, %v2129
        %2131 = vmatprep.mubr.bf16.mxu0 %v1364
        %2132 = vmatmul.mubr.bf16.gmra.mxu0 %v762
        %v2133 = vpop.f32.mrf.mxu0
        %v2134 = vadd.f32 %v605, %v2133
        %v2135 = vpop.f32.mrf.mxu0
        %v2136 = vadd.f32 %v605, %v2135
        %v2137 = vpop.f32.mrf.mxu0
        %v2138 = vadd.f32 %v610, %v2137
        %v2139 = vpop.f32.mrf.mxu0
        %v2140 = vadd.f32 %v610, %v2139
        %2141 = vmatprep.mubr.bf16.mxu0 %v1367
        %2142 = vmatmul.mubr.bf16.gmra.mxu0 %v764
        %v2143 = vpop.f32.mrf.mxu0
        %v2144 = vadd.f32 %v615, %v2143
        %v2145 = vpop.f32.mrf.mxu0
        %v2146 = vadd.f32 %v615, %v2145
        %v2147 = vpop.f32.mrf.mxu0
        %v2148 = vadd.f32 %v620, %v2147
        %v2149 = vpop.f32.mrf.mxu0
        %v2150 = vadd.f32 %v620, %v2149
        %2151 = vmatprep.mubr.bf16.mxu0 %v1370
        %2152 = vmatmul.mubr.bf16.gmra.mxu0 %v766
        %v2153 = vpop.f32.mrf.mxu0
        %v2154 = vadd.f32 %v625, %v2153
        %v2155 = vpop.f32.mrf.mxu0
        %v2156 = vadd.f32 %v625, %v2155
        %v2157 = vpop.f32.mrf.mxu0
        %v2158 = vadd.f32 %v630, %v2157
        %v2159 = vpop.f32.mrf.mxu0
        %v2160 = vadd.f32 %v630, %v2159
        %2161 = vmatprep.mubr.bf16.mxu0 %v1373
        %2162 = vmatmul.mubr.bf16.gmra.mxu0 %v768
        %v2163 = vpop.f32.mrf.mxu0
        %v2164 = vadd.f32 %v635, %v2163
        %v2165 = vpop.f32.mrf.mxu0
        %v2166 = vadd.f32 %v635, %v2165
        %v2167 = vpop.f32.mrf.mxu0
        %v2168 = vadd.f32 %v640, %v2167
        %v2169 = vpop.f32.mrf.mxu0
        %v2170 = vadd.f32 %v640, %v2169
        %2171 = vdwg.mxu0
        %v2172 = vmax.f32 %v1435, 0.0
        %v2173 = vmax.f32 %v1437, 0.0
        %v2174 = vmax.f32 %v1628, 0.0
        %v2175 = vmax.f32 %v1630, 0.0
        %v2176 = vmax.f32 %v1821, 0.0
        %v2177 = vmax.f32 %v1823, 0.0
        %v2178 = vmax.f32 %v2014, 0.0
        %v2179 = vmax.f32 %v2016, 0.0
        %v2180 = vmax.f32 %v1439, 0.0
        %v2181 = vmax.f32 %v1441, 0.0
        %v2182 = vmax.f32 %v1632, 0.0
        %v2183 = vmax.f32 %v1634, 0.0
        %v2184 = vmax.f32 %v1825, 0.0
        %v2185 = vmax.f32 %v1827, 0.0
        %v2186 = vmax.f32 %v2018, 0.0
        %v2187 = vmax.f32 %v2020, 0.0
        %v2188 = vmax.f32 %v1445, 0.0
        %v2189 = vmax.f32 %v1447, 0.0
        %v2190 = vmax.f32 %v1638, 0.0
        %v2191 = vmax.f32 %v1640, 0.0
        %v2192 = vmax.f32 %v1831, 0.0
        %v2193 = vmax.f32 %v1833, 0.0
        %v2194 = vmax.f32 %v2024, 0.0
        %v2195 = vmax.f32 %v2026, 0.0
        %v2196 = vmax.f32 %v1449, 0.0
        %v2197 = vmax.f32 %v1451, 0.0
        %v2198 = vmax.f32 %v1642, 0.0
        %v2199 = vmax.f32 %v1644, 0.0
        %v2200 = vmax.f32 %v1835, 0.0
        %v2201 = vmax.f32 %v1837, 0.0
        %v2202 = vmax.f32 %v2028, 0.0
        %v2203 = vmax.f32 %v2030, 0.0
        %v2204 = vmax.f32 %v1455, 0.0
        %v2205 = vmax.f32 %v1457, 0.0
        %v2206 = vmax.f32 %v1648, 0.0
        %v2207 = vmax.f32 %v1650, 0.0
        %v2208 = vmax.f32 %v1841, 0.0
        %v2209 = vmax.f32 %v1843, 0.0
        %v2210 = vmax.f32 %v2034, 0.0
        %v2211 = vmax.f32 %v2036, 0.0
        %v2212 = vmax.f32 %v1459, 0.0
        %v2213 = vmax.f32 %v1461, 0.0
        %v2214 = vmax.f32 %v1652, 0.0
        %v2215 = vmax.f32 %v1654, 0.0
        %v2216 = vmax.f32 %v1845, 0.0
        %v2217 = vmax.f32 %v1847, 0.0
        %v2218 = vmax.f32 %v2038, 0.0
        %v2219 = vmax.f32 %v2040, 0.0
        %v2220 = vmax.f32 %v1465, 0.0
        %v2221 = vmax.f32 %v1467, 0.0
        %v2222 = vmax.f32 %v1658, 0.0
        %v2223 = vmax.f32 %v1660, 0.0
        %v2224 = vmax.f32 %v1851, 0.0
        %v2225 = vmax.f32 %v1853, 0.0
        %v2226 = vmax.f32 %v2044, 0.0
        %v2227 = vmax.f32 %v2046, 0.0
        %v2228 = vmax.f32 %v1469, 0.0
        %v2229 = vmax.f32 %v1471, 0.0
        %v2230 = vmax.f32 %v1662, 0.0
        %v2231 = vmax.f32 %v1664, 0.0
        %v2232 = vmax.f32 %v1855, 0.0
        %v2233 = vmax.f32 %v1857, 0.0
        %v2234 = vmax.f32 %v2048, 0.0
        %v2235 = vmax.f32 %v2050, 0.0
        %v2236 = vmax.f32 %v1475, 0.0
        %v2237 = vmax.f32 %v1477, 0.0
        %v2238 = vmax.f32 %v1668, 0.0
        %v2239 = vmax.f32 %v1670, 0.0
        %v2240 = vmax.f32 %v1861, 0.0
        %v2241 = vmax.f32 %v1863, 0.0
        %v2242 = vmax.f32 %v2054, 0.0
        %v2243 = vmax.f32 %v2056, 0.0
        %v2244 = vmax.f32 %v1479, 0.0
        %v2245 = vmax.f32 %v1481, 0.0
        %v2246 = vmax.f32 %v1672, 0.0
        %v2247 = vmax.f32 %v1674, 0.0
        %v2248 = vmax.f32 %v1865, 0.0
        %v2249 = vmax.f32 %v1867, 0.0
        %v2250 = vmax.f32 %v2058, 0.0
        %v2251 = vmax.f32 %v2060, 0.0
        %v2252 = vmax.f32 %v1485, 0.0
        %v2253 = vmax.f32 %v1487, 0.0
        %v2254 = vmax.f32 %v1678, 0.0
        %v2255 = vmax.f32 %v1680, 0.0
        %v2256 = vmax.f32 %v1871, 0.0
        %v2257 = vmax.f32 %v1873, 0.0
        %v2258 = vmax.f32 %v2064, 0.0
        %v2259 = vmax.f32 %v2066, 0.0
        %v2260 = vmax.f32 %v1489, 0.0
        %v2261 = vmax.f32 %v1491, 0.0
        %v2262 = vmax.f32 %v1682, 0.0
        %v2263 = vmax.f32 %v1684, 0.0
        %v2264 = vmax.f32 %v1875, 0.0
        %v2265 = vmax.f32 %v1877, 0.0
        %v2266 = vmax.f32 %v2068, 0.0
        %v2267 = vmax.f32 %v2070, 0.0
        %v2268 = vmax.f32 %v1495, 0.0
        %v2269 = vmax.f32 %v1497, 0.0
        %v2270 = vmax.f32 %v1688, 0.0
        %v2271 = vmax.f32 %v1690, 0.0
        %v2272 = vmax.f32 %v1881, 0.0
        %v2273 = vmax.f32 %v1883, 0.0
        %v2274 = vmax.f32 %v2074, 0.0
        %v2275 = vmax.f32 %v2076, 0.0
        %v2276 = vmax.f32 %v1499, 0.0
        %v2277 = vmax.f32 %v1501, 0.0
        %v2278 = vmax.f32 %v1692, 0.0
        %v2279 = vmax.f32 %v1694, 0.0
        %v2280 = vmax.f32 %v1885, 0.0
        %v2281 = vmax.f32 %v1887, 0.0
        %v2282 = vmax.f32 %v2078, 0.0
        %v2283 = vmax.f32 %v2080, 0.0
        %v2284 = vmax.f32 %v1505, 0.0
        %v2285 = vmax.f32 %v1507, 0.0
        %v2286 = vmax.f32 %v1698, 0.0
        %v2287 = vmax.f32 %v1700, 0.0
        %v2288 = vmax.f32 %v1891, 0.0
        %v2289 = vmax.f32 %v1893, 0.0
        %v2290 = vmax.f32 %v2084, 0.0
        %v2291 = vmax.f32 %v2086, 0.0
        %v2292 = vmax.f32 %v1509, 0.0
        %v2293 = vmax.f32 %v1511, 0.0
        %v2294 = vmax.f32 %v1702, 0.0
        %v2295 = vmax.f32 %v1704, 0.0
        %v2296 = vmax.f32 %v1895, 0.0
        %v2297 = vmax.f32 %v1897, 0.0
        %v2298 = vmax.f32 %v2088, 0.0
        %v2299 = vmax.f32 %v2090, 0.0
        %v2300 = vmax.f32 %v1515, 0.0
        %v2301 = vmax.f32 %v1517, 0.0
        %v2302 = vmax.f32 %v1708, 0.0
        %v2303 = vmax.f32 %v1710, 0.0
        %v2304 = vmax.f32 %v1901, 0.0
        %v2305 = vmax.f32 %v1903, 0.0
        %v2306 = vmax.f32 %v2094, 0.0
        %v2307 = vmax.f32 %v2096, 0.0
        %v2308 = vmax.f32 %v1519, 0.0
        %v2309 = vmax.f32 %v1521, 0.0
        %v2310 = vmax.f32 %v1712, 0.0
        %v2311 = vmax.f32 %v1714, 0.0
        %v2312 = vmax.f32 %v1905, 0.0
        %v2313 = vmax.f32 %v1907, 0.0
        %v2314 = vmax.f32 %v2098, 0.0
        %v2315 = vmax.f32 %v2100, 0.0
        %v2316 = vmax.f32 %v1525, 0.0
        %v2317 = vmax.f32 %v1527, 0.0
        %v2318 = vmax.f32 %v1718, 0.0
        %v2319 = vmax.f32 %v1720, 0.0
        %v2320 = vmax.f32 %v1911, 0.0
        %v2321 = vmax.f32 %v1913, 0.0
        %v2322 = vmax.f32 %v2104, 0.0
        %v2323 = vmax.f32 %v2106, 0.0
        %v2324 = vmax.f32 %v1529, 0.0
        %v2325 = vmax.f32 %v1531, 0.0
        %v2326 = vmax.f32 %v1722, 0.0
        %v2327 = vmax.f32 %v1724, 0.0
        %v2328 = vmax.f32 %v1915, 0.0
        %v2329 = vmax.f32 %v1917, 0.0
        %v2330 = vmax.f32 %v2108, 0.0
        %v2331 = vmax.f32 %v2110, 0.0
        %v2332 = vmax.f32 %v1535, 0.0
        %v2333 = vmax.f32 %v1537, 0.0
        %v2334 = vmax.f32 %v1728, 0.0
        %v2335 = vmax.f32 %v1730, 0.0
        %v2336 = vmax.f32 %v1921, 0.0
        %v2337 = vmax.f32 %v1923, 0.0
        %v2338 = vmax.f32 %v2114, 0.0
        %v2339 = vmax.f32 %v2116, 0.0
        %v2340 = vmax.f32 %v1539, 0.0
        %v2341 = vmax.f32 %v1541, 0.0
        %v2342 = vmax.f32 %v1732, 0.0
        %v2343 = vmax.f32 %v1734, 0.0
        %v2344 = vmax.f32 %v1925, 0.0
        %v2345 = vmax.f32 %v1927, 0.0
        %v2346 = vmax.f32 %v2118, 0.0
        %v2347 = vmax.f32 %v2120, 0.0
        %v2348 = vmax.f32 %v1545, 0.0
        %v2349 = vmax.f32 %v1547, 0.0
        %v2350 = vmax.f32 %v1738, 0.0
        %v2351 = vmax.f32 %v1740, 0.0
        %v2352 = vmax.f32 %v1931, 0.0
        %v2353 = vmax.f32 %v1933, 0.0
        %v2354 = vmax.f32 %v2124, 0.0
        %v2355 = vmax.f32 %v2126, 0.0
        %v2356 = vmax.f32 %v1549, 0.0
        %v2357 = vmax.f32 %v1551, 0.0
        %v2358 = vmax.f32 %v1742, 0.0
        %v2359 = vmax.f32 %v1744, 0.0
        %v2360 = vmax.f32 %v1935, 0.0
        %v2361 = vmax.f32 %v1937, 0.0
        %v2362 = vmax.f32 %v2128, 0.0
        %v2363 = vmax.f32 %v2130, 0.0
        %v2364 = vmax.f32 %v1555, 0.0
        %v2365 = vmax.f32 %v1557, 0.0
        %v2366 = vmax.f32 %v1748, 0.0
        %v2367 = vmax.f32 %v1750, 0.0
        %v2368 = vmax.f32 %v1941, 0.0
        %v2369 = vmax.f32 %v1943, 0.0
        %v2370 = vmax.f32 %v2134, 0.0
        %v2371 = vmax.f32 %v2136, 0.0
        %v2372 = vmax.f32 %v1559, 0.0
        %v2373 = vmax.f32 %v1561, 0.0
        %v2374 = vmax.f32 %v1752, 0.0
        %v2375 = vmax.f32 %v1754, 0.0
        %v2376 = vmax.f32 %v1945, 0.0
        %v2377 = vmax.f32 %v1947, 0.0
        %v2378 = vmax.f32 %v2138, 0.0
        %v2379 = vmax.f32 %v2140, 0.0
        %v2380 = vmax.f32 %v1565, 0.0
        %v2381 = vmax.f32 %v1567, 0.0
        %v2382 = vmax.f32 %v1758, 0.0
        %v2383 = vmax.f32 %v1760, 0.0
        %v2384 = vmax.f32 %v1951, 0.0
        %v2385 = vmax.f32 %v1953, 0.0
        %v2386 = vmax.f32 %v2144, 0.0
        %v2387 = vmax.f32 %v2146, 0.0
        %v2388 = vmax.f32 %v1569, 0.0
        %v2389 = vmax.f32 %v1571, 0.0
        %v2390 = vmax.f32 %v1762, 0.0
        %v2391 = vmax.f32 %v1764, 0.0
        %v2392 = vmax.f32 %v1955, 0.0
        %v2393 = vmax.f32 %v1957, 0.0
        %v2394 = vmax.f32 %v2148, 0.0
        %v2395 = vmax.f32 %v2150, 0.0
        %v2396 = vmax.f32 %v1575, 0.0
        %v2397 = vmax.f32 %v1577, 0.0
        %v2398 = vmax.f32 %v1768, 0.0
        %v2399 = vmax.f32 %v1770, 0.0
        %v2400 = vmax.f32 %v1961, 0.0
        %v2401 = vmax.f32 %v1963, 0.0
        %v2402 = vmax.f32 %v2154, 0.0
        %v2403 = vmax.f32 %v2156, 0.0
        %v2404 = vmax.f32 %v1579, 0.0
        %v2405 = vmax.f32 %v1581, 0.0
        %v2406 = vmax.f32 %v1772, 0.0
        %v2407 = vmax.f32 %v1774, 0.0
        %v2408 = vmax.f32 %v1965, 0.0
        %v2409 = vmax.f32 %v1967, 0.0
        %v2410 = vmax.f32 %v2158, 0.0
        %v2411 = vmax.f32 %v2160, 0.0
        %v2412 = vmax.f32 %v1585, 0.0
        %v2413 = vmax.f32 %v1587, 0.0
        %v2414 = vmax.f32 %v1778, 0.0
        %v2415 = vmax.f32 %v1780, 0.0
        %v2416 = vmax.f32 %v1971, 0.0
        %v2417 = vmax.f32 %v1973, 0.0
        %v2418 = vmax.f32 %v2164, 0.0
        %v2419 = vmax.f32 %v2166, 0.0
        %v2420 = vmax.f32 %v1589, 0.0
        %v2421 = vmax.f32 %v1591, 0.0
        %v2422 = vmax.f32 %v1782, 0.0
        %v2423 = vmax.f32 %v1784, 0.0
        %v2424 = vmax.f32 %v1975, 0.0
        %v2425 = vmax.f32 %v1977, 0.0
        %v2426 = vmax.f32 %v2168, 0.0
        %v2427 = vmax.f32 %v2170, 0.0
        %v2428 = vpack.c.bf16 %v2180, %v2172
        %v2429 = vpack.c.bf16 %v2181, %v2173
        %v2430 = vpack.c.bf16 %v2182, %v2174
        %v2431 = vpack.c.bf16 %v2183, %v2175
        %v2432 = vpack.c.bf16 %v2184, %v2176
        %v2433 = vpack.c.bf16 %v2185, %v2177
        %v2434 = vpack.c.bf16 %v2186, %v2178
        %v2435 = vpack.c.bf16 %v2187, %v2179
        %v2436 = vpack.c.bf16 %v2196, %v2188
        %v2437 = vpack.c.bf16 %v2197, %v2189
        %v2438 = vpack.c.bf16 %v2198, %v2190
        %v2439 = vpack.c.bf16 %v2199, %v2191
        %v2440 = vpack.c.bf16 %v2200, %v2192
        %v2441 = vpack.c.bf16 %v2201, %v2193
        %v2442 = vpack.c.bf16 %v2202, %v2194
        %v2443 = vpack.c.bf16 %v2203, %v2195
        %v2444 = vpack.c.bf16 %v2212, %v2204
        %v2445 = vpack.c.bf16 %v2213, %v2205
        %v2446 = vpack.c.bf16 %v2214, %v2206
        %v2447 = vpack.c.bf16 %v2215, %v2207
        %v2448 = vpack.c.bf16 %v2216, %v2208
        %v2449 = vpack.c.bf16 %v2217, %v2209
        %v2450 = vpack.c.bf16 %v2218, %v2210
        %v2451 = vpack.c.bf16 %v2219, %v2211
        %v2452 = vpack.c.bf16 %v2228, %v2220
        %v2453 = vpack.c.bf16 %v2229, %v2221
        %v2454 = vpack.c.bf16 %v2230, %v2222
        %v2455 = vpack.c.bf16 %v2231, %v2223
        %v2456 = vpack.c.bf16 %v2232, %v2224
        %v2457 = vpack.c.bf16 %v2233, %v2225
        %v2458 = vpack.c.bf16 %v2234, %v2226
        %v2459 = vpack.c.bf16 %v2235, %v2227
        %v2460 = vpack.c.bf16 %v2244, %v2236
        %v2461 = vpack.c.bf16 %v2245, %v2237
        %v2462 = vpack.c.bf16 %v2246, %v2238
        %v2463 = vpack.c.bf16 %v2247, %v2239
        %v2464 = vpack.c.bf16 %v2248, %v2240
        %v2465 = vpack.c.bf16 %v2249, %v2241
        %v2466 = vpack.c.bf16 %v2250, %v2242
        %v2467 = vpack.c.bf16 %v2251, %v2243
        %v2468 = vpack.c.bf16 %v2260, %v2252
        %v2469 = vpack.c.bf16 %v2261, %v2253
        %v2470 = vpack.c.bf16 %v2262, %v2254
        %v2471 = vpack.c.bf16 %v2263, %v2255
        %v2472 = vpack.c.bf16 %v2264, %v2256
        %v2473 = vpack.c.bf16 %v2265, %v2257
        %v2474 = vpack.c.bf16 %v2266, %v2258
        %v2475 = vpack.c.bf16 %v2267, %v2259
        %v2476 = vpack.c.bf16 %v2276, %v2268
        %v2477 = vpack.c.bf16 %v2277, %v2269
        %v2478 = vpack.c.bf16 %v2278, %v2270
        %v2479 = vpack.c.bf16 %v2279, %v2271
        %v2480 = vpack.c.bf16 %v2280, %v2272
        %v2481 = vpack.c.bf16 %v2281, %v2273
        %v2482 = vpack.c.bf16 %v2282, %v2274
        %v2483 = vpack.c.bf16 %v2283, %v2275
        %v2484 = vpack.c.bf16 %v2292, %v2284
        %v2485 = vpack.c.bf16 %v2293, %v2285
        %v2486 = vpack.c.bf16 %v2294, %v2286
        %v2487 = vpack.c.bf16 %v2295, %v2287
        %v2488 = vpack.c.bf16 %v2296, %v2288
        %v2489 = vpack.c.bf16 %v2297, %v2289
        %v2490 = vpack.c.bf16 %v2298, %v2290
        %v2491 = vpack.c.bf16 %v2299, %v2291
        %v2492 = vpack.c.bf16 %v2308, %v2300
        %v2493 = vpack.c.bf16 %v2309, %v2301
        %v2494 = vpack.c.bf16 %v2310, %v2302
        %v2495 = vpack.c.bf16 %v2311, %v2303
        %v2496 = vpack.c.bf16 %v2312, %v2304
        %v2497 = vpack.c.bf16 %v2313, %v2305
        %v2498 = vpack.c.bf16 %v2314, %v2306
        %v2499 = vpack.c.bf16 %v2315, %v2307
        %v2500 = vpack.c.bf16 %v2324, %v2316
        %v2501 = vpack.c.bf16 %v2325, %v2317
        %v2502 = vpack.c.bf16 %v2326, %v2318
        %v2503 = vpack.c.bf16 %v2327, %v2319
        %v2504 = vpack.c.bf16 %v2328, %v2320
        %v2505 = vpack.c.bf16 %v2329, %v2321
        %v2506 = vpack.c.bf16 %v2330, %v2322
        %v2507 = vpack.c.bf16 %v2331, %v2323
        %v2508 = vpack.c.bf16 %v2340, %v2332
        %v2509 = vpack.c.bf16 %v2341, %v2333
        %v2510 = vpack.c.bf16 %v2342, %v2334
        %v2511 = vpack.c.bf16 %v2343, %v2335
        %v2512 = vpack.c.bf16 %v2344, %v2336
        %v2513 = vpack.c.bf16 %v2345, %v2337
        %v2514 = vpack.c.bf16 %v2346, %v2338
        %v2515 = vpack.c.bf16 %v2347, %v2339
        %v2516 = vpack.c.bf16 %v2356, %v2348
        %v2517 = vpack.c.bf16 %v2357, %v2349
        %v2518 = vpack.c.bf16 %v2358, %v2350
        %v2519 = vpack.c.bf16 %v2359, %v2351
        %v2520 = vpack.c.bf16 %v2360, %v2352
        %v2521 = vpack.c.bf16 %v2361, %v2353
        %v2522 = vpack.c.bf16 %v2362, %v2354
        %v2523 = vpack.c.bf16 %v2363, %v2355
        %v2524 = vpack.c.bf16 %v2372, %v2364
        %v2525 = vpack.c.bf16 %v2373, %v2365
        %v2526 = vpack.c.bf16 %v2374, %v2366
        %v2527 = vpack.c.bf16 %v2375, %v2367
        %v2528 = vpack.c.bf16 %v2376, %v2368
        %v2529 = vpack.c.bf16 %v2377, %v2369
        %v2530 = vpack.c.bf16 %v2378, %v2370
        %v2531 = vpack.c.bf16 %v2379, %v2371
        %v2532 = vpack.c.bf16 %v2388, %v2380
        %v2533 = vpack.c.bf16 %v2389, %v2381
        %v2534 = vpack.c.bf16 %v2390, %v2382
        %v2535 = vpack.c.bf16 %v2391, %v2383
        %v2536 = vpack.c.bf16 %v2392, %v2384
        %v2537 = vpack.c.bf16 %v2393, %v2385
        %v2538 = vpack.c.bf16 %v2394, %v2386
        %v2539 = vpack.c.bf16 %v2395, %v2387
        %v2540 = vpack.c.bf16 %v2404, %v2396
        %v2541 = vpack.c.bf16 %v2405, %v2397
        %v2542 = vpack.c.bf16 %v2406, %v2398
        %v2543 = vpack.c.bf16 %v2407, %v2399
        %v2544 = vpack.c.bf16 %v2408, %v2400
        %v2545 = vpack.c.bf16 %v2409, %v2401
        %v2546 = vpack.c.bf16 %v2410, %v2402
        %v2547 = vpack.c.bf16 %v2411, %v2403
        %v2548 = vpack.c.bf16 %v2420, %v2412
        %v2549 = vpack.c.bf16 %v2421, %v2413
        %v2550 = vpack.c.bf16 %v2422, %v2414
        %v2551 = vpack.c.bf16 %v2423, %v2415
        %v2552 = vpack.c.bf16 %v2424, %v2416
        %v2553 = vpack.c.bf16 %v2425, %v2417
        %v2554 = vpack.c.bf16 %v2426, %v2418
        %v2555 = vpack.c.bf16 %v2427, %v2419
        %v2556 = vld [vmem:[%s3] sm:$0xff]
        %v2557 = vld [vmem:[%s3 + $0x8] sm:$0xf]
        %v2558 = vld [vmem:[%s3 + $0xc] sm:$0xff]
        %v2559 = vld [vmem:[%s3 + $0x14] sm:$0xf]
        %v2560 = vld [vmem:[%s3 + $0x18] sm:$0xff]
        %v2561 = vld [vmem:[%s3 + $0x20] sm:$0xf]
        %v2562 = vld [vmem:[%s3 + $0x24] sm:$0xff]
        %v2563 = vld [vmem:[%s3 + $0x2c] sm:$0xf]
        %v2564 = vld [vmem:[%s3 + $0x30] sm:$0xff]
        %v2565 = vld [vmem:[%s3 + $0x38] sm:$0xf]
        %v2566 = vld [vmem:[%s3 + $0x3c] sm:$0xff]
        %v2567 = vld [vmem:[%s3 + $0x44] sm:$0xf]
        %v2568 = vld [vmem:[%s3 + $0x48] sm:$0xff]
        %v2569 = vld [vmem:[%s3 + $0x50] sm:$0xf]
        %v2570 = vld [vmem:[%s3 + $0x54] sm:$0xff]
        %v2571 = vld [vmem:[%s3 + $0x5c] sm:$0xf]
        %v2572 = vld [vmem:[%s3 + $0x60] sm:$0xff]
        %v2573 = vld [vmem:[%s3 + $0x68] sm:$0xf]
        %v2574 = vld [vmem:[%s3 + $0x6c] sm:$0xff]
        %v2575 = vld [vmem:[%s3 + $0x74] sm:$0xf]
        %v2576 = vld [vmem:[%s3 + $0x78] sm:$0xff]
        %v2577 = vld [vmem:[%s3 + $0x80] sm:$0xf]
        %v2578 = vld [vmem:[%s3 + $0x84] sm:$0xff]
        %v2579 = vld [vmem:[%s3 + $0x8c] sm:$0xf]
        %v2580 = vld [vmem:[%s3 + $0x90] sm:$0xff]
        %v2581 = vld [vmem:[%s3 + $0x98] sm:$0xf]
        %v2582 = vld [vmem:[%s3 + $0x9c] sm:$0xff]
        %v2583 = vld [vmem:[%s3 + $0xa4] sm:$0xf]
        %v2584 = vld [vmem:[%s3 + $0xa8] sm:$0xff]
        %v2585 = vld [vmem:[%s3 + $0xb0] sm:$0xf]
        %v2586 = vld [vmem:[%s3 + $0xb4] sm:$0xff]
        %v2587 = vld [vmem:[%s3 + $0xbc] sm:$0xf]
        %v2588 = vld [vmem:[%s3 + $0xc0] sm:$0xff]
        %v2589 = vld [vmem:[%s3 + $0xc8] sm:$0xf]
        %v2590 = vld [vmem:[%s3 + $0xcc] sm:$0xff]
        %v2591 = vld [vmem:[%s3 + $0xd4] sm:$0xf]
        %v2592 = vld [vmem:[%s3 + $0xd8] sm:$0xff]
        %v2593 = vld [vmem:[%s3 + $0xe0] sm:$0xf]
        %v2594 = vld [vmem:[%s3 + $0xe4] sm:$0xff]
        %v2595 = vld [vmem:[%s3 + $0xec] sm:$0xf]
        %v2596 = vld [vmem:[%s3 + $0xf0] sm:$0xff]
        %v2597 = vld [vmem:[%s3 + $0xf8] sm:$0xf]
        %v2598 = vld [vmem:[%s3 + $0xfc] sm:$0xff]
        %v2599 = vld [vmem:[%s3 + $0x104] sm:$0xf]
        %v2600 = vld [vmem:[%s3 + $0x108] sm:$0xff]
        %v2601 = vld [vmem:[%s3 + $0x110] sm:$0xf]
        %v2602 = vld [vmem:[%s3 + $0x114] sm:$0xff]
        %v2603 = vld [vmem:[%s3 + $0x11c] sm:$0xf]
        %v2604 = vld [vmem:[%s3 + $0x120] sm:$0xff]
        %v2605 = vld [vmem:[%s3 + $0x128] sm:$0xf]
        %v2606 = vld [vmem:[%s3 + $0x12c] sm:$0xff]
        %v2607 = vld [vmem:[%s3 + $0x134] sm:$0xf]
        %v2608 = vld [vmem:[%s3 + $0x138] sm:$0xff]
        %v2609 = vld [vmem:[%s3 + $0x140] sm:$0xf]
        %v2610 = vld [vmem:[%s3 + $0x144] sm:$0xff]
        %v2611 = vld [vmem:[%s3 + $0x14c] sm:$0xf]
        %v2612 = vld [vmem:[%s3 + $0x150] sm:$0xff]
        %v2613 = vld [vmem:[%s3 + $0x158] sm:$0xf]
        %v2614 = vld [vmem:[%s3 + $0x15c] sm:$0xff]
        %v2615 = vld [vmem:[%s3 + $0x164] sm:$0xf]
        %v2616 = vld [vmem:[%s3 + $0x168] sm:$0xff]
        %v2617 = vld [vmem:[%s3 + $0x170] sm:$0xf]
        %v2618 = vld [vmem:[%s3 + $0x174] sm:$0xff]
        %v2619 = vld [vmem:[%s3 + $0x17c] sm:$0xf]
        %v2620 = vld [vmem:[%s3 + $0x180] sm:$0xff]
        %v2621 = vld [vmem:[%s3 + $0x188] sm:$0xf]
        %v2622 = vld [vmem:[%s3 + $0x18c] sm:$0xff]
        %v2623 = vld [vmem:[%s3 + $0x194] sm:$0xf]
        %v2624 = vld [vmem:[%s3 + $0x198] sm:$0xff]
        %v2625 = vld [vmem:[%s3 + $0x1a0] sm:$0xf]
        %v2626 = vld [vmem:[%s3 + $0x1a4] sm:$0xff]
        %v2627 = vld [vmem:[%s3 + $0x1ac] sm:$0xf]
        %v2628 = vld [vmem:[%s3 + $0x1b0] sm:$0xff]
        %v2629 = vld [vmem:[%s3 + $0x1b8] sm:$0xf]
        %v2630 = vld [vmem:[%s3 + $0x1bc] sm:$0xff]
        %v2631 = vld [vmem:[%s3 + $0x1c4] sm:$0xf]
        %v2632 = vld [vmem:[%s3 + $0x1c8] sm:$0xff]
        %v2633 = vld [vmem:[%s3 + $0x1d0] sm:$0xf]
        %v2634 = vld [vmem:[%s3 + $0x1d4] sm:$0xff]
        %v2635 = vld [vmem:[%s3 + $0x1dc] sm:$0xf]
        %v2636 = vld [vmem:[%s3 + $0x1e0] sm:$0xff]
        %v2637 = vld [vmem:[%s3 + $0x1e8] sm:$0xf]
        %v2638 = vld [vmem:[%s3 + $0x1ec] sm:$0xff]
        %v2639 = vld [vmem:[%s3 + $0x1f4] sm:$0xf]
        %v2640 = vld [vmem:[%s3 + $0x1f8] sm:$0xff]
        %v2641 = vld [vmem:[%s3 + $0x200] sm:$0xf]
        %v2642 = vld [vmem:[%s3 + $0x204] sm:$0xff]
        %v2643 = vld [vmem:[%s3 + $0x20c] sm:$0xf]
        %v2644 = vld [vmem:[%s3 + $0x210] sm:$0xff]
        %v2645 = vld [vmem:[%s3 + $0x218] sm:$0xf]
        %v2646 = vld [vmem:[%s3 + $0x21c] sm:$0xff]
        %v2647 = vld [vmem:[%s3 + $0x224] sm:$0xf]
        %v2648 = vld [vmem:[%s3 + $0x228] sm:$0xff]
        %v2649 = vld [vmem:[%s3 + $0x230] sm:$0xf]
        %v2650 = vld [vmem:[%s3 + $0x234] sm:$0xff]
        %v2651 = vld [vmem:[%s3 + $0x23c] sm:$0xf]
        %v2652 = vld [vmem:[%s3 + $0x240] sm:$0xff]
        %v2653 = vld [vmem:[%s3 + $0x248] sm:$0xf]
        %v2654 = vld [vmem:[%s3 + $0x24c] sm:$0xff]
        %v2655 = vld [vmem:[%s3 + $0x254] sm:$0xf]
        %v2656 = vld [vmem:[%s3 + $0x258] sm:$0xff]
        %v2657 = vld [vmem:[%s3 + $0x260] sm:$0xf]
        %v2658 = vld [vmem:[%s3 + $0x264] sm:$0xff]
        %v2659 = vld [vmem:[%s3 + $0x26c] sm:$0xf]
        %v2660 = vld [vmem:[%s3 + $0x270] sm:$0xff]
        %v2661 = vld [vmem:[%s3 + $0x278] sm:$0xf]
        %v2662 = vld [vmem:[%s3 + $0x27c] sm:$0xff]
        %v2663 = vld [vmem:[%s3 + $0x284] sm:$0xf]
        %v2664 = vld [vmem:[%s3 + $0x288] sm:$0xff]
        %v2665 = vld [vmem:[%s3 + $0x290] sm:$0xf]
        %v2666 = vld [vmem:[%s3 + $0x294] sm:$0xff]
        %v2667 = vld [vmem:[%s3 + $0x29c] sm:$0xf]
        %v2668 = vld [vmem:[%s3 + $0x2a0] sm:$0xff]
        %v2669 = vld [vmem:[%s3 + $0x2a8] sm:$0xf]
        %v2670 = vld [vmem:[%s3 + $0x2ac] sm:$0xff]
        %v2671 = vld [vmem:[%s3 + $0x2b4] sm:$0xf]
        %v2672 = vld [vmem:[%s3 + $0x2b8] sm:$0xff]
        %v2673 = vld [vmem:[%s3 + $0x2c0] sm:$0xf]
        %v2674 = vld [vmem:[%s3 + $0x2c4] sm:$0xff]
        %v2675 = vld [vmem:[%s3 + $0x2cc] sm:$0xf]
        %v2676 = vld [vmem:[%s3 + $0x2d0] sm:$0xff]
        %v2677 = vld [vmem:[%s3 + $0x2d8] sm:$0xf]
        %v2678 = vld [vmem:[%s3 + $0x2dc] sm:$0xff]
        %v2679 = vld [vmem:[%s3 + $0x2e4] sm:$0xf]
        %v2680 = vld [vmem:[%s3 + $0x2e8] sm:$0xff]
        %v2681 = vld [vmem:[%s3 + $0x2f0] sm:$0xf]
        %v2682 = vld [vmem:[%s3 + $0x2f4] sm:$0xff]
        %v2683 = vld [vmem:[%s3 + $0x2fc] sm:$0xf]
        %v2684 = vld [vmem:[%s3 + $0x300] sm:$0xff]
        %v2685 = vld [vmem:[%s3 + $0x308] sm:$0xf]
        %v2686 = vld [vmem:[%s3 + $0x30c] sm:$0xff]
        %v2687 = vld [vmem:[%s3 + $0x314] sm:$0xf]
        %v2688 = vld [vmem:[%s3 + $0x318] sm:$0xff]
        %v2689 = vld [vmem:[%s3 + $0x320] sm:$0xf]
        %v2690 = vld [vmem:[%s3 + $0x324] sm:$0xff]
        %v2691 = vld [vmem:[%s3 + $0x32c] sm:$0xf]
        %v2692 = vld [vmem:[%s3 + $0x330] sm:$0xff]
        %v2693 = vld [vmem:[%s3 + $0x338] sm:$0xf]
        %v2694 = vld [vmem:[%s3 + $0x33c] sm:$0xff]
        %v2695 = vld [vmem:[%s3 + $0x344] sm:$0xf]
        %v2696 = vld [vmem:[%s3 + $0x348] sm:$0xff]
        %v2697 = vld [vmem:[%s3 + $0x350] sm:$0xf]
        %v2698 = vld [vmem:[%s3 + $0x354] sm:$0xff]
        %v2699 = vld [vmem:[%s3 + $0x35c] sm:$0xf]
        %v2700 = vld [vmem:[%s3 + $0x360] sm:$0xff]
        %v2701 = vld [vmem:[%s3 + $0x368] sm:$0xf]
        %v2702 = vld [vmem:[%s3 + $0x36c] sm:$0xff]
        %v2703 = vld [vmem:[%s3 + $0x374] sm:$0xf]
        %v2704 = vld [vmem:[%s3 + $0x378] sm:$0xff]
        %v2705 = vld [vmem:[%s3 + $0x380] sm:$0xf]
        %v2706 = vld [vmem:[%s3 + $0x384] sm:$0xff]
        %v2707 = vld [vmem:[%s3 + $0x38c] sm:$0xf]
        %v2708 = vld [vmem:[%s3 + $0x390] sm:$0xff]
        %v2709 = vld [vmem:[%s3 + $0x398] sm:$0xf]
        %v2710 = vld [vmem:[%s3 + $0x39c] sm:$0xff]
        %v2711 = vld [vmem:[%s3 + $0x3a4] sm:$0xf]
        %v2712 = vld [vmem:[%s3 + $0x3a8] sm:$0xff]
        %v2713 = vld [vmem:[%s3 + $0x3b0] sm:$0xf]
        %v2714 = vld [vmem:[%s3 + $0x3b4] sm:$0xff]
        %v2715 = vld [vmem:[%s3 + $0x3bc] sm:$0xf]
        %v2716 = vld [vmem:[%s3 + $0x3c0] sm:$0xff]
        %v2717 = vld [vmem:[%s3 + $0x3c8] sm:$0xf]
        %v2718 = vld [vmem:[%s3 + $0x3cc] sm:$0xff]
        %v2719 = vld [vmem:[%s3 + $0x3d4] sm:$0xf]
        %v2720 = vld [vmem:[%s3 + $0x3d8] sm:$0xff]
        %v2721 = vld [vmem:[%s3 + $0x3e0] sm:$0xf]
        %v2722 = vld [vmem:[%s3 + $0x3e4] sm:$0xff]
        %v2723 = vld [vmem:[%s3 + $0x3ec] sm:$0xf]
        %v2724 = vld [vmem:[%s3 + $0x3f0] sm:$0xff]
        %v2725 = vld [vmem:[%s3 + $0x3f8] sm:$0xf]
        %v2726 = vld [vmem:[%s3 + $0x3fc] sm:$0xff]
        %v2727 = vld [vmem:[%s3 + $0x404] sm:$0xf]
        %v2728 = vld [vmem:[%s3 + $0x408] sm:$0xff]
        %v2729 = vld [vmem:[%s3 + $0x410] sm:$0xf]
        %v2730 = vld [vmem:[%s3 + $0x414] sm:$0xff]
        %v2731 = vld [vmem:[%s3 + $0x41c] sm:$0xf]
        %v2732 = vld [vmem:[%s3 + $0x420] sm:$0xff]
        %v2733 = vld [vmem:[%s3 + $0x428] sm:$0xf]
        %v2734 = vld [vmem:[%s3 + $0x42c] sm:$0xff]
        %v2735 = vld [vmem:[%s3 + $0x434] sm:$0xf]
        %v2736 = vld [vmem:[%s3 + $0x438] sm:$0xff]
        %v2737 = vld [vmem:[%s3 + $0x440] sm:$0xf]
        %v2738 = vld [vmem:[%s3 + $0x444] sm:$0xff]
        %v2739 = vld [vmem:[%s3 + $0x44c] sm:$0xf]
        %v2740 = vld [vmem:[%s3 + $0x450] sm:$0xff]
        %v2741 = vld [vmem:[%s3 + $0x458] sm:$0xf]
        %v2742 = vld [vmem:[%s3 + $0x45c] sm:$0xff]
        %v2743 = vld [vmem:[%s3 + $0x464] sm:$0xf]
        %v2744 = vld [vmem:[%s3 + $0x468] sm:$0xff]
        %v2745 = vld [vmem:[%s3 + $0x470] sm:$0xf]
        %v2746 = vld [vmem:[%s3 + $0x474] sm:$0xff]
        %v2747 = vld [vmem:[%s3 + $0x47c] sm:$0xf]
        %v2748 = vld [vmem:[%s3 + $0x480] sm:$0xff]
        %v2749 = vld [vmem:[%s3 + $0x488] sm:$0xf]
        %v2750 = vld [vmem:[%s3 + $0x48c] sm:$0xff]
        %v2751 = vld [vmem:[%s3 + $0x494] sm:$0xf]
        %v2752 = vld [vmem:[%s3 + $0x498] sm:$0xff]
        %v2753 = vld [vmem:[%s3 + $0x4a0] sm:$0xf]
        %v2754 = vld [vmem:[%s3 + $0x4a4] sm:$0xff]
        %v2755 = vld [vmem:[%s3 + $0x4ac] sm:$0xf]
        %v2756 = vld [vmem:[%s3 + $0x4b0] sm:$0xff]
        %v2757 = vld [vmem:[%s3 + $0x4b8] sm:$0xf]
        %v2758 = vld [vmem:[%s3 + $0x4bc] sm:$0xff]
        %v2759 = vld [vmem:[%s3 + $0x4c4] sm:$0xf]
        %v2760 = vld [vmem:[%s3 + $0x4c8] sm:$0xff]
        %v2761 = vld [vmem:[%s3 + $0x4d0] sm:$0xf]
        %v2762 = vld [vmem:[%s3 + $0x4d4] sm:$0xff]
        %v2763 = vld [vmem:[%s3 + $0x4dc] sm:$0xf]
        %v2764 = vld [vmem:[%s3 + $0x4e0] sm:$0xff]
        %v2765 = vld [vmem:[%s3 + $0x4e8] sm:$0xf]
        %v2766 = vld [vmem:[%s3 + $0x4ec] sm:$0xff]
        %v2767 = vld [vmem:[%s3 + $0x4f4] sm:$0xf]
        %v2768 = vld [vmem:[%s3 + $0x4f8] sm:$0xff]
        %v2769 = vld [vmem:[%s3 + $0x500] sm:$0xf]
        %v2770 = vld [vmem:[%s3 + $0x504] sm:$0xff]
        %v2771 = vld [vmem:[%s3 + $0x50c] sm:$0xf]
        %v2772 = vld [vmem:[%s3 + $0x510] sm:$0xff]
        %v2773 = vld [vmem:[%s3 + $0x518] sm:$0xf]
        %v2774 = vld [vmem:[%s3 + $0x51c] sm:$0xff]
        %v2775 = vld [vmem:[%s3 + $0x524] sm:$0xf]
        %v2776 = vld [vmem:[%s3 + $0x528] sm:$0xff]
        %v2777 = vld [vmem:[%s3 + $0x530] sm:$0xf]
        %v2778 = vld [vmem:[%s3 + $0x534] sm:$0xff]
        %v2779 = vld [vmem:[%s3 + $0x53c] sm:$0xf]
        %v2780 = vld [vmem:[%s3 + $0x540] sm:$0xff]
        %v2781 = vld [vmem:[%s3 + $0x548] sm:$0xf]
        %v2782 = vld [vmem:[%s3 + $0x54c] sm:$0xff]
        %v2783 = vld [vmem:[%s3 + $0x554] sm:$0xf]
        %v2784 = vld [vmem:[%s3 + $0x558] sm:$0xff]
        %v2785 = vld [vmem:[%s3 + $0x560] sm:$0xf]
        %v2786 = vld [vmem:[%s3 + $0x564] sm:$0xff]
        %v2787 = vld [vmem:[%s3 + $0x56c] sm:$0xf]
        %v2788 = vld [vmem:[%s3 + $0x570] sm:$0xff]
        %v2789 = vld [vmem:[%s3 + $0x578] sm:$0xf]
        %v2790 = vld [vmem:[%s3 + $0x57c] sm:$0xff]
        %v2791 = vld [vmem:[%s3 + $0x584] sm:$0xf]
        %v2792 = vld [vmem:[%s3 + $0x588] sm:$0xff]
        %v2793 = vld [vmem:[%s3 + $0x590] sm:$0xf]
        %v2794 = vld [vmem:[%s3 + $0x594] sm:$0xff]
        %v2795 = vld [vmem:[%s3 + $0x59c] sm:$0xf]
        %v2796 = vld [vmem:[%s3 + $0x5a0] sm:$0xff]
        %v2797 = vld [vmem:[%s3 + $0x5a8] sm:$0xf]
        %v2798 = vld [vmem:[%s3 + $0x5ac] sm:$0xff]
        %v2799 = vld [vmem:[%s3 + $0x5b4] sm:$0xf]
        %v2800 = vld [vmem:[%s3 + $0x5b8] sm:$0xff]
        %v2801 = vld [vmem:[%s3 + $0x5c0] sm:$0xf]
        %v2802 = vld [vmem:[%s3 + $0x5c4] sm:$0xff]
        %v2803 = vld [vmem:[%s3 + $0x5cc] sm:$0xf]
        %v2804 = vld [vmem:[%s3 + $0x5d0] sm:$0xff]
        %v2805 = vld [vmem:[%s3 + $0x5d8] sm:$0xf]
        %v2806 = vld [vmem:[%s3 + $0x5dc] sm:$0xff]
        %v2807 = vld [vmem:[%s3 + $0x5e4] sm:$0xf]
        %v2808 = vld [vmem:[%s3 + $0x5e8] sm:$0xff]
        %v2809 = vld [vmem:[%s3 + $0x5f0] sm:$0xf]
        %v2810 = vld [vmem:[%s3 + $0x5f4] sm:$0xff]
        %v2811 = vld [vmem:[%s3 + $0x5fc] sm:$0xf]
        %v3068 = vunpack.c.l.b16 %v2556
        %v3069 = vunpack.c.h.b16 %v2556
        %v3070 = vunpack.c.l.b16 %v2557
        %v3071 = vunpack.c.l.b16 %v2558
        %v3072 = vunpack.c.h.b16 %v2558
        %v3073 = vunpack.c.l.b16 %v2559
        %v3074 = vunpack.c.l.b16 %v2560
        %v3075 = vunpack.c.h.b16 %v2560
        %v3076 = vunpack.c.l.b16 %v2561
        %v3077 = vunpack.c.l.b16 %v2562
        %v3078 = vunpack.c.h.b16 %v2562
        %v3079 = vunpack.c.l.b16 %v2563
        %v3080 = vunpack.c.l.b16 %v2564
        %v3081 = vunpack.c.h.b16 %v2564
        %v3082 = vunpack.c.l.b16 %v2565
        %v3083 = vunpack.c.l.b16 %v2566
        %v3084 = vunpack.c.h.b16 %v2566
        %v3085 = vunpack.c.l.b16 %v2567
        %v3086 = vunpack.c.l.b16 %v2568
        %v3087 = vunpack.c.h.b16 %v2568
        %v3088 = vunpack.c.l.b16 %v2569
        %v3089 = vunpack.c.l.b16 %v2570
        %v3090 = vunpack.c.h.b16 %v2570
        %v3091 = vunpack.c.l.b16 %v2571
        %v3092 = vunpack.c.l.b16 %v2572
        %v3093 = vunpack.c.h.b16 %v2572
        %v3094 = vunpack.c.l.b16 %v2573
        %v3095 = vunpack.c.l.b16 %v2574
        %v3096 = vunpack.c.h.b16 %v2574
        %v3097 = vunpack.c.l.b16 %v2575
        %v3098 = vunpack.c.l.b16 %v2576
        %v3099 = vunpack.c.h.b16 %v2576
        %v3100 = vunpack.c.l.b16 %v2577
        %v3101 = vunpack.c.l.b16 %v2578
        %v3102 = vunpack.c.h.b16 %v2578
        %v3103 = vunpack.c.l.b16 %v2579
        %v3104 = vunpack.c.l.b16 %v2580
        %v3105 = vunpack.c.h.b16 %v2580
        %v3106 = vunpack.c.l.b16 %v2581
        %v3107 = vunpack.c.l.b16 %v2582
        %v3108 = vunpack.c.h.b16 %v2582
        %v3109 = vunpack.c.l.b16 %v2583
        %v3110 = vunpack.c.l.b16 %v2584
        %v3111 = vunpack.c.h.b16 %v2584
        %v3112 = vunpack.c.l.b16 %v2585
        %v3113 = vunpack.c.l.b16 %v2586
        %v3114 = vunpack.c.h.b16 %v2586
        %v3115 = vunpack.c.l.b16 %v2587
        %v3116 = vunpack.c.l.b16 %v2588
        %v3117 = vunpack.c.h.b16 %v2588
        %v3118 = vunpack.c.l.b16 %v2589
        %v3119 = vunpack.c.l.b16 %v2590
        %v3120 = vunpack.c.h.b16 %v2590
        %v3121 = vunpack.c.l.b16 %v2591
        %v3122 = vunpack.c.l.b16 %v2592
        %v3123 = vunpack.c.h.b16 %v2592
        %v3124 = vunpack.c.l.b16 %v2593
        %v3125 = vunpack.c.l.b16 %v2594
        %v3126 = vunpack.c.h.b16 %v2594
        %v3127 = vunpack.c.l.b16 %v2595
        %v3128 = vunpack.c.l.b16 %v2596
        %v3129 = vunpack.c.h.b16 %v2596
        %v3130 = vunpack.c.l.b16 %v2597
        %v3131 = vunpack.c.l.b16 %v2598
        %v3132 = vunpack.c.h.b16 %v2598
        %v3133 = vunpack.c.l.b16 %v2599
        %v3134 = vunpack.c.l.b16 %v2600
        %v3135 = vunpack.c.h.b16 %v2600
        %v3136 = vunpack.c.l.b16 %v2601
        %v3137 = vunpack.c.l.b16 %v2602
        %v3138 = vunpack.c.h.b16 %v2602
        %v3139 = vunpack.c.l.b16 %v2603
        %v3140 = vunpack.c.l.b16 %v2604
        %v3141 = vunpack.c.h.b16 %v2604
        %v3142 = vunpack.c.l.b16 %v2605
        %v3143 = vunpack.c.l.b16 %v2606
        %v3144 = vunpack.c.h.b16 %v2606
        %v3145 = vunpack.c.l.b16 %v2607
        %v3146 = vunpack.c.l.b16 %v2608
        %v3147 = vunpack.c.h.b16 %v2608
        %v3148 = vunpack.c.l.b16 %v2609
        %v3149 = vunpack.c.l.b16 %v2610
        %v3150 = vunpack.c.h.b16 %v2610
        %v3151 = vunpack.c.l.b16 %v2611
        %v3152 = vunpack.c.l.b16 %v2612
        %v3153 = vunpack.c.h.b16 %v2612
        %v3154 = vunpack.c.l.b16 %v2613
        %v3155 = vunpack.c.l.b16 %v2614
        %v3156 = vunpack.c.h.b16 %v2614
        %v3157 = vunpack.c.l.b16 %v2615
        %v3158 = vunpack.c.l.b16 %v2616
        %v3159 = vunpack.c.h.b16 %v2616
        %v3160 = vunpack.c.l.b16 %v2617
        %v3161 = vunpack.c.l.b16 %v2618
        %v3162 = vunpack.c.h.b16 %v2618
        %v3163 = vunpack.c.l.b16 %v2619
        %v3164 = vunpack.c.l.b16 %v2620
        %v3165 = vunpack.c.h.b16 %v2620
        %v3166 = vunpack.c.l.b16 %v2621
        %v3167 = vunpack.c.l.b16 %v2622
        %v3168 = vunpack.c.h.b16 %v2622
        %v3169 = vunpack.c.l.b16 %v2623
        %v3170 = vunpack.c.l.b16 %v2624
        %v3171 = vunpack.c.h.b16 %v2624
        %v3172 = vunpack.c.l.b16 %v2625
        %v3173 = vunpack.c.l.b16 %v2626
        %v3174 = vunpack.c.h.b16 %v2626
        %v3175 = vunpack.c.l.b16 %v2627
        %v3176 = vunpack.c.l.b16 %v2628
        %v3177 = vunpack.c.h.b16 %v2628
        %v3178 = vunpack.c.l.b16 %v2629
        %v3179 = vunpack.c.l.b16 %v2630
        %v3180 = vunpack.c.h.b16 %v2630
        %v3181 = vunpack.c.l.b16 %v2631
        %v3182 = vunpack.c.l.b16 %v2632
        %v3183 = vunpack.c.h.b16 %v2632
        %v3184 = vunpack.c.l.b16 %v2633
        %v3185 = vunpack.c.l.b16 %v2634
        %v3186 = vunpack.c.h.b16 %v2634
        %v3187 = vunpack.c.l.b16 %v2635
        %v3188 = vunpack.c.l.b16 %v2636
        %v3189 = vunpack.c.h.b16 %v2636
        %v3190 = vunpack.c.l.b16 %v2637
        %v3191 = vunpack.c.l.b16 %v2638
        %v3192 = vunpack.c.h.b16 %v2638
        %v3193 = vunpack.c.l.b16 %v2639
        %v3194 = vunpack.c.l.b16 %v2640
        %v3195 = vunpack.c.h.b16 %v2640
        %v3196 = vunpack.c.l.b16 %v2641
        %v3197 = vunpack.c.l.b16 %v2642
        %v3198 = vunpack.c.h.b16 %v2642
        %v3199 = vunpack.c.l.b16 %v2643
        %v3200 = vunpack.c.l.b16 %v2644
        %v3201 = vunpack.c.h.b16 %v2644
        %v3202 = vunpack.c.l.b16 %v2645
        %v3203 = vunpack.c.l.b16 %v2646
        %v3204 = vunpack.c.h.b16 %v2646
        %v3205 = vunpack.c.l.b16 %v2647
        %v3206 = vunpack.c.l.b16 %v2648
        %v3207 = vunpack.c.h.b16 %v2648
        %v3208 = vunpack.c.l.b16 %v2649
        %v3209 = vunpack.c.l.b16 %v2650
        %v3210 = vunpack.c.h.b16 %v2650
        %v3211 = vunpack.c.l.b16 %v2651
        %v3212 = vunpack.c.l.b16 %v2652
        %v3213 = vunpack.c.h.b16 %v2652
        %v3214 = vunpack.c.l.b16 %v2653
        %v3215 = vunpack.c.l.b16 %v2654
        %v3216 = vunpack.c.h.b16 %v2654
        %v3217 = vunpack.c.l.b16 %v2655
        %v3218 = vunpack.c.l.b16 %v2656
        %v3219 = vunpack.c.h.b16 %v2656
        %v3220 = vunpack.c.l.b16 %v2657
        %v3221 = vunpack.c.l.b16 %v2658
        %v3222 = vunpack.c.h.b16 %v2658
        %v3223 = vunpack.c.l.b16 %v2659
        %v3224 = vunpack.c.l.b16 %v2660
        %v3225 = vunpack.c.h.b16 %v2660
        %v3226 = vunpack.c.l.b16 %v2661
        %v3227 = vunpack.c.l.b16 %v2662
        %v3228 = vunpack.c.h.b16 %v2662
        %v3229 = vunpack.c.l.b16 %v2663
        %v3230 = vunpack.c.l.b16 %v2664
        %v3231 = vunpack.c.h.b16 %v2664
        %v3232 = vunpack.c.l.b16 %v2665
        %v3233 = vunpack.c.l.b16 %v2666
        %v3234 = vunpack.c.h.b16 %v2666
        %v3235 = vunpack.c.l.b16 %v2667
        %v3236 = vunpack.c.l.b16 %v2668
        %v3237 = vunpack.c.h.b16 %v2668
        %v3238 = vunpack.c.l.b16 %v2669
        %v3239 = vunpack.c.l.b16 %v2670
        %v3240 = vunpack.c.h.b16 %v2670
        %v3241 = vunpack.c.l.b16 %v2671
        %v3242 = vunpack.c.l.b16 %v2672
        %v3243 = vunpack.c.h.b16 %v2672
        %v3244 = vunpack.c.l.b16 %v2673
        %v3245 = vunpack.c.l.b16 %v2674
        %v3246 = vunpack.c.h.b16 %v2674
        %v3247 = vunpack.c.l.b16 %v2675
        %v3248 = vunpack.c.l.b16 %v2676
        %v3249 = vunpack.c.h.b16 %v2676
        %v3250 = vunpack.c.l.b16 %v2677
        %v3251 = vunpack.c.l.b16 %v2678
        %v3252 = vunpack.c.h.b16 %v2678
        %v3253 = vunpack.c.l.b16 %v2679
        %v3254 = vunpack.c.l.b16 %v2680
        %v3255 = vunpack.c.h.b16 %v2680
        %v3256 = vunpack.c.l.b16 %v2681
        %v3257 = vunpack.c.l.b16 %v2682
        %v3258 = vunpack.c.h.b16 %v2682
        %v3259 = vunpack.c.l.b16 %v2683
        %v3260 = vunpack.c.l.b16 %v2684
        %v3261 = vunpack.c.h.b16 %v2684
        %v3262 = vunpack.c.l.b16 %v2685
        %v3263 = vunpack.c.l.b16 %v2686
        %v3264 = vunpack.c.h.b16 %v2686
        %v3265 = vunpack.c.l.b16 %v2687
        %v3266 = vunpack.c.l.b16 %v2688
        %v3267 = vunpack.c.h.b16 %v2688
        %v3268 = vunpack.c.l.b16 %v2689
        %v3269 = vunpack.c.l.b16 %v2690
        %v3270 = vunpack.c.h.b16 %v2690
        %v3271 = vunpack.c.l.b16 %v2691
        %v3272 = vunpack.c.l.b16 %v2692
        %v3273 = vunpack.c.h.b16 %v2692
        %v3274 = vunpack.c.l.b16 %v2693
        %v3275 = vunpack.c.l.b16 %v2694
        %v3276 = vunpack.c.h.b16 %v2694
        %v3277 = vunpack.c.l.b16 %v2695
        %v3278 = vunpack.c.l.b16 %v2696
        %v3279 = vunpack.c.h.b16 %v2696
        %v3280 = vunpack.c.l.b16 %v2697
        %v3281 = vunpack.c.l.b16 %v2698
        %v3282 = vunpack.c.h.b16 %v2698
        %v3283 = vunpack.c.l.b16 %v2699
        %v3284 = vunpack.c.l.b16 %v2700
        %v3285 = vunpack.c.h.b16 %v2700
        %v3286 = vunpack.c.l.b16 %v2701
        %v3287 = vunpack.c.l.b16 %v2702
        %v3288 = vunpack.c.h.b16 %v2702
        %v3289 = vunpack.c.l.b16 %v2703
        %v3290 = vunpack.c.l.b16 %v2704
        %v3291 = vunpack.c.h.b16 %v2704
        %v3292 = vunpack.c.l.b16 %v2705
        %v3293 = vunpack.c.l.b16 %v2706
        %v3294 = vunpack.c.h.b16 %v2706
        %v3295 = vunpack.c.l.b16 %v2707
        %v3296 = vunpack.c.l.b16 %v2708
        %v3297 = vunpack.c.h.b16 %v2708
        %v3298 = vunpack.c.l.b16 %v2709
        %v3299 = vunpack.c.l.b16 %v2710
        %v3300 = vunpack.c.h.b16 %v2710
        %v3301 = vunpack.c.l.b16 %v2711
        %v3302 = vunpack.c.l.b16 %v2712
        %v3303 = vunpack.c.h.b16 %v2712
        %v3304 = vunpack.c.l.b16 %v2713
        %v3305 = vunpack.c.l.b16 %v2714
        %v3306 = vunpack.c.h.b16 %v2714
        %v3307 = vunpack.c.l.b16 %v2715
        %v3308 = vunpack.c.l.b16 %v2716
        %v3309 = vunpack.c.h.b16 %v2716
        %v3310 = vunpack.c.l.b16 %v2717
        %v3311 = vunpack.c.l.b16 %v2718
        %v3312 = vunpack.c.h.b16 %v2718
        %v3313 = vunpack.c.l.b16 %v2719
        %v3314 = vunpack.c.l.b16 %v2720
        %v3315 = vunpack.c.h.b16 %v2720
        %v3316 = vunpack.c.l.b16 %v2721
        %v3317 = vunpack.c.l.b16 %v2722
        %v3318 = vunpack.c.h.b16 %v2722
        %v3319 = vunpack.c.l.b16 %v2723
        %v3320 = vunpack.c.l.b16 %v2724
        %v3321 = vunpack.c.h.b16 %v2724
        %v3322 = vunpack.c.l.b16 %v2725
        %v3323 = vunpack.c.l.b16 %v2726
        %v3324 = vunpack.c.h.b16 %v2726
        %v3325 = vunpack.c.l.b16 %v2727
        %v3326 = vunpack.c.l.b16 %v2728
        %v3327 = vunpack.c.h.b16 %v2728
        %v3328 = vunpack.c.l.b16 %v2729
        %v3329 = vunpack.c.l.b16 %v2730
        %v3330 = vunpack.c.h.b16 %v2730
        %v3331 = vunpack.c.l.b16 %v2731
        %v3332 = vunpack.c.l.b16 %v2732
        %v3333 = vunpack.c.h.b16 %v2732
        %v3334 = vunpack.c.l.b16 %v2733
        %v3335 = vunpack.c.l.b16 %v2734
        %v3336 = vunpack.c.h.b16 %v2734
        %v3337 = vunpack.c.l.b16 %v2735
        %v3338 = vunpack.c.l.b16 %v2736
        %v3339 = vunpack.c.h.b16 %v2736
        %v3340 = vunpack.c.l.b16 %v2737
        %v3341 = vunpack.c.l.b16 %v2738
        %v3342 = vunpack.c.h.b16 %v2738
        %v3343 = vunpack.c.l.b16 %v2739
        %v3344 = vunpack.c.l.b16 %v2740
        %v3345 = vunpack.c.h.b16 %v2740
        %v3346 = vunpack.c.l.b16 %v2741
        %v3347 = vunpack.c.l.b16 %v2742
        %v3348 = vunpack.c.h.b16 %v2742
        %v3349 = vunpack.c.l.b16 %v2743
        %v3350 = vunpack.c.l.b16 %v2744
        %v3351 = vunpack.c.h.b16 %v2744
        %v3352 = vunpack.c.l.b16 %v2745
        %v3353 = vunpack.c.l.b16 %v2746
        %v3354 = vunpack.c.h.b16 %v2746
        %v3355 = vunpack.c.l.b16 %v2747
        %v3356 = vunpack.c.l.b16 %v2748
        %v3357 = vunpack.c.h.b16 %v2748
        %v3358 = vunpack.c.l.b16 %v2749
        %v3359 = vunpack.c.l.b16 %v2750
        %v3360 = vunpack.c.h.b16 %v2750
        %v3361 = vunpack.c.l.b16 %v2751
        %v3362 = vunpack.c.l.b16 %v2752
        %v3363 = vunpack.c.h.b16 %v2752
        %v3364 = vunpack.c.l.b16 %v2753
        %v3365 = vunpack.c.l.b16 %v2754
        %v3366 = vunpack.c.h.b16 %v2754
        %v3367 = vunpack.c.l.b16 %v2755
        %v3368 = vunpack.c.l.b16 %v2756
        %v3369 = vunpack.c.h.b16 %v2756
        %v3370 = vunpack.c.l.b16 %v2757
        %v3371 = vunpack.c.l.b16 %v2758
        %v3372 = vunpack.c.h.b16 %v2758
        %v3373 = vunpack.c.l.b16 %v2759
        %v3374 = vunpack.c.l.b16 %v2760
        %v3375 = vunpack.c.h.b16 %v2760
        %v3376 = vunpack.c.l.b16 %v2761
        %v3377 = vunpack.c.l.b16 %v2762
        %v3378 = vunpack.c.h.b16 %v2762
        %v3379 = vunpack.c.l.b16 %v2763
        %v3380 = vunpack.c.l.b16 %v2764
        %v3381 = vunpack.c.h.b16 %v2764
        %v3382 = vunpack.c.l.b16 %v2765
        %v3383 = vunpack.c.l.b16 %v2766
        %v3384 = vunpack.c.h.b16 %v2766
        %v3385 = vunpack.c.l.b16 %v2767
        %v3386 = vunpack.c.l.b16 %v2768
        %v3387 = vunpack.c.h.b16 %v2768
        %v3388 = vunpack.c.l.b16 %v2769
        %v3389 = vunpack.c.l.b16 %v2770
        %v3390 = vunpack.c.h.b16 %v2770
        %v3391 = vunpack.c.l.b16 %v2771
        %v3392 = vunpack.c.l.b16 %v2772
        %v3393 = vunpack.c.h.b16 %v2772
        %v3394 = vunpack.c.l.b16 %v2773
        %v3395 = vunpack.c.l.b16 %v2774
        %v3396 = vunpack.c.h.b16 %v2774
        %v3397 = vunpack.c.l.b16 %v2775
        %v3398 = vunpack.c.l.b16 %v2776
        %v3399 = vunpack.c.h.b16 %v2776
        %v3400 = vunpack.c.l.b16 %v2777
        %v3401 = vunpack.c.l.b16 %v2778
        %v3402 = vunpack.c.h.b16 %v2778
        %v3403 = vunpack.c.l.b16 %v2779
        %v3404 = vunpack.c.l.b16 %v2780
        %v3405 = vunpack.c.h.b16 %v2780
        %v3406 = vunpack.c.l.b16 %v2781
        %v3407 = vunpack.c.l.b16 %v2782
        %v3408 = vunpack.c.h.b16 %v2782
        %v3409 = vunpack.c.l.b16 %v2783
        %v3410 = vunpack.c.l.b16 %v2784
        %v3411 = vunpack.c.h.b16 %v2784
        %v3412 = vunpack.c.l.b16 %v2785
        %v3413 = vunpack.c.l.b16 %v2786
        %v3414 = vunpack.c.h.b16 %v2786
        %v3415 = vunpack.c.l.b16 %v2787
        %v3416 = vunpack.c.l.b16 %v2788
        %v3417 = vunpack.c.h.b16 %v2788
        %v3418 = vunpack.c.l.b16 %v2789
        %v3419 = vunpack.c.l.b16 %v2790
        %v3420 = vunpack.c.h.b16 %v2790
        %v3421 = vunpack.c.l.b16 %v2791
        %v3422 = vunpack.c.l.b16 %v2792
        %v3423 = vunpack.c.h.b16 %v2792
        %v3424 = vunpack.c.l.b16 %v2793
        %v3425 = vunpack.c.l.b16 %v2794
        %v3426 = vunpack.c.h.b16 %v2794
        %v3427 = vunpack.c.l.b16 %v2795
        %v3428 = vunpack.c.l.b16 %v2796
        %v3429 = vunpack.c.h.b16 %v2796
        %v3430 = vunpack.c.l.b16 %v2797
        %v3431 = vunpack.c.l.b16 %v2798
        %v3432 = vunpack.c.h.b16 %v2798
        %v3433 = vunpack.c.l.b16 %v2799
        %v3434 = vunpack.c.l.b16 %v2800
        %v3435 = vunpack.c.h.b16 %v2800
        %v3436 = vunpack.c.l.b16 %v2801
        %v3437 = vunpack.c.l.b16 %v2802
        %v3438 = vunpack.c.h.b16 %v2802
        %v3439 = vunpack.c.l.b16 %v2803
        %v3440 = vunpack.c.l.b16 %v2804
        %v3441 = vunpack.c.h.b16 %v2804
        %v3442 = vunpack.c.l.b16 %v2805
        %v3443 = vunpack.c.l.b16 %v2806
        %v3444 = vunpack.c.h.b16 %v2806
        %v3445 = vunpack.c.l.b16 %v2807
        %v3446 = vunpack.c.l.b16 %v2808
        %v3447 = vunpack.c.h.b16 %v2808
        %v3448 = vunpack.c.l.b16 %v2809
        %v3449 = vunpack.c.l.b16 %v2810
        %v3450 = vunpack.c.h.b16 %v2810
        %v3451 = vunpack.c.l.b16 %v2811
        %v3452 = vpack.c.b16 %v3071, %v3068
        %v3453 = vpack.c.b16 %v3072, %v3069
        %v3454 = vpack.c.b16 %v3073, %v3070
        %v3455 = vpack.c.b16 %v3077, %v3074
        %v3456 = vpack.c.b16 %v3078, %v3075
        %v3457 = vpack.c.b16 %v3079, %v3076
        %v3458 = vpack.c.b16 %v3083, %v3080
        %v3459 = vpack.c.b16 %v3084, %v3081
        %v3460 = vpack.c.b16 %v3085, %v3082
        %v3461 = vpack.c.b16 %v3089, %v3086
        %v3462 = vpack.c.b16 %v3090, %v3087
        %v3463 = vpack.c.b16 %v3091, %v3088
        %v3464 = vpack.c.b16 %v3095, %v3092
        %v3465 = vpack.c.b16 %v3096, %v3093
        %v3466 = vpack.c.b16 %v3097, %v3094
        %v3467 = vpack.c.b16 %v3101, %v3098
        %v3468 = vpack.c.b16 %v3102, %v3099
        %v3469 = vpack.c.b16 %v3103, %v3100
        %v3470 = vpack.c.b16 %v3107, %v3104
        %v3471 = vpack.c.b16 %v3108, %v3105
        %v3472 = vpack.c.b16 %v3109, %v3106
        %v3473 = vpack.c.b16 %v3113, %v3110
        %v3474 = vpack.c.b16 %v3114, %v3111
        %v3475 = vpack.c.b16 %v3115, %v3112
        %v3476 = vpack.c.b16 %v3119, %v3116
        %v3477 = vpack.c.b16 %v3120, %v3117
        %v3478 = vpack.c.b16 %v3121, %v3118
        %v3479 = vpack.c.b16 %v3125, %v3122
        %v3480 = vpack.c.b16 %v3126, %v3123
        %v3481 = vpack.c.b16 %v3127, %v3124
        %v3482 = vpack.c.b16 %v3131, %v3128
        %v3483 = vpack.c.b16 %v3132, %v3129
        %v3484 = vpack.c.b16 %v3133, %v3130
        %v3485 = vpack.c.b16 %v3137, %v3134
        %v3486 = vpack.c.b16 %v3138, %v3135
        %v3487 = vpack.c.b16 %v3139, %v3136
        %v3488 = vpack.c.b16 %v3143, %v3140
        %v3489 = vpack.c.b16 %v3144, %v3141
        %v3490 = vpack.c.b16 %v3145, %v3142
        %v3491 = vpack.c.b16 %v3149, %v3146
        %v3492 = vpack.c.b16 %v3150, %v3147
        %v3493 = vpack.c.b16 %v3151, %v3148
        %v3494 = vpack.c.b16 %v3155, %v3152
        %v3495 = vpack.c.b16 %v3156, %v3153
        %v3496 = vpack.c.b16 %v3157, %v3154
        %v3497 = vpack.c.b16 %v3161, %v3158
        %v3498 = vpack.c.b16 %v3162, %v3159
        %v3499 = vpack.c.b16 %v3163, %v3160
        %v3500 = vpack.c.b16 %v3167, %v3164
        %v3501 = vpack.c.b16 %v3168, %v3165
        %v3502 = vpack.c.b16 %v3169, %v3166
        %v3503 = vpack.c.b16 %v3173, %v3170
        %v3504 = vpack.c.b16 %v3174, %v3171
        %v3505 = vpack.c.b16 %v3175, %v3172
        %v3506 = vpack.c.b16 %v3179, %v3176
        %v3507 = vpack.c.b16 %v3180, %v3177
        %v3508 = vpack.c.b16 %v3181, %v3178
        %v3509 = vpack.c.b16 %v3185, %v3182
        %v3510 = vpack.c.b16 %v3186, %v3183
        %v3511 = vpack.c.b16 %v3187, %v3184
        %v3512 = vpack.c.b16 %v3191, %v3188
        %v3513 = vpack.c.b16 %v3192, %v3189
        %v3514 = vpack.c.b16 %v3193, %v3190
        %v3515 = vpack.c.b16 %v3197, %v3194
        %v3516 = vpack.c.b16 %v3198, %v3195
        %v3517 = vpack.c.b16 %v3199, %v3196
        %v3518 = vpack.c.b16 %v3203, %v3200
        %v3519 = vpack.c.b16 %v3204, %v3201
        %v3520 = vpack.c.b16 %v3205, %v3202
        %v3521 = vpack.c.b16 %v3209, %v3206
        %v3522 = vpack.c.b16 %v3210, %v3207
        %v3523 = vpack.c.b16 %v3211, %v3208
        %v3524 = vpack.c.b16 %v3215, %v3212
        %v3525 = vpack.c.b16 %v3216, %v3213
        %v3526 = vpack.c.b16 %v3217, %v3214
        %v3527 = vpack.c.b16 %v3221, %v3218
        %v3528 = vpack.c.b16 %v3222, %v3219
        %v3529 = vpack.c.b16 %v3223, %v3220
        %v3530 = vpack.c.b16 %v3227, %v3224
        %v3531 = vpack.c.b16 %v3228, %v3225
        %v3532 = vpack.c.b16 %v3229, %v3226
        %v3533 = vpack.c.b16 %v3233, %v3230
        %v3534 = vpack.c.b16 %v3234, %v3231
        %v3535 = vpack.c.b16 %v3235, %v3232
        %v3536 = vpack.c.b16 %v3239, %v3236
        %v3537 = vpack.c.b16 %v3240, %v3237
        %v3538 = vpack.c.b16 %v3241, %v3238
        %v3539 = vpack.c.b16 %v3245, %v3242
        %v3540 = vpack.c.b16 %v3246, %v3243
        %v3541 = vpack.c.b16 %v3247, %v3244
        %v3542 = vpack.c.b16 %v3251, %v3248
        %v3543 = vpack.c.b16 %v3252, %v3249
        %v3544 = vpack.c.b16 %v3253, %v3250
        %v3545 = vpack.c.b16 %v3257, %v3254
        %v3546 = vpack.c.b16 %v3258, %v3255
        %v3547 = vpack.c.b16 %v3259, %v3256
        %v3548 = vpack.c.b16 %v3263, %v3260
        %v3549 = vpack.c.b16 %v3264, %v3261
        %v3550 = vpack.c.b16 %v3265, %v3262
        %v3551 = vpack.c.b16 %v3269, %v3266
        %v3552 = vpack.c.b16 %v3270, %v3267
        %v3553 = vpack.c.b16 %v3271, %v3268
        %v3554 = vpack.c.b16 %v3275, %v3272
        %v3555 = vpack.c.b16 %v3276, %v3273
        %v3556 = vpack.c.b16 %v3277, %v3274
        %v3557 = vpack.c.b16 %v3281, %v3278
        %v3558 = vpack.c.b16 %v3282, %v3279
        %v3559 = vpack.c.b16 %v3283, %v3280
        %v3560 = vpack.c.b16 %v3287, %v3284
        %v3561 = vpack.c.b16 %v3288, %v3285
        %v3562 = vpack.c.b16 %v3289, %v3286
        %v3563 = vpack.c.b16 %v3293, %v3290
        %v3564 = vpack.c.b16 %v3294, %v3291
        %v3565 = vpack.c.b16 %v3295, %v3292
        %v3566 = vpack.c.b16 %v3299, %v3296
        %v3567 = vpack.c.b16 %v3300, %v3297
        %v3568 = vpack.c.b16 %v3301, %v3298
        %v3569 = vpack.c.b16 %v3305, %v3302
        %v3570 = vpack.c.b16 %v3306, %v3303
        %v3571 = vpack.c.b16 %v3307, %v3304
        %v3572 = vpack.c.b16 %v3311, %v3308
        %v3573 = vpack.c.b16 %v3312, %v3309
        %v3574 = vpack.c.b16 %v3313, %v3310
        %v3575 = vpack.c.b16 %v3317, %v3314
        %v3576 = vpack.c.b16 %v3318, %v3315
        %v3577 = vpack.c.b16 %v3319, %v3316
        %v3578 = vpack.c.b16 %v3323, %v3320
        %v3579 = vpack.c.b16 %v3324, %v3321
        %v3580 = vpack.c.b16 %v3325, %v3322
        %v3581 = vpack.c.b16 %v3329, %v3326
        %v3582 = vpack.c.b16 %v3330, %v3327
        %v3583 = vpack.c.b16 %v3331, %v3328
        %v3584 = vpack.c.b16 %v3335, %v3332
        %v3585 = vpack.c.b16 %v3336, %v3333
        %v3586 = vpack.c.b16 %v3337, %v3334
        %v3587 = vpack.c.b16 %v3341, %v3338
        %v3588 = vpack.c.b16 %v3342, %v3339
        %v3589 = vpack.c.b16 %v3343, %v3340
        %v3590 = vpack.c.b16 %v3347, %v3344
        %v3591 = vpack.c.b16 %v3348, %v3345
        %v3592 = vpack.c.b16 %v3349, %v3346
        %v3593 = vpack.c.b16 %v3353, %v3350
        %v3594 = vpack.c.b16 %v3354, %v3351
        %v3595 = vpack.c.b16 %v3355, %v3352
        %v3596 = vpack.c.b16 %v3359, %v3356
        %v3597 = vpack.c.b16 %v3360, %v3357
        %v3598 = vpack.c.b16 %v3361, %v3358
        %v3599 = vpack.c.b16 %v3365, %v3362
        %v3600 = vpack.c.b16 %v3366, %v3363
        %v3601 = vpack.c.b16 %v3367, %v3364
        %v3602 = vpack.c.b16 %v3371, %v3368
        %v3603 = vpack.c.b16 %v3372, %v3369
        %v3604 = vpack.c.b16 %v3373, %v3370
        %v3605 = vpack.c.b16 %v3377, %v3374
        %v3606 = vpack.c.b16 %v3378, %v3375
        %v3607 = vpack.c.b16 %v3379, %v3376
        %v3608 = vpack.c.b16 %v3383, %v3380
        %v3609 = vpack.c.b16 %v3384, %v3381
        %v3610 = vpack.c.b16 %v3385, %v3382
        %v3611 = vpack.c.b16 %v3389, %v3386
        %v3612 = vpack.c.b16 %v3390, %v3387
        %v3613 = vpack.c.b16 %v3391, %v3388
        %v3614 = vpack.c.b16 %v3395, %v3392
        %v3615 = vpack.c.b16 %v3396, %v3393
        %v3616 = vpack.c.b16 %v3397, %v3394
        %v3617 = vpack.c.b16 %v3401, %v3398
        %v3618 = vpack.c.b16 %v3402, %v3399
        %v3619 = vpack.c.b16 %v3403, %v3400
        %v3620 = vpack.c.b16 %v3407, %v3404
        %v3621 = vpack.c.b16 %v3408, %v3405
        %v3622 = vpack.c.b16 %v3409, %v3406
        %v3623 = vpack.c.b16 %v3413, %v3410
        %v3624 = vpack.c.b16 %v3414, %v3411
        %v3625 = vpack.c.b16 %v3415, %v3412
        %v3626 = vpack.c.b16 %v3419, %v3416
        %v3627 = vpack.c.b16 %v3420, %v3417
        %v3628 = vpack.c.b16 %v3421, %v3418
        %v3629 = vpack.c.b16 %v3425, %v3422
        %v3630 = vpack.c.b16 %v3426, %v3423
        %v3631 = vpack.c.b16 %v3427, %v3424
        %v3632 = vpack.c.b16 %v3431, %v3428
        %v3633 = vpack.c.b16 %v3432, %v3429
        %v3634 = vpack.c.b16 %v3433, %v3430
        %v3635 = vpack.c.b16 %v3437, %v3434
        %v3636 = vpack.c.b16 %v3438, %v3435
        %v3637 = vpack.c.b16 %v3439, %v3436
        %v3638 = vpack.c.b16 %v3443, %v3440
        %v3639 = vpack.c.b16 %v3444, %v3441
        %v3640 = vpack.c.b16 %v3445, %v3442
        %v3641 = vpack.c.b16 %v3449, %v3446
        %v3642 = vpack.c.b16 %v3450, %v3447
        %v3643 = vpack.c.b16 %v3451, %v3448
        %3836 = vmatprep.subr.bf16.mxu0 %v3474
        %3837 = vmatpush1.bf16.msra.mxu0 %v3473
        %3838 = vmatprep.subr.bf16.mxu0 %v3471
        %3839 = vmatpush1.bf16.msra.mxu0 %v3470
        %3840 = vmatprep.subr.bf16.mxu0 %v3468
        %3841 = vmatpush1.bf16.msra.mxu0 %v3467
        %3842 = vmatprep.subr.bf16.mxu0 %v3465
        %3843 = vmatpush1.bf16.msra.mxu0 %v3464
        %3844 = vmatprep.subr.bf16.mxu0 %v3462
        %3845 = vmatpush1.bf16.msra.mxu0 %v3461
        %3846 = vmatprep.subr.bf16.mxu0 %v3459
        %3847 = vmatpush1.bf16.msra.mxu0 %v3458
        %3848 = vmatprep.subr.bf16.mxu0 %v3456
        %3849 = vmatpush1.bf16.msra.mxu0 %v3455
        %3850 = vmatprep.subr.bf16.mxu0 %v3453
        %3851 = vmatpush1.bf16.msra.mxu0 %v3452
        %3852 = vmatprep.subr.bf16.mxu0 %v3498
        %3853 = vmatpush2.bf16.msra.mxu0 %v3497
        %3854 = vmatprep.subr.bf16.mxu0 %v3495
        %3855 = vmatpush2.bf16.msra.mxu0 %v3494
        %3856 = vmatprep.subr.bf16.mxu0 %v3492
        %3857 = vmatpush2.bf16.msra.mxu0 %v3491
        %3858 = vmatprep.subr.bf16.mxu0 %v3489
        %3859 = vmatpush2.bf16.msra.mxu0 %v3488
        %3860 = vmatprep.subr.bf16.mxu0 %v3486
        %3861 = vmatpush2.bf16.msra.mxu0 %v3485
        %3862 = vmatprep.subr.bf16.mxu0 %v3483
        %3863 = vmatpush2.bf16.msra.mxu0 %v3482
        %3864 = vmatprep.subr.bf16.mxu0 %v3480
        %3865 = vmatpush2.bf16.msra.mxu0 %v3479
        %3866 = vmatprep.subr.bf16.mxu0 %v3477
        %3867 = vmatpush2.bf16.msra.mxu0 %v3476
        %3868 = vmatprep.mubr.bf16.mxu0 %v2429
        %3869 = vmatmul.mubr.bf16.gmra.mxu0 %v2428
        %v3870 = vpop.f32.mrf.mxu0
        %v3871 = vadd.f32 0.0, %v3870
        %v3872 = vpop.f32.mrf.mxu0
        %v3873 = vadd.f32 0.0, %v3872
        %v3874 = vpop.f32.mrf.mxu0
        %v3875 = vadd.f32 0.0, %v3874
        %v3876 = vpop.f32.mrf.mxu0
        %v3877 = vadd.f32 0.0, %v3876
        %3878 = vmatprep.mubr.bf16.mxu0 %v2437
        %3879 = vmatmul.mubr.bf16.gmra.mxu0 %v2436
        %v3880 = vpop.f32.mrf.mxu0
        %v3881 = vadd.f32 0.0, %v3880
        %v3882 = vpop.f32.mrf.mxu0
        %v3883 = vadd.f32 0.0, %v3882
        %v3884 = vpop.f32.mrf.mxu0
        %v3885 = vadd.f32 0.0, %v3884
        %v3886 = vpop.f32.mrf.mxu0
        %v3887 = vadd.f32 0.0, %v3886
        %3888 = vmatprep.mubr.bf16.mxu0 %v2445
        %3889 = vmatmul.mubr.bf16.gmra.mxu0 %v2444
        %v3890 = vpop.f32.mrf.mxu0
        %v3891 = vadd.f32 0.0, %v3890
        %v3892 = vpop.f32.mrf.mxu0
        %v3893 = vadd.f32 0.0, %v3892
        %v3894 = vpop.f32.mrf.mxu0
        %v3895 = vadd.f32 0.0, %v3894
        %v3896 = vpop.f32.mrf.mxu0
        %v3897 = vadd.f32 0.0, %v3896
        %3898 = vmatprep.mubr.bf16.mxu0 %v2453
        %3899 = vmatmul.mubr.bf16.gmra.mxu0 %v2452
        %v3900 = vpop.f32.mrf.mxu0
        %v3901 = vadd.f32 0.0, %v3900
        %v3902 = vpop.f32.mrf.mxu0
        %v3903 = vadd.f32 0.0, %v3902
        %v3904 = vpop.f32.mrf.mxu0
        %v3905 = vadd.f32 0.0, %v3904
        %v3906 = vpop.f32.mrf.mxu0
        %v3907 = vadd.f32 0.0, %v3906
        %3908 = vmatprep.mubr.bf16.mxu0 %v2461
        %3909 = vmatmul.mubr.bf16.gmra.mxu0 %v2460
        %v3910 = vpop.f32.mrf.mxu0
        %v3911 = vadd.f32 0.0, %v3910
        %v3912 = vpop.f32.mrf.mxu0
        %v3913 = vadd.f32 0.0, %v3912
        %v3914 = vpop.f32.mrf.mxu0
        %v3915 = vadd.f32 0.0, %v3914
        %v3916 = vpop.f32.mrf.mxu0
        %v3917 = vadd.f32 0.0, %v3916
        %3918 = vmatprep.mubr.bf16.mxu0 %v2469
        %3919 = vmatmul.mubr.bf16.gmra.mxu0 %v2468
        %v3920 = vpop.f32.mrf.mxu0
        %v3921 = vadd.f32 0.0, %v3920
        %v3922 = vpop.f32.mrf.mxu0
        %v3923 = vadd.f32 0.0, %v3922
        %v3924 = vpop.f32.mrf.mxu0
        %v3925 = vadd.f32 0.0, %v3924
        %v3926 = vpop.f32.mrf.mxu0
        %v3927 = vadd.f32 0.0, %v3926
        %3928 = vmatprep.mubr.bf16.mxu0 %v2477
        %3929 = vmatmul.mubr.bf16.gmra.mxu0 %v2476
        %v3930 = vpop.f32.mrf.mxu0
        %v3931 = vadd.f32 0.0, %v3930
        %v3932 = vpop.f32.mrf.mxu0
        %v3933 = vadd.f32 0.0, %v3932
        %v3934 = vpop.f32.mrf.mxu0
        %v3935 = vadd.f32 0.0, %v3934
        %v3936 = vpop.f32.mrf.mxu0
        %v3937 = vadd.f32 0.0, %v3936
        %3938 = vmatprep.mubr.bf16.mxu0 %v2485
        %3939 = vmatmul.mubr.bf16.gmra.mxu0 %v2484
        %v3940 = vpop.f32.mrf.mxu0
        %v3941 = vadd.f32 0.0, %v3940
        %v3942 = vpop.f32.mrf.mxu0
        %v3943 = vadd.f32 0.0, %v3942
        %v3944 = vpop.f32.mrf.mxu0
        %v3945 = vadd.f32 0.0, %v3944
        %v3946 = vpop.f32.mrf.mxu0
        %v3947 = vadd.f32 0.0, %v3946
        %3948 = vmatprep.mubr.bf16.mxu0 %v2493
        %3949 = vmatmul.mubr.bf16.gmra.mxu0 %v2492
        %v3950 = vpop.f32.mrf.mxu0
        %v3951 = vadd.f32 0.0, %v3950
        %v3952 = vpop.f32.mrf.mxu0
        %v3953 = vadd.f32 0.0, %v3952
        %v3954 = vpop.f32.mrf.mxu0
        %v3955 = vadd.f32 0.0, %v3954
        %v3956 = vpop.f32.mrf.mxu0
        %v3957 = vadd.f32 0.0, %v3956
        %3958 = vmatprep.mubr.bf16.mxu0 %v2501
        %3959 = vmatmul.mubr.bf16.gmra.mxu0 %v2500
        %v3960 = vpop.f32.mrf.mxu0
        %v3961 = vadd.f32 0.0, %v3960
        %v3962 = vpop.f32.mrf.mxu0
        %v3963 = vadd.f32 0.0, %v3962
        %v3964 = vpop.f32.mrf.mxu0
        %v3965 = vadd.f32 0.0, %v3964
        %v3966 = vpop.f32.mrf.mxu0
        %v3967 = vadd.f32 0.0, %v3966
        %3968 = vmatprep.mubr.bf16.mxu0 %v2509
        %3969 = vmatmul.mubr.bf16.gmra.mxu0 %v2508
        %v3970 = vpop.f32.mrf.mxu0
        %v3971 = vadd.f32 0.0, %v3970
        %v3972 = vpop.f32.mrf.mxu0
        %v3973 = vadd.f32 0.0, %v3972
        %v3974 = vpop.f32.mrf.mxu0
        %v3975 = vadd.f32 0.0, %v3974
        %v3976 = vpop.f32.mrf.mxu0
        %v3977 = vadd.f32 0.0, %v3976
        %3978 = vmatprep.mubr.bf16.mxu0 %v2517
        %3979 = vmatmul.mubr.bf16.gmra.mxu0 %v2516
        %v3980 = vpop.f32.mrf.mxu0
        %v3981 = vadd.f32 0.0, %v3980
        %v3982 = vpop.f32.mrf.mxu0
        %v3983 = vadd.f32 0.0, %v3982
        %v3984 = vpop.f32.mrf.mxu0
        %v3985 = vadd.f32 0.0, %v3984
        %v3986 = vpop.f32.mrf.mxu0
        %v3987 = vadd.f32 0.0, %v3986
        %3988 = vmatprep.mubr.bf16.mxu0 %v2525
        %3989 = vmatmul.mubr.bf16.gmra.mxu0 %v2524
        %v3990 = vpop.f32.mrf.mxu0
        %v3991 = vadd.f32 0.0, %v3990
        %v3992 = vpop.f32.mrf.mxu0
        %v3993 = vadd.f32 0.0, %v3992
        %v3994 = vpop.f32.mrf.mxu0
        %v3995 = vadd.f32 0.0, %v3994
        %v3996 = vpop.f32.mrf.mxu0
        %v3997 = vadd.f32 0.0, %v3996
        %3998 = vmatprep.mubr.bf16.mxu0 %v2533
        %3999 = vmatmul.mubr.bf16.gmra.mxu0 %v2532
        %v4000 = vpop.f32.mrf.mxu0
        %v4001 = vadd.f32 0.0, %v4000
        %v4002 = vpop.f32.mrf.mxu0
        %v4003 = vadd.f32 0.0, %v4002
        %v4004 = vpop.f32.mrf.mxu0
        %v4005 = vadd.f32 0.0, %v4004
        %v4006 = vpop.f32.mrf.mxu0
        %v4007 = vadd.f32 0.0, %v4006
        %4008 = vmatprep.mubr.bf16.mxu0 %v2541
        %4009 = vmatmul.mubr.bf16.gmra.mxu0 %v2540
        %v4010 = vpop.f32.mrf.mxu0
        %v4011 = vadd.f32 0.0, %v4010
        %v4012 = vpop.f32.mrf.mxu0
        %v4013 = vadd.f32 0.0, %v4012
        %v4014 = vpop.f32.mrf.mxu0
        %v4015 = vadd.f32 0.0, %v4014
        %v4016 = vpop.f32.mrf.mxu0
        %v4017 = vadd.f32 0.0, %v4016
        %4018 = vmatprep.mubr.bf16.mxu0 %v2549
        %4019 = vmatmul.mubr.bf16.gmra.mxu0 %v2548
        %v4020 = vpop.f32.mrf.mxu0
        %v4021 = vadd.f32 0.0, %v4020
        %v4022 = vpop.f32.mrf.mxu0
        %v4023 = vadd.f32 0.0, %v4022
        %v4024 = vpop.f32.mrf.mxu0
        %v4025 = vadd.f32 0.0, %v4024
        %v4026 = vpop.f32.mrf.mxu0
        %v4027 = vadd.f32 0.0, %v4026
        %4028 = vdwg.mxu0
        %4029 = vmatprep.subr.bf16.mxu0 %v3522
        %4030 = vmatpush1.bf16.msra.mxu0 %v3521
        %4031 = vmatprep.subr.bf16.mxu0 %v3519
        %4032 = vmatpush1.bf16.msra.mxu0 %v3518
        %4033 = vmatprep.subr.bf16.mxu0 %v3516
        %4034 = vmatpush1.bf16.msra.mxu0 %v3515
        %4035 = vmatprep.subr.bf16.mxu0 %v3513
        %4036 = vmatpush1.bf16.msra.mxu0 %v3512
        %4037 = vmatprep.subr.bf16.mxu0 %v3510
        %4038 = vmatpush1.bf16.msra.mxu0 %v3509
        %4039 = vmatprep.subr.bf16.mxu0 %v3507
        %4040 = vmatpush1.bf16.msra.mxu0 %v3506
        %4041 = vmatprep.subr.bf16.mxu0 %v3504
        %4042 = vmatpush1.bf16.msra.mxu0 %v3503
        %4043 = vmatprep.subr.bf16.mxu0 %v3501
        %4044 = vmatpush1.bf16.msra.mxu0 %v3500
        %4045 = vmatprep.subr.bf16.mxu0 %v3546
        %4046 = vmatpush2.bf16.msra.mxu0 %v3545
        %4047 = vmatprep.subr.bf16.mxu0 %v3543
        %4048 = vmatpush2.bf16.msra.mxu0 %v3542
        %4049 = vmatprep.subr.bf16.mxu0 %v3540
        %4050 = vmatpush2.bf16.msra.mxu0 %v3539
        %4051 = vmatprep.subr.bf16.mxu0 %v3537
        %4052 = vmatpush2.bf16.msra.mxu0 %v3536
        %4053 = vmatprep.subr.bf16.mxu0 %v3534
        %4054 = vmatpush2.bf16.msra.mxu0 %v3533
        %4055 = vmatprep.subr.bf16.mxu0 %v3531
        %4056 = vmatpush2.bf16.msra.mxu0 %v3530
        %4057 = vmatprep.subr.bf16.mxu0 %v3528
        %4058 = vmatpush2.bf16.msra.mxu0 %v3527
        %4059 = vmatprep.subr.bf16.mxu0 %v3525
        %4060 = vmatpush2.bf16.msra.mxu0 %v3524
        %4061 = vmatprep.mubr.bf16.mxu0 %v2431
        %4062 = vmatmul.mubr.bf16.gmra.mxu0 %v2430
        %v4063 = vpop.f32.mrf.mxu0
        %v4064 = vadd.f32 %v3871, %v4063
        %v4065 = vpop.f32.mrf.mxu0
        %v4066 = vadd.f32 %v3873, %v4065
        %v4067 = vpop.f32.mrf.mxu0
        %v4068 = vadd.f32 %v3875, %v4067
        %v4069 = vpop.f32.mrf.mxu0
        %v4070 = vadd.f32 %v3877, %v4069
        %4071 = vmatprep.mubr.bf16.mxu0 %v2439
        %4072 = vmatmul.mubr.bf16.gmra.mxu0 %v2438
        %v4073 = vpop.f32.mrf.mxu0
        %v4074 = vadd.f32 %v3881, %v4073
        %v4075 = vpop.f32.mrf.mxu0
        %v4076 = vadd.f32 %v3883, %v4075
        %v4077 = vpop.f32.mrf.mxu0
        %v4078 = vadd.f32 %v3885, %v4077
        %v4079 = vpop.f32.mrf.mxu0
        %v4080 = vadd.f32 %v3887, %v4079
        %4081 = vmatprep.mubr.bf16.mxu0 %v2447
        %4082 = vmatmul.mubr.bf16.gmra.mxu0 %v2446
        %v4083 = vpop.f32.mrf.mxu0
        %v4084 = vadd.f32 %v3891, %v4083
        %v4085 = vpop.f32.mrf.mxu0
        %v4086 = vadd.f32 %v3893, %v4085
        %v4087 = vpop.f32.mrf.mxu0
        %v4088 = vadd.f32 %v3895, %v4087
        %v4089 = vpop.f32.mrf.mxu0
        %v4090 = vadd.f32 %v3897, %v4089
        %4091 = vmatprep.mubr.bf16.mxu0 %v2455
        %4092 = vmatmul.mubr.bf16.gmra.mxu0 %v2454
        %v4093 = vpop.f32.mrf.mxu0
        %v4094 = vadd.f32 %v3901, %v4093
        %v4095 = vpop.f32.mrf.mxu0
        %v4096 = vadd.f32 %v3903, %v4095
        %v4097 = vpop.f32.mrf.mxu0
        %v4098 = vadd.f32 %v3905, %v4097
        %v4099 = vpop.f32.mrf.mxu0
        %v4100 = vadd.f32 %v3907, %v4099
        %4101 = vmatprep.mubr.bf16.mxu0 %v2463
        %4102 = vmatmul.mubr.bf16.gmra.mxu0 %v2462
        %v4103 = vpop.f32.mrf.mxu0
        %v4104 = vadd.f32 %v3911, %v4103
        %v4105 = vpop.f32.mrf.mxu0
        %v4106 = vadd.f32 %v3913, %v4105
        %v4107 = vpop.f32.mrf.mxu0
        %v4108 = vadd.f32 %v3915, %v4107
        %v4109 = vpop.f32.mrf.mxu0
        %v4110 = vadd.f32 %v3917, %v4109
        %4111 = vmatprep.mubr.bf16.mxu0 %v2471
        %4112 = vmatmul.mubr.bf16.gmra.mxu0 %v2470
        %v4113 = vpop.f32.mrf.mxu0
        %v4114 = vadd.f32 %v3921, %v4113
        %v4115 = vpop.f32.mrf.mxu0
        %v4116 = vadd.f32 %v3923, %v4115
        %v4117 = vpop.f32.mrf.mxu0
        %v4118 = vadd.f32 %v3925, %v4117
        %v4119 = vpop.f32.mrf.mxu0
        %v4120 = vadd.f32 %v3927, %v4119
        %4121 = vmatprep.mubr.bf16.mxu0 %v2479
        %4122 = vmatmul.mubr.bf16.gmra.mxu0 %v2478
        %v4123 = vpop.f32.mrf.mxu0
        %v4124 = vadd.f32 %v3931, %v4123
        %v4125 = vpop.f32.mrf.mxu0
        %v4126 = vadd.f32 %v3933, %v4125
        %v4127 = vpop.f32.mrf.mxu0
        %v4128 = vadd.f32 %v3935, %v4127
        %v4129 = vpop.f32.mrf.mxu0
        %v4130 = vadd.f32 %v3937, %v4129
        %4131 = vmatprep.mubr.bf16.mxu0 %v2487
        %4132 = vmatmul.mubr.bf16.gmra.mxu0 %v2486
        %v4133 = vpop.f32.mrf.mxu0
        %v4134 = vadd.f32 %v3941, %v4133
        %v4135 = vpop.f32.mrf.mxu0
        %v4136 = vadd.f32 %v3943, %v4135
        %v4137 = vpop.f32.mrf.mxu0
        %v4138 = vadd.f32 %v3945, %v4137
        %v4139 = vpop.f32.mrf.mxu0
        %v4140 = vadd.f32 %v3947, %v4139
        %4141 = vmatprep.mubr.bf16.mxu0 %v2495
        %4142 = vmatmul.mubr.bf16.gmra.mxu0 %v2494
        %v4143 = vpop.f32.mrf.mxu0
        %v4144 = vadd.f32 %v3951, %v4143
        %v4145 = vpop.f32.mrf.mxu0
        %v4146 = vadd.f32 %v3953, %v4145
        %v4147 = vpop.f32.mrf.mxu0
        %v4148 = vadd.f32 %v3955, %v4147
        %v4149 = vpop.f32.mrf.mxu0
        %v4150 = vadd.f32 %v3957, %v4149
        %4151 = vmatprep.mubr.bf16.mxu0 %v2503
        %4152 = vmatmul.mubr.bf16.gmra.mxu0 %v2502
        %v4153 = vpop.f32.mrf.mxu0
        %v4154 = vadd.f32 %v3961, %v4153
        %v4155 = vpop.f32.mrf.mxu0
        %v4156 = vadd.f32 %v3963, %v4155
        %v4157 = vpop.f32.mrf.mxu0
        %v4158 = vadd.f32 %v3965, %v4157
        %v4159 = vpop.f32.mrf.mxu0
        %v4160 = vadd.f32 %v3967, %v4159
        %4161 = vmatprep.mubr.bf16.mxu0 %v2511
        %4162 = vmatmul.mubr.bf16.gmra.mxu0 %v2510
        %v4163 = vpop.f32.mrf.mxu0
        %v4164 = vadd.f32 %v3971, %v4163
        %v4165 = vpop.f32.mrf.mxu0
        %v4166 = vadd.f32 %v3973, %v4165
        %v4167 = vpop.f32.mrf.mxu0
        %v4168 = vadd.f32 %v3975, %v4167
        %v4169 = vpop.f32.mrf.mxu0
        %v4170 = vadd.f32 %v3977, %v4169
        %4171 = vmatprep.mubr.bf16.mxu0 %v2519
        %4172 = vmatmul.mubr.bf16.gmra.mxu0 %v2518
        %v4173 = vpop.f32.mrf.mxu0
        %v4174 = vadd.f32 %v3981, %v4173
        %v4175 = vpop.f32.mrf.mxu0
        %v4176 = vadd.f32 %v3983, %v4175
        %v4177 = vpop.f32.mrf.mxu0
        %v4178 = vadd.f32 %v3985, %v4177
        %v4179 = vpop.f32.mrf.mxu0
        %v4180 = vadd.f32 %v3987, %v4179
        %4181 = vmatprep.mubr.bf16.mxu0 %v2527
        %4182 = vmatmul.mubr.bf16.gmra.mxu0 %v2526
        %v4183 = vpop.f32.mrf.mxu0
        %v4184 = vadd.f32 %v3991, %v4183
        %v4185 = vpop.f32.mrf.mxu0
        %v4186 = vadd.f32 %v3993, %v4185
        %v4187 = vpop.f32.mrf.mxu0
        %v4188 = vadd.f32 %v3995, %v4187
        %v4189 = vpop.f32.mrf.mxu0
        %v4190 = vadd.f32 %v3997, %v4189
        %4191 = vmatprep.mubr.bf16.mxu0 %v2535
        %4192 = vmatmul.mubr.bf16.gmra.mxu0 %v2534
        %v4193 = vpop.f32.mrf.mxu0
        %v4194 = vadd.f32 %v4001, %v4193
        %v4195 = vpop.f32.mrf.mxu0
        %v4196 = vadd.f32 %v4003, %v4195
        %v4197 = vpop.f32.mrf.mxu0
        %v4198 = vadd.f32 %v4005, %v4197
        %v4199 = vpop.f32.mrf.mxu0
        %v4200 = vadd.f32 %v4007, %v4199
        %4201 = vmatprep.mubr.bf16.mxu0 %v2543
        %4202 = vmatmul.mubr.bf16.gmra.mxu0 %v2542
        %v4203 = vpop.f32.mrf.mxu0
        %v4204 = vadd.f32 %v4011, %v4203
        %v4205 = vpop.f32.mrf.mxu0
        %v4206 = vadd.f32 %v4013, %v4205
        %v4207 = vpop.f32.mrf.mxu0
        %v4208 = vadd.f32 %v4015, %v4207
        %v4209 = vpop.f32.mrf.mxu0
        %v4210 = vadd.f32 %v4017, %v4209
        %4211 = vmatprep.mubr.bf16.mxu0 %v2551
        %4212 = vmatmul.mubr.bf16.gmra.mxu0 %v2550
        %v4213 = vpop.f32.mrf.mxu0
        %v4214 = vadd.f32 %v4021, %v4213
        %v4215 = vpop.f32.mrf.mxu0
        %v4216 = vadd.f32 %v4023, %v4215
        %v4217 = vpop.f32.mrf.mxu0
        %v4218 = vadd.f32 %v4025, %v4217
        %v4219 = vpop.f32.mrf.mxu0
        %v4220 = vadd.f32 %v4027, %v4219
        %4221 = vdwg.mxu0
        %4222 = vmatprep.subr.bf16.mxu0 %v3570
        %4223 = vmatpush1.bf16.msra.mxu0 %v3569
        %4224 = vmatprep.subr.bf16.mxu0 %v3567
        %4225 = vmatpush1.bf16.msra.mxu0 %v3566
        %4226 = vmatprep.subr.bf16.mxu0 %v3564
        %4227 = vmatpush1.bf16.msra.mxu0 %v3563
        %4228 = vmatprep.subr.bf16.mxu0 %v3561
        %4229 = vmatpush1.bf16.msra.mxu0 %v3560
        %4230 = vmatprep.subr.bf16.mxu0 %v3558
        %4231 = vmatpush1.bf16.msra.mxu0 %v3557
        %4232 = vmatprep.subr.bf16.mxu0 %v3555
        %4233 = vmatpush1.bf16.msra.mxu0 %v3554
        %4234 = vmatprep.subr.bf16.mxu0 %v3552
        %4235 = vmatpush1.bf16.msra.mxu0 %v3551
        %4236 = vmatprep.subr.bf16.mxu0 %v3549
        %4237 = vmatpush1.bf16.msra.mxu0 %v3548
        %4238 = vmatprep.subr.bf16.mxu0 %v3594
        %4239 = vmatpush2.bf16.msra.mxu0 %v3593
        %4240 = vmatprep.subr.bf16.mxu0 %v3591
        %4241 = vmatpush2.bf16.msra.mxu0 %v3590
        %4242 = vmatprep.subr.bf16.mxu0 %v3588
        %4243 = vmatpush2.bf16.msra.mxu0 %v3587
        %4244 = vmatprep.subr.bf16.mxu0 %v3585
        %4245 = vmatpush2.bf16.msra.mxu0 %v3584
        %4246 = vmatprep.subr.bf16.mxu0 %v3582
        %4247 = vmatpush2.bf16.msra.mxu0 %v3581
        %4248 = vmatprep.subr.bf16.mxu0 %v3579
        %4249 = vmatpush2.bf16.msra.mxu0 %v3578
        %4250 = vmatprep.subr.bf16.mxu0 %v3576
        %4251 = vmatpush2.bf16.msra.mxu0 %v3575
        %4252 = vmatprep.subr.bf16.mxu0 %v3573
        %4253 = vmatpush2.bf16.msra.mxu0 %v3572
        %4254 = vmatprep.mubr.bf16.mxu0 %v2433
        %4255 = vmatmul.mubr.bf16.gmra.mxu0 %v2432
        %v4256 = vpop.f32.mrf.mxu0
        %v4257 = vadd.f32 %v4064, %v4256
        %v4258 = vpop.f32.mrf.mxu0
        %v4259 = vadd.f32 %v4066, %v4258
        %v4260 = vpop.f32.mrf.mxu0
        %v4261 = vadd.f32 %v4068, %v4260
        %v4262 = vpop.f32.mrf.mxu0
        %v4263 = vadd.f32 %v4070, %v4262
        %4264 = vmatprep.mubr.bf16.mxu0 %v2441
        %4265 = vmatmul.mubr.bf16.gmra.mxu0 %v2440
        %v4266 = vpop.f32.mrf.mxu0
        %v4267 = vadd.f32 %v4074, %v4266
        %v4268 = vpop.f32.mrf.mxu0
        %v4269 = vadd.f32 %v4076, %v4268
        %v4270 = vpop.f32.mrf.mxu0
        %v4271 = vadd.f32 %v4078, %v4270
        %v4272 = vpop.f32.mrf.mxu0
        %v4273 = vadd.f32 %v4080, %v4272
        %4274 = vmatprep.mubr.bf16.mxu0 %v2449
        %4275 = vmatmul.mubr.bf16.gmra.mxu0 %v2448
        %v4276 = vpop.f32.mrf.mxu0
        %v4277 = vadd.f32 %v4084, %v4276
        %v4278 = vpop.f32.mrf.mxu0
        %v4279 = vadd.f32 %v4086, %v4278
        %v4280 = vpop.f32.mrf.mxu0
        %v4281 = vadd.f32 %v4088, %v4280
        %v4282 = vpop.f32.mrf.mxu0
        %v4283 = vadd.f32 %v4090, %v4282
        %4284 = vmatprep.mubr.bf16.mxu0 %v2457
        %4285 = vmatmul.mubr.bf16.gmra.mxu0 %v2456
        %v4286 = vpop.f32.mrf.mxu0
        %v4287 = vadd.f32 %v4094, %v4286
        %v4288 = vpop.f32.mrf.mxu0
        %v4289 = vadd.f32 %v4096, %v4288
        %v4290 = vpop.f32.mrf.mxu0
        %v4291 = vadd.f32 %v4098, %v4290
        %v4292 = vpop.f32.mrf.mxu0
        %v4293 = vadd.f32 %v4100, %v4292
        %4294 = vmatprep.mubr.bf16.mxu0 %v2465
        %4295 = vmatmul.mubr.bf16.gmra.mxu0 %v2464
        %v4296 = vpop.f32.mrf.mxu0
        %v4297 = vadd.f32 %v4104, %v4296
        %v4298 = vpop.f32.mrf.mxu0
        %v4299 = vadd.f32 %v4106, %v4298
        %v4300 = vpop.f32.mrf.mxu0
        %v4301 = vadd.f32 %v4108, %v4300
        %v4302 = vpop.f32.mrf.mxu0
        %v4303 = vadd.f32 %v4110, %v4302
        %4304 = vmatprep.mubr.bf16.mxu0 %v2473
        %4305 = vmatmul.mubr.bf16.gmra.mxu0 %v2472
        %v4306 = vpop.f32.mrf.mxu0
        %v4307 = vadd.f32 %v4114, %v4306
        %v4308 = vpop.f32.mrf.mxu0
        %v4309 = vadd.f32 %v4116, %v4308
        %v4310 = vpop.f32.mrf.mxu0
        %v4311 = vadd.f32 %v4118, %v4310
        %v4312 = vpop.f32.mrf.mxu0
        %v4313 = vadd.f32 %v4120, %v4312
        %4314 = vmatprep.mubr.bf16.mxu0 %v2481
        %4315 = vmatmul.mubr.bf16.gmra.mxu0 %v2480
        %v4316 = vpop.f32.mrf.mxu0
        %v4317 = vadd.f32 %v4124, %v4316
        %v4318 = vpop.f32.mrf.mxu0
        %v4319 = vadd.f32 %v4126, %v4318
        %v4320 = vpop.f32.mrf.mxu0
        %v4321 = vadd.f32 %v4128, %v4320
        %v4322 = vpop.f32.mrf.mxu0
        %v4323 = vadd.f32 %v4130, %v4322
        %4324 = vmatprep.mubr.bf16.mxu0 %v2489
        %4325 = vmatmul.mubr.bf16.gmra.mxu0 %v2488
        %v4326 = vpop.f32.mrf.mxu0
        %v4327 = vadd.f32 %v4134, %v4326
        %v4328 = vpop.f32.mrf.mxu0
        %v4329 = vadd.f32 %v4136, %v4328
        %v4330 = vpop.f32.mrf.mxu0
        %v4331 = vadd.f32 %v4138, %v4330
        %v4332 = vpop.f32.mrf.mxu0
        %v4333 = vadd.f32 %v4140, %v4332
        %4334 = vmatprep.mubr.bf16.mxu0 %v2497
        %4335 = vmatmul.mubr.bf16.gmra.mxu0 %v2496
        %v4336 = vpop.f32.mrf.mxu0
        %v4337 = vadd.f32 %v4144, %v4336
        %v4338 = vpop.f32.mrf.mxu0
        %v4339 = vadd.f32 %v4146, %v4338
        %v4340 = vpop.f32.mrf.mxu0
        %v4341 = vadd.f32 %v4148, %v4340
        %v4342 = vpop.f32.mrf.mxu0
        %v4343 = vadd.f32 %v4150, %v4342
        %4344 = vmatprep.mubr.bf16.mxu0 %v2505
        %4345 = vmatmul.mubr.bf16.gmra.mxu0 %v2504
        %v4346 = vpop.f32.mrf.mxu0
        %v4347 = vadd.f32 %v4154, %v4346
        %v4348 = vpop.f32.mrf.mxu0
        %v4349 = vadd.f32 %v4156, %v4348
        %v4350 = vpop.f32.mrf.mxu0
        %v4351 = vadd.f32 %v4158, %v4350
        %v4352 = vpop.f32.mrf.mxu0
        %v4353 = vadd.f32 %v4160, %v4352
        %4354 = vmatprep.mubr.bf16.mxu0 %v2513
        %4355 = vmatmul.mubr.bf16.gmra.mxu0 %v2512
        %v4356 = vpop.f32.mrf.mxu0
        %v4357 = vadd.f32 %v4164, %v4356
        %v4358 = vpop.f32.mrf.mxu0
        %v4359 = vadd.f32 %v4166, %v4358
        %v4360 = vpop.f32.mrf.mxu0
        %v4361 = vadd.f32 %v4168, %v4360
        %v4362 = vpop.f32.mrf.mxu0
        %v4363 = vadd.f32 %v4170, %v4362
        %4364 = vmatprep.mubr.bf16.mxu0 %v2521
        %4365 = vmatmul.mubr.bf16.gmra.mxu0 %v2520
        %v4366 = vpop.f32.mrf.mxu0
        %v4367 = vadd.f32 %v4174, %v4366
        %v4368 = vpop.f32.mrf.mxu0
        %v4369 = vadd.f32 %v4176, %v4368
        %v4370 = vpop.f32.mrf.mxu0
        %v4371 = vadd.f32 %v4178, %v4370
        %v4372 = vpop.f32.mrf.mxu0
        %v4373 = vadd.f32 %v4180, %v4372
        %4374 = vmatprep.mubr.bf16.mxu0 %v2529
        %4375 = vmatmul.mubr.bf16.gmra.mxu0 %v2528
        %v4376 = vpop.f32.mrf.mxu0
        %v4377 = vadd.f32 %v4184, %v4376
        %v4378 = vpop.f32.mrf.mxu0
        %v4379 = vadd.f32 %v4186, %v4378
        %v4380 = vpop.f32.mrf.mxu0
        %v4381 = vadd.f32 %v4188, %v4380
        %v4382 = vpop.f32.mrf.mxu0
        %v4383 = vadd.f32 %v4190, %v4382
        %4384 = vmatprep.mubr.bf16.mxu0 %v2537
        %4385 = vmatmul.mubr.bf16.gmra.mxu0 %v2536
        %v4386 = vpop.f32.mrf.mxu0
        %v4387 = vadd.f32 %v4194, %v4386
        %v4388 = vpop.f32.mrf.mxu0
        %v4389 = vadd.f32 %v4196, %v4388
        %v4390 = vpop.f32.mrf.mxu0
        %v4391 = vadd.f32 %v4198, %v4390
        %v4392 = vpop.f32.mrf.mxu0
        %v4393 = vadd.f32 %v4200, %v4392
        %4394 = vmatprep.mubr.bf16.mxu0 %v2545
        %4395 = vmatmul.mubr.bf16.gmra.mxu0 %v2544
        %v4396 = vpop.f32.mrf.mxu0
        %v4397 = vadd.f32 %v4204, %v4396
        %v4398 = vpop.f32.mrf.mxu0
        %v4399 = vadd.f32 %v4206, %v4398
        %v4400 = vpop.f32.mrf.mxu0
        %v4401 = vadd.f32 %v4208, %v4400
        %v4402 = vpop.f32.mrf.mxu0
        %v4403 = vadd.f32 %v4210, %v4402
        %4404 = vmatprep.mubr.bf16.mxu0 %v2553
        %4405 = vmatmul.mubr.bf16.gmra.mxu0 %v2552
        %v4406 = vpop.f32.mrf.mxu0
        %v4407 = vadd.f32 %v4214, %v4406
        %v4408 = vpop.f32.mrf.mxu0
        %v4409 = vadd.f32 %v4216, %v4408
        %v4410 = vpop.f32.mrf.mxu0
        %v4411 = vadd.f32 %v4218, %v4410
        %v4412 = vpop.f32.mrf.mxu0
        %v4413 = vadd.f32 %v4220, %v4412
        %4414 = vdwg.mxu0
        %4415 = vmatprep.subr.bf16.mxu0 %v3618
        %4416 = vmatpush1.bf16.msra.mxu0 %v3617
        %4417 = vmatprep.subr.bf16.mxu0 %v3615
        %4418 = vmatpush1.bf16.msra.mxu0 %v3614
        %4419 = vmatprep.subr.bf16.mxu0 %v3612
        %4420 = vmatpush1.bf16.msra.mxu0 %v3611
        %4421 = vmatprep.subr.bf16.mxu0 %v3609
        %4422 = vmatpush1.bf16.msra.mxu0 %v3608
        %4423 = vmatprep.subr.bf16.mxu0 %v3606
        %4424 = vmatpush1.bf16.msra.mxu0 %v3605
        %4425 = vmatprep.subr.bf16.mxu0 %v3603
        %4426 = vmatpush1.bf16.msra.mxu0 %v3602
        %4427 = vmatprep.subr.bf16.mxu0 %v3600
        %4428 = vmatpush1.bf16.msra.mxu0 %v3599
        %4429 = vmatprep.subr.bf16.mxu0 %v3597
        %4430 = vmatpush1.bf16.msra.mxu0 %v3596
        %4431 = vmatprep.subr.bf16.mxu0 %v3642
        %4432 = vmatpush2.bf16.msra.mxu0 %v3641
        %4433 = vmatprep.subr.bf16.mxu0 %v3639
        %4434 = vmatpush2.bf16.msra.mxu0 %v3638
        %4435 = vmatprep.subr.bf16.mxu0 %v3636
        %4436 = vmatpush2.bf16.msra.mxu0 %v3635
        %4437 = vmatprep.subr.bf16.mxu0 %v3633
        %4438 = vmatpush2.bf16.msra.mxu0 %v3632
        %4439 = vmatprep.subr.bf16.mxu0 %v3630
        %4440 = vmatpush2.bf16.msra.mxu0 %v3629
        %4441 = vmatprep.subr.bf16.mxu0 %v3627
        %4442 = vmatpush2.bf16.msra.mxu0 %v3626
        %4443 = vmatprep.subr.bf16.mxu0 %v3624
        %4444 = vmatpush2.bf16.msra.mxu0 %v3623
        %4445 = vmatprep.subr.bf16.mxu0 %v3621
        %4446 = vmatpush2.bf16.msra.mxu0 %v3620
        %4447 = vmatprep.mubr.bf16.mxu0 %v2435
        %4448 = vmatmul.mubr.bf16.gmra.mxu0 %v2434
        %v4449 = vpop.f32.mrf.mxu0
        %v4450 = vadd.f32 %v4257, %v4449
        %v4451 = vpop.f32.mrf.mxu0
        %v4452 = vadd.f32 %v4259, %v4451
        %v4453 = vpop.f32.mrf.mxu0
        %v4454 = vadd.f32 %v4261, %v4453
        %v4455 = vpop.f32.mrf.mxu0
        %v4456 = vadd.f32 %v4263, %v4455
        %4457 = vmatprep.mubr.bf16.mxu0 %v2443
        %4458 = vmatmul.mubr.bf16.gmra.mxu0 %v2442
        %v4459 = vpop.f32.mrf.mxu0
        %v4460 = vadd.f32 %v4267, %v4459
        %v4461 = vpop.f32.mrf.mxu0
        %v4462 = vadd.f32 %v4269, %v4461
        %v4463 = vpop.f32.mrf.mxu0
        %v4464 = vadd.f32 %v4271, %v4463
        %v4465 = vpop.f32.mrf.mxu0
        %v4466 = vadd.f32 %v4273, %v4465
        %4467 = vmatprep.mubr.bf16.mxu0 %v2451
        %4468 = vmatmul.mubr.bf16.gmra.mxu0 %v2450
        %v4469 = vpop.f32.mrf.mxu0
        %v4470 = vadd.f32 %v4277, %v4469
        %v4471 = vpop.f32.mrf.mxu0
        %v4472 = vadd.f32 %v4279, %v4471
        %v4473 = vpop.f32.mrf.mxu0
        %v4474 = vadd.f32 %v4281, %v4473
        %v4475 = vpop.f32.mrf.mxu0
        %v4476 = vadd.f32 %v4283, %v4475
        %4477 = vmatprep.mubr.bf16.mxu0 %v2459
        %4478 = vmatmul.mubr.bf16.gmra.mxu0 %v2458
        %v4479 = vpop.f32.mrf.mxu0
        %v4480 = vadd.f32 %v4287, %v4479
        %v4481 = vpop.f32.mrf.mxu0
        %v4482 = vadd.f32 %v4289, %v4481
        %v4483 = vpop.f32.mrf.mxu0
        %v4484 = vadd.f32 %v4291, %v4483
        %v4485 = vpop.f32.mrf.mxu0
        %v4486 = vadd.f32 %v4293, %v4485
        %4487 = vmatprep.mubr.bf16.mxu0 %v2467
        %4488 = vmatmul.mubr.bf16.gmra.mxu0 %v2466
        %v4489 = vpop.f32.mrf.mxu0
        %v4490 = vadd.f32 %v4297, %v4489
        %v4491 = vpop.f32.mrf.mxu0
        %v4492 = vadd.f32 %v4299, %v4491
        %v4493 = vpop.f32.mrf.mxu0
        %v4494 = vadd.f32 %v4301, %v4493
        %v4495 = vpop.f32.mrf.mxu0
        %v4496 = vadd.f32 %v4303, %v4495
        %4497 = vmatprep.mubr.bf16.mxu0 %v2475
        %4498 = vmatmul.mubr.bf16.gmra.mxu0 %v2474
        %v4499 = vpop.f32.mrf.mxu0
        %v4500 = vadd.f32 %v4307, %v4499
        %v4501 = vpop.f32.mrf.mxu0
        %v4502 = vadd.f32 %v4309, %v4501
        %v4503 = vpop.f32.mrf.mxu0
        %v4504 = vadd.f32 %v4311, %v4503
        %v4505 = vpop.f32.mrf.mxu0
        %v4506 = vadd.f32 %v4313, %v4505
        %4507 = vmatprep.mubr.bf16.mxu0 %v2483
        %4508 = vmatmul.mubr.bf16.gmra.mxu0 %v2482
        %v4509 = vpop.f32.mrf.mxu0
        %v4510 = vadd.f32 %v4317, %v4509
        %v4511 = vpop.f32.mrf.mxu0
        %v4512 = vadd.f32 %v4319, %v4511
        %v4513 = vpop.f32.mrf.mxu0
        %v4514 = vadd.f32 %v4321, %v4513
        %v4515 = vpop.f32.mrf.mxu0
        %v4516 = vadd.f32 %v4323, %v4515
        %4517 = vmatprep.mubr.bf16.mxu0 %v2491
        %4518 = vmatmul.mubr.bf16.gmra.mxu0 %v2490
        %v4519 = vpop.f32.mrf.mxu0
        %v4520 = vadd.f32 %v4327, %v4519
        %v4521 = vpop.f32.mrf.mxu0
        %v4522 = vadd.f32 %v4329, %v4521
        %v4523 = vpop.f32.mrf.mxu0
        %v4524 = vadd.f32 %v4331, %v4523
        %v4525 = vpop.f32.mrf.mxu0
        %v4526 = vadd.f32 %v4333, %v4525
        %4527 = vmatprep.mubr.bf16.mxu0 %v2499
        %4528 = vmatmul.mubr.bf16.gmra.mxu0 %v2498
        %v4529 = vpop.f32.mrf.mxu0
        %v4530 = vadd.f32 %v4337, %v4529
        %v4531 = vpop.f32.mrf.mxu0
        %v4532 = vadd.f32 %v4339, %v4531
        %v4533 = vpop.f32.mrf.mxu0
        %v4534 = vadd.f32 %v4341, %v4533
        %v4535 = vpop.f32.mrf.mxu0
        %v4536 = vadd.f32 %v4343, %v4535
        %4537 = vmatprep.mubr.bf16.mxu0 %v2507
        %4538 = vmatmul.mubr.bf16.gmra.mxu0 %v2506
        %v4539 = vpop.f32.mrf.mxu0
        %v4540 = vadd.f32 %v4347, %v4539
        %v4541 = vpop.f32.mrf.mxu0
        %v4542 = vadd.f32 %v4349, %v4541
        %v4543 = vpop.f32.mrf.mxu0
        %v4544 = vadd.f32 %v4351, %v4543
        %v4545 = vpop.f32.mrf.mxu0
        %v4546 = vadd.f32 %v4353, %v4545
        %4547 = vmatprep.mubr.bf16.mxu0 %v2515
        %4548 = vmatmul.mubr.bf16.gmra.mxu0 %v2514
        %v4549 = vpop.f32.mrf.mxu0
        %v4550 = vadd.f32 %v4357, %v4549
        %v4551 = vpop.f32.mrf.mxu0
        %v4552 = vadd.f32 %v4359, %v4551
        %v4553 = vpop.f32.mrf.mxu0
        %v4554 = vadd.f32 %v4361, %v4553
        %v4555 = vpop.f32.mrf.mxu0
        %v4556 = vadd.f32 %v4363, %v4555
        %4557 = vmatprep.mubr.bf16.mxu0 %v2523
        %4558 = vmatmul.mubr.bf16.gmra.mxu0 %v2522
        %v4559 = vpop.f32.mrf.mxu0
        %v4560 = vadd.f32 %v4367, %v4559
        %v4561 = vpop.f32.mrf.mxu0
        %v4562 = vadd.f32 %v4369, %v4561
        %v4563 = vpop.f32.mrf.mxu0
        %v4564 = vadd.f32 %v4371, %v4563
        %v4565 = vpop.f32.mrf.mxu0
        %v4566 = vadd.f32 %v4373, %v4565
        %4567 = vmatprep.mubr.bf16.mxu0 %v2531
        %4568 = vmatmul.mubr.bf16.gmra.mxu0 %v2530
        %v4569 = vpop.f32.mrf.mxu0
        %v4570 = vadd.f32 %v4377, %v4569
        %v4571 = vpop.f32.mrf.mxu0
        %v4572 = vadd.f32 %v4379, %v4571
        %v4573 = vpop.f32.mrf.mxu0
        %v4574 = vadd.f32 %v4381, %v4573
        %v4575 = vpop.f32.mrf.mxu0
        %v4576 = vadd.f32 %v4383, %v4575
        %4577 = vmatprep.mubr.bf16.mxu0 %v2539
        %4578 = vmatmul.mubr.bf16.gmra.mxu0 %v2538
        %v4579 = vpop.f32.mrf.mxu0
        %v4580 = vadd.f32 %v4387, %v4579
        %v4581 = vpop.f32.mrf.mxu0
        %v4582 = vadd.f32 %v4389, %v4581
        %v4583 = vpop.f32.mrf.mxu0
        %v4584 = vadd.f32 %v4391, %v4583
        %v4585 = vpop.f32.mrf.mxu0
        %v4586 = vadd.f32 %v4393, %v4585
        %4587 = vmatprep.mubr.bf16.mxu0 %v2547
        %4588 = vmatmul.mubr.bf16.gmra.mxu0 %v2546
        %v4589 = vpop.f32.mrf.mxu0
        %v4590 = vadd.f32 %v4397, %v4589
        %v4591 = vpop.f32.mrf.mxu0
        %v4592 = vadd.f32 %v4399, %v4591
        %v4593 = vpop.f32.mrf.mxu0
        %v4594 = vadd.f32 %v4401, %v4593
        %v4595 = vpop.f32.mrf.mxu0
        %v4596 = vadd.f32 %v4403, %v4595
        %4597 = vmatprep.mubr.bf16.mxu0 %v2555
        %4598 = vmatmul.mubr.bf16.gmra.mxu0 %v2554
        %v4599 = vpop.f32.mrf.mxu0
        %v4600 = vadd.f32 %v4407, %v4599
        %v4601 = vpop.f32.mrf.mxu0
        %v4602 = vadd.f32 %v4409, %v4601
        %v4603 = vpop.f32.mrf.mxu0
        %v4604 = vadd.f32 %v4411, %v4603
        %v4605 = vpop.f32.mrf.mxu0
        %v4606 = vadd.f32 %v4413, %v4605
        %4607 = vdwg.mxu0
        %4608 = vmatprep.subr.bf16.mxu0 0
        %4609 = vmatpush1.bf16.msra.mxu0 %v3475
        %4610 = vmatprep.subr.bf16.mxu0 0
        %4611 = vmatpush1.bf16.msra.mxu0 %v3472
        %4612 = vmatprep.subr.bf16.mxu0 0
        %4613 = vmatpush1.bf16.msra.mxu0 %v3469
        %4614 = vmatprep.subr.bf16.mxu0 0
        %4615 = vmatpush1.bf16.msra.mxu0 %v3466
        %4616 = vmatprep.subr.bf16.mxu0 0
        %4617 = vmatpush1.bf16.msra.mxu0 %v3463
        %4618 = vmatprep.subr.bf16.mxu0 0
        %4619 = vmatpush1.bf16.msra.mxu0 %v3460
        %4620 = vmatprep.subr.bf16.mxu0 0
        %4621 = vmatpush1.bf16.msra.mxu0 %v3457
        %4622 = vmatprep.subr.bf16.mxu0 0
        %4623 = vmatpush1.bf16.msra.mxu0 %v3454
        %4624 = vmatprep.subr.bf16.mxu0 0
        %4625 = vmatpush2.bf16.msra.mxu0 %v3499
        %4626 = vmatprep.subr.bf16.mxu0 0
        %4627 = vmatpush2.bf16.msra.mxu0 %v3496
        %4628 = vmatprep.subr.bf16.mxu0 0
        %4629 = vmatpush2.bf16.msra.mxu0 %v3493
        %4630 = vmatprep.subr.bf16.mxu0 0
        %4631 = vmatpush2.bf16.msra.mxu0 %v3490
        %4632 = vmatprep.subr.bf16.mxu0 0
        %4633 = vmatpush2.bf16.msra.mxu0 %v3487
        %4634 = vmatprep.subr.bf16.mxu0 0
        %4635 = vmatpush2.bf16.msra.mxu0 %v3484
        %4636 = vmatprep.subr.bf16.mxu0 0
        %4637 = vmatpush2.bf16.msra.mxu0 %v3481
        %4638 = vmatprep.subr.bf16.mxu0 0
        %4639 = vmatpush2.bf16.msra.mxu0 %v3478
        %4640 = vmatprep.mubr.bf16.mxu0 %v2429
        %4641 = vmatmul.mubr.bf16.gmra.mxu0 %v2428
        %v4642 = vpop.f32.mrf.mxu0
        %v4643 = vadd.f32 0.0, %v4642
        %v4644 = vpop.f32.mrf.mxu0
        %v4645 = vpop.f32.mrf.mxu0
        %v4646 = vadd.f32 0.0, %v4645
        %v4647 = vpop.f32.mrf.mxu0
        %4648 = vmatprep.mubr.bf16.mxu0 %v2437
        %4649 = vmatmul.mubr.bf16.gmra.mxu0 %v2436
        %v4650 = vpop.f32.mrf.mxu0
        %v4651 = vadd.f32 0.0, %v4650
        %v4652 = vpop.f32.mrf.mxu0
        %v4653 = vpop.f32.mrf.mxu0
        %v4654 = vadd.f32 0.0, %v4653
        %v4655 = vpop.f32.mrf.mxu0
        %4656 = vmatprep.mubr.bf16.mxu0 %v2445
        %4657 = vmatmul.mubr.bf16.gmra.mxu0 %v2444
        %v4658 = vpop.f32.mrf.mxu0
        %v4659 = vadd.f32 0.0, %v4658
        %v4660 = vpop.f32.mrf.mxu0
        %v4661 = vpop.f32.mrf.mxu0
        %v4662 = vadd.f32 0.0, %v4661
        %v4663 = vpop.f32.mrf.mxu0
        %4664 = vmatprep.mubr.bf16.mxu0 %v2453
        %4665 = vmatmul.mubr.bf16.gmra.mxu0 %v2452
        %v4666 = vpop.f32.mrf.mxu0
        %v4667 = vadd.f32 0.0, %v4666
        %v4668 = vpop.f32.mrf.mxu0
        %v4669 = vpop.f32.mrf.mxu0
        %v4670 = vadd.f32 0.0, %v4669
        %v4671 = vpop.f32.mrf.mxu0
        %4672 = vmatprep.mubr.bf16.mxu0 %v2461
        %4673 = vmatmul.mubr.bf16.gmra.mxu0 %v2460
        %v4674 = vpop.f32.mrf.mxu0
        %v4675 = vadd.f32 0.0, %v4674
        %v4676 = vpop.f32.mrf.mxu0
        %v4677 = vpop.f32.mrf.mxu0
        %v4678 = vadd.f32 0.0, %v4677
        %v4679 = vpop.f32.mrf.mxu0
        %4680 = vmatprep.mubr.bf16.mxu0 %v2469
        %4681 = vmatmul.mubr.bf16.gmra.mxu0 %v2468
        %v4682 = vpop.f32.mrf.mxu0
        %v4683 = vadd.f32 0.0, %v4682
        %v4684 = vpop.f32.mrf.mxu0
        %v4685 = vpop.f32.mrf.mxu0
        %v4686 = vadd.f32 0.0, %v4685
        %v4687 = vpop.f32.mrf.mxu0
        %4688 = vmatprep.mubr.bf16.mxu0 %v2477
        %4689 = vmatmul.mubr.bf16.gmra.mxu0 %v2476
        %v4690 = vpop.f32.mrf.mxu0
        %v4691 = vadd.f32 0.0, %v4690
        %v4692 = vpop.f32.mrf.mxu0
        %v4693 = vpop.f32.mrf.mxu0
        %v4694 = vadd.f32 0.0, %v4693
        %v4695 = vpop.f32.mrf.mxu0
        %4696 = vmatprep.mubr.bf16.mxu0 %v2485
        %4697 = vmatmul.mubr.bf16.gmra.mxu0 %v2484
        %v4698 = vpop.f32.mrf.mxu0
        %v4699 = vadd.f32 0.0, %v4698
        %v4700 = vpop.f32.mrf.mxu0
        %v4701 = vpop.f32.mrf.mxu0
        %v4702 = vadd.f32 0.0, %v4701
        %v4703 = vpop.f32.mrf.mxu0
        %4704 = vmatprep.mubr.bf16.mxu0 %v2493
        %4705 = vmatmul.mubr.bf16.gmra.mxu0 %v2492
        %v4706 = vpop.f32.mrf.mxu0
        %v4707 = vadd.f32 0.0, %v4706
        %v4708 = vpop.f32.mrf.mxu0
        %v4709 = vpop.f32.mrf.mxu0
        %v4710 = vadd.f32 0.0, %v4709
        %v4711 = vpop.f32.mrf.mxu0
        %4712 = vmatprep.mubr.bf16.mxu0 %v2501
        %4713 = vmatmul.mubr.bf16.gmra.mxu0 %v2500
        %v4714 = vpop.f32.mrf.mxu0
        %v4715 = vadd.f32 0.0, %v4714
        %v4716 = vpop.f32.mrf.mxu0
        %v4717 = vpop.f32.mrf.mxu0
        %v4718 = vadd.f32 0.0, %v4717
        %v4719 = vpop.f32.mrf.mxu0
        %4720 = vmatprep.mubr.bf16.mxu0 %v2509
        %4721 = vmatmul.mubr.bf16.gmra.mxu0 %v2508
        %v4722 = vpop.f32.mrf.mxu0
        %v4723 = vadd.f32 0.0, %v4722
        %v4724 = vpop.f32.mrf.mxu0
        %v4725 = vpop.f32.mrf.mxu0
        %v4726 = vadd.f32 0.0, %v4725
        %v4727 = vpop.f32.mrf.mxu0
        %4728 = vmatprep.mubr.bf16.mxu0 %v2517
        %4729 = vmatmul.mubr.bf16.gmra.mxu0 %v2516
        %v4730 = vpop.f32.mrf.mxu0
        %v4731 = vadd.f32 0.0, %v4730
        %v4732 = vpop.f32.mrf.mxu0
        %v4733 = vpop.f32.mrf.mxu0
        %v4734 = vadd.f32 0.0, %v4733
        %v4735 = vpop.f32.mrf.mxu0
        %4736 = vmatprep.mubr.bf16.mxu0 %v2525
        %4737 = vmatmul.mubr.bf16.gmra.mxu0 %v2524
        %v4738 = vpop.f32.mrf.mxu0
        %v4739 = vadd.f32 0.0, %v4738
        %v4740 = vpop.f32.mrf.mxu0
        %v4741 = vpop.f32.mrf.mxu0
        %v4742 = vadd.f32 0.0, %v4741
        %v4743 = vpop.f32.mrf.mxu0
        %4744 = vmatprep.mubr.bf16.mxu0 %v2533
        %4745 = vmatmul.mubr.bf16.gmra.mxu0 %v2532
        %v4746 = vpop.f32.mrf.mxu0
        %v4747 = vadd.f32 0.0, %v4746
        %v4748 = vpop.f32.mrf.mxu0
        %v4749 = vpop.f32.mrf.mxu0
        %v4750 = vadd.f32 0.0, %v4749
        %v4751 = vpop.f32.mrf.mxu0
        %4752 = vmatprep.mubr.bf16.mxu0 %v2541
        %4753 = vmatmul.mubr.bf16.gmra.mxu0 %v2540
        %v4754 = vpop.f32.mrf.mxu0
        %v4755 = vadd.f32 0.0, %v4754
        %v4756 = vpop.f32.mrf.mxu0
        %v4757 = vpop.f32.mrf.mxu0
        %v4758 = vadd.f32 0.0, %v4757
        %v4759 = vpop.f32.mrf.mxu0
        %4760 = vmatprep.mubr.bf16.mxu0 %v2549
        %4761 = vmatmul.mubr.bf16.gmra.mxu0 %v2548
        %v4762 = vpop.f32.mrf.mxu0
        %v4763 = vadd.f32 0.0, %v4762
        %v4764 = vpop.f32.mrf.mxu0
        %v4765 = vpop.f32.mrf.mxu0
        %v4766 = vadd.f32 0.0, %v4765
        %v4767 = vpop.f32.mrf.mxu0
        %4768 = vdwg.mxu0
        %4769 = vmatprep.subr.bf16.mxu0 0
        %4770 = vmatpush1.bf16.msra.mxu0 %v3523
        %4771 = vmatprep.subr.bf16.mxu0 0
        %4772 = vmatpush1.bf16.msra.mxu0 %v3520
        %4773 = vmatprep.subr.bf16.mxu0 0
        %4774 = vmatpush1.bf16.msra.mxu0 %v3517
        %4775 = vmatprep.subr.bf16.mxu0 0
        %4776 = vmatpush1.bf16.msra.mxu0 %v3514
        %4777 = vmatprep.subr.bf16.mxu0 0
        %4778 = vmatpush1.bf16.msra.mxu0 %v3511
        %4779 = vmatprep.subr.bf16.mxu0 0
        %4780 = vmatpush1.bf16.msra.mxu0 %v3508
        %4781 = vmatprep.subr.bf16.mxu0 0
        %4782 = vmatpush1.bf16.msra.mxu0 %v3505
        %4783 = vmatprep.subr.bf16.mxu0 0
        %4784 = vmatpush1.bf16.msra.mxu0 %v3502
        %4785 = vmatprep.subr.bf16.mxu0 0
        %4786 = vmatpush2.bf16.msra.mxu0 %v3547
        %4787 = vmatprep.subr.bf16.mxu0 0
        %4788 = vmatpush2.bf16.msra.mxu0 %v3544
        %4789 = vmatprep.subr.bf16.mxu0 0
        %4790 = vmatpush2.bf16.msra.mxu0 %v3541
        %4791 = vmatprep.subr.bf16.mxu0 0
        %4792 = vmatpush2.bf16.msra.mxu0 %v3538
        %4793 = vmatprep.subr.bf16.mxu0 0
        %4794 = vmatpush2.bf16.msra.mxu0 %v3535
        %4795 = vmatprep.subr.bf16.mxu0 0
        %4796 = vmatpush2.bf16.msra.mxu0 %v3532
        %4797 = vmatprep.subr.bf16.mxu0 0
        %4798 = vmatpush2.bf16.msra.mxu0 %v3529
        %4799 = vmatprep.subr.bf16.mxu0 0
        %4800 = vmatpush2.bf16.msra.mxu0 %v3526
        %4801 = vmatprep.mubr.bf16.mxu0 %v2431
        %4802 = vmatmul.mubr.bf16.gmra.mxu0 %v2430
        %v4803 = vpop.f32.mrf.mxu0
        %v4804 = vadd.f32 %v4643, %v4803
        %v4805 = vpop.f32.mrf.mxu0
        %v4806 = vpop.f32.mrf.mxu0
        %v4807 = vadd.f32 %v4646, %v4806
        %v4808 = vpop.f32.mrf.mxu0
        %4809 = vmatprep.mubr.bf16.mxu0 %v2439
        %4810 = vmatmul.mubr.bf16.gmra.mxu0 %v2438
        %v4811 = vpop.f32.mrf.mxu0
        %v4812 = vadd.f32 %v4651, %v4811
        %v4813 = vpop.f32.mrf.mxu0
        %v4814 = vpop.f32.mrf.mxu0
        %v4815 = vadd.f32 %v4654, %v4814
        %v4816 = vpop.f32.mrf.mxu0
        %4817 = vmatprep.mubr.bf16.mxu0 %v2447
        %4818 = vmatmul.mubr.bf16.gmra.mxu0 %v2446
        %v4819 = vpop.f32.mrf.mxu0
        %v4820 = vadd.f32 %v4659, %v4819
        %v4821 = vpop.f32.mrf.mxu0
        %v4822 = vpop.f32.mrf.mxu0
        %v4823 = vadd.f32 %v4662, %v4822
        %v4824 = vpop.f32.mrf.mxu0
        %4825 = vmatprep.mubr.bf16.mxu0 %v2455
        %4826 = vmatmul.mubr.bf16.gmra.mxu0 %v2454
        %v4827 = vpop.f32.mrf.mxu0
        %v4828 = vadd.f32 %v4667, %v4827
        %v4829 = vpop.f32.mrf.mxu0
        %v4830 = vpop.f32.mrf.mxu0
        %v4831 = vadd.f32 %v4670, %v4830
        %v4832 = vpop.f32.mrf.mxu0
        %4833 = vmatprep.mubr.bf16.mxu0 %v2463
        %4834 = vmatmul.mubr.bf16.gmra.mxu0 %v2462
        %v4835 = vpop.f32.mrf.mxu0
        %v4836 = vadd.f32 %v4675, %v4835
        %v4837 = vpop.f32.mrf.mxu0
        %v4838 = vpop.f32.mrf.mxu0
        %v4839 = vadd.f32 %v4678, %v4838
        %v4840 = vpop.f32.mrf.mxu0
        %4841 = vmatprep.mubr.bf16.mxu0 %v2471
        %4842 = vmatmul.mubr.bf16.gmra.mxu0 %v2470
        %v4843 = vpop.f32.mrf.mxu0
        %v4844 = vadd.f32 %v4683, %v4843
        %v4845 = vpop.f32.mrf.mxu0
        %v4846 = vpop.f32.mrf.mxu0
        %v4847 = vadd.f32 %v4686, %v4846
        %v4848 = vpop.f32.mrf.mxu0
        %4849 = vmatprep.mubr.bf16.mxu0 %v2479
        %4850 = vmatmul.mubr.bf16.gmra.mxu0 %v2478
        %v4851 = vpop.f32.mrf.mxu0
        %v4852 = vadd.f32 %v4691, %v4851
        %v4853 = vpop.f32.mrf.mxu0
        %v4854 = vpop.f32.mrf.mxu0
        %v4855 = vadd.f32 %v4694, %v4854
        %v4856 = vpop.f32.mrf.mxu0
        %4857 = vmatprep.mubr.bf16.mxu0 %v2487
        %4858 = vmatmul.mubr.bf16.gmra.mxu0 %v2486
        %v4859 = vpop.f32.mrf.mxu0
        %v4860 = vadd.f32 %v4699, %v4859
        %v4861 = vpop.f32.mrf.mxu0
        %v4862 = vpop.f32.mrf.mxu0
        %v4863 = vadd.f32 %v4702, %v4862
        %v4864 = vpop.f32.mrf.mxu0
        %4865 = vmatprep.mubr.bf16.mxu0 %v2495
        %4866 = vmatmul.mubr.bf16.gmra.mxu0 %v2494
        %v4867 = vpop.f32.mrf.mxu0
        %v4868 = vadd.f32 %v4707, %v4867
        %v4869 = vpop.f32.mrf.mxu0
        %v4870 = vpop.f32.mrf.mxu0
        %v4871 = vadd.f32 %v4710, %v4870
        %v4872 = vpop.f32.mrf.mxu0
        %4873 = vmatprep.mubr.bf16.mxu0 %v2503
        %4874 = vmatmul.mubr.bf16.gmra.mxu0 %v2502
        %v4875 = vpop.f32.mrf.mxu0
        %v4876 = vadd.f32 %v4715, %v4875
        %v4877 = vpop.f32.mrf.mxu0
        %v4878 = vpop.f32.mrf.mxu0
        %v4879 = vadd.f32 %v4718, %v4878
        %v4880 = vpop.f32.mrf.mxu0
        %4881 = vmatprep.mubr.bf16.mxu0 %v2511
        %4882 = vmatmul.mubr.bf16.gmra.mxu0 %v2510
        %v4883 = vpop.f32.mrf.mxu0
        %v4884 = vadd.f32 %v4723, %v4883
        %v4885 = vpop.f32.mrf.mxu0
        %v4886 = vpop.f32.mrf.mxu0
        %v4887 = vadd.f32 %v4726, %v4886
        %v4888 = vpop.f32.mrf.mxu0
        %4889 = vmatprep.mubr.bf16.mxu0 %v2519
        %4890 = vmatmul.mubr.bf16.gmra.mxu0 %v2518
        %v4891 = vpop.f32.mrf.mxu0
        %v4892 = vadd.f32 %v4731, %v4891
        %v4893 = vpop.f32.mrf.mxu0
        %v4894 = vpop.f32.mrf.mxu0
        %v4895 = vadd.f32 %v4734, %v4894
        %v4896 = vpop.f32.mrf.mxu0
        %4897 = vmatprep.mubr.bf16.mxu0 %v2527
        %4898 = vmatmul.mubr.bf16.gmra.mxu0 %v2526
        %v4899 = vpop.f32.mrf.mxu0
        %v4900 = vadd.f32 %v4739, %v4899
        %v4901 = vpop.f32.mrf.mxu0
        %v4902 = vpop.f32.mrf.mxu0
        %v4903 = vadd.f32 %v4742, %v4902
        %v4904 = vpop.f32.mrf.mxu0
        %4905 = vmatprep.mubr.bf16.mxu0 %v2535
        %4906 = vmatmul.mubr.bf16.gmra.mxu0 %v2534
        %v4907 = vpop.f32.mrf.mxu0
        %v4908 = vadd.f32 %v4747, %v4907
        %v4909 = vpop.f32.mrf.mxu0
        %v4910 = vpop.f32.mrf.mxu0
        %v4911 = vadd.f32 %v4750, %v4910
        %v4912 = vpop.f32.mrf.mxu0
        %4913 = vmatprep.mubr.bf16.mxu0 %v2543
        %4914 = vmatmul.mubr.bf16.gmra.mxu0 %v2542
        %v4915 = vpop.f32.mrf.mxu0
        %v4916 = vadd.f32 %v4755, %v4915
        %v4917 = vpop.f32.mrf.mxu0
        %v4918 = vpop.f32.mrf.mxu0
        %v4919 = vadd.f32 %v4758, %v4918
        %v4920 = vpop.f32.mrf.mxu0
        %4921 = vmatprep.mubr.bf16.mxu0 %v2551
        %4922 = vmatmul.mubr.bf16.gmra.mxu0 %v2550
        %v4923 = vpop.f32.mrf.mxu0
        %v4924 = vadd.f32 %v4763, %v4923
        %v4925 = vpop.f32.mrf.mxu0
        %v4926 = vpop.f32.mrf.mxu0
        %v4927 = vadd.f32 %v4766, %v4926
        %v4928 = vpop.f32.mrf.mxu0
        %4929 = vdwg.mxu0
        %4930 = vmatprep.subr.bf16.mxu0 0
        %4931 = vmatpush1.bf16.msra.mxu0 %v3571
        %4932 = vmatprep.subr.bf16.mxu0 0
        %4933 = vmatpush1.bf16.msra.mxu0 %v3568
        %4934 = vmatprep.subr.bf16.mxu0 0
        %4935 = vmatpush1.bf16.msra.mxu0 %v3565
        %4936 = vmatprep.subr.bf16.mxu0 0
        %4937 = vmatpush1.bf16.msra.mxu0 %v3562
        %4938 = vmatprep.subr.bf16.mxu0 0
        %4939 = vmatpush1.bf16.msra.mxu0 %v3559
        %4940 = vmatprep.subr.bf16.mxu0 0
        %4941 = vmatpush1.bf16.msra.mxu0 %v3556
        %4942 = vmatprep.subr.bf16.mxu0 0
        %4943 = vmatpush1.bf16.msra.mxu0 %v3553
        %4944 = vmatprep.subr.bf16.mxu0 0
        %4945 = vmatpush1.bf16.msra.mxu0 %v3550
        %4946 = vmatprep.subr.bf16.mxu0 0
        %4947 = vmatpush2.bf16.msra.mxu0 %v3595
        %4948 = vmatprep.subr.bf16.mxu0 0
        %4949 = vmatpush2.bf16.msra.mxu0 %v3592
        %4950 = vmatprep.subr.bf16.mxu0 0
        %4951 = vmatpush2.bf16.msra.mxu0 %v3589
        %4952 = vmatprep.subr.bf16.mxu0 0
        %4953 = vmatpush2.bf16.msra.mxu0 %v3586
        %4954 = vmatprep.subr.bf16.mxu0 0
        %4955 = vmatpush2.bf16.msra.mxu0 %v3583
        %4956 = vmatprep.subr.bf16.mxu0 0
        %4957 = vmatpush2.bf16.msra.mxu0 %v3580
        %4958 = vmatprep.subr.bf16.mxu0 0
        %4959 = vmatpush2.bf16.msra.mxu0 %v3577
        %4960 = vmatprep.subr.bf16.mxu0 0
        %4961 = vmatpush2.bf16.msra.mxu0 %v3574
        %4962 = vmatprep.mubr.bf16.mxu0 %v2433
        %4963 = vmatmul.mubr.bf16.gmra.mxu0 %v2432
        %v4964 = vpop.f32.mrf.mxu0
        %v4965 = vadd.f32 %v4804, %v4964
        %v4966 = vpop.f32.mrf.mxu0
        %v4967 = vpop.f32.mrf.mxu0
        %v4968 = vadd.f32 %v4807, %v4967
        %v4969 = vpop.f32.mrf.mxu0
        %4970 = vmatprep.mubr.bf16.mxu0 %v2441
        %4971 = vmatmul.mubr.bf16.gmra.mxu0 %v2440
        %v4972 = vpop.f32.mrf.mxu0
        %v4973 = vadd.f32 %v4812, %v4972
        %v4974 = vpop.f32.mrf.mxu0
        %v4975 = vpop.f32.mrf.mxu0
        %v4976 = vadd.f32 %v4815, %v4975
        %v4977 = vpop.f32.mrf.mxu0
        %4978 = vmatprep.mubr.bf16.mxu0 %v2449
        %4979 = vmatmul.mubr.bf16.gmra.mxu0 %v2448
        %v4980 = vpop.f32.mrf.mxu0
        %v4981 = vadd.f32 %v4820, %v4980
        %v4982 = vpop.f32.mrf.mxu0
        %v4983 = vpop.f32.mrf.mxu0
        %v4984 = vadd.f32 %v4823, %v4983
        %v4985 = vpop.f32.mrf.mxu0
        %4986 = vmatprep.mubr.bf16.mxu0 %v2457
        %4987 = vmatmul.mubr.bf16.gmra.mxu0 %v2456
        %v4988 = vpop.f32.mrf.mxu0
        %v4989 = vadd.f32 %v4828, %v4988
        %v4990 = vpop.f32.mrf.mxu0
        %v4991 = vpop.f32.mrf.mxu0
        %v4992 = vadd.f32 %v4831, %v4991
        %v4993 = vpop.f32.mrf.mxu0
        %4994 = vmatprep.mubr.bf16.mxu0 %v2465
        %4995 = vmatmul.mubr.bf16.gmra.mxu0 %v2464
        %v4996 = vpop.f32.mrf.mxu0
        %v4997 = vadd.f32 %v4836, %v4996
        %v4998 = vpop.f32.mrf.mxu0
        %v4999 = vpop.f32.mrf.mxu0
        %v5000 = vadd.f32 %v4839, %v4999
        %v5001 = vpop.f32.mrf.mxu0
        %5002 = vmatprep.mubr.bf16.mxu0 %v2473
        %5003 = vmatmul.mubr.bf16.gmra.mxu0 %v2472
        %v5004 = vpop.f32.mrf.mxu0
        %v5005 = vadd.f32 %v4844, %v5004
        %v5006 = vpop.f32.mrf.mxu0
        %v5007 = vpop.f32.mrf.mxu0
        %v5008 = vadd.f32 %v4847, %v5007
        %v5009 = vpop.f32.mrf.mxu0
        %5010 = vmatprep.mubr.bf16.mxu0 %v2481
        %5011 = vmatmul.mubr.bf16.gmra.mxu0 %v2480
        %v5012 = vpop.f32.mrf.mxu0
        %v5013 = vadd.f32 %v4852, %v5012
        %v5014 = vpop.f32.mrf.mxu0
        %v5015 = vpop.f32.mrf.mxu0
        %v5016 = vadd.f32 %v4855, %v5015
        %v5017 = vpop.f32.mrf.mxu0
        %5018 = vmatprep.mubr.bf16.mxu0 %v2489
        %5019 = vmatmul.mubr.bf16.gmra.mxu0 %v2488
        %v5020 = vpop.f32.mrf.mxu0
        %v5021 = vadd.f32 %v4860, %v5020
        %v5022 = vpop.f32.mrf.mxu0
        %v5023 = vpop.f32.mrf.mxu0
        %v5024 = vadd.f32 %v4863, %v5023
        %v5025 = vpop.f32.mrf.mxu0
        %5026 = vmatprep.mubr.bf16.mxu0 %v2497
        %5027 = vmatmul.mubr.bf16.gmra.mxu0 %v2496
        %v5028 = vpop.f32.mrf.mxu0
        %v5029 = vadd.f32 %v4868, %v5028
        %v5030 = vpop.f32.mrf.mxu0
        %v5031 = vpop.f32.mrf.mxu0
        %v5032 = vadd.f32 %v4871, %v5031
        %v5033 = vpop.f32.mrf.mxu0
        %5034 = vmatprep.mubr.bf16.mxu0 %v2505
        %5035 = vmatmul.mubr.bf16.gmra.mxu0 %v2504
        %v5036 = vpop.f32.mrf.mxu0
        %v5037 = vadd.f32 %v4876, %v5036
        %v5038 = vpop.f32.mrf.mxu0
        %v5039 = vpop.f32.mrf.mxu0
        %v5040 = vadd.f32 %v4879, %v5039
        %v5041 = vpop.f32.mrf.mxu0
        %5042 = vmatprep.mubr.bf16.mxu0 %v2513
        %5043 = vmatmul.mubr.bf16.gmra.mxu0 %v2512
        %v5044 = vpop.f32.mrf.mxu0
        %v5045 = vadd.f32 %v4884, %v5044
        %v5046 = vpop.f32.mrf.mxu0
        %v5047 = vpop.f32.mrf.mxu0
        %v5048 = vadd.f32 %v4887, %v5047
        %v5049 = vpop.f32.mrf.mxu0
        %5050 = vmatprep.mubr.bf16.mxu0 %v2521
        %5051 = vmatmul.mubr.bf16.gmra.mxu0 %v2520
        %v5052 = vpop.f32.mrf.mxu0
        %v5053 = vadd.f32 %v4892, %v5052
        %v5054 = vpop.f32.mrf.mxu0
        %v5055 = vpop.f32.mrf.mxu0
        %v5056 = vadd.f32 %v4895, %v5055
        %v5057 = vpop.f32.mrf.mxu0
        %5058 = vmatprep.mubr.bf16.mxu0 %v2529
        %5059 = vmatmul.mubr.bf16.gmra.mxu0 %v2528
        %v5060 = vpop.f32.mrf.mxu0
        %v5061 = vadd.f32 %v4900, %v5060
        %v5062 = vpop.f32.mrf.mxu0
        %v5063 = vpop.f32.mrf.mxu0
        %v5064 = vadd.f32 %v4903, %v5063
        %v5065 = vpop.f32.mrf.mxu0
        %5066 = vmatprep.mubr.bf16.mxu0 %v2537
        %5067 = vmatmul.mubr.bf16.gmra.mxu0 %v2536
        %v5068 = vpop.f32.mrf.mxu0
        %v5069 = vadd.f32 %v4908, %v5068
        %v5070 = vpop.f32.mrf.mxu0
        %v5071 = vpop.f32.mrf.mxu0
        %v5072 = vadd.f32 %v4911, %v5071
        %v5073 = vpop.f32.mrf.mxu0
        %5074 = vmatprep.mubr.bf16.mxu0 %v2545
        %5075 = vmatmul.mubr.bf16.gmra.mxu0 %v2544
        %v5076 = vpop.f32.mrf.mxu0
        %v5077 = vadd.f32 %v4916, %v5076
        %v5078 = vpop.f32.mrf.mxu0
        %v5079 = vpop.f32.mrf.mxu0
        %v5080 = vadd.f32 %v4919, %v5079
        %v5081 = vpop.f32.mrf.mxu0
        %5082 = vmatprep.mubr.bf16.mxu0 %v2553
        %5083 = vmatmul.mubr.bf16.gmra.mxu0 %v2552
        %v5084 = vpop.f32.mrf.mxu0
        %v5085 = vadd.f32 %v4924, %v5084
        %v5086 = vpop.f32.mrf.mxu0
        %v5087 = vpop.f32.mrf.mxu0
        %v5088 = vadd.f32 %v4927, %v5087
        %v5089 = vpop.f32.mrf.mxu0
        %5090 = vdwg.mxu0
        %5091 = vmatprep.subr.bf16.mxu0 0
        %5092 = vmatpush1.bf16.msra.mxu0 %v3619
        %5093 = vmatprep.subr.bf16.mxu0 0
        %5094 = vmatpush1.bf16.msra.mxu0 %v3616
        %5095 = vmatprep.subr.bf16.mxu0 0
        %5096 = vmatpush1.bf16.msra.mxu0 %v3613
        %5097 = vmatprep.subr.bf16.mxu0 0
        %5098 = vmatpush1.bf16.msra.mxu0 %v3610
        %5099 = vmatprep.subr.bf16.mxu0 0
        %5100 = vmatpush1.bf16.msra.mxu0 %v3607
        %5101 = vmatprep.subr.bf16.mxu0 0
        %5102 = vmatpush1.bf16.msra.mxu0 %v3604
        %5103 = vmatprep.subr.bf16.mxu0 0
        %5104 = vmatpush1.bf16.msra.mxu0 %v3601
        %5105 = vmatprep.subr.bf16.mxu0 0
        %5106 = vmatpush1.bf16.msra.mxu0 %v3598
        %5107 = vmatprep.subr.bf16.mxu0 0
        %5108 = vmatpush2.bf16.msra.mxu0 %v3643
        %5109 = vmatprep.subr.bf16.mxu0 0
        %5110 = vmatpush2.bf16.msra.mxu0 %v3640
        %5111 = vmatprep.subr.bf16.mxu0 0
        %5112 = vmatpush2.bf16.msra.mxu0 %v3637
        %5113 = vmatprep.subr.bf16.mxu0 0
        %5114 = vmatpush2.bf16.msra.mxu0 %v3634
        %5115 = vmatprep.subr.bf16.mxu0 0
        %5116 = vmatpush2.bf16.msra.mxu0 %v3631
        %5117 = vmatprep.subr.bf16.mxu0 0
        %5118 = vmatpush2.bf16.msra.mxu0 %v3628
        %5119 = vmatprep.subr.bf16.mxu0 0
        %5120 = vmatpush2.bf16.msra.mxu0 %v3625
        %5121 = vmatprep.subr.bf16.mxu0 0
        %5122 = vmatpush2.bf16.msra.mxu0 %v3622
        %5123 = vmatprep.mubr.bf16.mxu0 %v2435
        %5124 = vmatmul.mubr.bf16.gmra.mxu0 %v2434
        %v5125 = vpop.f32.mrf.mxu0
        %v5126 = vadd.f32 %v4965, %v5125
        %v5127 = vpop.f32.mrf.mxu0
        %v5128 = vpop.f32.mrf.mxu0
        %v5129 = vadd.f32 %v4968, %v5128
        %v5130 = vpop.f32.mrf.mxu0
        %5131 = vmatprep.mubr.bf16.mxu0 %v2443
        %5132 = vmatmul.mubr.bf16.gmra.mxu0 %v2442
        %v5133 = vpop.f32.mrf.mxu0
        %v5134 = vadd.f32 %v4973, %v5133
        %v5135 = vpop.f32.mrf.mxu0
        %v5136 = vpop.f32.mrf.mxu0
        %v5137 = vadd.f32 %v4976, %v5136
        %v5138 = vpop.f32.mrf.mxu0
        %5139 = vmatprep.mubr.bf16.mxu0 %v2451
        %5140 = vmatmul.mubr.bf16.gmra.mxu0 %v2450
        %v5141 = vpop.f32.mrf.mxu0
        %v5142 = vadd.f32 %v4981, %v5141
        %v5143 = vpop.f32.mrf.mxu0
        %v5144 = vpop.f32.mrf.mxu0
        %v5145 = vadd.f32 %v4984, %v5144
        %v5146 = vpop.f32.mrf.mxu0
        %5147 = vmatprep.mubr.bf16.mxu0 %v2459
        %5148 = vmatmul.mubr.bf16.gmra.mxu0 %v2458
        %v5149 = vpop.f32.mrf.mxu0
        %v5150 = vadd.f32 %v4989, %v5149
        %v5151 = vpop.f32.mrf.mxu0
        %v5152 = vpop.f32.mrf.mxu0
        %v5153 = vadd.f32 %v4992, %v5152
        %v5154 = vpop.f32.mrf.mxu0
        %5155 = vmatprep.mubr.bf16.mxu0 %v2467
        %5156 = vmatmul.mubr.bf16.gmra.mxu0 %v2466
        %v5157 = vpop.f32.mrf.mxu0
        %v5158 = vadd.f32 %v4997, %v5157
        %v5159 = vpop.f32.mrf.mxu0
        %v5160 = vpop.f32.mrf.mxu0
        %v5161 = vadd.f32 %v5000, %v5160
        %v5162 = vpop.f32.mrf.mxu0
        %5163 = vmatprep.mubr.bf16.mxu0 %v2475
        %5164 = vmatmul.mubr.bf16.gmra.mxu0 %v2474
        %v5165 = vpop.f32.mrf.mxu0
        %v5166 = vadd.f32 %v5005, %v5165
        %v5167 = vpop.f32.mrf.mxu0
        %v5168 = vpop.f32.mrf.mxu0
        %v5169 = vadd.f32 %v5008, %v5168
        %v5170 = vpop.f32.mrf.mxu0
        %5171 = vmatprep.mubr.bf16.mxu0 %v2483
        %5172 = vmatmul.mubr.bf16.gmra.mxu0 %v2482
        %v5173 = vpop.f32.mrf.mxu0
        %v5174 = vadd.f32 %v5013, %v5173
        %v5175 = vpop.f32.mrf.mxu0
        %v5176 = vpop.f32.mrf.mxu0
        %v5177 = vadd.f32 %v5016, %v5176
        %v5178 = vpop.f32.mrf.mxu0
        %5179 = vmatprep.mubr.bf16.mxu0 %v2491
        %5180 = vmatmul.mubr.bf16.gmra.mxu0 %v2490
        %v5181 = vpop.f32.mrf.mxu0
        %v5182 = vadd.f32 %v5021, %v5181
        %v5183 = vpop.f32.mrf.mxu0
        %v5184 = vpop.f32.mrf.mxu0
        %v5185 = vadd.f32 %v5024, %v5184
        %v5186 = vpop.f32.mrf.mxu0
        %5187 = vmatprep.mubr.bf16.mxu0 %v2499
        %5188 = vmatmul.mubr.bf16.gmra.mxu0 %v2498
        %v5189 = vpop.f32.mrf.mxu0
        %v5190 = vadd.f32 %v5029, %v5189
        %v5191 = vpop.f32.mrf.mxu0
        %v5192 = vpop.f32.mrf.mxu0
        %v5193 = vadd.f32 %v5032, %v5192
        %v5194 = vpop.f32.mrf.mxu0
        %5195 = vmatprep.mubr.bf16.mxu0 %v2507
        %5196 = vmatmul.mubr.bf16.gmra.mxu0 %v2506
        %v5197 = vpop.f32.mrf.mxu0
        %v5198 = vadd.f32 %v5037, %v5197
        %v5199 = vpop.f32.mrf.mxu0
        %v5200 = vpop.f32.mrf.mxu0
        %v5201 = vadd.f32 %v5040, %v5200
        %v5202 = vpop.f32.mrf.mxu0
        %5203 = vmatprep.mubr.bf16.mxu0 %v2515
        %5204 = vmatmul.mubr.bf16.gmra.mxu0 %v2514
        %v5205 = vpop.f32.mrf.mxu0
        %v5206 = vadd.f32 %v5045, %v5205
        %v5207 = vpop.f32.mrf.mxu0
        %v5208 = vpop.f32.mrf.mxu0
        %v5209 = vadd.f32 %v5048, %v5208
        %v5210 = vpop.f32.mrf.mxu0
        %5211 = vmatprep.mubr.bf16.mxu0 %v2523
        %5212 = vmatmul.mubr.bf16.gmra.mxu0 %v2522
        %v5213 = vpop.f32.mrf.mxu0
        %v5214 = vadd.f32 %v5053, %v5213
        %v5215 = vpop.f32.mrf.mxu0
        %v5216 = vpop.f32.mrf.mxu0
        %v5217 = vadd.f32 %v5056, %v5216
        %v5218 = vpop.f32.mrf.mxu0
        %5219 = vmatprep.mubr.bf16.mxu0 %v2531
        %5220 = vmatmul.mubr.bf16.gmra.mxu0 %v2530
        %v5221 = vpop.f32.mrf.mxu0
        %v5222 = vadd.f32 %v5061, %v5221
        %v5223 = vpop.f32.mrf.mxu0
        %v5224 = vpop.f32.mrf.mxu0
        %v5225 = vadd.f32 %v5064, %v5224
        %v5226 = vpop.f32.mrf.mxu0
        %5227 = vmatprep.mubr.bf16.mxu0 %v2539
        %5228 = vmatmul.mubr.bf16.gmra.mxu0 %v2538
        %v5229 = vpop.f32.mrf.mxu0
        %v5230 = vadd.f32 %v5069, %v5229
        %v5231 = vpop.f32.mrf.mxu0
        %v5232 = vpop.f32.mrf.mxu0
        %v5233 = vadd.f32 %v5072, %v5232
        %v5234 = vpop.f32.mrf.mxu0
        %5235 = vmatprep.mubr.bf16.mxu0 %v2547
        %5236 = vmatmul.mubr.bf16.gmra.mxu0 %v2546
        %v5237 = vpop.f32.mrf.mxu0
        %v5238 = vadd.f32 %v5077, %v5237
        %v5239 = vpop.f32.mrf.mxu0
        %v5240 = vpop.f32.mrf.mxu0
        %v5241 = vadd.f32 %v5080, %v5240
        %v5242 = vpop.f32.mrf.mxu0
        %5243 = vmatprep.mubr.bf16.mxu0 %v2555
        %5244 = vmatmul.mubr.bf16.gmra.mxu0 %v2554
        %v5245 = vpop.f32.mrf.mxu0
        %v5246 = vadd.f32 %v5085, %v5245
        %v5247 = vpop.f32.mrf.mxu0
        %v5248 = vpop.f32.mrf.mxu0
        %v5249 = vadd.f32 %v5088, %v5248
        %v5250 = vpop.f32.mrf.mxu0
        %5251 = vdwg.mxu0
        %v5252 = vld [vmem:[%s4] sm:$0xff]
        %v5253 = vld [vmem:[%s4 + $0x8] sm:$0xff]
        %v5254 = vld [vmem:[%s4 + $0x10] sm:$0xff]
        %v5255 = vld [vmem:[%s4 + $0x18] sm:$0xff]
        %v5256 = vld [vmem:[%s4 + $0x20] sm:$0xff]
        %v5257 = vld [vmem:[%s4 + $0x28] sm:$0xff]
        %v5258 = vld [vmem:[%s4 + $0x30] sm:$0xff]
        %v5259 = vld [vmem:[%s4 + $0x38] sm:$0xff]
        %v5260 = vld [vmem:[%s4 + $0x40] sm:$0xff]
        %v5261 = vld [vmem:[%s4 + $0x48] sm:$0xff]
        %v5262 = vld [vmem:[%s4 + $0x50] sm:$0xff]
        %v5263 = vld [vmem:[%s4 + $0x58] sm:$0xff]
        %v5264 = vld [vmem:[%s4 + $0x60] sm:$0xff]
        %v5265 = vld [vmem:[%s4 + $0x68] sm:$0xff]
        %v5266 = vld [vmem:[%s4 + $0x70] sm:$0xff]
        %v5267 = vld [vmem:[%s4 + $0x78] sm:$0xff]
        %v5268 = vld [vmem:[%s4 + $0x80] sm:$0xff]
        %v5269 = vld [vmem:[%s4 + $0x88] sm:$0xff]
        %v5270 = vld [vmem:[%s4 + $0x90] sm:$0xff]
        %v5271 = vld [vmem:[%s4 + $0x98] sm:$0xff]
        %v5272 = vld [vmem:[%s4 + $0xa0] sm:$0xff]
        %v5273 = vld [vmem:[%s4 + $0xa8] sm:$0xff]
        %v5274 = vld [vmem:[%s4 + $0xb0] sm:$0xff]
        %v5275 = vld [vmem:[%s4 + $0xb8] sm:$0xff]
        %v5276 = vld [vmem:[%s4 + $0xc0] sm:$0xff]
        %v5277 = vld [vmem:[%s4 + $0xc8] sm:$0xff]
        %v5278 = vld [vmem:[%s4 + $0xd0] sm:$0xff]
        %v5279 = vld [vmem:[%s4 + $0xd8] sm:$0xff]
        %v5280 = vld [vmem:[%s4 + $0xe0] sm:$0xff]
        %v5281 = vld [vmem:[%s4 + $0xe8] sm:$0xff]
        %v5282 = vld [vmem:[%s4 + $0xf0] sm:$0xff]
        %v5283 = vld [vmem:[%s4 + $0xf8] sm:$0xff]
        %v5284 = vld [vmem:[%s4 + $0x100] sm:$0xff]
        %v5285 = vld [vmem:[%s4 + $0x108] sm:$0xff]
        %v5286 = vld [vmem:[%s4 + $0x110] sm:$0xff]
        %v5287 = vld [vmem:[%s4 + $0x118] sm:$0xff]
        %v5288 = vld [vmem:[%s4 + $0x120] sm:$0xff]
        %v5289 = vld [vmem:[%s4 + $0x128] sm:$0xff]
        %v5290 = vld [vmem:[%s4 + $0x130] sm:$0xff]
        %v5291 = vld [vmem:[%s4 + $0x138] sm:$0xff]
        %v5292 = vld [vmem:[%s4 + $0x140] sm:$0xff]
        %v5293 = vld [vmem:[%s4 + $0x148] sm:$0xff]
        %v5294 = vld [vmem:[%s4 + $0x150] sm:$0xff]
        %v5295 = vld [vmem:[%s4 + $0x158] sm:$0xff]
        %v5296 = vld [vmem:[%s4 + $0x160] sm:$0xff]
        %v5297 = vld [vmem:[%s4 + $0x168] sm:$0xff]
        %v5298 = vld [vmem:[%s4 + $0x170] sm:$0xff]
        %v5299 = vld [vmem:[%s4 + $0x178] sm:$0xff]
        %v5300 = vld [vmem:[%s4 + $0x180] sm:$0xff]
        %v5301 = vld [vmem:[%s4 + $0x188] sm:$0xff]
        %v5302 = vld [vmem:[%s4 + $0x190] sm:$0xff]
        %v5303 = vld [vmem:[%s4 + $0x198] sm:$0xff]
        %v5304 = vld [vmem:[%s4 + $0x1a0] sm:$0xff]
        %v5305 = vld [vmem:[%s4 + $0x1a8] sm:$0xff]
        %v5306 = vld [vmem:[%s4 + $0x1b0] sm:$0xff]
        %v5307 = vld [vmem:[%s4 + $0x1b8] sm:$0xff]
        %v5308 = vld [vmem:[%s4 + $0x1c0] sm:$0xff]
        %v5309 = vld [vmem:[%s4 + $0x1c8] sm:$0xff]
        %v5310 = vld [vmem:[%s4 + $0x1d0] sm:$0xff]
        %v5311 = vld [vmem:[%s4 + $0x1d8] sm:$0xff]
        %v5312 = vld [vmem:[%s4 + $0x1e0] sm:$0xff]
        %v5313 = vld [vmem:[%s4 + $0x1e8] sm:$0xff]
        %v5314 = vld [vmem:[%s4 + $0x1f0] sm:$0xff]
        %v5315 = vld [vmem:[%s4 + $0x1f8] sm:$0xff]
        %v5316 = vld [vmem:[%s4 + $0x200] sm:$0xff]
        %v5317 = vld [vmem:[%s4 + $0x208] sm:$0xff]
        %v5318 = vld [vmem:[%s4 + $0x210] sm:$0xff]
        %v5319 = vld [vmem:[%s4 + $0x218] sm:$0xff]
        %v5320 = vld [vmem:[%s4 + $0x220] sm:$0xff]
        %v5321 = vld [vmem:[%s4 + $0x228] sm:$0xff]
        %v5322 = vld [vmem:[%s4 + $0x230] sm:$0xff]
        %v5323 = vld [vmem:[%s4 + $0x238] sm:$0xff]
        %v5324 = vld [vmem:[%s4 + $0x240] sm:$0xff]
        %v5325 = vld [vmem:[%s4 + $0x248] sm:$0xff]
        %v5326 = vld [vmem:[%s4 + $0x250] sm:$0xff]
        %v5327 = vld [vmem:[%s4 + $0x258] sm:$0xff]
        %v5328 = vld [vmem:[%s4 + $0x260] sm:$0xff]
        %v5329 = vld [vmem:[%s4 + $0x268] sm:$0xff]
        %v5330 = vld [vmem:[%s4 + $0x270] sm:$0xff]
        %v5331 = vld [vmem:[%s4 + $0x278] sm:$0xff]
        %v5332 = vld [vmem:[%s4 + $0x280] sm:$0xff]
        %v5333 = vld [vmem:[%s4 + $0x288] sm:$0xff]
        %v5334 = vld [vmem:[%s4 + $0x290] sm:$0xff]
        %v5335 = vld [vmem:[%s4 + $0x298] sm:$0xff]
        %v5336 = vld [vmem:[%s4 + $0x2a0] sm:$0xff]
        %v5337 = vld [vmem:[%s4 + $0x2a8] sm:$0xff]
        %v5338 = vld [vmem:[%s4 + $0x2b0] sm:$0xff]
        %v5339 = vld [vmem:[%s4 + $0x2b8] sm:$0xff]
        %v5340 = vld [vmem:[%s4 + $0x2c0] sm:$0xff]
        %v5341 = vld [vmem:[%s4 + $0x2c8] sm:$0xff]
        %v5342 = vld [vmem:[%s4 + $0x2d0] sm:$0xff]
        %v5343 = vld [vmem:[%s4 + $0x2d8] sm:$0xff]
        %v5344 = vld [vmem:[%s4 + $0x2e0] sm:$0xff]
        %v5345 = vld [vmem:[%s4 + $0x2e8] sm:$0xff]
        %v5346 = vld [vmem:[%s4 + $0x2f0] sm:$0xff]
        %v5347 = vld [vmem:[%s4 + $0x2f8] sm:$0xff]
        %v5348 = vmul.f32 %v4450, %v5252
        %v5349 = vmul.f32 %v4452, %v5253
        %v5350 = vmul.f32 %v5126, %v5254
        %v5351 = vmul.f32 %v4454, %v5255
        %v5352 = vmul.f32 %v4456, %v5256
        %v5353 = vmul.f32 %v5129, %v5257
        %v5354 = vmul.f32 %v4460, %v5258
        %v5355 = vmul.f32 %v4462, %v5259
        %v5356 = vmul.f32 %v5134, %v5260
        %v5357 = vmul.f32 %v4464, %v5261
        %v5358 = vmul.f32 %v4466, %v5262
        %v5359 = vmul.f32 %v5137, %v5263
        %v5360 = vmul.f32 %v4470, %v5264
        %v5361 = vmul.f32 %v4472, %v5265
        %v5362 = vmul.f32 %v5142, %v5266
        %v5363 = vmul.f32 %v4474, %v5267
        %v5364 = vmul.f32 %v4476, %v5268
        %v5365 = vmul.f32 %v5145, %v5269
        %v5366 = vmul.f32 %v4480, %v5270
        %v5367 = vmul.f32 %v4482, %v5271
        %v5368 = vmul.f32 %v5150, %v5272
        %v5369 = vmul.f32 %v4484, %v5273
        %v5370 = vmul.f32 %v4486, %v5274
        %v5371 = vmul.f32 %v5153, %v5275
        %v5372 = vmul.f32 %v4490, %v5276
        %v5373 = vmul.f32 %v4492, %v5277
        %v5374 = vmul.f32 %v5158, %v5278
        %v5375 = vmul.f32 %v4494, %v5279
        %v5376 = vmul.f32 %v4496, %v5280
        %v5377 = vmul.f32 %v5161, %v5281
        %v5378 = vmul.f32 %v4500, %v5282
        %v5379 = vmul.f32 %v4502, %v5283
        %v5380 = vmul.f32 %v5166, %v5284
        %v5381 = vmul.f32 %v4504, %v5285
        %v5382 = vmul.f32 %v4506, %v5286
        %v5383 = vmul.f32 %v5169, %v5287
        %v5384 = vmul.f32 %v4510, %v5288
        %v5385 = vmul.f32 %v4512, %v5289
        %v5386 = vmul.f32 %v5174, %v5290
        %v5387 = vmul.f32 %v4514, %v5291
        %v5388 = vmul.f32 %v4516, %v5292
        %v5389 = vmul.f32 %v5177, %v5293
        %v5390 = vmul.f32 %v4520, %v5294
        %v5391 = vmul.f32 %v4522, %v5295
        %v5392 = vmul.f32 %v5182, %v5296
        %v5393 = vmul.f32 %v4524, %v5297
        %v5394 = vmul.f32 %v4526, %v5298
        %v5395 = vmul.f32 %v5185, %v5299
        %v5396 = vmul.f32 %v4530, %v5300
        %v5397 = vmul.f32 %v4532, %v5301
        %v5398 = vmul.f32 %v5190, %v5302
        %v5399 = vmul.f32 %v4534, %v5303
        %v5400 = vmul.f32 %v4536, %v5304
        %v5401 = vmul.f32 %v5193, %v5305
        %v5402 = vmul.f32 %v4540, %v5306
        %v5403 = vmul.f32 %v4542, %v5307
        %v5404 = vmul.f32 %v5198, %v5308
        %v5405 = vmul.f32 %v4544, %v5309
        %v5406 = vmul.f32 %v4546, %v5310
        %v5407 = vmul.f32 %v5201, %v5311
        %v5408 = vmul.f32 %v4550, %v5312
        %v5409 = vmul.f32 %v4552, %v5313
        %v5410 = vmul.f32 %v5206, %v5314
        %v5411 = vmul.f32 %v4554, %v5315
        %v5412 = vmul.f32 %v4556, %v5316
        %v5413 = vmul.f32 %v5209, %v5317
        %v5414 = vmul.f32 %v4560, %v5318
        %v5415 = vmul.f32 %v4562, %v5319
        %v5416 = vmul.f32 %v5214, %v5320
        %v5417 = vmul.f32 %v4564, %v5321
        %v5418 = vmul.f32 %v4566, %v5322
        %v5419 = vmul.f32 %v5217, %v5323
        %v5420 = vmul.f32 %v4570, %v5324
        %v5421 = vmul.f32 %v4572, %v5325
        %v5422 = vmul.f32 %v5222, %v5326
        %v5423 = vmul.f32 %v4574, %v5327
        %v5424 = vmul.f32 %v4576, %v5328
        %v5425 = vmul.f32 %v5225, %v5329
        %v5426 = vmul.f32 %v4580, %v5330
        %v5427 = vmul.f32 %v4582, %v5331
        %v5428 = vmul.f32 %v5230, %v5332
        %v5429 = vmul.f32 %v4584, %v5333
        %v5430 = vmul.f32 %v4586, %v5334
        %v5431 = vmul.f32 %v5233, %v5335
        %v5432 = vmul.f32 %v4590, %v5336
        %v5433 = vmul.f32 %v4592, %v5337
        %v5434 = vmul.f32 %v5238, %v5338
        %v5435 = vmul.f32 %v4594, %v5339
        %v5436 = vmul.f32 %v4596, %v5340
        %v5437 = vmul.f32 %v5241, %v5341
        %v5438 = vmul.f32 %v4600, %v5342
        %v5439 = vmul.f32 %v4602, %v5343
        %v5440 = vmul.f32 %v5246, %v5344
        %v5441 = vmul.f32 %v4604, %v5345
        %v5442 = vmul.f32 %v4606, %v5346
        %v5443 = vmul.f32 %v5249, %v5347
        %v5444 = vld [vmem:[%s5] sm:$0xff]
        %v5445 = vld [vmem:[%s5 + $0x8] sm:$0xff]
        %v5446 = vld [vmem:[%s5 + $0x10] sm:$0xff]
        %v5447 = vld [vmem:[%s5 + $0x18] sm:$0xff]
        %v5448 = vld [vmem:[%s5 + $0x20] sm:$0xff]
        %v5449 = vld [vmem:[%s5 + $0x28] sm:$0xff]
        %v5450 = vld [vmem:[%s5 + $0x30] sm:$0xff]
        %v5451 = vld [vmem:[%s5 + $0x38] sm:$0xff]
        %v5452 = vld [vmem:[%s5 + $0x40] sm:$0xff]
        %v5453 = vld [vmem:[%s5 + $0x48] sm:$0xff]
        %v5454 = vld [vmem:[%s5 + $0x50] sm:$0xff]
        %v5455 = vld [vmem:[%s5 + $0x58] sm:$0xff]
        %v5456 = vld [vmem:[%s5 + $0x60] sm:$0xff]
        %v5457 = vld [vmem:[%s5 + $0x68] sm:$0xff]
        %v5458 = vld [vmem:[%s5 + $0x70] sm:$0xff]
        %v5459 = vld [vmem:[%s5 + $0x78] sm:$0xff]
        %v5460 = vld [vmem:[%s5 + $0x80] sm:$0xff]
        %v5461 = vld [vmem:[%s5 + $0x88] sm:$0xff]
        %v5462 = vld [vmem:[%s5 + $0x90] sm:$0xff]
        %v5463 = vld [vmem:[%s5 + $0x98] sm:$0xff]
        %v5464 = vld [vmem:[%s5 + $0xa0] sm:$0xff]
        %v5465 = vld [vmem:[%s5 + $0xa8] sm:$0xff]
        %v5466 = vld [vmem:[%s5 + $0xb0] sm:$0xff]
        %v5467 = vld [vmem:[%s5 + $0xb8] sm:$0xff]
        %v5468 = vld [vmem:[%s5 + $0xc0] sm:$0xff]
        %v5469 = vld [vmem:[%s5 + $0xc8] sm:$0xff]
        %v5470 = vld [vmem:[%s5 + $0xd0] sm:$0xff]
        %v5471 = vld [vmem:[%s5 + $0xd8] sm:$0xff]
        %v5472 = vld [vmem:[%s5 + $0xe0] sm:$0xff]
        %v5473 = vld [vmem:[%s5 + $0xe8] sm:$0xff]
        %v5474 = vld [vmem:[%s5 + $0xf0] sm:$0xff]
        %v5475 = vld [vmem:[%s5 + $0xf8] sm:$0xff]
        %v5476 = vld [vmem:[%s5 + $0x100] sm:$0xff]
        %v5477 = vld [vmem:[%s5 + $0x108] sm:$0xff]
        %v5478 = vld [vmem:[%s5 + $0x110] sm:$0xff]
        %v5479 = vld [vmem:[%s5 + $0x118] sm:$0xff]
        %v5480 = vld [vmem:[%s5 + $0x120] sm:$0xff]
        %v5481 = vld [vmem:[%s5 + $0x128] sm:$0xff]
        %v5482 = vld [vmem:[%s5 + $0x130] sm:$0xff]
        %v5483 = vld [vmem:[%s5 + $0x138] sm:$0xff]
        %vm5484 = vcmask 523264
        %v5486 = vsel %vm5484, %v5350, 0
        %v5489 = vsel %vm5484, %v5353, 0
        %v5492 = vsel %vm5484, %v5356, 0
        %v5495 = vsel %vm5484, %v5359, 0
        %v5498 = vsel %vm5484, %v5362, 0
        %v5501 = vsel %vm5484, %v5365, 0
        %v5504 = vsel %vm5484, %v5368, 0
        %v5507 = vsel %vm5484, %v5371, 0
        %v5510 = vsel %vm5484, %v5374, 0
        %v5513 = vsel %vm5484, %v5377, 0
        %v5516 = vsel %vm5484, %v5380, 0
        %v5519 = vsel %vm5484, %v5383, 0
        %v5522 = vsel %vm5484, %v5386, 0
        %v5525 = vsel %vm5484, %v5389, 0
        %v5528 = vsel %vm5484, %v5392, 0
        %v5531 = vsel %vm5484, %v5395, 0
        %v5534 = vsel %vm5484, %v5398, 0
        %v5537 = vsel %vm5484, %v5401, 0
        %v5540 = vsel %vm5484, %v5404, 0
        %v5543 = vsel %vm5484, %v5407, 0
        %v5546 = vsel %vm5484, %v5410, 0
        %v5549 = vsel %vm5484, %v5413, 0
        %v5552 = vsel %vm5484, %v5416, 0
        %v5555 = vsel %vm5484, %v5419, 0
        %v5558 = vsel %vm5484, %v5422, 0
        %v5561 = vsel %vm5484, %v5425, 0
        %v5564 = vsel %vm5484, %v5428, 0
        %v5567 = vsel %vm5484, %v5431, 0
        %v5570 = vsel %vm5484, %v5434, 0
        %v5573 = vsel %vm5484, %v5437, 0
        %v5576 = vsel %vm5484, %v5440, 0
        %v5579 = vsel %vm5484, %v5443, 0
        %5581 = vmatprep.subr.mxu0 0.0
        %5582 = vmatpush1.msra.mxu0 %v5459
        %5583 = vmatprep.subr.mxu0 0.0
        %5584 = vmatpush1.msra.mxu0 %v5458
        %5585 = vmatprep.subr.mxu0 0.0
        %5586 = vmatpush1.msra.mxu0 %v5457
        %5587 = vmatprep.subr.mxu0 0.0
        %5588 = vmatpush1.msra.mxu0 %v5456
        %5589 = vmatprep.subr.mxu0 0.0
        %5590 = vmatpush1.msra.mxu0 %v5455
        %5591 = vmatprep.subr.mxu0 0.0
        %5592 = vmatpush1.msra.mxu0 %v5454
        %5593 = vmatprep.subr.mxu0 0.0
        %5594 = vmatpush1.msra.mxu0 %v5453
        %5595 = vmatprep.subr.mxu0 0.0
        %5596 = vmatpush1.msra.mxu0 %v5452
        %5597 = vmatprep.subr.mxu0 0.0
        %5598 = vmatpush1.msra.mxu0 %v5451
        %5599 = vmatprep.subr.mxu0 0.0
        %5600 = vmatpush1.msra.mxu0 %v5450
        %5601 = vmatprep.subr.mxu0 0.0
        %5602 = vmatpush1.msra.mxu0 %v5449
        %5603 = vmatprep.subr.mxu0 0.0
        %5604 = vmatpush1.msra.mxu0 %v5448
        %5605 = vmatprep.subr.mxu0 0.0
        %5606 = vmatpush1.msra.mxu0 %v5447
        %5607 = vmatprep.subr.mxu0 0.0
        %5608 = vmatpush1.msra.mxu0 %v5446
        %5609 = vmatprep.subr.mxu0 0.0
        %5610 = vmatpush1.msra.mxu0 %v5445
        %5611 = vmatprep.subr.mxu0 0.0
        %5612 = vmatpush1.msra.mxu0 %v5444
        %5613 = vmatprep.subr.mxu0 0.0
        %5614 = vmatpush2.msra.mxu0 %v5475
        %5615 = vmatprep.subr.mxu0 0.0
        %5616 = vmatpush2.msra.mxu0 %v5474
        %5617 = vmatprep.subr.mxu0 0.0
        %5618 = vmatpush2.msra.mxu0 %v5473
        %5619 = vmatprep.subr.mxu0 0.0
        %5620 = vmatpush2.msra.mxu0 %v5472
        %5621 = vmatprep.subr.mxu0 0.0
        %5622 = vmatpush2.msra.mxu0 %v5471
        %5623 = vmatprep.subr.mxu0 0.0
        %5624 = vmatpush2.msra.mxu0 %v5470
        %5625 = vmatprep.subr.mxu0 0.0
        %5626 = vmatpush2.msra.mxu0 %v5469
        %5627 = vmatprep.subr.mxu0 0.0
        %5628 = vmatpush2.msra.mxu0 %v5468
        %5629 = vmatprep.subr.mxu0 0.0
        %5630 = vmatpush2.msra.mxu0 %v5467
        %5631 = vmatprep.subr.mxu0 0.0
        %5632 = vmatpush2.msra.mxu0 %v5466
        %5633 = vmatprep.subr.mxu0 0.0
        %5634 = vmatpush2.msra.mxu0 %v5465
        %5635 = vmatprep.subr.mxu0 0.0
        %5636 = vmatpush2.msra.mxu0 %v5464
        %5637 = vmatprep.subr.mxu0 0.0
        %5638 = vmatpush2.msra.mxu0 %v5463
        %5639 = vmatprep.subr.mxu0 0.0
        %5640 = vmatpush2.msra.mxu0 %v5462
        %5641 = vmatprep.subr.mxu0 0.0
        %5642 = vmatpush2.msra.mxu0 %v5461
        %5643 = vmatprep.subr.mxu0 0.0
        %5644 = vmatpush2.msra.mxu0 %v5460
        %5645 = vmatprep.mubr.f32.mxu0 %v5349
        %5646 = vmatmul.mubr.f32.gmra.mxu0 %v5348
        %v5647 = vpop.f32.mrf.mxu0
        %v5648 = vadd.f32 0.0, %v5647
        %v5649 = vpop.f32.mrf.mxu0
        %5650 = vmatprep.mubr.f32.mxu0 %v5352
        %5651 = vmatmul.mubr.f32.gmra.mxu0 %v5351
        %v5652 = vpop.f32.mrf.mxu0
        %v5653 = vadd.f32 0.0, %v5652
        %v5654 = vpop.f32.mrf.mxu0
        %5655 = vmatprep.mubr.f32.mxu0 %v5355
        %5656 = vmatmul.mubr.f32.gmra.mxu0 %v5354
        %v5657 = vpop.f32.mrf.mxu0
        %v5658 = vadd.f32 0.0, %v5657
        %v5659 = vpop.f32.mrf.mxu0
        %5660 = vmatprep.mubr.f32.mxu0 %v5358
        %5661 = vmatmul.mubr.f32.gmra.mxu0 %v5357
        %v5662 = vpop.f32.mrf.mxu0
        %v5663 = vadd.f32 0.0, %v5662
        %v5664 = vpop.f32.mrf.mxu0
        %5665 = vmatprep.mubr.f32.mxu0 %v5361
        %5666 = vmatmul.mubr.f32.gmra.mxu0 %v5360
        %v5667 = vpop.f32.mrf.mxu0
        %v5668 = vadd.f32 0.0, %v5667
        %v5669 = vpop.f32.mrf.mxu0
        %5670 = vmatprep.mubr.f32.mxu0 %v5364
        %5671 = vmatmul.mubr.f32.gmra.mxu0 %v5363
        %v5672 = vpop.f32.mrf.mxu0
        %v5673 = vadd.f32 0.0, %v5672
        %v5674 = vpop.f32.mrf.mxu0
        %5675 = vmatprep.mubr.f32.mxu0 %v5367
        %5676 = vmatmul.mubr.f32.gmra.mxu0 %v5366
        %v5677 = vpop.f32.mrf.mxu0
        %v5678 = vadd.f32 0.0, %v5677
        %v5679 = vpop.f32.mrf.mxu0
        %5680 = vmatprep.mubr.f32.mxu0 %v5370
        %5681 = vmatmul.mubr.f32.gmra.mxu0 %v5369
        %v5682 = vpop.f32.mrf.mxu0
        %v5683 = vadd.f32 0.0, %v5682
        %v5684 = vpop.f32.mrf.mxu0
        %5685 = vmatprep.mubr.f32.mxu0 %v5373
        %5686 = vmatmul.mubr.f32.gmra.mxu0 %v5372
        %v5687 = vpop.f32.mrf.mxu0
        %v5688 = vadd.f32 0.0, %v5687
        %v5689 = vpop.f32.mrf.mxu0
        %5690 = vmatprep.mubr.f32.mxu0 %v5376
        %5691 = vmatmul.mubr.f32.gmra.mxu0 %v5375
        %v5692 = vpop.f32.mrf.mxu0
        %v5693 = vadd.f32 0.0, %v5692
        %v5694 = vpop.f32.mrf.mxu0
        %5695 = vmatprep.mubr.f32.mxu0 %v5379
        %5696 = vmatmul.mubr.f32.gmra.mxu0 %v5378
        %v5697 = vpop.f32.mrf.mxu0
        %v5698 = vadd.f32 0.0, %v5697
        %v5699 = vpop.f32.mrf.mxu0
        %5700 = vmatprep.mubr.f32.mxu0 %v5382
        %5701 = vmatmul.mubr.f32.gmra.mxu0 %v5381
        %v5702 = vpop.f32.mrf.mxu0
        %v5703 = vadd.f32 0.0, %v5702
        %v5704 = vpop.f32.mrf.mxu0
        %5705 = vmatprep.mubr.f32.mxu0 %v5385
        %5706 = vmatmul.mubr.f32.gmra.mxu0 %v5384
        %v5707 = vpop.f32.mrf.mxu0
        %v5708 = vadd.f32 0.0, %v5707
        %v5709 = vpop.f32.mrf.mxu0
        %5710 = vmatprep.mubr.f32.mxu0 %v5388
        %5711 = vmatmul.mubr.f32.gmra.mxu0 %v5387
        %v5712 = vpop.f32.mrf.mxu0
        %v5713 = vadd.f32 0.0, %v5712
        %v5714 = vpop.f32.mrf.mxu0
        %5715 = vmatprep.mubr.f32.mxu0 %v5391
        %5716 = vmatmul.mubr.f32.gmra.mxu0 %v5390
        %v5717 = vpop.f32.mrf.mxu0
        %v5718 = vadd.f32 0.0, %v5717
        %v5719 = vpop.f32.mrf.mxu0
        %5720 = vmatprep.mubr.f32.mxu0 %v5394
        %5721 = vmatmul.mubr.f32.gmra.mxu0 %v5393
        %v5722 = vpop.f32.mrf.mxu0
        %v5723 = vadd.f32 0.0, %v5722
        %v5724 = vpop.f32.mrf.mxu0
        %5725 = vmatprep.mubr.f32.mxu0 %v5397
        %5726 = vmatmul.mubr.f32.gmra.mxu0 %v5396
        %v5727 = vpop.f32.mrf.mxu0
        %v5728 = vadd.f32 0.0, %v5727
        %v5729 = vpop.f32.mrf.mxu0
        %5730 = vmatprep.mubr.f32.mxu0 %v5400
        %5731 = vmatmul.mubr.f32.gmra.mxu0 %v5399
        %v5732 = vpop.f32.mrf.mxu0
        %v5733 = vadd.f32 0.0, %v5732
        %v5734 = vpop.f32.mrf.mxu0
        %5735 = vmatprep.mubr.f32.mxu0 %v5403
        %5736 = vmatmul.mubr.f32.gmra.mxu0 %v5402
        %v5737 = vpop.f32.mrf.mxu0
        %v5738 = vadd.f32 0.0, %v5737
        %v5739 = vpop.f32.mrf.mxu0
        %5740 = vmatprep.mubr.f32.mxu0 %v5406
        %5741 = vmatmul.mubr.f32.gmra.mxu0 %v5405
        %v5742 = vpop.f32.mrf.mxu0
        %v5743 = vadd.f32 0.0, %v5742
        %v5744 = vpop.f32.mrf.mxu0
        %5745 = vmatprep.mubr.f32.mxu0 %v5409
        %5746 = vmatmul.mubr.f32.gmra.mxu0 %v5408
        %v5747 = vpop.f32.mrf.mxu0
        %v5748 = vadd.f32 0.0, %v5747
        %v5749 = vpop.f32.mrf.mxu0
        %5750 = vmatprep.mubr.f32.mxu0 %v5412
        %5751 = vmatmul.mubr.f32.gmra.mxu0 %v5411
        %v5752 = vpop.f32.mrf.mxu0
        %v5753 = vadd.f32 0.0, %v5752
        %v5754 = vpop.f32.mrf.mxu0
        %5755 = vmatprep.mubr.f32.mxu0 %v5415
        %5756 = vmatmul.mubr.f32.gmra.mxu0 %v5414
        %v5757 = vpop.f32.mrf.mxu0
        %v5758 = vadd.f32 0.0, %v5757
        %v5759 = vpop.f32.mrf.mxu0
        %5760 = vmatprep.mubr.f32.mxu0 %v5418
        %5761 = vmatmul.mubr.f32.gmra.mxu0 %v5417
        %v5762 = vpop.f32.mrf.mxu0
        %v5763 = vadd.f32 0.0, %v5762
        %v5764 = vpop.f32.mrf.mxu0
        %5765 = vmatprep.mubr.f32.mxu0 %v5421
        %5766 = vmatmul.mubr.f32.gmra.mxu0 %v5420
        %v5767 = vpop.f32.mrf.mxu0
        %v5768 = vadd.f32 0.0, %v5767
        %v5769 = vpop.f32.mrf.mxu0
        %5770 = vmatprep.mubr.f32.mxu0 %v5424
        %5771 = vmatmul.mubr.f32.gmra.mxu0 %v5423
        %v5772 = vpop.f32.mrf.mxu0
        %v5773 = vadd.f32 0.0, %v5772
        %v5774 = vpop.f32.mrf.mxu0
        %5775 = vmatprep.mubr.f32.mxu0 %v5427
        %5776 = vmatmul.mubr.f32.gmra.mxu0 %v5426
        %v5777 = vpop.f32.mrf.mxu0
        %v5778 = vadd.f32 0.0, %v5777
        %v5779 = vpop.f32.mrf.mxu0
        %5780 = vmatprep.mubr.f32.mxu0 %v5430
        %5781 = vmatmul.mubr.f32.gmra.mxu0 %v5429
        %v5782 = vpop.f32.mrf.mxu0
        %v5783 = vadd.f32 0.0, %v5782
        %v5784 = vpop.f32.mrf.mxu0
        %5785 = vmatprep.mubr.f32.mxu0 %v5433
        %5786 = vmatmul.mubr.f32.gmra.mxu0 %v5432
        %v5787 = vpop.f32.mrf.mxu0
        %v5788 = vadd.f32 0.0, %v5787
        %v5789 = vpop.f32.mrf.mxu0
        %5790 = vmatprep.mubr.f32.mxu0 %v5436
        %5791 = vmatmul.mubr.f32.gmra.mxu0 %v5435
        %v5792 = vpop.f32.mrf.mxu0
        %v5793 = vadd.f32 0.0, %v5792
        %v5794 = vpop.f32.mrf.mxu0
        %5795 = vmatprep.mubr.f32.mxu0 %v5439
        %5796 = vmatmul.mubr.f32.gmra.mxu0 %v5438
        %v5797 = vpop.f32.mrf.mxu0
        %v5798 = vadd.f32 0.0, %v5797
        %v5799 = vpop.f32.mrf.mxu0
        %5800 = vmatprep.mubr.f32.mxu0 %v5442
        %5801 = vmatmul.mubr.f32.gmra.mxu0 %v5441
        %v5802 = vpop.f32.mrf.mxu0
        %v5803 = vadd.f32 0.0, %v5802
        %v5804 = vpop.f32.mrf.mxu0
        %5805 = vdwg.mxu0
        %5806 = vmatprep.subr.mxu0 0.0
        %5807 = vmatpush1.msra.mxu0 0.0
        %5808 = vmatprep.subr.mxu0 0.0
        %5809 = vmatpush1.msra.mxu0 0.0
        %5810 = vmatprep.subr.mxu0 0.0
        %5811 = vmatpush1.msra.mxu0 0.0
        %5812 = vmatprep.subr.mxu0 0.0
        %5813 = vmatpush1.msra.mxu0 0.0
        %5814 = vmatprep.subr.mxu0 0.0
        %5815 = vmatpush1.msra.mxu0 0.0
        %5816 = vmatprep.subr.mxu0 0.0
        %5817 = vmatpush1.msra.mxu0 0.0
        %5818 = vmatprep.subr.mxu0 0.0
        %5819 = vmatpush1.msra.mxu0 0.0
        %5820 = vmatprep.subr.mxu0 0.0
        %5821 = vmatpush1.msra.mxu0 0.0
        %5822 = vmatprep.subr.mxu0 0.0
        %5823 = vmatpush1.msra.mxu0 %v5483
        %5824 = vmatprep.subr.mxu0 0.0
        %5825 = vmatpush1.msra.mxu0 %v5482
        %5826 = vmatprep.subr.mxu0 0.0
        %5827 = vmatpush1.msra.mxu0 %v5481
        %5828 = vmatprep.subr.mxu0 0.0
        %5829 = vmatpush1.msra.mxu0 %v5480
        %5830 = vmatprep.subr.mxu0 0.0
        %5831 = vmatpush1.msra.mxu0 %v5479
        %5832 = vmatprep.subr.mxu0 0.0
        %5833 = vmatpush1.msra.mxu0 %v5478
        %5834 = vmatprep.subr.mxu0 0.0
        %5835 = vmatpush1.msra.mxu0 %v5477
        %5836 = vmatprep.subr.mxu0 0.0
        %5837 = vmatpush1.msra.mxu0 %v5476
        %5838 = vmatprep.subr.mxu0 0.0
        %5839 = vmatpush2.msra.mxu0 0.0
        %5840 = vmatprep.subr.mxu0 0.0
        %5841 = vmatpush2.msra.mxu0 0.0
        %5842 = vmatprep.subr.mxu0 0.0
        %5843 = vmatpush2.msra.mxu0 0.0
        %5844 = vmatprep.subr.mxu0 0.0
        %5845 = vmatpush2.msra.mxu0 0.0
        %5846 = vmatprep.subr.mxu0 0.0
        %5847 = vmatpush2.msra.mxu0 0.0
        %5848 = vmatprep.subr.mxu0 0.0
        %5849 = vmatpush2.msra.mxu0 0.0
        %5850 = vmatprep.subr.mxu0 0.0
        %5851 = vmatpush2.msra.mxu0 0.0
        %5852 = vmatprep.subr.mxu0 0.0
        %5853 = vmatpush2.msra.mxu0 0.0
        %5854 = vmatprep.subr.mxu0 0.0
        %5855 = vmatpush2.msra.mxu0 0.0
        %5856 = vmatprep.subr.mxu0 0.0
        %5857 = vmatpush2.msra.mxu0 0.0
        %5858 = vmatprep.subr.mxu0 0.0
        %5859 = vmatpush2.msra.mxu0 0.0
        %5860 = vmatprep.subr.mxu0 0.0
        %5861 = vmatpush2.msra.mxu0 0.0
        %5862 = vmatprep.subr.mxu0 0.0
        %5863 = vmatpush2.msra.mxu0 0.0
        %5864 = vmatprep.subr.mxu0 0.0
        %5865 = vmatpush2.msra.mxu0 0.0
        %5866 = vmatprep.subr.mxu0 0.0
        %5867 = vmatpush2.msra.mxu0 0.0
        %5868 = vmatprep.subr.mxu0 0.0
        %5869 = vmatpush2.msra.mxu0 0.0
        %5870 = vmatprep.mubr.f32.mxu0 0.0
        %5871 = vmatmul.mubr.f32.gmra.mxu0 %v5486
        %v5872 = vpop.f32.mrf.mxu0
        %v5873 = vadd.f32 %v5648, %v5872
        %v5874 = vpop.f32.mrf.mxu0
        %5875 = vmatprep.mubr.f32.mxu0 0.0
        %5876 = vmatmul.mubr.f32.gmra.mxu0 %v5489
        %v5877 = vpop.f32.mrf.mxu0
        %v5878 = vadd.f32 %v5653, %v5877
        %v5879 = vpop.f32.mrf.mxu0
        %5880 = vmatprep.mubr.f32.mxu0 0.0
        %5881 = vmatmul.mubr.f32.gmra.mxu0 %v5492
        %v5882 = vpop.f32.mrf.mxu0
        %v5883 = vadd.f32 %v5658, %v5882
        %v5884 = vpop.f32.mrf.mxu0
        %5885 = vmatprep.mubr.f32.mxu0 0.0
        %5886 = vmatmul.mubr.f32.gmra.mxu0 %v5495
        %v5887 = vpop.f32.mrf.mxu0
        %v5888 = vadd.f32 %v5663, %v5887
        %v5889 = vpop.f32.mrf.mxu0
        %5890 = vmatprep.mubr.f32.mxu0 0.0
        %5891 = vmatmul.mubr.f32.gmra.mxu0 %v5498
        %v5892 = vpop.f32.mrf.mxu0
        %v5893 = vadd.f32 %v5668, %v5892
        %v5894 = vpop.f32.mrf.mxu0
        %5895 = vmatprep.mubr.f32.mxu0 0.0
        %5896 = vmatmul.mubr.f32.gmra.mxu0 %v5501
        %v5897 = vpop.f32.mrf.mxu0
        %v5898 = vadd.f32 %v5673, %v5897
        %v5899 = vpop.f32.mrf.mxu0
        %5900 = vmatprep.mubr.f32.mxu0 0.0
        %5901 = vmatmul.mubr.f32.gmra.mxu0 %v5504
        %v5902 = vpop.f32.mrf.mxu0
        %v5903 = vadd.f32 %v5678, %v5902
        %v5904 = vpop.f32.mrf.mxu0
        %5905 = vmatprep.mubr.f32.mxu0 0.0
        %5906 = vmatmul.mubr.f32.gmra.mxu0 %v5507
        %v5907 = vpop.f32.mrf.mxu0
        %v5908 = vadd.f32 %v5683, %v5907
        %v5909 = vpop.f32.mrf.mxu0
        %5910 = vmatprep.mubr.f32.mxu0 0.0
        %5911 = vmatmul.mubr.f32.gmra.mxu0 %v5510
        %v5912 = vpop.f32.mrf.mxu0
        %v5913 = vadd.f32 %v5688, %v5912
        %v5914 = vpop.f32.mrf.mxu0
        %5915 = vmatprep.mubr.f32.mxu0 0.0
        %5916 = vmatmul.mubr.f32.gmra.mxu0 %v5513
        %v5917 = vpop.f32.mrf.mxu0
        %v5918 = vadd.f32 %v5693, %v5917
        %v5919 = vpop.f32.mrf.mxu0
        %5920 = vmatprep.mubr.f32.mxu0 0.0
        %5921 = vmatmul.mubr.f32.gmra.mxu0 %v5516
        %v5922 = vpop.f32.mrf.mxu0
        %v5923 = vadd.f32 %v5698, %v5922
        %v5924 = vpop.f32.mrf.mxu0
        %5925 = vmatprep.mubr.f32.mxu0 0.0
        %5926 = vmatmul.mubr.f32.gmra.mxu0 %v5519
        %v5927 = vpop.f32.mrf.mxu0
        %v5928 = vadd.f32 %v5703, %v5927
        %v5929 = vpop.f32.mrf.mxu0
        %5930 = vmatprep.mubr.f32.mxu0 0.0
        %5931 = vmatmul.mubr.f32.gmra.mxu0 %v5522
        %v5932 = vpop.f32.mrf.mxu0
        %v5933 = vadd.f32 %v5708, %v5932
        %v5934 = vpop.f32.mrf.mxu0
        %5935 = vmatprep.mubr.f32.mxu0 0.0
        %5936 = vmatmul.mubr.f32.gmra.mxu0 %v5525
        %v5937 = vpop.f32.mrf.mxu0
        %v5938 = vadd.f32 %v5713, %v5937
        %v5939 = vpop.f32.mrf.mxu0
        %5940 = vmatprep.mubr.f32.mxu0 0.0
        %5941 = vmatmul.mubr.f32.gmra.mxu0 %v5528
        %v5942 = vpop.f32.mrf.mxu0
        %v5943 = vadd.f32 %v5718, %v5942
        %v5944 = vpop.f32.mrf.mxu0
        %5945 = vmatprep.mubr.f32.mxu0 0.0
        %5946 = vmatmul.mubr.f32.gmra.mxu0 %v5531
        %v5947 = vpop.f32.mrf.mxu0
        %v5948 = vadd.f32 %v5723, %v5947
        %v5949 = vpop.f32.mrf.mxu0
        %5950 = vmatprep.mubr.f32.mxu0 0.0
        %5951 = vmatmul.mubr.f32.gmra.mxu0 %v5534
        %v5952 = vpop.f32.mrf.mxu0
        %v5953 = vadd.f32 %v5728, %v5952
        %v5954 = vpop.f32.mrf.mxu0
        %5955 = vmatprep.mubr.f32.mxu0 0.0
        %5956 = vmatmul.mubr.f32.gmra.mxu0 %v5537
        %v5957 = vpop.f32.mrf.mxu0
        %v5958 = vadd.f32 %v5733, %v5957
        %v5959 = vpop.f32.mrf.mxu0
        %5960 = vmatprep.mubr.f32.mxu0 0.0
        %5961 = vmatmul.mubr.f32.gmra.mxu0 %v5540
        %v5962 = vpop.f32.mrf.mxu0
        %v5963 = vadd.f32 %v5738, %v5962
        %v5964 = vpop.f32.mrf.mxu0
        %5965 = vmatprep.mubr.f32.mxu0 0.0
        %5966 = vmatmul.mubr.f32.gmra.mxu0 %v5543
        %v5967 = vpop.f32.mrf.mxu0
        %v5968 = vadd.f32 %v5743, %v5967
        %v5969 = vpop.f32.mrf.mxu0
        %5970 = vmatprep.mubr.f32.mxu0 0.0
        %5971 = vmatmul.mubr.f32.gmra.mxu0 %v5546
        %v5972 = vpop.f32.mrf.mxu0
        %v5973 = vadd.f32 %v5748, %v5972
        %v5974 = vpop.f32.mrf.mxu0
        %5975 = vmatprep.mubr.f32.mxu0 0.0
        %5976 = vmatmul.mubr.f32.gmra.mxu0 %v5549
        %v5977 = vpop.f32.mrf.mxu0
        %v5978 = vadd.f32 %v5753, %v5977
        %v5979 = vpop.f32.mrf.mxu0
        %5980 = vmatprep.mubr.f32.mxu0 0.0
        %5981 = vmatmul.mubr.f32.gmra.mxu0 %v5552
        %v5982 = vpop.f32.mrf.mxu0
        %v5983 = vadd.f32 %v5758, %v5982
        %v5984 = vpop.f32.mrf.mxu0
        %5985 = vmatprep.mubr.f32.mxu0 0.0
        %5986 = vmatmul.mubr.f32.gmra.mxu0 %v5555
        %v5987 = vpop.f32.mrf.mxu0
        %v5988 = vadd.f32 %v5763, %v5987
        %v5989 = vpop.f32.mrf.mxu0
        %5990 = vmatprep.mubr.f32.mxu0 0.0
        %5991 = vmatmul.mubr.f32.gmra.mxu0 %v5558
        %v5992 = vpop.f32.mrf.mxu0
        %v5993 = vadd.f32 %v5768, %v5992
        %v5994 = vpop.f32.mrf.mxu0
        %5995 = vmatprep.mubr.f32.mxu0 0.0
        %5996 = vmatmul.mubr.f32.gmra.mxu0 %v5561
        %v5997 = vpop.f32.mrf.mxu0
        %v5998 = vadd.f32 %v5773, %v5997
        %v5999 = vpop.f32.mrf.mxu0
        %6000 = vmatprep.mubr.f32.mxu0 0.0
        %6001 = vmatmul.mubr.f32.gmra.mxu0 %v5564
        %v6002 = vpop.f32.mrf.mxu0
        %v6003 = vadd.f32 %v5778, %v6002
        %v6004 = vpop.f32.mrf.mxu0
        %6005 = vmatprep.mubr.f32.mxu0 0.0
        %6006 = vmatmul.mubr.f32.gmra.mxu0 %v5567
        %v6007 = vpop.f32.mrf.mxu0
        %v6008 = vadd.f32 %v5783, %v6007
        %v6009 = vpop.f32.mrf.mxu0
        %6010 = vmatprep.mubr.f32.mxu0 0.0
        %6011 = vmatmul.mubr.f32.gmra.mxu0 %v5570
        %v6012 = vpop.f32.mrf.mxu0
        %v6013 = vadd.f32 %v5788, %v6012
        %v6014 = vpop.f32.mrf.mxu0
        %6015 = vmatprep.mubr.f32.mxu0 0.0
        %6016 = vmatmul.mubr.f32.gmra.mxu0 %v5573
        %v6017 = vpop.f32.mrf.mxu0
        %v6018 = vadd.f32 %v5793, %v6017
        %v6019 = vpop.f32.mrf.mxu0
        %6020 = vmatprep.mubr.f32.mxu0 0.0
        %6021 = vmatmul.mubr.f32.gmra.mxu0 %v5576
        %v6022 = vpop.f32.mrf.mxu0
        %v6023 = vadd.f32 %v5798, %v6022
        %v6024 = vpop.f32.mrf.mxu0
        %6025 = vmatprep.mubr.f32.mxu0 0.0
        %6026 = vmatmul.mubr.f32.gmra.mxu0 %v5579
        %v6027 = vpop.f32.mrf.mxu0
        %v6028 = vadd.f32 %v5803, %v6027
        %v6029 = vpop.f32.mrf.mxu0
        %6030 = vdwg.mxu0
        %v6031 = vld [vmem:[%s6] sm:$0xff]
        %v6032 = vld [vmem:[%s6 + $0x8] sm:$0xff]
        %v6033 = vld [vmem:[%s7] sm:$0x1]
        %v6035 = vlaneseq
        %v6036 = vshrl.u32 %v6035, 7
        %v6037 = vsub.s32 0, %v6036
        %v6038 = vrot.slane %v6033, %v6037
        %6040 = vmatprep.subr.mxu0 0.0
        %6041 = vmatpush1.msra.mxu0 %v5948
        %6042 = vmatprep.subr.mxu0 0.0
        %6043 = vmatpush1.msra.mxu0 %v5943
        %6044 = vmatprep.subr.mxu0 0.0
        %6045 = vmatpush1.msra.mxu0 %v5938
        %6046 = vmatprep.subr.mxu0 0.0
        %6047 = vmatpush1.msra.mxu0 %v5933
        %6048 = vmatprep.subr.mxu0 0.0
        %6049 = vmatpush1.msra.mxu0 %v5928
        %6050 = vmatprep.subr.mxu0 0.0
        %6051 = vmatpush1.msra.mxu0 %v5923
        %6052 = vmatprep.subr.mxu0 0.0
        %6053 = vmatpush1.msra.mxu0 %v5918
        %6054 = vmatprep.subr.mxu0 0.0
        %6055 = vmatpush1.msra.mxu0 %v5913
        %6056 = vmatprep.subr.mxu0 0.0
        %6057 = vmatpush1.msra.mxu0 %v5908
        %6058 = vmatprep.subr.mxu0 0.0
        %6059 = vmatpush1.msra.mxu0 %v5903
        %6060 = vmatprep.subr.mxu0 0.0
        %6061 = vmatpush1.msra.mxu0 %v5898
        %6062 = vmatprep.subr.mxu0 0.0
        %6063 = vmatpush1.msra.mxu0 %v5893
        %6064 = vmatprep.subr.mxu0 0.0
        %6065 = vmatpush1.msra.mxu0 %v5888
        %6066 = vmatprep.subr.mxu0 0.0
        %6067 = vmatpush1.msra.mxu0 %v5883
        %6068 = vmatprep.subr.mxu0 0.0
        %6069 = vmatpush1.msra.mxu0 %v5878
        %6070 = vmatprep.subr.mxu0 0.0
        %6071 = vmatpush1.msra.mxu0 %v5873
        %6072 = vmatprep.subr.mxu0 0.0
        %6073 = vmatpush2.msra.mxu0 %v6028
        %6074 = vmatprep.subr.mxu0 0.0
        %6075 = vmatpush2.msra.mxu0 %v6023
        %6076 = vmatprep.subr.mxu0 0.0
        %6077 = vmatpush2.msra.mxu0 %v6018
        %6078 = vmatprep.subr.mxu0 0.0
        %6079 = vmatpush2.msra.mxu0 %v6013
        %6080 = vmatprep.subr.mxu0 0.0
        %6081 = vmatpush2.msra.mxu0 %v6008
        %6082 = vmatprep.subr.mxu0 0.0
        %6083 = vmatpush2.msra.mxu0 %v6003
        %6084 = vmatprep.subr.mxu0 0.0
        %6085 = vmatpush2.msra.mxu0 %v5998
        %6086 = vmatprep.subr.mxu0 0.0
        %6087 = vmatpush2.msra.mxu0 %v5993
        %6088 = vmatprep.subr.mxu0 0.0
        %6089 = vmatpush2.msra.mxu0 %v5988
        %6090 = vmatprep.subr.mxu0 0.0
        %6091 = vmatpush2.msra.mxu0 %v5983
        %6092 = vmatprep.subr.mxu0 0.0
        %6093 = vmatpush2.msra.mxu0 %v5978
        %6094 = vmatprep.subr.mxu0 0.0
        %6095 = vmatpush2.msra.mxu0 %v5973
        %6096 = vmatprep.subr.mxu0 0.0
        %6097 = vmatpush2.msra.mxu0 %v5968
        %6098 = vmatprep.subr.mxu0 0.0
        %6099 = vmatpush2.msra.mxu0 %v5963
        %6100 = vmatprep.subr.mxu0 0.0
        %6101 = vmatpush2.msra.mxu0 %v5958
        %6102 = vmatprep.subr.mxu0 0.0
        %6103 = vmatpush2.msra.mxu0 %v5953
        %6104 = vmatprep.mubr.f32.mxu0 %v6032
        %6105 = vmatmul.mubr.f32.gmra.mxu0 %v6031
        %v6106 = vpop.f32.mrf.mxu0
        %v6107 = vadd.f32 %v6038, %v6106
        %v6108 = vpop.f32.mrf.mxu0
        %6109 = vdwg.mxu0
        %vm6110 = vcmask 80896
        %6111 = vst.msk [vmem:[%s301] sm:$0xff] %vm6110, %v6107
        %s6112 = sand.u32 %s203, 1
        %s6113 = scalar_lea.sflag [#allocation3], %s6112
        %s6114 = sand.u32 %s203, 1
        %s6115 = smul.addr %s6114, 8
        %s6116 = scalar_lea.vmem [#allocation2], %s6115
        // Predicated region
        $region53: #{mynet_forward.1} parent=51 // pred_check
          %p6117 = pneg %p213
        $region54: #{mynet_forward.1} parent=51 // pred_check_branch
          %6119 = sbr.rel (%p6117) target = $region56
        $region55: #{mynet_forward.1} parent=51 // pred_region
          %s6121 = ssub.s32 128, 128
          %6122 = vsyncadd %s6113, %s6121
          %s6123 = smul.addr %s22, 128
          %s6124 = scalar_lea.hbm %s8, %s6123
          %s6126 = sshll.u32 %s6116, 4
          %s6127 = int_to_ptr.vmem [resolvable:$true] %s6126
          %6129 = dma.vmem_to_hbm [thread:$0]  %s6127, 128, %s6124, %s6113
        $region56: #{mynet_forward.1} parent=51 // pred_fallthru
          _
      $region52: #{mynet_forward.1} parent=5 // pred_fallthru
        _
      %p6130 = scmp.le.s32.totalorder 2, %s17
      // Predicated region
      $region57: #{mynet_forward.1} parent=5 // pred_check
        %p6131 = pneg %p6130
      $region58: #{mynet_forward.1} parent=5 // pred_check_branch
        %6133 = sbr.rel (%p6131) target = $region60
      $region59: #{mynet_forward.1} parent=5 // pred_region
        %s6134 = ssub.s32 %s17, 2
        // Predicated region
        $region61: #{mynet_forward.1} parent=59 // pred_check
          %p6135 = pneg %p219
        $region62: #{mynet_forward.1} parent=59 // pred_check_branch
          %6137 = sbr.rel (%p6135) target = $region64
        $region63: #{mynet_forward.1} parent=59 // pred_region
          %s6138 = sand.u32 %s204, 1
          %s6139 = scalar_lea.sflag [#allocation3], %s6138
          %s6140 = sand.u32 %s204, 1
          %s6141 = smul.addr %s6140, 8
          %s6142 = scalar_lea.vmem [#allocation2], %s6141
          %6143 = dma.done %s6139, 128
        $region64: #{mynet_forward.1} parent=59 // pred_fallthru
          _
      $region60: #{mynet_forward.1} parent=5 // pred_fallthru
        _
    $region6: #{mynet_forward.1} parent=1 // loop_footer
      %s21 = sadd.s32 1, %s17
    $region7: #{mynet_forward.1} parent=1 // loop_footer_branch
      %16 = sbr.rel target = $region3
    $region8: #{mynet_forward.1} parent=1 // loop_exit
      _
    %6144 = vsyncpa [#allocation3], 1
    %s6145 = scalar_lea.sflag [#allocation3], 1
    %6146 = vsyncpa %s6145, 1

</llo_original>
